<compile_context>
chip_gen: v7x
topology: tpu7x:2x2x1
jax: 0.10.0
libtpu: 0.0.40
codegen_flags: <defaults>
</compile_context>

<pallas_src>
import jax
import jax.numpy as jnp
from jax.experimental import pallas as pl
from jax.experimental.pallas import tpu as pltpu


# ----------------------------------------------------------------------------- kernel
def _forward_kernel(x4_ref, w1_ref, b1_ref, w2_ref, b2_ref,
                    wf1_ref, bf1_ref, wf2_ref, bf2_ref, out_ref, p2_ref):
    f32 = jnp.float32
    mmdt = w2_ref.dtype                      # matmul input dtype (bf16)
    _, TB, L2 = x4_ref.shape                 # x4[p, b, j] = x[b, 4j + p]
    L3 = L2 // 2

    # ---- conv1 (k=5, stride 2, pad 2) + ReLU + pool1, fused -----------------------
    # Quarter-phase planes, relayouted once from (TB, L2)[time in lanes] to
    # (TB, L2, 1)[time in sublanes] so channels can live in lanes from here on.
    q0 = x4_ref[0][:, :, None]               # x[b, 4j+0]
    q1 = x4_ref[1][:, :, None]               # x[b, 4j+1]
    q2 = x4_ref[2][:, :, None]               # x[b, 4j+2]
    q3 = x4_ref[3][:, :, None]               # x[b, 4j+3]
    zrow = jnp.zeros((TB, 1, 1), f32)
    q2m = jnp.concatenate([zrow, q2[:, :L2 - 1, :]], axis=1)   # x[b, 4j-2]
    q3m = jnp.concatenate([zrow, q3[:, :L2 - 1, :]], axis=1)   # x[b, 4j-1]
    q0p = jnp.concatenate([q0[:, 1:, :], zrow], axis=1)        # x[b, 4j+4]

    w1 = w1_ref[...]                                           # (5, 32) f32
    wk = lambda k: w1[k:k + 1, :][None]                        # (1, 1, 32)
    # conv1 output at even pool positions i = 2j and odd positions i = 2j+1:
    #   y1[i] = sum_k w1[k] * x[2i + k - 2]
    y_e = q2m * wk(0) + q3m * wk(1) + q0 * wk(2) + q1 * wk(3) + q2 * wk(4)
    y_o = q0 * wk(0) + q1 * wk(1) + q2 * wk(2) + q3 * wk(3) + q0p * wk(4)
    # bias + ReLU commute with the pool max -> pool1 is free.
    z1 = jnp.maximum(jnp.maximum(y_e, y_o) + b1_ref[...][None], 0.0)   # (TB, L2, 32)

    # ---- conv2 (k=5, s=1, p=2) as ONE fused K=160 MXU matmul -----------------------
    # bf16 im2col scratch p2[b, j, 32k + c] = z1[b, j+k-2, c]; exactly one full-range
    # store per tap (zero borders baked into the value, no @pl.when / partial stores).
    z1b = z1.astype(mmdt)
    zer1 = jnp.zeros((TB, 1, 32), mmdt)
    zer2 = jnp.zeros((TB, 2, 32), mmdt)
    taps = (
        jnp.concatenate([zer2, z1b[:, :L2 - 2, :]], axis=1),   # z1[j-2]
        jnp.concatenate([zer1, z1b[:, :L2 - 1, :]], axis=1),   # z1[j-1]
        z1b,                                                   # z1[j]
        jnp.concatenate([z1b[:, 1:, :], zer1], axis=1),        # z1[j+1]
        jnp.concatenate([z1b[:, 2:, :], zer2], axis=1),        # z1[j+2]
    )
    for k in range(5):
        p2_ref[:, :, k * 32:(k + 1) * 32] = taps[k]

    p2 = p2_ref[...].reshape(TB * L2, 5 * 32)
    y2 = jnp.dot(p2, w2_ref[...], preferred_element_type=f32)
    y2 = jnp.maximum(y2 + b2_ref[...], 0.0)                    # (TB*L2, 64)

    # ---- pool2 ---------------------------------------------------------------------
    y2r = y2.reshape(TB, L3, 2, 64)
    z2 = jnp.maximum(y2r[:, :, 0, :], y2r[:, :, 1, :])         # (TB, L3, 64)

    # ---- flatten time-major (t*64 + c); w_fc1 rows were permuted on the host to
    # match PyTorch's channel-major x.view(-1, 64*L3) exactly.
    feat = z2.reshape(TB, L3 * 64)

    # ---- fc1 + ReLU ----------------------------------------------------------------
    h = jnp.dot(feat.astype(mmdt), wf1_ref[...], preferred_element_type=f32)
    h = jnp.maximum(h + bf1_ref[...], 0.0)

    # dropout(p=0.5): eval-mode identity.
    # TODO(synk): training-mode stochastic dropout (pltpu.prng_seed / prng_random_bits).

    # ---- fc2 -----------------------------------------------------------------------
    out = jnp.dot(h.astype(mmdt), wf2_ref[...], preferred_element_type=f32) + bf2_ref[...]
    out_ref[...] = out.astype(out_ref.dtype)


# ----------------------------------------------------------------------------- tiling
def _per_sample_vmem_bytes(L):
    """Rough per-batch-element VMEM footprint of live intermediates (lane-padded)."""
    L2, L3 = L // 4, L // 8
    lanes = lambda n: -(-n // 128) * 128
    act_f32 = (3 * L2 * 32 + L2 * 64 + L3 * 64) * 4       # y_e / y_o / z1, y2, z2
    im2col = L2 * lanes(160) * 2                          # bf16 conv2 im2col scratch
    x_in = 2 * 4 * lanes(L2) * 4                          # double-buffered x4 block
    return act_f32 + im2col + x_in


def _choose_batch_tile(B, L, weight_bytes, vmem_limit):
    per_sample = 2 * _per_sample_vmem_bytes(L)            # 2x headroom for pipeline/temps
    budget = vmem_limit - 2 * weight_bytes - (2 << 20)
    cap = max(8, budget // max(per_sample, 1))
    cap = int(min(cap, 1024, B))
    divisors = [t for t in range(8, B + 1, 8) if B % t == 0]
    if not divisors:
        return B                                          # tiny / ragged batch: one tile
    fitting = [t for t in divisors if t <= cap]
    if not fitting:
        return divisors[0]
    # Prefer a grid length >= 2 so v7x can shard the parallel batch axis over 2 TCs;
    # the extra ~0.35 us step is negligible on single-TC chips.
    proper = [t for t in fitting if t < B]
    return max(proper) if proper else max(fitting)


# ----------------------------------------------------------------------------- wrapper
def fingerprint_classifier_forward(x, params, *, batch_tile=None):
    """x: (B, input_size) float32 -> logits (B, num_classes) float32."""
    B, L = x.shape
    assert L % 8 == 0 and L >= 16, "input_size must be a multiple of 8 (and >= 16)"
    L1, L2, L3 = L // 2, L // 4, L // 8
    F = 64 * L3
    H = params["w_fc1"].shape[1]
    NC = params["w_fc2"].shape[1]
    mmdt = params["w2"].dtype

    # Host-side layout plumbing (one cheap strided copy): quarter-phase deinterleave,
    # x4[p, b, j] = x[b, 4j + p], so the kernel never transposes / phase-splits x.
    x4 = jnp.transpose(x.reshape(B, L2, 4), (2, 0, 1))

    weight_bytes = sum(int(v.size) * v.dtype.itemsize for v in params.values())
    try:
        vmem_cap = int(pltpu.get_tpu_info().vmem_capacity_bytes)
    except Exception:
        vmem_cap = 64 << 20                     # assume the most constrained gen (v7x)
    # leave headroom under the physical capacity (48 MiB on v7x, ~100 MiB on v5e/v6e)
    vmem_limit = int(min(max(vmem_cap - (16 << 20), 32 << 20), 100 << 20))

    if batch_tile is None:
        batch_tile = _choose_batch_tile(B, L, weight_bytes, vmem_limit)
    TB = batch_tile
    assert B % TB == 0 and (TB == B or TB % 8 == 0), "invalid batch_tile"

    flops = 2 * B * (L1 * 5 * 32 + L2 * 160 * 64 + F * H + H * NC)
    bytes_accessed = int(x4.size) * x4.dtype.itemsize + B * NC * 4 + weight_bytes

    const = lambda i: (0, 0)
    return pl.pallas_call(
        _forward_kernel,
        out_shape=jax.ShapeDtypeStruct((B, NC), jnp.float32),
        grid_spec=pltpu.PrefetchScalarGridSpec(
            num_scalar_prefetch=0,
            grid=(B // TB,),
            in_specs=[
                pl.BlockSpec((4, TB, L2), lambda i: (0, i, 0)),  # quarter-phase x (batch-tiled)
                pl.BlockSpec((5, 32), const),                    # conv1 weight (f32, VPU)
                pl.BlockSpec((1, 32), const),                    # conv1 bias
                pl.BlockSpec((160, 64), const),                  # conv2 weight (fused K=160)
                pl.BlockSpec((1, 64), const),                    # conv2 bias
                pl.BlockSpec((F, H), const),                     # fc1 weight (row-permuted)
                pl.BlockSpec((1, H), const),                     # fc1 bias
                pl.BlockSpec((H, NC), const),                    # fc2 weight
                pl.BlockSpec((1, NC), const),                    # fc2 bias
            ],
            out_specs=pl.BlockSpec((TB, NC), lambda i: (i, 0)),
            scratch_shapes=[pltpu.VMEM((TB, L2, 160), mmdt)],    # bf16 conv2 im2col
        ),
        compiler_params=pltpu.CompilerParams(
            dimension_semantics=("parallel",),
            vmem_limit_bytes=vmem_limit,
        ),
        cost_estimate=pl.CostEstimate(flops=flops, transcendentals=0,
                                      bytes_accessed=bytes_accessed),
    )(x4, params["w1"], params["b1"], params["w2"], params["b2"],
      params["w_fc1"], params["b_fc1"], params["w_fc2"], params["b_fc2"])


# ----------------------------------------------------------------------------- params
def make_reference_params(key, input_size, hidden_size, num_classes):
    """Deterministic synthetic parameters in the PyTorch layouts."""
    L3 = input_size // 8
    fc_in = 64 * L3
    ks = jax.random.split(key, 8)
    return {
        "conv1_w": jax.random.normal(ks[0], (32, 1, 5), jnp.float32) * 0.1,
        "conv1_b": jax.random.normal(ks[1], (32,), jnp.float32) * 0.1,
        "conv2_w": jax.random.normal(ks[2], (64, 32, 5), jnp.float32) * 0.05,
        "conv2_b": jax.random.normal(ks[3], (64,), jnp.float32) * 0.05,
        "fc1_w": jax.random.normal(ks[4], (hidden_size, fc_in), jnp.float32) * 0.02,
        "fc1_b": jax.random.normal(ks[5], (hidden_size,), jnp.float32) * 0.02,
        "fc2_w": jax.random.normal(ks[6], (num_classes, hidden_size), jnp.float32) * 0.05,
        "fc2_b": jax.random.normal(ks[7], (num_classes,), jnp.float32) * 0.05,
    }


def to_kernel_params(tp, *, matmul_dtype=jnp.bfloat16):
    """One-time host rearrangement from PyTorch layouts into the kernel layouts."""
    hidden_size, fc_in = tp["fc1_w"].shape
    L3 = fc_in // 64
    num_classes = tp["fc2_w"].shape[0]
    return {
        # conv1: (out, in, k) -> (k, out); stays f32 (VPU broadcast-FMAs).
        "w1": jnp.transpose(tp["conv1_w"][:, 0, :], (1, 0)),
        "b1": tp["conv1_b"].reshape(1, 32),
        # conv2: (out, in, k) -> (k*in, out) = (160, 64) for the single fused matmul.
        "w2": jnp.transpose(tp["conv2_w"], (2, 1, 0)).reshape(5 * 32, 64).astype(matmul_dtype),
        "b2": tp["conv2_b"].reshape(1, 64),
        # fc1: permute rows from PyTorch's channel-major c*L3+t order to the kernel's
        # time-major t*64+c order (no pre-fc1 transpose in the kernel).
        "w_fc1": jnp.transpose(tp["fc1_w"].reshape(hidden_size, 64, L3), (2, 1, 0))
                    .reshape(fc_in, hidden_size).astype(matmul_dtype),
        "b_fc1": tp["fc1_b"].reshape(1, hidden_size),
        "w_fc2": jnp.transpose(tp["fc2_w"], (1, 0)).astype(matmul_dtype),
        "b_fc2": tp["fc2_b"].reshape(1, num_classes),
    }


def reference_forward(x, tp):
    """Pure-JAX f32 replica of the PyTorch module (eval mode)."""
    B, L = x.shape
    L1, L2, L3 = L // 2, L // 4, L // 8
    xpad = jnp.pad(x, ((0, 0), (2, 2)))
    y1 = jnp.zeros((B, 32, L1), jnp.float32)
    for k in range(5):
        y1 = y1 + tp["conv1_w"][:, 0, k][None, :, None] * xpad[:, k:k + 2 * L1:2][:, None, :]
    y1 = jax.nn.relu(y1 + tp["conv1_b"][None, :, None])
    z1 = jnp.max(y1.reshape(B, 32, L2, 2), axis=-1)
    z1p = jnp.pad(z1, ((0, 0), (0, 0), (2, 2)))
    y2 = jnp.zeros((B, 64, L2), jnp.float32)
    for k in range(5):
        y2 = y2 + jnp.einsum('oc,bcj->boj', tp["conv2_w"][:, :, k], z1p[:, :, k:k + L2])
    y2 = jax.nn.relu(y2 + tp["conv2_b"][None, :, None])
    z2 = jnp.max(y2.reshape(B, 64, L3, 2), axis=-1)
    feat = z2.reshape(B, 64 * L3)
    h = jax.nn.relu(feat @ tp["fc1_w"].T + tp["fc1_b"])
    return h @ tp["fc2_w"].T + tp["fc2_b"]


# ----------------------------------------------------------------------------- main
if __name__ == "__main__":
    batch = 64
    input_size = 64        # multiple of 8, as the module requires
    hidden_size = 32
    num_classes = 8

    key = jax.random.PRNGKey(0)
    kx, kp = jax.random.split(key)
    x = jax.random.normal(kx, (batch, input_size), jnp.float32)
    tparams = make_reference_params(kp, input_size, hidden_size, num_classes)
    kparams = to_kernel_params(tparams)

    logits = fingerprint_classifier_forward(x, kparams)
    logits = jax.block_until_ready(logits)
    assert logits.shape == (batch, num_classes)
    assert logits.dtype == jnp.float32

    ref = jax.block_until_ready(reference_forward(x, tparams))
    max_err = float(jnp.max(jnp.abs(logits - ref)))
    assert max_err < 3e-2, f"kernel/reference mismatch: max_err={max_err}"
    print("KERNEL_OK")
</pallas_src>

<mosaic_0001>
module attributes {stable_mosaic.version = 11 : i64} {
  func.func @_forward_kernel(%arg0: i32, %arg1: memref<4x32x16xf32, #tpu.memory_space<vmem>>, %arg2: memref<5x32xf32, #tpu.memory_space<vmem>>, %arg3: memref<1x32xf32, #tpu.memory_space<vmem>>, %arg4: memref<160x64xbf16, #tpu.memory_space<vmem>>, %arg5: memref<1x64xf32, #tpu.memory_space<vmem>>, %arg6: memref<512x32xbf16, #tpu.memory_space<vmem>>, %arg7: memref<1x32xf32, #tpu.memory_space<vmem>>, %arg8: memref<32x8xbf16, #tpu.memory_space<vmem>>, %arg9: memref<1x8xf32, #tpu.memory_space<vmem>>, %arg10: memref<32x8xf32, #tpu.memory_space<vmem>>, %arg11: memref<32x16x160xbf16, #tpu.memory_space<vmem>>) attributes {dimension_semantics = [#tpu.dimension_semantics<parallel>], iteration_bounds = array<i64: 2>, scalar_prefetch = 0 : i64, scratch_operands = 1 : i64, tpu.core_type = #tpu.core_type<tc>, window_params = [{transform_indices = @transform_0, window_bounds = array<i64: 4, 32, 16>}, {pipeline_mode = #tpu.pipeline_mode<synchronous>, transform_indices = @transform_1, window_bounds = array<i64: 5, 32>}, {pipeline_mode = #tpu.pipeline_mode<synchronous>, transform_indices = @transform_2, window_bounds = array<i64: 1, 32>}, {pipeline_mode = #tpu.pipeline_mode<synchronous>, transform_indices = @transform_3, window_bounds = array<i64: 160, 64>}, {pipeline_mode = #tpu.pipeline_mode<synchronous>, transform_indices = @transform_4, window_bounds = array<i64: 1, 64>}, {pipeline_mode = #tpu.pipeline_mode<synchronous>, transform_indices = @transform_5, window_bounds = array<i64: 512, 32>}, {pipeline_mode = #tpu.pipeline_mode<synchronous>, transform_indices = @transform_6, window_bounds = array<i64: 1, 32>}, {pipeline_mode = #tpu.pipeline_mode<synchronous>, transform_indices = @transform_7, window_bounds = array<i64: 32, 8>}, {pipeline_mode = #tpu.pipeline_mode<synchronous>, transform_indices = @transform_8, window_bounds = array<i64: 1, 8>}, {transform_indices = @transform_9, window_bounds = array<i64: 32, 8>}]} {
    %c0 = arith.constant 0 : index
    %c0_0 = arith.constant 0 : index
    %c0_1 = arith.constant 0 : index
    %0 = vector.load %arg1[%c0, %c0_0, %c0_1] : memref<4x32x16xf32, #tpu.memory_space<vmem>>, vector<1x32x16xf32>
    %1 = vector.shape_cast %0 : vector<1x32x16xf32> to vector<32x16xf32>
    %2 = vector.shape_cast %1 : vector<32x16xf32> to vector<32x16x1xf32>
    %c1 = arith.constant 1 : index
    %c0_2 = arith.constant 0 : index
    %c0_3 = arith.constant 0 : index
    %3 = vector.load %arg1[%c1, %c0_2, %c0_3] : memref<4x32x16xf32, #tpu.memory_space<vmem>>, vector<1x32x16xf32>
    %4 = vector.shape_cast %3 : vector<1x32x16xf32> to vector<32x16xf32>
    %5 = vector.shape_cast %4 : vector<32x16xf32> to vector<32x16x1xf32>
    %c2 = arith.constant 2 : index
    %c0_4 = arith.constant 0 : index
    %c0_5 = arith.constant 0 : index
    %6 = vector.load %arg1[%c2, %c0_4, %c0_5] : memref<4x32x16xf32, #tpu.memory_space<vmem>>, vector<1x32x16xf32>
    %7 = vector.shape_cast %6 : vector<1x32x16xf32> to vector<32x16xf32>
    %8 = vector.shape_cast %7 : vector<32x16xf32> to vector<32x16x1xf32>
    %c3 = arith.constant 3 : index
    %c0_6 = arith.constant 0 : index
    %c0_7 = arith.constant 0 : index
    %9 = vector.load %arg1[%c3, %c0_6, %c0_7] : memref<4x32x16xf32, #tpu.memory_space<vmem>>, vector<1x32x16xf32>
    %10 = vector.shape_cast %9 : vector<1x32x16xf32> to vector<32x16xf32>
    %11 = vector.shape_cast %10 : vector<32x16xf32> to vector<32x16x1xf32>
    %cst = arith.constant 0.000000e+00 : f32
    %12 = vector.broadcast %cst : f32 to vector<32x1x1xf32>
    %13 = vector.extract_strided_slice %8 {offsets = [0, 0, 0], sizes = [32, 15, 1], strides = [1, 1, 1]} : vector<32x16x1xf32> to vector<32x15x1xf32>
    %14 = tpu.concatenate %12, %13 in 1 : vector<32x1x1xf32>, vector<32x15x1xf32> -> vector<32x16x1xf32>
    %15 = vector.extract_strided_slice %11 {offsets = [0, 0, 0], sizes = [32, 15, 1], strides = [1, 1, 1]} : vector<32x16x1xf32> to vector<32x15x1xf32>
    %16 = tpu.concatenate %12, %15 in 1 : vector<32x1x1xf32>, vector<32x15x1xf32> -> vector<32x16x1xf32>
    %17 = vector.extract_strided_slice %2 {offsets = [0, 1, 0], sizes = [32, 15, 1], strides = [1, 1, 1]} : vector<32x16x1xf32> to vector<32x15x1xf32>
    %18 = tpu.concatenate %17, %12 in 1 : vector<32x15x1xf32>, vector<32x1x1xf32> -> vector<32x16x1xf32>
    %c0_8 = arith.constant 0 : index
    %c0_9 = arith.constant 0 : index
    %19 = vector.load %arg2[%c0_8, %c0_9] : memref<5x32xf32, #tpu.memory_space<vmem>>, vector<5x32xf32>
    %20 = vector.extract_strided_slice %19 {offsets = [0, 0], sizes = [1, 32], strides = [1, 1]} : vector<5x32xf32> to vector<1x32xf32>
    %21 = vector.shape_cast %20 : vector<1x32xf32> to vector<1x1x32xf32>
    %22 = vector.broadcast %14 : vector<32x16x1xf32> to vector<32x16x32xf32>
    %23 = vector.broadcast %21 : vector<1x1x32xf32> to vector<32x16x32xf32>
    %24 = arith.mulf %22, %23 : vector<32x16x32xf32>
    %25 = vector.extract_strided_slice %19 {offsets = [1, 0], sizes = [1, 32], strides = [1, 1]} : vector<5x32xf32> to vector<1x32xf32>
    %26 = vector.shape_cast %25 : vector<1x32xf32> to vector<1x1x32xf32>
    %27 = vector.broadcast %16 : vector<32x16x1xf32> to vector<32x16x32xf32>
    %28 = vector.broadcast %26 : vector<1x1x32xf32> to vector<32x16x32xf32>
    %29 = arith.mulf %27, %28 : vector<32x16x32xf32>
    %30 = arith.addf %24, %29 : vector<32x16x32xf32>
    %31 = vector.extract_strided_slice %19 {offsets = [2, 0], sizes = [1, 32], strides = [1, 1]} : vector<5x32xf32> to vector<1x32xf32>
    %32 = vector.shape_cast %31 : vector<1x32xf32> to vector<1x1x32xf32>
    %33 = vector.broadcast %2 : vector<32x16x1xf32> to vector<32x16x32xf32>
    %34 = vector.broadcast %32 : vector<1x1x32xf32> to vector<32x16x32xf32>
    %35 = arith.mulf %33, %34 : vector<32x16x32xf32>
    %36 = arith.addf %30, %35 : vector<32x16x32xf32>
    %37 = vector.extract_strided_slice %19 {offsets = [3, 0], sizes = [1, 32], strides = [1, 1]} : vector<5x32xf32> to vector<1x32xf32>
    %38 = vector.shape_cast %37 : vector<1x32xf32> to vector<1x1x32xf32>
    %39 = vector.broadcast %5 : vector<32x16x1xf32> to vector<32x16x32xf32>
    %40 = vector.broadcast %38 : vector<1x1x32xf32> to vector<32x16x32xf32>
    %41 = arith.mulf %39, %40 : vector<32x16x32xf32>
    %42 = arith.addf %36, %41 : vector<32x16x32xf32>
    %43 = vector.extract_strided_slice %19 {offsets = [4, 0], sizes = [1, 32], strides = [1, 1]} : vector<5x32xf32> to vector<1x32xf32>
    %44 = vector.shape_cast %43 : vector<1x32xf32> to vector<1x1x32xf32>
    %45 = vector.broadcast %8 : vector<32x16x1xf32> to vector<32x16x32xf32>
    %46 = vector.broadcast %44 : vector<1x1x32xf32> to vector<32x16x32xf32>
    %47 = arith.mulf %45, %46 : vector<32x16x32xf32>
    %48 = arith.addf %42, %47 : vector<32x16x32xf32>
    %49 = vector.extract_strided_slice %19 {offsets = [0, 0], sizes = [1, 32], strides = [1, 1]} : vector<5x32xf32> to vector<1x32xf32>
    %50 = vector.shape_cast %49 : vector<1x32xf32> to vector<1x1x32xf32>
    %51 = vector.broadcast %2 : vector<32x16x1xf32> to vector<32x16x32xf32>
    %52 = vector.broadcast %50 : vector<1x1x32xf32> to vector<32x16x32xf32>
    %53 = arith.mulf %51, %52 : vector<32x16x32xf32>
    %54 = vector.extract_strided_slice %19 {offsets = [1, 0], sizes = [1, 32], strides = [1, 1]} : vector<5x32xf32> to vector<1x32xf32>
    %55 = vector.shape_cast %54 : vector<1x32xf32> to vector<1x1x32xf32>
    %56 = vector.broadcast %5 : vector<32x16x1xf32> to vector<32x16x32xf32>
    %57 = vector.broadcast %55 : vector<1x1x32xf32> to vector<32x16x32xf32>
    %58 = arith.mulf %56, %57 : vector<32x16x32xf32>
    %59 = arith.addf %53, %58 : vector<32x16x32xf32>
    %60 = vector.extract_strided_slice %19 {offsets = [2, 0], sizes = [1, 32], strides = [1, 1]} : vector<5x32xf32> to vector<1x32xf32>
    %61 = vector.shape_cast %60 : vector<1x32xf32> to vector<1x1x32xf32>
    %62 = vector.broadcast %8 : vector<32x16x1xf32> to vector<32x16x32xf32>
    %63 = vector.broadcast %61 : vector<1x1x32xf32> to vector<32x16x32xf32>
    %64 = arith.mulf %62, %63 : vector<32x16x32xf32>
    %65 = arith.addf %59, %64 : vector<32x16x32xf32>
    %66 = vector.extract_strided_slice %19 {offsets = [3, 0], sizes = [1, 32], strides = [1, 1]} : vector<5x32xf32> to vector<1x32xf32>
    %67 = vector.shape_cast %66 : vector<1x32xf32> to vector<1x1x32xf32>
    %68 = vector.broadcast %11 : vector<32x16x1xf32> to vector<32x16x32xf32>
    %69 = vector.broadcast %67 : vector<1x1x32xf32> to vector<32x16x32xf32>
    %70 = arith.mulf %68, %69 : vector<32x16x32xf32>
    %71 = arith.addf %65, %70 : vector<32x16x32xf32>
    %72 = vector.extract_strided_slice %19 {offsets = [4, 0], sizes = [1, 32], strides = [1, 1]} : vector<5x32xf32> to vector<1x32xf32>
    %73 = vector.shape_cast %72 : vector<1x32xf32> to vector<1x1x32xf32>
    %74 = vector.broadcast %18 : vector<32x16x1xf32> to vector<32x16x32xf32>
    %75 = vector.broadcast %73 : vector<1x1x32xf32> to vector<32x16x32xf32>
    %76 = arith.mulf %74, %75 : vector<32x16x32xf32>
    %77 = arith.addf %71, %76 : vector<32x16x32xf32>
    %78 = arith.maximumf %48, %77 : vector<32x16x32xf32>
    %c0_10 = arith.constant 0 : index
    %c0_11 = arith.constant 0 : index
    %79 = vector.load %arg3[%c0_10, %c0_11] : memref<1x32xf32, #tpu.memory_space<vmem>>, vector<1x32xf32>
    %80 = vector.shape_cast %79 : vector<1x32xf32> to vector<1x1x32xf32>
    %81 = vector.broadcast %80 : vector<1x1x32xf32> to vector<32x16x32xf32>
    %82 = arith.addf %78, %81 : vector<32x16x32xf32>
    %cst_12 = arith.constant 0.000000e+00 : f32
    %83 = vector.broadcast %cst_12 : f32 to vector<32x16x32xf32>
    %84 = arith.maximumf %82, %83 : vector<32x16x32xf32>
    %85 = arith.truncf %84 : vector<32x16x32xf32> to vector<32x16x32xbf16>
    %cst_13 = arith.constant 0.000000e+00 : bf16
    %86 = vector.broadcast %cst_13 : bf16 to vector<32x1x32xbf16>
    %cst_14 = arith.constant 0.000000e+00 : bf16
    %87 = vector.broadcast %cst_14 : bf16 to vector<32x2x32xbf16>
    %88 = vector.extract_strided_slice %85 {offsets = [0, 0, 0], sizes = [32, 14, 32], strides = [1, 1, 1]} : vector<32x16x32xbf16> to vector<32x14x32xbf16>
    %89 = tpu.concatenate %87, %88 in 1 : vector<32x2x32xbf16>, vector<32x14x32xbf16> -> vector<32x16x32xbf16>
    %90 = vector.extract_strided_slice %85 {offsets = [0, 0, 0], sizes = [32, 15, 32], strides = [1, 1, 1]} : vector<32x16x32xbf16> to vector<32x15x32xbf16>
    %91 = tpu.concatenate %86, %90 in 1 : vector<32x1x32xbf16>, vector<32x15x32xbf16> -> vector<32x16x32xbf16>
    %92 = vector.extract_strided_slice %85 {offsets = [0, 1, 0], sizes = [32, 15, 32], strides = [1, 1, 1]} : vector<32x16x32xbf16> to vector<32x15x32xbf16>
    %93 = tpu.concatenate %92, %86 in 1 : vector<32x15x32xbf16>, vector<32x1x32xbf16> -> vector<32x16x32xbf16>
    %94 = vector.extract_strided_slice %85 {offsets = [0, 2, 0], sizes = [32, 14, 32], strides = [1, 1, 1]} : vector<32x16x32xbf16> to vector<32x14x32xbf16>
    %95 = tpu.concatenate %94, %87 in 1 : vector<32x14x32xbf16>, vector<32x2x32xbf16> -> vector<32x16x32xbf16>
    %c0_15 = arith.constant 0 : index
    %c0_16 = arith.constant 0 : index
    %c0_17 = arith.constant 0 : index
    %96 = vector.load %arg11[%c0_15, %c0_16, %c0_17] : memref<32x16x160xbf16, #tpu.memory_space<vmem>>, vector<32x16x32xbf16>
    tpu.vector_store %arg11[%c0_15, %c0_16, %c0_17], %89 {strides = array<i32>} : memref<32x16x160xbf16, #tpu.memory_space<vmem>>, vector<32x16x32xbf16>,
    %c0_18 = arith.constant 0 : index
    %c0_19 = arith.constant 0 : index
    %c32 = arith.constant 32 : index
    %97 = vector.load %arg11[%c0_18, %c0_19, %c32] : memref<32x16x160xbf16, #tpu.memory_space<vmem>>, vector<32x16x32xbf16>
    tpu.vector_store %arg11[%c0_18, %c0_19, %c32], %91 {strides = array<i32>} : memref<32x16x160xbf16, #tpu.memory_space<vmem>>, vector<32x16x32xbf16>,
    %c0_20 = arith.constant 0 : index
    %c0_21 = arith.constant 0 : index
    %c64 = arith.constant 64 : index
    %98 = vector.load %arg11[%c0_20, %c0_21, %c64] : memref<32x16x160xbf16, #tpu.memory_space<vmem>>, vector<32x16x32xbf16>
    tpu.vector_store %arg11[%c0_20, %c0_21, %c64], %85 {strides = array<i32>} : memref<32x16x160xbf16, #tpu.memory_space<vmem>>, vector<32x16x32xbf16>,
    %c0_22 = arith.constant 0 : index
    %c0_23 = arith.constant 0 : index
    %c96 = arith.constant 96 : index
    %99 = vector.load %arg11[%c0_22, %c0_23, %c96] : memref<32x16x160xbf16, #tpu.memory_space<vmem>>, vector<32x16x32xbf16>
    tpu.vector_store %arg11[%c0_22, %c0_23, %c96], %93 {strides = array<i32>} : memref<32x16x160xbf16, #tpu.memory_space<vmem>>, vector<32x16x32xbf16>,
    %c0_24 = arith.constant 0 : index
    %c0_25 = arith.constant 0 : index
    %c128 = arith.constant 128 : index
    %100 = vector.load %arg11[%c0_24, %c0_25, %c128] : memref<32x16x160xbf16, #tpu.memory_space<vmem>>, vector<32x16x32xbf16>
    tpu.vector_store %arg11[%c0_24, %c0_25, %c128], %95 {strides = array<i32>} : memref<32x16x160xbf16, #tpu.memory_space<vmem>>, vector<32x16x32xbf16>,
    %c0_26 = arith.constant 0 : index
    %c0_27 = arith.constant 0 : index
    %c0_28 = arith.constant 0 : index
    %101 = vector.load %arg11[%c0_26, %c0_27, %c0_28] : memref<32x16x160xbf16, #tpu.memory_space<vmem>>, vector<32x16x160xbf16>
    %102 = vector.shape_cast %101 : vector<32x16x160xbf16> to vector<512x160xbf16>
    %c0_29 = arith.constant 0 : index
    %c0_30 = arith.constant 0 : index
    %103 = vector.load %arg4[%c0_29, %c0_30] : memref<160x64xbf16, #tpu.memory_space<vmem>>, vector<160x64xbf16>
    %cst_31 = arith.constant dense<0.000000e+00> : vector<512x64xf32>
    %104 = tpu.matmul %102, %103, %cst_31 {dimension_numbers = #tpu.dot_dimension_numbers<[1], [0], [0], [1], [0, 0, 1, 1], [], []>} : vector<512x160xbf16>, vector<160x64xbf16>, vector<512x64xf32> -> vector<512x64xf32>
    %c0_32 = arith.constant 0 : index
    %c0_33 = arith.constant 0 : index
    %105 = vector.load %arg5[%c0_32, %c0_33] : memref<1x64xf32, #tpu.memory_space<vmem>>, vector<1x64xf32>
    %106 = vector.broadcast %105 : vector<1x64xf32> to vector<512x64xf32>
    %107 = arith.addf %104, %106 : vector<512x64xf32>
    %cst_34 = arith.constant 0.000000e+00 : f32
    %108 = vector.broadcast %cst_34 : f32 to vector<512x64xf32>
    %109 = arith.maximumf %107, %108 : vector<512x64xf32>
    %110 = vector.shape_cast %109 : vector<512x64xf32> to vector<32x8x2x64xf32>
    %111 = vector.extract_strided_slice %110 {offsets = [0, 0, 0, 0], sizes = [32, 8, 1, 64], strides = [1, 1, 1, 1]} : vector<32x8x2x64xf32> to vector<32x8x1x64xf32>
    %112 = vector.shape_cast %111 : vector<32x8x1x64xf32> to vector<32x8x64xf32>
    %113 = vector.extract_strided_slice %110 {offsets = [0, 0, 1, 0], sizes = [32, 8, 1, 64], strides = [1, 1, 1, 1]} : vector<32x8x2x64xf32> to vector<32x8x1x64xf32>
    %114 = vector.shape_cast %113 : vector<32x8x1x64xf32> to vector<32x8x64xf32>
    %115 = arith.maximumf %112, %114 : vector<32x8x64xf32>
    %116 = vector.shape_cast %115 : vector<32x8x64xf32> to vector<32x512xf32>
    %117 = arith.truncf %116 : vector<32x512xf32> to vector<32x512xbf16>
    %c0_35 = arith.constant 0 : index
    %c0_36 = arith.constant 0 : index
    %118 = vector.load %arg6[%c0_35, %c0_36] : memref<512x32xbf16, #tpu.memory_space<vmem>>, vector<512x32xbf16>
    %cst_37 = arith.constant dense<0.000000e+00> : vector<32x32xf32>
    %119 = tpu.matmul %117, %118, %cst_37 {dimension_numbers = #tpu.dot_dimension_numbers<[1], [0], [0], [1], [0, 0, 1, 1], [], []>} : vector<32x512xbf16>, vector<512x32xbf16>, vector<32x32xf32> -> vector<32x32xf32>
    %c0_38 = arith.constant 0 : index
    %c0_39 = arith.constant 0 : index
    %120 = vector.load %arg7[%c0_38, %c0_39] : memref<1x32xf32, #tpu.memory_space<vmem>>, vector<1x32xf32>
    %121 = vector.broadcast %120 : vector<1x32xf32> to vector<32x32xf32>
    %122 = arith.addf %119, %121 : vector<32x32xf32>
    %cst_40 = arith.constant 0.000000e+00 : f32
    %123 = vector.broadcast %cst_40 : f32 to vector<32x32xf32>
    %124 = arith.maximumf %122, %123 : vector<32x32xf32>
    %125 = arith.truncf %124 : vector<32x32xf32> to vector<32x32xbf16>
    %c0_41 = arith.constant 0 : index
    %c0_42 = arith.constant 0 : index
    %126 = vector.load %arg8[%c0_41, %c0_42] : memref<32x8xbf16, #tpu.memory_space<vmem>>, vector<32x8xbf16>
    %cst_43 = arith.constant dense<0.000000e+00> : vector<32x8xf32>
    %127 = tpu.matmul %125, %126, %cst_43 {dimension_numbers = #tpu.dot_dimension_numbers<[1], [0], [0], [1], [0, 0, 1, 1], [], []>} : vector<32x32xbf16>, vector<32x8xbf16>, vector<32x8xf32> -> vector<32x8xf32>
    %c0_44 = arith.constant 0 : index
    %c0_45 = arith.constant 0 : index
    %128 = vector.load %arg9[%c0_44, %c0_45] : memref<1x8xf32, #tpu.memory_space<vmem>>, vector<1x8xf32>
    %129 = vector.broadcast %128 : vector<1x8xf32> to vector<32x8xf32>
    %130 = arith.addf %127, %129 : vector<32x8xf32>
    %c0_46 = arith.constant 0 : index
    %c0_47 = arith.constant 0 : index
    %131 = vector.load %arg10[%c0_46, %c0_47] : memref<32x8xf32, #tpu.memory_space<vmem>>, vector<32x8xf32>
    tpu.vector_store %arg10[%c0_46, %c0_47], %130 {strides = array<i32>} : memref<32x8xf32, #tpu.memory_space<vmem>>, vector<32x8xf32>,
    return
  }
  func.func @transform_0(%arg0: i32) -> (i32, i32, i32) {
    %c0_i32 = arith.constant 0 : i32
    %c0_i32_0 = arith.constant 0 : i32
    %c0_i32_1 = arith.constant 0 : i32
    return %c0_i32, %arg0, %c0_i32_0 : i32, i32, i32
  }
  func.func @transform_1(%arg0: i32) -> (i32, i32) {
    %c0_i32 = arith.constant 0 : i32
    %c0_i32_0 = arith.constant 0 : i32
    %c0_i32_1 = arith.constant 0 : i32
    return %c0_i32, %c0_i32_0 : i32, i32
  }
  func.func @transform_2(%arg0: i32) -> (i32, i32) {
    %c0_i32 = arith.constant 0 : i32
    %c0_i32_0 = arith.constant 0 : i32
    %c0_i32_1 = arith.constant 0 : i32
    return %c0_i32, %c0_i32_0 : i32, i32
  }
  func.func @transform_3(%arg0: i32) -> (i32, i32) {
    %c0_i32 = arith.constant 0 : i32
    %c0_i32_0 = arith.constant 0 : i32
    %c0_i32_1 = arith.constant 0 : i32
    return %c0_i32, %c0_i32_0 : i32, i32
  }
  func.func @transform_4(%arg0: i32) -> (i32, i32) {
    %c0_i32 = arith.constant 0 : i32
    %c0_i32_0 = arith.constant 0 : i32
    %c0_i32_1 = arith.constant 0 : i32
    return %c0_i32, %c0_i32_0 : i32, i32
  }
  func.func @transform_5(%arg0: i32) -> (i32, i32) {
    %c0_i32 = arith.constant 0 : i32
    %c0_i32_0 = arith.constant 0 : i32
    %c0_i32_1 = arith.constant 0 : i32
    return %c0_i32, %c0_i32_0 : i32, i32
  }
  func.func @transform_6(%arg0: i32) -> (i32, i32) {
    %c0_i32 = arith.constant 0 : i32
    %c0_i32_0 = arith.constant 0 : i32
    %c0_i32_1 = arith.constant 0 : i32
    return %c0_i32, %c0_i32_0 : i32, i32
  }
  func.func @transform_7(%arg0: i32) -> (i32, i32) {
    %c0_i32 = arith.constant 0 : i32
    %c0_i32_0 = arith.constant 0 : i32
    %c0_i32_1 = arith.constant 0 : i32
    return %c0_i32, %c0_i32_0 : i32, i32
  }
  func.func @transform_8(%arg0: i32) -> (i32, i32) {
    %c0_i32 = arith.constant 0 : i32
    %c0_i32_0 = arith.constant 0 : i32
    %c0_i32_1 = arith.constant 0 : i32
    return %c0_i32, %c0_i32_0 : i32, i32
  }
  func.func @transform_9(%arg0: i32) -> (i32, i32) {
    %c0_i32 = arith.constant 0 : i32
    %c0_i32_0 = arith.constant 0 : i32
    return %arg0, %c0_i32 : i32, i32
  }
}

</mosaic_0001>

<llo_original>
// kernel: tpu_custom_call.1
$region0: #{tpu_custom_call.1}
  #allocation0 [shape = 'u32[]', space=smem, size = 0x4, offset = 0x4, fixed_abs, tag = 'smem constant byte address 0x4 - core index']
  #allocation1 [shape = 'u32[144,128]{1,0:T(1,128)}', space=vmem, size = 0x12000, scoped, tag = 'internal scratch']
  #allocation2 [shape = 'bf16[32,16,160]{2,1,0:T(16,128)(2,1)}', space=vmem, size = 0x40000, scoped, tag = 'scratch operand']
  %s0 = inlined_call_operand.vmem [shape: f32[4,64,16], index: 0, kind: input, shape index: {}]
  %s1 = inlined_call_operand.vmem [shape: f32[5,32], index: 1, kind: input, shape index: {}]
  %s2 = inlined_call_operand.vmem [shape: f32[1,32], index: 2, kind: input, shape index: {}]
  %s3 = inlined_call_operand.vmem [shape: bf16[160,64], index: 3, kind: input, shape index: {}]
  %s4 = inlined_call_operand.vmem [shape: f32[1,64], index: 4, kind: input, shape index: {}]
  %s5 = inlined_call_operand.vmem [shape: bf16[512,32], index: 5, kind: input, shape index: {}]
  %s6 = inlined_call_operand.vmem [shape: f32[1,32], index: 6, kind: input, shape index: {}]
  %s7 = inlined_call_operand.vmem [shape: bf16[32,8], index: 7, kind: input, shape index: {}]
  %s8 = inlined_call_operand.vmem [shape: f32[1,8], index: 8, kind: input, shape index: {}]
  %s9 = inlined_call_operand.vmem [shape: f32[64,8], index: 9, kind: output, shape index: {}]
  %s10 = sld [smem:[#allocation0]]
  $region107: #{tpu_custom_call.1} parent=0
    _
  %s12 = ssub.s32 1, %s10
  %s13 = scalar_select 0, %s12, %s10
  $region1: #{tpu_custom_call.1} parent=0
    #allocation3 [shape = 'u8[131072]{0}', space=vmem, size = 0x20000, scoped, tag = 'input window, operand 0']
    loop: start=0, step=1, limit=4
    $region2: #{tpu_custom_call.1} parent=1 // loop_pre_header
      _
    $region3: #{tpu_custom_call.1} parent=1 // loop_header
      %s15 = sphi 0, %s19
      %p16 = scmp.ge.s32.totalorder %s15, 4
      %s25 = sphi 0, %s27
      %s28 = sphi 0, %s25
      %s29 = sphi 0, %s28
      %s45 = sphi 0, %s29
      %s49 = sphi 0, %s49
      %s51 = sphi 0, %s49
      %s52 = sphi 0, %s51
      %s66 = sphi 0, %s52
      %s70 = sphi 0, %s70
      %s72 = sphi 0, %s70
      %s73 = sphi 0, %s72
      %s87 = sphi 0, %s73
      %s91 = sphi 0, %s91
      %s93 = sphi 0, %s91
      %s94 = sphi 0, %s93
      %s108 = sphi 0, %s94
      %s112 = sphi 0, %s112
      %s114 = sphi 0, %s112
      %s115 = sphi 0, %s114
      %s129 = sphi 0, %s115
      %s133 = sphi 0, %s133
      %s135 = sphi 0, %s133
      %s136 = sphi 0, %s135
      %s150 = sphi 0, %s136
      %s154 = sphi 0, %s154
      %s156 = sphi 0, %s154
      %s157 = sphi 0, %s156
      %s171 = sphi 0, %s157
      %s175 = sphi 0, %s175
      %s177 = sphi 0, %s175
      %s178 = sphi 0, %s177
      %s192 = sphi 0, %s178
      %s196 = sphi 0, %s196
      %s198 = sphi 0, %s196
      %s199 = sphi 0, %s198
      %s213 = sphi 0, %s199
      %s219 = sphi 0, %s221
      %s222 = sphi 0, %s219
      %s223 = sphi 0, %s222
      %s239 = sphi 0, %s223
    $region4: #{tpu_custom_call.1} parent=1 // loop_header_branch
      %18 = sbr.rel (%p16) target = $region8
    $region5: #{tpu_custom_call.1} parent=1 // loop_body
      %s20 = ssub.s32 %s15, 1
      %s21 = ssub.s32 %s15, 2
      %s22 = sadd.s32 %s15, 1
      %s23 = ssub.s32 %s15, %s22
      %p24 = scmp.eq.s32.totalorder %s23, 0
      %s26 = sadd.s32 %s25, 1
      %s27 = scalar_select %p24, %s25, %s26
      %p30 = pneg %p24
      %p31 = scmp.eq.s32.totalorder %s15, 1
      %p32 = por %p30, %p31
      %p33 = scmp.ne.s32.totalorder %s25, %s28
      %p34 = scmp.eq.s32.totalorder %s15, 0
      %p35 = por %p33, %p34
      %p36 = scmp.ne.s32.totalorder %s25, %s28
      %p37 = scmp.eq.s32.totalorder %s20, 1
      %p38 = por %p36, %p37
      %p39 = scmp.ne.s32.totalorder %s28, %s29
      %p40 = scmp.eq.s32.totalorder %s20, 0
      %p41 = por %p39, %p40
      %p42 = scmp.ne.s32.totalorder %s28, %s29
      %p43 = scmp.eq.s32.totalorder %s21, 1
      %p44 = por %p42, %p43
      %p46 = scmp.ne.s32.totalorder %s29, %s45
      %p47 = scmp.eq.s32.totalorder %s21, 0
      %p48 = por %p46, %p47
      %s50 = sadd.s32 %s49, 1
      %p53 = scmp.eq.s32.totalorder %s15, 1
      %p54 = scmp.ne.s32.totalorder %s49, %s51
      %p55 = scmp.eq.s32.totalorder %s15, 0
      %p56 = por %p54, %p55
      %p57 = scmp.ne.s32.totalorder %s49, %s51
      %p58 = scmp.eq.s32.totalorder %s20, 1
      %p59 = por %p57, %p58
      %p60 = scmp.ne.s32.totalorder %s51, %s52
      %p61 = scmp.eq.s32.totalorder %s20, 0
      %p62 = por %p60, %p61
      %p63 = scmp.ne.s32.totalorder %s51, %s52
      %p64 = scmp.eq.s32.totalorder %s21, 1
      %p65 = por %p63, %p64
      %p67 = scmp.ne.s32.totalorder %s52, %s66
      %p68 = scmp.eq.s32.totalorder %s21, 0
      %p69 = por %p67, %p68
      %s71 = sadd.s32 %s70, 1
      %p74 = scmp.eq.s32.totalorder %s15, 1
      %p75 = scmp.ne.s32.totalorder %s70, %s72
      %p76 = scmp.eq.s32.totalorder %s15, 0
      %p77 = por %p75, %p76
      %p78 = scmp.ne.s32.totalorder %s70, %s72
      %p79 = scmp.eq.s32.totalorder %s20, 1
      %p80 = por %p78, %p79
      %p81 = scmp.ne.s32.totalorder %s72, %s73
      %p82 = scmp.eq.s32.totalorder %s20, 0
      %p83 = por %p81, %p82
      %p84 = scmp.ne.s32.totalorder %s72, %s73
      %p85 = scmp.eq.s32.totalorder %s21, 1
      %p86 = por %p84, %p85
      %p88 = scmp.ne.s32.totalorder %s73, %s87
      %p89 = scmp.eq.s32.totalorder %s21, 0
      %p90 = por %p88, %p89
      %s92 = sadd.s32 %s91, 1
      %p95 = scmp.eq.s32.totalorder %s15, 1
      %p96 = scmp.ne.s32.totalorder %s91, %s93
      %p97 = scmp.eq.s32.totalorder %s15, 0
      %p98 = por %p96, %p97
      %p99 = scmp.ne.s32.totalorder %s91, %s93
      %p100 = scmp.eq.s32.totalorder %s20, 1
      %p101 = por %p99, %p100
      %p102 = scmp.ne.s32.totalorder %s93, %s94
      %p103 = scmp.eq.s32.totalorder %s20, 0
      %p104 = por %p102, %p103
      %p105 = scmp.ne.s32.totalorder %s93, %s94
      %p106 = scmp.eq.s32.totalorder %s21, 1
      %p107 = por %p105, %p106
      %p109 = scmp.ne.s32.totalorder %s94, %s108
      %p110 = scmp.eq.s32.totalorder %s21, 0
      %p111 = por %p109, %p110
      %s113 = sadd.s32 %s112, 1
      %p116 = scmp.eq.s32.totalorder %s15, 1
      %p117 = scmp.ne.s32.totalorder %s112, %s114
      %p118 = scmp.eq.s32.totalorder %s15, 0
      %p119 = por %p117, %p118
      %p120 = scmp.ne.s32.totalorder %s112, %s114
      %p121 = scmp.eq.s32.totalorder %s20, 1
      %p122 = por %p120, %p121
      %p123 = scmp.ne.s32.totalorder %s114, %s115
      %p124 = scmp.eq.s32.totalorder %s20, 0
      %p125 = por %p123, %p124
      %p126 = scmp.ne.s32.totalorder %s114, %s115
      %p127 = scmp.eq.s32.totalorder %s21, 1
      %p128 = por %p126, %p127
      %p130 = scmp.ne.s32.totalorder %s115, %s129
      %p131 = scmp.eq.s32.totalorder %s21, 0
      %p132 = por %p130, %p131
      %s134 = sadd.s32 %s133, 1
      %p137 = scmp.eq.s32.totalorder %s15, 1
      %p138 = scmp.ne.s32.totalorder %s133, %s135
      %p139 = scmp.eq.s32.totalorder %s15, 0
      %p140 = por %p138, %p139
      %p141 = scmp.ne.s32.totalorder %s133, %s135
      %p142 = scmp.eq.s32.totalorder %s20, 1
      %p143 = por %p141, %p142
      %p144 = scmp.ne.s32.totalorder %s135, %s136
      %p145 = scmp.eq.s32.totalorder %s20, 0
      %p146 = por %p144, %p145
      %p147 = scmp.ne.s32.totalorder %s135, %s136
      %p148 = scmp.eq.s32.totalorder %s21, 1
      %p149 = por %p147, %p148
      %p151 = scmp.ne.s32.totalorder %s136, %s150
      %p152 = scmp.eq.s32.totalorder %s21, 0
      %p153 = por %p151, %p152
      %s155 = sadd.s32 %s154, 1
      %p158 = scmp.eq.s32.totalorder %s15, 1
      %p159 = scmp.ne.s32.totalorder %s154, %s156
      %p160 = scmp.eq.s32.totalorder %s15, 0
      %p161 = por %p159, %p160
      %p162 = scmp.ne.s32.totalorder %s154, %s156
      %p163 = scmp.eq.s32.totalorder %s20, 1
      %p164 = por %p162, %p163
      %p165 = scmp.ne.s32.totalorder %s156, %s157
      %p166 = scmp.eq.s32.totalorder %s20, 0
      %p167 = por %p165, %p166
      %p168 = scmp.ne.s32.totalorder %s156, %s157
      %p169 = scmp.eq.s32.totalorder %s21, 1
      %p170 = por %p168, %p169
      %p172 = scmp.ne.s32.totalorder %s157, %s171
      %p173 = scmp.eq.s32.totalorder %s21, 0
      %p174 = por %p172, %p173
      %s176 = sadd.s32 %s175, 1
      %p179 = scmp.eq.s32.totalorder %s15, 1
      %p180 = scmp.ne.s32.totalorder %s175, %s177
      %p181 = scmp.eq.s32.totalorder %s15, 0
      %p182 = por %p180, %p181
      %p183 = scmp.ne.s32.totalorder %s175, %s177
      %p184 = scmp.eq.s32.totalorder %s20, 1
      %p185 = por %p183, %p184
      %p186 = scmp.ne.s32.totalorder %s177, %s178
      %p187 = scmp.eq.s32.totalorder %s20, 0
      %p188 = por %p186, %p187
      %p189 = scmp.ne.s32.totalorder %s177, %s178
      %p190 = scmp.eq.s32.totalorder %s21, 1
      %p191 = por %p189, %p190
      %p193 = scmp.ne.s32.totalorder %s178, %s192
      %p194 = scmp.eq.s32.totalorder %s21, 0
      %p195 = por %p193, %p194
      %s197 = sadd.s32 %s196, 1
      %p200 = scmp.eq.s32.totalorder %s15, 1
      %p201 = scmp.ne.s32.totalorder %s196, %s198
      %p202 = scmp.eq.s32.totalorder %s15, 0
      %p203 = por %p201, %p202
      %p204 = scmp.ne.s32.totalorder %s196, %s198
      %p205 = scmp.eq.s32.totalorder %s20, 1
      %p206 = por %p204, %p205
      %p207 = scmp.ne.s32.totalorder %s198, %s199
      %p208 = scmp.eq.s32.totalorder %s20, 0
      %p209 = por %p207, %p208
      %p210 = scmp.ne.s32.totalorder %s198, %s199
      %p211 = scmp.eq.s32.totalorder %s21, 1
      %p212 = por %p210, %p211
      %p214 = scmp.ne.s32.totalorder %s199, %s213
      %p215 = scmp.eq.s32.totalorder %s21, 0
      %p216 = por %p214, %p215
      %s217 = ssub.s32 %s15, %s22
      %p218 = scmp.eq.s32.totalorder %s217, 0
      %s220 = sadd.s32 %s219, 1
      %s221 = scalar_select %p218, %s219, %s220
      %p224 = pneg %p218
      %p225 = scmp.eq.s32.totalorder %s15, 1
      %p226 = por %p224, %p225
      %p227 = scmp.ne.s32.totalorder %s219, %s222
      %p228 = scmp.eq.s32.totalorder %s15, 0
      %p229 = por %p227, %p228
      %p230 = scmp.ne.s32.totalorder %s219, %s222
      %p231 = scmp.eq.s32.totalorder %s20, 1
      %p232 = por %p230, %p231
      %p233 = scmp.ne.s32.totalorder %s222, %s223
      %p234 = scmp.eq.s32.totalorder %s20, 0
      %p235 = por %p233, %p234
      %p236 = scmp.ne.s32.totalorder %s222, %s223
      %p237 = scmp.eq.s32.totalorder %s21, 1
      %p238 = por %p236, %p237
      %p240 = scmp.ne.s32.totalorder %s223, %s239
      %p241 = scmp.eq.s32.totalorder %s21, 0
      %p242 = por %p240, %p241
      %p243 = scmp.le.s32.totalorder 1, %s15
      %p244 = scmp.lt.s32.totalorder %s15, 3
      %p245 = pnand %p243, %p244
      %p246 = pneg %p245
      // Predicated region
      $region9: #{tpu_custom_call.1} parent=5 // pred_check
        _
      $region10: #{tpu_custom_call.1} parent=5 // pred_check_branch
        %248 = sbr.rel (%p245) target = $region12
      $region11: #{tpu_custom_call.1} parent=5 // pred_region
        %s249 = ssub.s32 %s15, 1
        // Predicated region
        $region13: #{tpu_custom_call.1} parent=11 // pred_check
          %p250 = pneg %p62
        $region14: #{tpu_custom_call.1} parent=11 // pred_check_branch
          %252 = sbr.rel (%p250) target = $region16
        $region15: #{tpu_custom_call.1} parent=11 // pred_region
          _
        $region16: #{tpu_custom_call.1} parent=11 // pred_fallthru
          _
        // Predicated region
        $region17: #{tpu_custom_call.1} parent=11 // pred_check
          %p253 = pneg %p83
        $region18: #{tpu_custom_call.1} parent=11 // pred_check_branch
          %255 = sbr.rel (%p253) target = $region20
        $region19: #{tpu_custom_call.1} parent=11 // pred_region
          _
        $region20: #{tpu_custom_call.1} parent=11 // pred_fallthru
          _
        // Predicated region
        $region21: #{tpu_custom_call.1} parent=11 // pred_check
          %p256 = pneg %p104
        $region22: #{tpu_custom_call.1} parent=11 // pred_check_branch
          %258 = sbr.rel (%p256) target = $region24
        $region23: #{tpu_custom_call.1} parent=11 // pred_region
          _
        $region24: #{tpu_custom_call.1} parent=11 // pred_fallthru
          _
        // Predicated region
        $region25: #{tpu_custom_call.1} parent=11 // pred_check
          %p259 = pneg %p125
        $region26: #{tpu_custom_call.1} parent=11 // pred_check_branch
          %261 = sbr.rel (%p259) target = $region28
        $region27: #{tpu_custom_call.1} parent=11 // pred_region
          _
        $region28: #{tpu_custom_call.1} parent=11 // pred_fallthru
          _
        // Predicated region
        $region29: #{tpu_custom_call.1} parent=11 // pred_check
          %p262 = pneg %p146
        $region30: #{tpu_custom_call.1} parent=11 // pred_check_branch
          %264 = sbr.rel (%p262) target = $region32
        $region31: #{tpu_custom_call.1} parent=11 // pred_region
          _
        $region32: #{tpu_custom_call.1} parent=11 // pred_fallthru
          _
        // Predicated region
        $region33: #{tpu_custom_call.1} parent=11 // pred_check
          %p265 = pneg %p167
        $region34: #{tpu_custom_call.1} parent=11 // pred_check_branch
          %267 = sbr.rel (%p265) target = $region36
        $region35: #{tpu_custom_call.1} parent=11 // pred_region
          _
        $region36: #{tpu_custom_call.1} parent=11 // pred_fallthru
          _
        // Predicated region
        $region37: #{tpu_custom_call.1} parent=11 // pred_check
          %p268 = pneg %p188
        $region38: #{tpu_custom_call.1} parent=11 // pred_check_branch
          %270 = sbr.rel (%p268) target = $region40
        $region39: #{tpu_custom_call.1} parent=11 // pred_region
          _
        $region40: #{tpu_custom_call.1} parent=11 // pred_fallthru
          _
        // Predicated region
        $region41: #{tpu_custom_call.1} parent=11 // pred_check
          %p271 = pneg %p209
        $region42: #{tpu_custom_call.1} parent=11 // pred_check_branch
          %273 = sbr.rel (%p271) target = $region44
        $region43: #{tpu_custom_call.1} parent=11 // pred_region
          _
        $region44: #{tpu_custom_call.1} parent=11 // pred_fallthru
          _
      $region12: #{tpu_custom_call.1} parent=5 // pred_fallthru
        _
      %p274 = scmp.lt.s32.totalorder %s15, 2
      // Predicated region
      $region45: #{tpu_custom_call.1} parent=5 // pred_check
        %p275 = pneg %p274
      $region46: #{tpu_custom_call.1} parent=5 // pred_check_branch
        %277 = sbr.rel (%p275) target = $region48
      $region47: #{tpu_custom_call.1} parent=5 // pred_region
        // Predicated region
        $region49: #{tpu_custom_call.1} parent=47 // pred_check
          %p278 = pneg %p35
        $region50: #{tpu_custom_call.1} parent=47 // pred_check_branch
          %280 = sbr.rel (%p278) target = $region52
        $region51: #{tpu_custom_call.1} parent=47 // pred_region
          %s281 = sand.u32 %s25, 1
          %s282 = sand.u32 %s25, 1
          %s283 = smul.addr %s282, 128
          %s284 = scalar_lea.vmem [#allocation3], %s283
          %s285 = smul.u32 4, %s15
          %s286 = smul.addr %s285, 8
          %s287 = scalar_lea.vmem %s0, %s286
          // Predicated region
          $region53: #{tpu_custom_call.1} parent=51 // pred_check
            _
          $region54: #{tpu_custom_call.1} parent=51 // pred_check_branch
            %289 = sbr.rel (0) target = $region56
          $region55: #{tpu_custom_call.1} parent=51 // pred_region
            // Predicated region
            $region57: #{tpu_custom_call.1} parent=55 // pred_check
              _
            $region58: #{tpu_custom_call.1} parent=55 // pred_check_branch
              %291 = sbr.rel (0) target = $region60
            $region59: #{tpu_custom_call.1} parent=55 // pred_region
              // Predicated region
              $region72: #{tpu_custom_call.1} parent=59 // pred_check
                _
              $region73: #{tpu_custom_call.1} parent=59 // pred_check_branch
                %336 = sbr.rel (0) target = $region75
              $region74: #{tpu_custom_call.1} parent=59 // pred_region
                loop: start=0, step=1, limit=1
                $region76: #{tpu_custom_call.1} parent=74 // loop_pre_header
                  _
                $region77: #{tpu_custom_call.1} parent=74 // loop_header
                  %s338 = sphi 0, %s342
                  %p339 = scmp.ge.s32.totalorder %s338, 1
                  %s343 = sphi %s287, %s287
                  %s344 = sphi %s284, %s284
                $region78: #{tpu_custom_call.1} parent=74 // loop_header_branch
                  %341 = sbr.rel (%p339) target = $region82
                $region79: #{tpu_custom_call.1} parent=74 // loop_body
                  %v345 = vld [vmem:[%s343] sm:$0xff]
                  %346 = vst [vmem:[%s344] sm:$0xff] %v345
                  %v347 = vld [vmem:[%s343 + $0x8] sm:$0xff]
                  %348 = vst [vmem:[%s344 + $0x8] sm:$0xff] %v347
                  %v349 = vld [vmem:[%s343 + $0x10] sm:$0xff]
                  %350 = vst [vmem:[%s344 + $0x10] sm:$0xff] %v349
                  %v351 = vld [vmem:[%s343 + $0x18] sm:$0xff]
                  %352 = vst [vmem:[%s344 + $0x18] sm:$0xff] %v351
                  %v353 = vld [vmem:[%s343 + $0x40] sm:$0xff]
                  %354 = vst [vmem:[%s344 + $0x20] sm:$0xff] %v353
                  %v355 = vld [vmem:[%s343 + $0x48] sm:$0xff]
                  %356 = vst [vmem:[%s344 + $0x28] sm:$0xff] %v355
                  %v357 = vld [vmem:[%s343 + $0x50] sm:$0xff]
                  %358 = vst [vmem:[%s344 + $0x30] sm:$0xff] %v357
                  %v359 = vld [vmem:[%s343 + $0x58] sm:$0xff]
                  %360 = vst [vmem:[%s344 + $0x38] sm:$0xff] %v359
                  %v361 = vld [vmem:[%s343 + $0x80] sm:$0xff]
                  %362 = vst [vmem:[%s344 + $0x40] sm:$0xff] %v361
                  %v363 = vld [vmem:[%s343 + $0x88] sm:$0xff]
                  %364 = vst [vmem:[%s344 + $0x48] sm:$0xff] %v363
                  %v365 = vld [vmem:[%s343 + $0x90] sm:$0xff]
                  %366 = vst [vmem:[%s344 + $0x50] sm:$0xff] %v365
                  %v367 = vld [vmem:[%s343 + $0x98] sm:$0xff]
                  %368 = vst [vmem:[%s344 + $0x58] sm:$0xff] %v367
                  %v369 = vld [vmem:[%s343 + $0xc0] sm:$0xff]
                  %370 = vst [vmem:[%s344 + $0x60] sm:$0xff] %v369
                  %v371 = vld [vmem:[%s343 + $0xc8] sm:$0xff]
                  %372 = vst [vmem:[%s344 + $0x68] sm:$0xff] %v371
                  %v373 = vld [vmem:[%s343 + $0xd0] sm:$0xff]
                  %374 = vst [vmem:[%s344 + $0x70] sm:$0xff] %v373
                  %v375 = vld [vmem:[%s343 + $0xd8] sm:$0xff]
                  %376 = vst [vmem:[%s344 + $0x78] sm:$0xff] %v375
                $region80: #{tpu_custom_call.1} parent=74 // loop_footer
                  %s342 = sadd.s32 1, %s338
                $region81: #{tpu_custom_call.1} parent=74 // loop_footer_branch
                  %337 = sbr.rel target = $region77
                $region82: #{tpu_custom_call.1} parent=74 // loop_exit
                  _
              $region75: #{tpu_custom_call.1} parent=59 // pred_fallthru
                _
              // Predicated region
              $region83: #{tpu_custom_call.1} parent=59 // pred_check
                _
              $region84: #{tpu_custom_call.1} parent=59 // pred_check_branch
                %378 = sbr.rel target = $region86
              $region85: #{tpu_custom_call.1} parent=59 // pred_region
                _
              $region86: #{tpu_custom_call.1} parent=59 // pred_fallthru
                _
            $region60: #{tpu_custom_call.1} parent=55 // pred_fallthru
              _
            // Predicated region
            $region61: #{tpu_custom_call.1} parent=55 // pred_check
              _
            $region62: #{tpu_custom_call.1} parent=55 // pred_check_branch
              %293 = sbr.rel target = $region64
            $region63: #{tpu_custom_call.1} parent=55 // pred_region
              loop: start=0, step=1, limit=1
              $region65: #{tpu_custom_call.1} parent=63 // loop_pre_header
                _
              $region66: #{tpu_custom_call.1} parent=63 // loop_header
                %s296 = sphi 0, %s300
                %p297 = scmp.ge.s32.totalorder %s296, 1
                %s301 = sphi %s287, %s287
                %s302 = sphi %s284, %s284
              $region67: #{tpu_custom_call.1} parent=63 // loop_header_branch
                %299 = sbr.rel (%p297) target = $region71
              $region68: #{tpu_custom_call.1} parent=63 // loop_body
                %v303 = vld [vmem:[%s301] sm:$0xff]
                %304 = vst [vmem:[%s302] sm:$0xff] %v303
                %v305 = vld [vmem:[%s301 + $0x8] sm:$0xff]
                %306 = vst [vmem:[%s302 + $0x8] sm:$0xff] %v305
                %v307 = vld [vmem:[%s301 + $0x10] sm:$0xff]
                %308 = vst [vmem:[%s302 + $0x10] sm:$0xff] %v307
                %v309 = vld [vmem:[%s301 + $0x18] sm:$0xff]
                %310 = vst [vmem:[%s302 + $0x18] sm:$0xff] %v309
                %v311 = vld [vmem:[%s301 + $0x40] sm:$0xff]
                %312 = vst [vmem:[%s302 + $0x20] sm:$0xff] %v311
                %v313 = vld [vmem:[%s301 + $0x48] sm:$0xff]
                %314 = vst [vmem:[%s302 + $0x28] sm:$0xff] %v313
                %v315 = vld [vmem:[%s301 + $0x50] sm:$0xff]
                %316 = vst [vmem:[%s302 + $0x30] sm:$0xff] %v315
                %v317 = vld [vmem:[%s301 + $0x58] sm:$0xff]
                %318 = vst [vmem:[%s302 + $0x38] sm:$0xff] %v317
                %v319 = vld [vmem:[%s301 + $0x80] sm:$0xff]
                %320 = vst [vmem:[%s302 + $0x40] sm:$0xff] %v319
                %v321 = vld [vmem:[%s301 + $0x88] sm:$0xff]
                %322 = vst [vmem:[%s302 + $0x48] sm:$0xff] %v321
                %v323 = vld [vmem:[%s301 + $0x90] sm:$0xff]
                %324 = vst [vmem:[%s302 + $0x50] sm:$0xff] %v323
                %v325 = vld [vmem:[%s301 + $0x98] sm:$0xff]
                %326 = vst [vmem:[%s302 + $0x58] sm:$0xff] %v325
                %v327 = vld [vmem:[%s301 + $0xc0] sm:$0xff]
                %328 = vst [vmem:[%s302 + $0x60] sm:$0xff] %v327
                %v329 = vld [vmem:[%s301 + $0xc8] sm:$0xff]
                %330 = vst [vmem:[%s302 + $0x68] sm:$0xff] %v329
                %v331 = vld [vmem:[%s301 + $0xd0] sm:$0xff]
                %332 = vst [vmem:[%s302 + $0x70] sm:$0xff] %v331
                %v333 = vld [vmem:[%s301 + $0xd8] sm:$0xff]
                %334 = vst [vmem:[%s302 + $0x78] sm:$0xff] %v333
              $region69: #{tpu_custom_call.1} parent=63 // loop_footer
                %s300 = sadd.s32 1, %s296
              $region70: #{tpu_custom_call.1} parent=63 // loop_footer_branch
                %295 = sbr.rel target = $region66
              $region71: #{tpu_custom_call.1} parent=63 // loop_exit
                _
            $region64: #{tpu_custom_call.1} parent=55 // pred_fallthru
              _
          $region56: #{tpu_custom_call.1} parent=51 // pred_fallthru
            _
          %379 = vnop
        $region52: #{tpu_custom_call.1} parent=47 // pred_fallthru
          _
      $region48: #{tpu_custom_call.1} parent=5 // pred_fallthru
        _
      %p380 = scmp.le.s32.totalorder 1, %s15
      %p381 = scmp.lt.s32.totalorder %s15, 3
      %p382 = pnand %p380, %p381
      %p383 = pneg %p382
      // Predicated region
      $region87: #{tpu_custom_call.1} parent=5 // pred_check
        _
      $region88: #{tpu_custom_call.1} parent=5 // pred_check_branch
        %385 = sbr.rel (%p382) target = $region90
      $region89: #{tpu_custom_call.1} parent=5 // pred_region
        %s386 = ssub.s32 %s15, 1
        %s387 = sand.u32 %s28, 1
        %s388 = sand.u32 %s28, 1
        %s389 = smul.addr %s388, 128
        %s390 = scalar_lea.vmem [#allocation3], %s389
        // Predicated region
        $region91: #{tpu_custom_call.1} parent=89 // pred_check
          %p391 = pneg %p41
        $region92: #{tpu_custom_call.1} parent=89 // pred_check_branch
          %393 = sbr.rel (%p391) target = $region94
        $region93: #{tpu_custom_call.1} parent=89 // pred_region
          _
        $region94: #{tpu_custom_call.1} parent=89 // pred_fallthru
          _
        %s394 = sand.u32 %s28, 1
        %s395 = sand.u32 %s28, 1
        %s396 = smul.addr %s395, 128
        %s397 = scalar_lea.vmem [#allocation3], %s396
        %p398 = pneg %p41
        %p399 = pneg %p38
        %p400 = pneg %p62
        %p401 = pneg %p59
        %p402 = pneg %p83
        %p403 = pneg %p80
        %p404 = pneg %p104
        %p405 = pneg %p101
        %p406 = pneg %p125
        %p407 = pneg %p122
        %p408 = pneg %p146
        %p409 = pneg %p143
        %p410 = pneg %p167
        %p411 = pneg %p164
        %p412 = pneg %p188
        %p413 = pneg %p185
        %p414 = pneg %p209
        %p415 = pneg %p206
        %p416 = pneg %p235
        %p417 = pneg %p232
        %s418 = smul.u32 4, %s20
        %p419 = scmp.lt.s32.totalorder %s418, 7
        %s420 = scalar_select %p419, %s418, 7
        %s421 = smul.addr %s420, 8
        %s422 = scalar_lea.vmem %s9, %s421
        %s423 = smul.u32 4, %s20
        %s424 = smul.u32 4, %s20
        %p425 = scmp.lt.s32.totalorder %s424, 7
        %s426 = scalar_select %p425, %s424, 7
        %s427 = smul.addr %s426, 8
        %s428 = scalar_lea.vmem %s9, %s427
        %s429 = smul.u32 4, %s20
        %v431 = vld [vmem:[%s390] sm:$0xff]
        %v432 = vld [vmem:[%s390 + $0x8] sm:$0xff]
        %v433 = vld [vmem:[%s390 + $0x10] sm:$0xff]
        %v434 = vld [vmem:[%s390 + $0x18] sm:$0xff]
        %v435 = vlaneseq
        %v436 = vshrl.u32 %v435, 7
        %v437 = vsub.s32 0, %v436
        %v438 = vrot.slane %v431, %v437
        %440 = vbcast.lane.b32.xlu0 %v438, 256
        %v441 = vpop.permute.xlu0 %440
        %s443 = sor.u32 256, 8
        %444 = vbcast.lane.b32.xlu0 %v438, %s443
        %v445 = vpop.permute.xlu0 %444
        %v446 = vlaneseq
        %v447 = vshrl.u32 %v446, 7
        %v448 = vsub.s32 1, %v447
        %v449 = vrot.slane %v431, %v448
        %451 = vbcast.lane.b32.xlu0 %v449, 256
        %v452 = vpop.permute.xlu0 %451
        %s454 = sor.u32 256, 8
        %455 = vbcast.lane.b32.xlu0 %v449, %s454
        %v456 = vpop.permute.xlu0 %455
        %v457 = vlaneseq
        %v458 = vshrl.u32 %v457, 7
        %v459 = vsub.s32 2, %v458
        %v460 = vrot.slane %v431, %v459
        %462 = vbcast.lane.b32.xlu0 %v460, 256
        %v463 = vpop.permute.xlu0 %462
        %s465 = sor.u32 256, 8
        %466 = vbcast.lane.b32.xlu0 %v460, %s465
        %v467 = vpop.permute.xlu0 %466
        %v468 = vlaneseq
        %v469 = vshrl.u32 %v468, 7
        %v470 = vsub.s32 3, %v469
        %v471 = vrot.slane %v431, %v470
        %473 = vbcast.lane.b32.xlu0 %v471, 256
        %v474 = vpop.permute.xlu0 %473
        %s476 = sor.u32 256, 8
        %477 = vbcast.lane.b32.xlu0 %v471, %s476
        %v478 = vpop.permute.xlu0 %477
        %v479 = vlaneseq
        %v480 = vshrl.u32 %v479, 7
        %v481 = vsub.s32 4, %v480
        %v482 = vrot.slane %v431, %v481
        %484 = vbcast.lane.b32.xlu0 %v482, 256
        %v485 = vpop.permute.xlu0 %484
        %s487 = sor.u32 256, 8
        %488 = vbcast.lane.b32.xlu0 %v482, %s487
        %v489 = vpop.permute.xlu0 %488
        %v490 = vlaneseq
        %v491 = vshrl.u32 %v490, 7
        %v492 = vsub.s32 5, %v491
        %v493 = vrot.slane %v431, %v492
        %495 = vbcast.lane.b32.xlu0 %v493, 256
        %v496 = vpop.permute.xlu0 %495
        %s498 = sor.u32 256, 8
        %499 = vbcast.lane.b32.xlu0 %v493, %s498
        %v500 = vpop.permute.xlu0 %499
        %v501 = vlaneseq
        %v502 = vshrl.u32 %v501, 7
        %v503 = vsub.s32 6, %v502
        %v504 = vrot.slane %v431, %v503
        %506 = vbcast.lane.b32.xlu0 %v504, 256
        %v507 = vpop.permute.xlu0 %506
        %s509 = sor.u32 256, 8
        %510 = vbcast.lane.b32.xlu0 %v504, %s509
        %v511 = vpop.permute.xlu0 %510
        %v512 = vlaneseq
        %v513 = vshrl.u32 %v512, 7
        %v514 = vsub.s32 7, %v513
        %v515 = vrot.slane %v431, %v514
        %517 = vbcast.lane.b32.xlu0 %v515, 256
        %v518 = vpop.permute.xlu0 %517
        %s520 = sor.u32 256, 8
        %521 = vbcast.lane.b32.xlu0 %v515, %s520
        %v522 = vpop.permute.xlu0 %521
        %v523 = vlaneseq
        %v524 = vshrl.u32 %v523, 7
        %v525 = vsub.s32 0, %v524
        %v526 = vrot.slane %v432, %v525
        %528 = vbcast.lane.b32.xlu0 %v526, 256
        %v529 = vpop.permute.xlu0 %528
        %s531 = sor.u32 256, 8
        %532 = vbcast.lane.b32.xlu0 %v526, %s531
        %v533 = vpop.permute.xlu0 %532
        %v534 = vlaneseq
        %v535 = vshrl.u32 %v534, 7
        %v536 = vsub.s32 1, %v535
        %v537 = vrot.slane %v432, %v536
        %539 = vbcast.lane.b32.xlu0 %v537, 256
        %v540 = vpop.permute.xlu0 %539
        %s542 = sor.u32 256, 8
        %543 = vbcast.lane.b32.xlu0 %v537, %s542
        %v544 = vpop.permute.xlu0 %543
        %v545 = vlaneseq
        %v546 = vshrl.u32 %v545, 7
        %v547 = vsub.s32 2, %v546
        %v548 = vrot.slane %v432, %v547
        %550 = vbcast.lane.b32.xlu0 %v548, 256
        %v551 = vpop.permute.xlu0 %550
        %s553 = sor.u32 256, 8
        %554 = vbcast.lane.b32.xlu0 %v548, %s553
        %v555 = vpop.permute.xlu0 %554
        %v556 = vlaneseq
        %v557 = vshrl.u32 %v556, 7
        %v558 = vsub.s32 3, %v557
        %v559 = vrot.slane %v432, %v558
        %561 = vbcast.lane.b32.xlu0 %v559, 256
        %v562 = vpop.permute.xlu0 %561
        %s564 = sor.u32 256, 8
        %565 = vbcast.lane.b32.xlu0 %v559, %s564
        %v566 = vpop.permute.xlu0 %565
        %v567 = vlaneseq
        %v568 = vshrl.u32 %v567, 7
        %v569 = vsub.s32 4, %v568
        %v570 = vrot.slane %v432, %v569
        %572 = vbcast.lane.b32.xlu0 %v570, 256
        %v573 = vpop.permute.xlu0 %572
        %s575 = sor.u32 256, 8
        %576 = vbcast.lane.b32.xlu0 %v570, %s575
        %v577 = vpop.permute.xlu0 %576
        %v578 = vlaneseq
        %v579 = vshrl.u32 %v578, 7
        %v580 = vsub.s32 5, %v579
        %v581 = vrot.slane %v432, %v580
        %583 = vbcast.lane.b32.xlu0 %v581, 256
        %v584 = vpop.permute.xlu0 %583
        %s586 = sor.u32 256, 8
        %587 = vbcast.lane.b32.xlu0 %v581, %s586
        %v588 = vpop.permute.xlu0 %587
        %v589 = vlaneseq
        %v590 = vshrl.u32 %v589, 7
        %v591 = vsub.s32 6, %v590
        %v592 = vrot.slane %v432, %v591
        %594 = vbcast.lane.b32.xlu0 %v592, 256
        %v595 = vpop.permute.xlu0 %594
        %s597 = sor.u32 256, 8
        %598 = vbcast.lane.b32.xlu0 %v592, %s597
        %v599 = vpop.permute.xlu0 %598
        %v600 = vlaneseq
        %v601 = vshrl.u32 %v600, 7
        %v602 = vsub.s32 7, %v601
        %v603 = vrot.slane %v432, %v602
        %605 = vbcast.lane.b32.xlu0 %v603, 256
        %v606 = vpop.permute.xlu0 %605
        %s608 = sor.u32 256, 8
        %609 = vbcast.lane.b32.xlu0 %v603, %s608
        %v610 = vpop.permute.xlu0 %609
        %v611 = vlaneseq
        %v612 = vshrl.u32 %v611, 7
        %v613 = vsub.s32 0, %v612
        %v614 = vrot.slane %v433, %v613
        %616 = vbcast.lane.b32.xlu0 %v614, 256
        %v617 = vpop.permute.xlu0 %616
        %s619 = sor.u32 256, 8
        %620 = vbcast.lane.b32.xlu0 %v614, %s619
        %v621 = vpop.permute.xlu0 %620
        %v622 = vlaneseq
        %v623 = vshrl.u32 %v622, 7
        %v624 = vsub.s32 1, %v623
        %v625 = vrot.slane %v433, %v624
        %627 = vbcast.lane.b32.xlu0 %v625, 256
        %v628 = vpop.permute.xlu0 %627
        %s630 = sor.u32 256, 8
        %631 = vbcast.lane.b32.xlu0 %v625, %s630
        %v632 = vpop.permute.xlu0 %631
        %v633 = vlaneseq
        %v634 = vshrl.u32 %v633, 7
        %v635 = vsub.s32 2, %v634
        %v636 = vrot.slane %v433, %v635
        %638 = vbcast.lane.b32.xlu0 %v636, 256
        %v639 = vpop.permute.xlu0 %638
        %s641 = sor.u32 256, 8
        %642 = vbcast.lane.b32.xlu0 %v636, %s641
        %v643 = vpop.permute.xlu0 %642
        %v644 = vlaneseq
        %v645 = vshrl.u32 %v644, 7
        %v646 = vsub.s32 3, %v645
        %v647 = vrot.slane %v433, %v646
        %649 = vbcast.lane.b32.xlu0 %v647, 256
        %v650 = vpop.permute.xlu0 %649
        %s652 = sor.u32 256, 8
        %653 = vbcast.lane.b32.xlu0 %v647, %s652
        %v654 = vpop.permute.xlu0 %653
        %v655 = vlaneseq
        %v656 = vshrl.u32 %v655, 7
        %v657 = vsub.s32 4, %v656
        %v658 = vrot.slane %v433, %v657
        %660 = vbcast.lane.b32.xlu0 %v658, 256
        %v661 = vpop.permute.xlu0 %660
        %s663 = sor.u32 256, 8
        %664 = vbcast.lane.b32.xlu0 %v658, %s663
        %v665 = vpop.permute.xlu0 %664
        %v666 = vlaneseq
        %v667 = vshrl.u32 %v666, 7
        %v668 = vsub.s32 5, %v667
        %v669 = vrot.slane %v433, %v668
        %671 = vbcast.lane.b32.xlu0 %v669, 256
        %v672 = vpop.permute.xlu0 %671
        %s674 = sor.u32 256, 8
        %675 = vbcast.lane.b32.xlu0 %v669, %s674
        %v676 = vpop.permute.xlu0 %675
        %v677 = vlaneseq
        %v678 = vshrl.u32 %v677, 7
        %v679 = vsub.s32 6, %v678
        %v680 = vrot.slane %v433, %v679
        %682 = vbcast.lane.b32.xlu0 %v680, 256
        %v683 = vpop.permute.xlu0 %682
        %s685 = sor.u32 256, 8
        %686 = vbcast.lane.b32.xlu0 %v680, %s685
        %v687 = vpop.permute.xlu0 %686
        %v688 = vlaneseq
        %v689 = vshrl.u32 %v688, 7
        %v690 = vsub.s32 7, %v689
        %v691 = vrot.slane %v433, %v690
        %693 = vbcast.lane.b32.xlu0 %v691, 256
        %v694 = vpop.permute.xlu0 %693
        %s696 = sor.u32 256, 8
        %697 = vbcast.lane.b32.xlu0 %v691, %s696
        %v698 = vpop.permute.xlu0 %697
        %v699 = vlaneseq
        %v700 = vshrl.u32 %v699, 7
        %v701 = vsub.s32 0, %v700
        %v702 = vrot.slane %v434, %v701
        %704 = vbcast.lane.b32.xlu0 %v702, 256
        %v705 = vpop.permute.xlu0 %704
        %s707 = sor.u32 256, 8
        %708 = vbcast.lane.b32.xlu0 %v702, %s707
        %v709 = vpop.permute.xlu0 %708
        %v710 = vlaneseq
        %v711 = vshrl.u32 %v710, 7
        %v712 = vsub.s32 1, %v711
        %v713 = vrot.slane %v434, %v712
        %715 = vbcast.lane.b32.xlu0 %v713, 256
        %v716 = vpop.permute.xlu0 %715
        %s718 = sor.u32 256, 8
        %719 = vbcast.lane.b32.xlu0 %v713, %s718
        %v720 = vpop.permute.xlu0 %719
        %v721 = vlaneseq
        %v722 = vshrl.u32 %v721, 7
        %v723 = vsub.s32 2, %v722
        %v724 = vrot.slane %v434, %v723
        %726 = vbcast.lane.b32.xlu0 %v724, 256
        %v727 = vpop.permute.xlu0 %726
        %s729 = sor.u32 256, 8
        %730 = vbcast.lane.b32.xlu0 %v724, %s729
        %v731 = vpop.permute.xlu0 %730
        %v732 = vlaneseq
        %v733 = vshrl.u32 %v732, 7
        %v734 = vsub.s32 3, %v733
        %v735 = vrot.slane %v434, %v734
        %737 = vbcast.lane.b32.xlu0 %v735, 256
        %v738 = vpop.permute.xlu0 %737
        %s740 = sor.u32 256, 8
        %741 = vbcast.lane.b32.xlu0 %v735, %s740
        %v742 = vpop.permute.xlu0 %741
        %v743 = vlaneseq
        %v744 = vshrl.u32 %v743, 7
        %v745 = vsub.s32 4, %v744
        %v746 = vrot.slane %v434, %v745
        %748 = vbcast.lane.b32.xlu0 %v746, 256
        %v749 = vpop.permute.xlu0 %748
        %s751 = sor.u32 256, 8
        %752 = vbcast.lane.b32.xlu0 %v746, %s751
        %v753 = vpop.permute.xlu0 %752
        %v754 = vlaneseq
        %v755 = vshrl.u32 %v754, 7
        %v756 = vsub.s32 5, %v755
        %v757 = vrot.slane %v434, %v756
        %759 = vbcast.lane.b32.xlu0 %v757, 256
        %v760 = vpop.permute.xlu0 %759
        %s762 = sor.u32 256, 8
        %763 = vbcast.lane.b32.xlu0 %v757, %s762
        %v764 = vpop.permute.xlu0 %763
        %v765 = vlaneseq
        %v766 = vshrl.u32 %v765, 7
        %v767 = vsub.s32 6, %v766
        %v768 = vrot.slane %v434, %v767
        %770 = vbcast.lane.b32.xlu0 %v768, 256
        %v771 = vpop.permute.xlu0 %770
        %s773 = sor.u32 256, 8
        %774 = vbcast.lane.b32.xlu0 %v768, %s773
        %v775 = vpop.permute.xlu0 %774
        %v776 = vlaneseq
        %v777 = vshrl.u32 %v776, 7
        %v778 = vsub.s32 7, %v777
        %v779 = vrot.slane %v434, %v778
        %781 = vbcast.lane.b32.xlu0 %v779, 256
        %v782 = vpop.permute.xlu0 %781
        %s784 = sor.u32 256, 8
        %785 = vbcast.lane.b32.xlu0 %v779, %s784
        %v786 = vpop.permute.xlu0 %785
        %s787 = scalar_lea.vmem %s390, 32 [#allocation3]
        %v788 = vld [vmem:[%s787] sm:$0xff]
        %v789 = vld [vmem:[%s787 + $0x8] sm:$0xff]
        %v790 = vld [vmem:[%s787 + $0x10] sm:$0xff]
        %v791 = vld [vmem:[%s787 + $0x18] sm:$0xff]
        %v792 = vlaneseq
        %v793 = vshrl.u32 %v792, 7
        %v794 = vsub.s32 0, %v793
        %v795 = vrot.slane %v788, %v794
        %797 = vbcast.lane.b32.xlu0 %v795, 256
        %v798 = vpop.permute.xlu0 %797
        %s800 = sor.u32 256, 8
        %801 = vbcast.lane.b32.xlu0 %v795, %s800
        %v802 = vpop.permute.xlu0 %801
        %v803 = vlaneseq
        %v804 = vshrl.u32 %v803, 7
        %v805 = vsub.s32 1, %v804
        %v806 = vrot.slane %v788, %v805
        %808 = vbcast.lane.b32.xlu0 %v806, 256
        %v809 = vpop.permute.xlu0 %808
        %s811 = sor.u32 256, 8
        %812 = vbcast.lane.b32.xlu0 %v806, %s811
        %v813 = vpop.permute.xlu0 %812
        %v814 = vlaneseq
        %v815 = vshrl.u32 %v814, 7
        %v816 = vsub.s32 2, %v815
        %v817 = vrot.slane %v788, %v816
        %819 = vbcast.lane.b32.xlu0 %v817, 256
        %v820 = vpop.permute.xlu0 %819
        %s822 = sor.u32 256, 8
        %823 = vbcast.lane.b32.xlu0 %v817, %s822
        %v824 = vpop.permute.xlu0 %823
        %v825 = vlaneseq
        %v826 = vshrl.u32 %v825, 7
        %v827 = vsub.s32 3, %v826
        %v828 = vrot.slane %v788, %v827
        %830 = vbcast.lane.b32.xlu0 %v828, 256
        %v831 = vpop.permute.xlu0 %830
        %s833 = sor.u32 256, 8
        %834 = vbcast.lane.b32.xlu0 %v828, %s833
        %v835 = vpop.permute.xlu0 %834
        %v836 = vlaneseq
        %v837 = vshrl.u32 %v836, 7
        %v838 = vsub.s32 4, %v837
        %v839 = vrot.slane %v788, %v838
        %841 = vbcast.lane.b32.xlu0 %v839, 256
        %v842 = vpop.permute.xlu0 %841
        %s844 = sor.u32 256, 8
        %845 = vbcast.lane.b32.xlu0 %v839, %s844
        %v846 = vpop.permute.xlu0 %845
        %v847 = vlaneseq
        %v848 = vshrl.u32 %v847, 7
        %v849 = vsub.s32 5, %v848
        %v850 = vrot.slane %v788, %v849
        %852 = vbcast.lane.b32.xlu0 %v850, 256
        %v853 = vpop.permute.xlu0 %852
        %s855 = sor.u32 256, 8
        %856 = vbcast.lane.b32.xlu0 %v850, %s855
        %v857 = vpop.permute.xlu0 %856
        %v858 = vlaneseq
        %v859 = vshrl.u32 %v858, 7
        %v860 = vsub.s32 6, %v859
        %v861 = vrot.slane %v788, %v860
        %863 = vbcast.lane.b32.xlu0 %v861, 256
        %v864 = vpop.permute.xlu0 %863
        %s866 = sor.u32 256, 8
        %867 = vbcast.lane.b32.xlu0 %v861, %s866
        %v868 = vpop.permute.xlu0 %867
        %v869 = vlaneseq
        %v870 = vshrl.u32 %v869, 7
        %v871 = vsub.s32 7, %v870
        %v872 = vrot.slane %v788, %v871
        %874 = vbcast.lane.b32.xlu0 %v872, 256
        %v875 = vpop.permute.xlu0 %874
        %s877 = sor.u32 256, 8
        %878 = vbcast.lane.b32.xlu0 %v872, %s877
        %v879 = vpop.permute.xlu0 %878
        %v880 = vlaneseq
        %v881 = vshrl.u32 %v880, 7
        %v882 = vsub.s32 0, %v881
        %v883 = vrot.slane %v789, %v882
        %885 = vbcast.lane.b32.xlu0 %v883, 256
        %v886 = vpop.permute.xlu0 %885
        %s888 = sor.u32 256, 8
        %889 = vbcast.lane.b32.xlu0 %v883, %s888
        %v890 = vpop.permute.xlu0 %889
        %v891 = vlaneseq
        %v892 = vshrl.u32 %v891, 7
        %v893 = vsub.s32 1, %v892
        %v894 = vrot.slane %v789, %v893
        %896 = vbcast.lane.b32.xlu0 %v894, 256
        %v897 = vpop.permute.xlu0 %896
        %s899 = sor.u32 256, 8
        %900 = vbcast.lane.b32.xlu0 %v894, %s899
        %v901 = vpop.permute.xlu0 %900
        %v902 = vlaneseq
        %v903 = vshrl.u32 %v902, 7
        %v904 = vsub.s32 2, %v903
        %v905 = vrot.slane %v789, %v904
        %907 = vbcast.lane.b32.xlu0 %v905, 256
        %v908 = vpop.permute.xlu0 %907
        %s910 = sor.u32 256, 8
        %911 = vbcast.lane.b32.xlu0 %v905, %s910
        %v912 = vpop.permute.xlu0 %911
        %v913 = vlaneseq
        %v914 = vshrl.u32 %v913, 7
        %v915 = vsub.s32 3, %v914
        %v916 = vrot.slane %v789, %v915
        %918 = vbcast.lane.b32.xlu0 %v916, 256
        %v919 = vpop.permute.xlu0 %918
        %s921 = sor.u32 256, 8
        %922 = vbcast.lane.b32.xlu0 %v916, %s921
        %v923 = vpop.permute.xlu0 %922
        %v924 = vlaneseq
        %v925 = vshrl.u32 %v924, 7
        %v926 = vsub.s32 4, %v925
        %v927 = vrot.slane %v789, %v926
        %929 = vbcast.lane.b32.xlu0 %v927, 256
        %v930 = vpop.permute.xlu0 %929
        %s932 = sor.u32 256, 8
        %933 = vbcast.lane.b32.xlu0 %v927, %s932
        %v934 = vpop.permute.xlu0 %933
        %v935 = vlaneseq
        %v936 = vshrl.u32 %v935, 7
        %v937 = vsub.s32 5, %v936
        %v938 = vrot.slane %v789, %v937
        %940 = vbcast.lane.b32.xlu0 %v938, 256
        %v941 = vpop.permute.xlu0 %940
        %s943 = sor.u32 256, 8
        %944 = vbcast.lane.b32.xlu0 %v938, %s943
        %v945 = vpop.permute.xlu0 %944
        %v946 = vlaneseq
        %v947 = vshrl.u32 %v946, 7
        %v948 = vsub.s32 6, %v947
        %v949 = vrot.slane %v789, %v948
        %951 = vbcast.lane.b32.xlu0 %v949, 256
        %v952 = vpop.permute.xlu0 %951
        %s954 = sor.u32 256, 8
        %955 = vbcast.lane.b32.xlu0 %v949, %s954
        %v956 = vpop.permute.xlu0 %955
        %v957 = vlaneseq
        %v958 = vshrl.u32 %v957, 7
        %v959 = vsub.s32 7, %v958
        %v960 = vrot.slane %v789, %v959
        %962 = vbcast.lane.b32.xlu0 %v960, 256
        %v963 = vpop.permute.xlu0 %962
        %s965 = sor.u32 256, 8
        %966 = vbcast.lane.b32.xlu0 %v960, %s965
        %v967 = vpop.permute.xlu0 %966
        %v968 = vlaneseq
        %v969 = vshrl.u32 %v968, 7
        %v970 = vsub.s32 0, %v969
        %v971 = vrot.slane %v790, %v970
        %973 = vbcast.lane.b32.xlu0 %v971, 256
        %v974 = vpop.permute.xlu0 %973
        %s976 = sor.u32 256, 8
        %977 = vbcast.lane.b32.xlu0 %v971, %s976
        %v978 = vpop.permute.xlu0 %977
        %v979 = vlaneseq
        %v980 = vshrl.u32 %v979, 7
        %v981 = vsub.s32 1, %v980
        %v982 = vrot.slane %v790, %v981
        %984 = vbcast.lane.b32.xlu0 %v982, 256
        %v985 = vpop.permute.xlu0 %984
        %s987 = sor.u32 256, 8
        %988 = vbcast.lane.b32.xlu0 %v982, %s987
        %v989 = vpop.permute.xlu0 %988
        %v990 = vlaneseq
        %v991 = vshrl.u32 %v990, 7
        %v992 = vsub.s32 2, %v991
        %v993 = vrot.slane %v790, %v992
        %995 = vbcast.lane.b32.xlu0 %v993, 256
        %v996 = vpop.permute.xlu0 %995
        %s998 = sor.u32 256, 8
        %999 = vbcast.lane.b32.xlu0 %v993, %s998
        %v1000 = vpop.permute.xlu0 %999
        %v1001 = vlaneseq
        %v1002 = vshrl.u32 %v1001, 7
        %v1003 = vsub.s32 3, %v1002
        %v1004 = vrot.slane %v790, %v1003
        %1006 = vbcast.lane.b32.xlu0 %v1004, 256
        %v1007 = vpop.permute.xlu0 %1006
        %s1009 = sor.u32 256, 8
        %1010 = vbcast.lane.b32.xlu0 %v1004, %s1009
        %v1011 = vpop.permute.xlu0 %1010
        %v1012 = vlaneseq
        %v1013 = vshrl.u32 %v1012, 7
        %v1014 = vsub.s32 4, %v1013
        %v1015 = vrot.slane %v790, %v1014
        %1017 = vbcast.lane.b32.xlu0 %v1015, 256
        %v1018 = vpop.permute.xlu0 %1017
        %s1020 = sor.u32 256, 8
        %1021 = vbcast.lane.b32.xlu0 %v1015, %s1020
        %v1022 = vpop.permute.xlu0 %1021
        %v1023 = vlaneseq
        %v1024 = vshrl.u32 %v1023, 7
        %v1025 = vsub.s32 5, %v1024
        %v1026 = vrot.slane %v790, %v1025
        %1028 = vbcast.lane.b32.xlu0 %v1026, 256
        %v1029 = vpop.permute.xlu0 %1028
        %s1031 = sor.u32 256, 8
        %1032 = vbcast.lane.b32.xlu0 %v1026, %s1031
        %v1033 = vpop.permute.xlu0 %1032
        %v1034 = vlaneseq
        %v1035 = vshrl.u32 %v1034, 7
        %v1036 = vsub.s32 6, %v1035
        %v1037 = vrot.slane %v790, %v1036
        %1039 = vbcast.lane.b32.xlu0 %v1037, 256
        %v1040 = vpop.permute.xlu0 %1039
        %s1042 = sor.u32 256, 8
        %1043 = vbcast.lane.b32.xlu0 %v1037, %s1042
        %v1044 = vpop.permute.xlu0 %1043
        %v1045 = vlaneseq
        %v1046 = vshrl.u32 %v1045, 7
        %v1047 = vsub.s32 7, %v1046
        %v1048 = vrot.slane %v790, %v1047
        %1050 = vbcast.lane.b32.xlu0 %v1048, 256
        %v1051 = vpop.permute.xlu0 %1050
        %s1053 = sor.u32 256, 8
        %1054 = vbcast.lane.b32.xlu0 %v1048, %s1053
        %v1055 = vpop.permute.xlu0 %1054
        %v1056 = vlaneseq
        %v1057 = vshrl.u32 %v1056, 7
        %v1058 = vsub.s32 0, %v1057
        %v1059 = vrot.slane %v791, %v1058
        %1061 = vbcast.lane.b32.xlu0 %v1059, 256
        %v1062 = vpop.permute.xlu0 %1061
        %s1064 = sor.u32 256, 8
        %1065 = vbcast.lane.b32.xlu0 %v1059, %s1064
        %v1066 = vpop.permute.xlu0 %1065
        %v1067 = vlaneseq
        %v1068 = vshrl.u32 %v1067, 7
        %v1069 = vsub.s32 1, %v1068
        %v1070 = vrot.slane %v791, %v1069
        %1072 = vbcast.lane.b32.xlu0 %v1070, 256
        %v1073 = vpop.permute.xlu0 %1072
        %s1075 = sor.u32 256, 8
        %1076 = vbcast.lane.b32.xlu0 %v1070, %s1075
        %v1077 = vpop.permute.xlu0 %1076
        %v1078 = vlaneseq
        %v1079 = vshrl.u32 %v1078, 7
        %v1080 = vsub.s32 2, %v1079
        %v1081 = vrot.slane %v791, %v1080
        %1083 = vbcast.lane.b32.xlu0 %v1081, 256
        %v1084 = vpop.permute.xlu0 %1083
        %s1086 = sor.u32 256, 8
        %1087 = vbcast.lane.b32.xlu0 %v1081, %s1086
        %v1088 = vpop.permute.xlu0 %1087
        %v1089 = vlaneseq
        %v1090 = vshrl.u32 %v1089, 7
        %v1091 = vsub.s32 3, %v1090
        %v1092 = vrot.slane %v791, %v1091
        %1094 = vbcast.lane.b32.xlu0 %v1092, 256
        %v1095 = vpop.permute.xlu0 %1094
        %s1097 = sor.u32 256, 8
        %1098 = vbcast.lane.b32.xlu0 %v1092, %s1097
        %v1099 = vpop.permute.xlu0 %1098
        %v1100 = vlaneseq
        %v1101 = vshrl.u32 %v1100, 7
        %v1102 = vsub.s32 4, %v1101
        %v1103 = vrot.slane %v791, %v1102
        %1105 = vbcast.lane.b32.xlu0 %v1103, 256
        %v1106 = vpop.permute.xlu0 %1105
        %s1108 = sor.u32 256, 8
        %1109 = vbcast.lane.b32.xlu0 %v1103, %s1108
        %v1110 = vpop.permute.xlu0 %1109
        %v1111 = vlaneseq
        %v1112 = vshrl.u32 %v1111, 7
        %v1113 = vsub.s32 5, %v1112
        %v1114 = vrot.slane %v791, %v1113
        %1116 = vbcast.lane.b32.xlu0 %v1114, 256
        %v1117 = vpop.permute.xlu0 %1116
        %s1119 = sor.u32 256, 8
        %1120 = vbcast.lane.b32.xlu0 %v1114, %s1119
        %v1121 = vpop.permute.xlu0 %1120
        %v1122 = vlaneseq
        %v1123 = vshrl.u32 %v1122, 7
        %v1124 = vsub.s32 6, %v1123
        %v1125 = vrot.slane %v791, %v1124
        %1127 = vbcast.lane.b32.xlu0 %v1125, 256
        %v1128 = vpop.permute.xlu0 %1127
        %s1130 = sor.u32 256, 8
        %1131 = vbcast.lane.b32.xlu0 %v1125, %s1130
        %v1132 = vpop.permute.xlu0 %1131
        %v1133 = vlaneseq
        %v1134 = vshrl.u32 %v1133, 7
        %v1135 = vsub.s32 7, %v1134
        %v1136 = vrot.slane %v791, %v1135
        %1138 = vbcast.lane.b32.xlu0 %v1136, 256
        %v1139 = vpop.permute.xlu0 %1138
        %s1141 = sor.u32 256, 8
        %1142 = vbcast.lane.b32.xlu0 %v1136, %s1141
        %v1143 = vpop.permute.xlu0 %1142
        %s1144 = scalar_lea.vmem %s390, 64 [#allocation3]
        %v1145 = vld [vmem:[%s1144] sm:$0xff]
        %v1146 = vld [vmem:[%s1144 + $0x8] sm:$0xff]
        %v1147 = vld [vmem:[%s1144 + $0x10] sm:$0xff]
        %v1148 = vld [vmem:[%s1144 + $0x18] sm:$0xff]
        %v1149 = vlaneseq
        %v1150 = vshrl.u32 %v1149, 7
        %v1151 = vsub.s32 0, %v1150
        %v1152 = vrot.slane %v1145, %v1151
        %1154 = vbcast.lane.b32.xlu0 %v1152, 256
        %v1155 = vpop.permute.xlu0 %1154
        %s1157 = sor.u32 256, 8
        %1158 = vbcast.lane.b32.xlu0 %v1152, %s1157
        %v1159 = vpop.permute.xlu0 %1158
        %v1160 = vlaneseq
        %v1161 = vshrl.u32 %v1160, 7
        %v1162 = vsub.s32 1, %v1161
        %v1163 = vrot.slane %v1145, %v1162
        %1165 = vbcast.lane.b32.xlu0 %v1163, 256
        %v1166 = vpop.permute.xlu0 %1165
        %s1168 = sor.u32 256, 8
        %1169 = vbcast.lane.b32.xlu0 %v1163, %s1168
        %v1170 = vpop.permute.xlu0 %1169
        %v1171 = vlaneseq
        %v1172 = vshrl.u32 %v1171, 7
        %v1173 = vsub.s32 2, %v1172
        %v1174 = vrot.slane %v1145, %v1173
        %1176 = vbcast.lane.b32.xlu0 %v1174, 256
        %v1177 = vpop.permute.xlu0 %1176
        %s1179 = sor.u32 256, 8
        %1180 = vbcast.lane.b32.xlu0 %v1174, %s1179
        %v1181 = vpop.permute.xlu0 %1180
        %v1182 = vlaneseq
        %v1183 = vshrl.u32 %v1182, 7
        %v1184 = vsub.s32 3, %v1183
        %v1185 = vrot.slane %v1145, %v1184
        %1187 = vbcast.lane.b32.xlu0 %v1185, 256
        %v1188 = vpop.permute.xlu0 %1187
        %s1190 = sor.u32 256, 8
        %1191 = vbcast.lane.b32.xlu0 %v1185, %s1190
        %v1192 = vpop.permute.xlu0 %1191
        %v1193 = vlaneseq
        %v1194 = vshrl.u32 %v1193, 7
        %v1195 = vsub.s32 4, %v1194
        %v1196 = vrot.slane %v1145, %v1195
        %1198 = vbcast.lane.b32.xlu0 %v1196, 256
        %v1199 = vpop.permute.xlu0 %1198
        %s1201 = sor.u32 256, 8
        %1202 = vbcast.lane.b32.xlu0 %v1196, %s1201
        %v1203 = vpop.permute.xlu0 %1202
        %v1204 = vlaneseq
        %v1205 = vshrl.u32 %v1204, 7
        %v1206 = vsub.s32 5, %v1205
        %v1207 = vrot.slane %v1145, %v1206
        %1209 = vbcast.lane.b32.xlu0 %v1207, 256
        %v1210 = vpop.permute.xlu0 %1209
        %s1212 = sor.u32 256, 8
        %1213 = vbcast.lane.b32.xlu0 %v1207, %s1212
        %v1214 = vpop.permute.xlu0 %1213
        %v1215 = vlaneseq
        %v1216 = vshrl.u32 %v1215, 7
        %v1217 = vsub.s32 6, %v1216
        %v1218 = vrot.slane %v1145, %v1217
        %1220 = vbcast.lane.b32.xlu0 %v1218, 256
        %v1221 = vpop.permute.xlu0 %1220
        %s1223 = sor.u32 256, 8
        %1224 = vbcast.lane.b32.xlu0 %v1218, %s1223
        %v1225 = vpop.permute.xlu0 %1224
        %v1226 = vlaneseq
        %v1227 = vshrl.u32 %v1226, 7
        %v1228 = vsub.s32 7, %v1227
        %v1229 = vrot.slane %v1145, %v1228
        %1231 = vbcast.lane.b32.xlu0 %v1229, 256
        %v1232 = vpop.permute.xlu0 %1231
        %s1234 = sor.u32 256, 8
        %1235 = vbcast.lane.b32.xlu0 %v1229, %s1234
        %v1236 = vpop.permute.xlu0 %1235
        %v1237 = vlaneseq
        %v1238 = vshrl.u32 %v1237, 7
        %v1239 = vsub.s32 0, %v1238
        %v1240 = vrot.slane %v1146, %v1239
        %1242 = vbcast.lane.b32.xlu0 %v1240, 256
        %v1243 = vpop.permute.xlu0 %1242
        %s1245 = sor.u32 256, 8
        %1246 = vbcast.lane.b32.xlu0 %v1240, %s1245
        %v1247 = vpop.permute.xlu0 %1246
        %v1248 = vlaneseq
        %v1249 = vshrl.u32 %v1248, 7
        %v1250 = vsub.s32 1, %v1249
        %v1251 = vrot.slane %v1146, %v1250
        %1253 = vbcast.lane.b32.xlu0 %v1251, 256
        %v1254 = vpop.permute.xlu0 %1253
        %s1256 = sor.u32 256, 8
        %1257 = vbcast.lane.b32.xlu0 %v1251, %s1256
        %v1258 = vpop.permute.xlu0 %1257
        %v1259 = vlaneseq
        %v1260 = vshrl.u32 %v1259, 7
        %v1261 = vsub.s32 2, %v1260
        %v1262 = vrot.slane %v1146, %v1261
        %1264 = vbcast.lane.b32.xlu0 %v1262, 256
        %v1265 = vpop.permute.xlu0 %1264
        %s1267 = sor.u32 256, 8
        %1268 = vbcast.lane.b32.xlu0 %v1262, %s1267
        %v1269 = vpop.permute.xlu0 %1268
        %v1270 = vlaneseq
        %v1271 = vshrl.u32 %v1270, 7
        %v1272 = vsub.s32 3, %v1271
        %v1273 = vrot.slane %v1146, %v1272
        %1275 = vbcast.lane.b32.xlu0 %v1273, 256
        %v1276 = vpop.permute.xlu0 %1275
        %s1278 = sor.u32 256, 8
        %1279 = vbcast.lane.b32.xlu0 %v1273, %s1278
        %v1280 = vpop.permute.xlu0 %1279
        %v1281 = vlaneseq
        %v1282 = vshrl.u32 %v1281, 7
        %v1283 = vsub.s32 4, %v1282
        %v1284 = vrot.slane %v1146, %v1283
        %1286 = vbcast.lane.b32.xlu0 %v1284, 256
        %v1287 = vpop.permute.xlu0 %1286
        %s1289 = sor.u32 256, 8
        %1290 = vbcast.lane.b32.xlu0 %v1284, %s1289
        %v1291 = vpop.permute.xlu0 %1290
        %v1292 = vlaneseq
        %v1293 = vshrl.u32 %v1292, 7
        %v1294 = vsub.s32 5, %v1293
        %v1295 = vrot.slane %v1146, %v1294
        %1297 = vbcast.lane.b32.xlu0 %v1295, 256
        %v1298 = vpop.permute.xlu0 %1297
        %s1300 = sor.u32 256, 8
        %1301 = vbcast.lane.b32.xlu0 %v1295, %s1300
        %v1302 = vpop.permute.xlu0 %1301
        %v1303 = vlaneseq
        %v1304 = vshrl.u32 %v1303, 7
        %v1305 = vsub.s32 6, %v1304
        %v1306 = vrot.slane %v1146, %v1305
        %1308 = vbcast.lane.b32.xlu0 %v1306, 256
        %v1309 = vpop.permute.xlu0 %1308
        %s1311 = sor.u32 256, 8
        %1312 = vbcast.lane.b32.xlu0 %v1306, %s1311
        %v1313 = vpop.permute.xlu0 %1312
        %v1314 = vlaneseq
        %v1315 = vshrl.u32 %v1314, 7
        %v1316 = vsub.s32 7, %v1315
        %v1317 = vrot.slane %v1146, %v1316
        %1319 = vbcast.lane.b32.xlu0 %v1317, 256
        %v1320 = vpop.permute.xlu0 %1319
        %s1322 = sor.u32 256, 8
        %1323 = vbcast.lane.b32.xlu0 %v1317, %s1322
        %v1324 = vpop.permute.xlu0 %1323
        %v1325 = vlaneseq
        %v1326 = vshrl.u32 %v1325, 7
        %v1327 = vsub.s32 0, %v1326
        %v1328 = vrot.slane %v1147, %v1327
        %1330 = vbcast.lane.b32.xlu0 %v1328, 256
        %v1331 = vpop.permute.xlu0 %1330
        %s1333 = sor.u32 256, 8
        %1334 = vbcast.lane.b32.xlu0 %v1328, %s1333
        %v1335 = vpop.permute.xlu0 %1334
        %v1336 = vlaneseq
        %v1337 = vshrl.u32 %v1336, 7
        %v1338 = vsub.s32 1, %v1337
        %v1339 = vrot.slane %v1147, %v1338
        %1341 = vbcast.lane.b32.xlu0 %v1339, 256
        %v1342 = vpop.permute.xlu0 %1341
        %s1344 = sor.u32 256, 8
        %1345 = vbcast.lane.b32.xlu0 %v1339, %s1344
        %v1346 = vpop.permute.xlu0 %1345
        %v1347 = vlaneseq
        %v1348 = vshrl.u32 %v1347, 7
        %v1349 = vsub.s32 2, %v1348
        %v1350 = vrot.slane %v1147, %v1349
        %1352 = vbcast.lane.b32.xlu0 %v1350, 256
        %v1353 = vpop.permute.xlu0 %1352
        %s1355 = sor.u32 256, 8
        %1356 = vbcast.lane.b32.xlu0 %v1350, %s1355
        %v1357 = vpop.permute.xlu0 %1356
        %v1358 = vlaneseq
        %v1359 = vshrl.u32 %v1358, 7
        %v1360 = vsub.s32 3, %v1359
        %v1361 = vrot.slane %v1147, %v1360
        %1363 = vbcast.lane.b32.xlu0 %v1361, 256
        %v1364 = vpop.permute.xlu0 %1363
        %s1366 = sor.u32 256, 8
        %1367 = vbcast.lane.b32.xlu0 %v1361, %s1366
        %v1368 = vpop.permute.xlu0 %1367
        %v1369 = vlaneseq
        %v1370 = vshrl.u32 %v1369, 7
        %v1371 = vsub.s32 4, %v1370
        %v1372 = vrot.slane %v1147, %v1371
        %1374 = vbcast.lane.b32.xlu0 %v1372, 256
        %v1375 = vpop.permute.xlu0 %1374
        %s1377 = sor.u32 256, 8
        %1378 = vbcast.lane.b32.xlu0 %v1372, %s1377
        %v1379 = vpop.permute.xlu0 %1378
        %v1380 = vlaneseq
        %v1381 = vshrl.u32 %v1380, 7
        %v1382 = vsub.s32 5, %v1381
        %v1383 = vrot.slane %v1147, %v1382
        %1385 = vbcast.lane.b32.xlu0 %v1383, 256
        %v1386 = vpop.permute.xlu0 %1385
        %s1388 = sor.u32 256, 8
        %1389 = vbcast.lane.b32.xlu0 %v1383, %s1388
        %v1390 = vpop.permute.xlu0 %1389
        %v1391 = vlaneseq
        %v1392 = vshrl.u32 %v1391, 7
        %v1393 = vsub.s32 6, %v1392
        %v1394 = vrot.slane %v1147, %v1393
        %1396 = vbcast.lane.b32.xlu0 %v1394, 256
        %v1397 = vpop.permute.xlu0 %1396
        %s1399 = sor.u32 256, 8
        %1400 = vbcast.lane.b32.xlu0 %v1394, %s1399
        %v1401 = vpop.permute.xlu0 %1400
        %v1402 = vlaneseq
        %v1403 = vshrl.u32 %v1402, 7
        %v1404 = vsub.s32 7, %v1403
        %v1405 = vrot.slane %v1147, %v1404
        %1407 = vbcast.lane.b32.xlu0 %v1405, 256
        %v1408 = vpop.permute.xlu0 %1407
        %s1410 = sor.u32 256, 8
        %1411 = vbcast.lane.b32.xlu0 %v1405, %s1410
        %v1412 = vpop.permute.xlu0 %1411
        %v1413 = vlaneseq
        %v1414 = vshrl.u32 %v1413, 7
        %v1415 = vsub.s32 0, %v1414
        %v1416 = vrot.slane %v1148, %v1415
        %1418 = vbcast.lane.b32.xlu0 %v1416, 256
        %v1419 = vpop.permute.xlu0 %1418
        %s1421 = sor.u32 256, 8
        %1422 = vbcast.lane.b32.xlu0 %v1416, %s1421
        %v1423 = vpop.permute.xlu0 %1422
        %v1424 = vlaneseq
        %v1425 = vshrl.u32 %v1424, 7
        %v1426 = vsub.s32 1, %v1425
        %v1427 = vrot.slane %v1148, %v1426
        %1429 = vbcast.lane.b32.xlu0 %v1427, 256
        %v1430 = vpop.permute.xlu0 %1429
        %s1432 = sor.u32 256, 8
        %1433 = vbcast.lane.b32.xlu0 %v1427, %s1432
        %v1434 = vpop.permute.xlu0 %1433
        %v1435 = vlaneseq
        %v1436 = vshrl.u32 %v1435, 7
        %v1437 = vsub.s32 2, %v1436
        %v1438 = vrot.slane %v1148, %v1437
        %1440 = vbcast.lane.b32.xlu0 %v1438, 256
        %v1441 = vpop.permute.xlu0 %1440
        %s1443 = sor.u32 256, 8
        %1444 = vbcast.lane.b32.xlu0 %v1438, %s1443
        %v1445 = vpop.permute.xlu0 %1444
        %v1446 = vlaneseq
        %v1447 = vshrl.u32 %v1446, 7
        %v1448 = vsub.s32 3, %v1447
        %v1449 = vrot.slane %v1148, %v1448
        %1451 = vbcast.lane.b32.xlu0 %v1449, 256
        %v1452 = vpop.permute.xlu0 %1451
        %s1454 = sor.u32 256, 8
        %1455 = vbcast.lane.b32.xlu0 %v1449, %s1454
        %v1456 = vpop.permute.xlu0 %1455
        %v1457 = vlaneseq
        %v1458 = vshrl.u32 %v1457, 7
        %v1459 = vsub.s32 4, %v1458
        %v1460 = vrot.slane %v1148, %v1459
        %1462 = vbcast.lane.b32.xlu0 %v1460, 256
        %v1463 = vpop.permute.xlu0 %1462
        %s1465 = sor.u32 256, 8
        %1466 = vbcast.lane.b32.xlu0 %v1460, %s1465
        %v1467 = vpop.permute.xlu0 %1466
        %v1468 = vlaneseq
        %v1469 = vshrl.u32 %v1468, 7
        %v1470 = vsub.s32 5, %v1469
        %v1471 = vrot.slane %v1148, %v1470
        %1473 = vbcast.lane.b32.xlu0 %v1471, 256
        %v1474 = vpop.permute.xlu0 %1473
        %s1476 = sor.u32 256, 8
        %1477 = vbcast.lane.b32.xlu0 %v1471, %s1476
        %v1478 = vpop.permute.xlu0 %1477
        %v1479 = vlaneseq
        %v1480 = vshrl.u32 %v1479, 7
        %v1481 = vsub.s32 6, %v1480
        %v1482 = vrot.slane %v1148, %v1481
        %1484 = vbcast.lane.b32.xlu0 %v1482, 256
        %v1485 = vpop.permute.xlu0 %1484
        %s1487 = sor.u32 256, 8
        %1488 = vbcast.lane.b32.xlu0 %v1482, %s1487
        %v1489 = vpop.permute.xlu0 %1488
        %v1490 = vlaneseq
        %v1491 = vshrl.u32 %v1490, 7
        %v1492 = vsub.s32 7, %v1491
        %v1493 = vrot.slane %v1148, %v1492
        %1495 = vbcast.lane.b32.xlu0 %v1493, 256
        %v1496 = vpop.permute.xlu0 %1495
        %s1498 = sor.u32 256, 8
        %1499 = vbcast.lane.b32.xlu0 %v1493, %s1498
        %v1500 = vpop.permute.xlu0 %1499
        %s1501 = scalar_lea.vmem %s390, 96 [#allocation3]
        %v1502 = vld [vmem:[%s1501] sm:$0xff]
        %v1503 = vld [vmem:[%s1501 + $0x8] sm:$0xff]
        %v1504 = vld [vmem:[%s1501 + $0x10] sm:$0xff]
        %v1505 = vld [vmem:[%s1501 + $0x18] sm:$0xff]
        %v1506 = vlaneseq
        %v1507 = vshrl.u32 %v1506, 7
        %v1508 = vsub.s32 0, %v1507
        %v1509 = vrot.slane %v1502, %v1508
        %1511 = vbcast.lane.b32.xlu0 %v1509, 256
        %v1512 = vpop.permute.xlu0 %1511
        %s1514 = sor.u32 256, 8
        %1515 = vbcast.lane.b32.xlu0 %v1509, %s1514
        %v1516 = vpop.permute.xlu0 %1515
        %v1517 = vlaneseq
        %v1518 = vshrl.u32 %v1517, 7
        %v1519 = vsub.s32 1, %v1518
        %v1520 = vrot.slane %v1502, %v1519
        %1522 = vbcast.lane.b32.xlu0 %v1520, 256
        %v1523 = vpop.permute.xlu0 %1522
        %s1525 = sor.u32 256, 8
        %1526 = vbcast.lane.b32.xlu0 %v1520, %s1525
        %v1527 = vpop.permute.xlu0 %1526
        %v1528 = vlaneseq
        %v1529 = vshrl.u32 %v1528, 7
        %v1530 = vsub.s32 2, %v1529
        %v1531 = vrot.slane %v1502, %v1530
        %1533 = vbcast.lane.b32.xlu0 %v1531, 256
        %v1534 = vpop.permute.xlu0 %1533
        %s1536 = sor.u32 256, 8
        %1537 = vbcast.lane.b32.xlu0 %v1531, %s1536
        %v1538 = vpop.permute.xlu0 %1537
        %v1539 = vlaneseq
        %v1540 = vshrl.u32 %v1539, 7
        %v1541 = vsub.s32 3, %v1540
        %v1542 = vrot.slane %v1502, %v1541
        %1544 = vbcast.lane.b32.xlu0 %v1542, 256
        %v1545 = vpop.permute.xlu0 %1544
        %s1547 = sor.u32 256, 8
        %1548 = vbcast.lane.b32.xlu0 %v1542, %s1547
        %v1549 = vpop.permute.xlu0 %1548
        %v1550 = vlaneseq
        %v1551 = vshrl.u32 %v1550, 7
        %v1552 = vsub.s32 4, %v1551
        %v1553 = vrot.slane %v1502, %v1552
        %1555 = vbcast.lane.b32.xlu0 %v1553, 256
        %v1556 = vpop.permute.xlu0 %1555
        %s1558 = sor.u32 256, 8
        %1559 = vbcast.lane.b32.xlu0 %v1553, %s1558
        %v1560 = vpop.permute.xlu0 %1559
        %v1561 = vlaneseq
        %v1562 = vshrl.u32 %v1561, 7
        %v1563 = vsub.s32 5, %v1562
        %v1564 = vrot.slane %v1502, %v1563
        %1566 = vbcast.lane.b32.xlu0 %v1564, 256
        %v1567 = vpop.permute.xlu0 %1566
        %s1569 = sor.u32 256, 8
        %1570 = vbcast.lane.b32.xlu0 %v1564, %s1569
        %v1571 = vpop.permute.xlu0 %1570
        %v1572 = vlaneseq
        %v1573 = vshrl.u32 %v1572, 7
        %v1574 = vsub.s32 6, %v1573
        %v1575 = vrot.slane %v1502, %v1574
        %1577 = vbcast.lane.b32.xlu0 %v1575, 256
        %v1578 = vpop.permute.xlu0 %1577
        %s1580 = sor.u32 256, 8
        %1581 = vbcast.lane.b32.xlu0 %v1575, %s1580
        %v1582 = vpop.permute.xlu0 %1581
        %v1583 = vlaneseq
        %v1584 = vshrl.u32 %v1583, 7
        %v1585 = vsub.s32 7, %v1584
        %v1586 = vrot.slane %v1502, %v1585
        %1588 = vbcast.lane.b32.xlu0 %v1586, 256
        %v1589 = vpop.permute.xlu0 %1588
        %s1591 = sor.u32 256, 8
        %1592 = vbcast.lane.b32.xlu0 %v1586, %s1591
        %v1593 = vpop.permute.xlu0 %1592
        %v1594 = vlaneseq
        %v1595 = vshrl.u32 %v1594, 7
        %v1596 = vsub.s32 0, %v1595
        %v1597 = vrot.slane %v1503, %v1596
        %1599 = vbcast.lane.b32.xlu0 %v1597, 256
        %v1600 = vpop.permute.xlu0 %1599
        %s1602 = sor.u32 256, 8
        %1603 = vbcast.lane.b32.xlu0 %v1597, %s1602
        %v1604 = vpop.permute.xlu0 %1603
        %v1605 = vlaneseq
        %v1606 = vshrl.u32 %v1605, 7
        %v1607 = vsub.s32 1, %v1606
        %v1608 = vrot.slane %v1503, %v1607
        %1610 = vbcast.lane.b32.xlu0 %v1608, 256
        %v1611 = vpop.permute.xlu0 %1610
        %s1613 = sor.u32 256, 8
        %1614 = vbcast.lane.b32.xlu0 %v1608, %s1613
        %v1615 = vpop.permute.xlu0 %1614
        %v1616 = vlaneseq
        %v1617 = vshrl.u32 %v1616, 7
        %v1618 = vsub.s32 2, %v1617
        %v1619 = vrot.slane %v1503, %v1618
        %1621 = vbcast.lane.b32.xlu0 %v1619, 256
        %v1622 = vpop.permute.xlu0 %1621
        %s1624 = sor.u32 256, 8
        %1625 = vbcast.lane.b32.xlu0 %v1619, %s1624
        %v1626 = vpop.permute.xlu0 %1625
        %v1627 = vlaneseq
        %v1628 = vshrl.u32 %v1627, 7
        %v1629 = vsub.s32 3, %v1628
        %v1630 = vrot.slane %v1503, %v1629
        %1632 = vbcast.lane.b32.xlu0 %v1630, 256
        %v1633 = vpop.permute.xlu0 %1632
        %s1635 = sor.u32 256, 8
        %1636 = vbcast.lane.b32.xlu0 %v1630, %s1635
        %v1637 = vpop.permute.xlu0 %1636
        %v1638 = vlaneseq
        %v1639 = vshrl.u32 %v1638, 7
        %v1640 = vsub.s32 4, %v1639
        %v1641 = vrot.slane %v1503, %v1640
        %1643 = vbcast.lane.b32.xlu0 %v1641, 256
        %v1644 = vpop.permute.xlu0 %1643
        %s1646 = sor.u32 256, 8
        %1647 = vbcast.lane.b32.xlu0 %v1641, %s1646
        %v1648 = vpop.permute.xlu0 %1647
        %v1649 = vlaneseq
        %v1650 = vshrl.u32 %v1649, 7
        %v1651 = vsub.s32 5, %v1650
        %v1652 = vrot.slane %v1503, %v1651
        %1654 = vbcast.lane.b32.xlu0 %v1652, 256
        %v1655 = vpop.permute.xlu0 %1654
        %s1657 = sor.u32 256, 8
        %1658 = vbcast.lane.b32.xlu0 %v1652, %s1657
        %v1659 = vpop.permute.xlu0 %1658
        %v1660 = vlaneseq
        %v1661 = vshrl.u32 %v1660, 7
        %v1662 = vsub.s32 6, %v1661
        %v1663 = vrot.slane %v1503, %v1662
        %1665 = vbcast.lane.b32.xlu0 %v1663, 256
        %v1666 = vpop.permute.xlu0 %1665
        %s1668 = sor.u32 256, 8
        %1669 = vbcast.lane.b32.xlu0 %v1663, %s1668
        %v1670 = vpop.permute.xlu0 %1669
        %v1671 = vlaneseq
        %v1672 = vshrl.u32 %v1671, 7
        %v1673 = vsub.s32 7, %v1672
        %v1674 = vrot.slane %v1503, %v1673
        %1676 = vbcast.lane.b32.xlu0 %v1674, 256
        %v1677 = vpop.permute.xlu0 %1676
        %s1679 = sor.u32 256, 8
        %1680 = vbcast.lane.b32.xlu0 %v1674, %s1679
        %v1681 = vpop.permute.xlu0 %1680
        %v1682 = vlaneseq
        %v1683 = vshrl.u32 %v1682, 7
        %v1684 = vsub.s32 0, %v1683
        %v1685 = vrot.slane %v1504, %v1684
        %1687 = vbcast.lane.b32.xlu0 %v1685, 256
        %v1688 = vpop.permute.xlu0 %1687
        %s1690 = sor.u32 256, 8
        %1691 = vbcast.lane.b32.xlu0 %v1685, %s1690
        %v1692 = vpop.permute.xlu0 %1691
        %v1693 = vlaneseq
        %v1694 = vshrl.u32 %v1693, 7
        %v1695 = vsub.s32 1, %v1694
        %v1696 = vrot.slane %v1504, %v1695
        %1698 = vbcast.lane.b32.xlu0 %v1696, 256
        %v1699 = vpop.permute.xlu0 %1698
        %s1701 = sor.u32 256, 8
        %1702 = vbcast.lane.b32.xlu0 %v1696, %s1701
        %v1703 = vpop.permute.xlu0 %1702
        %v1704 = vlaneseq
        %v1705 = vshrl.u32 %v1704, 7
        %v1706 = vsub.s32 2, %v1705
        %v1707 = vrot.slane %v1504, %v1706
        %1709 = vbcast.lane.b32.xlu0 %v1707, 256
        %v1710 = vpop.permute.xlu0 %1709
        %s1712 = sor.u32 256, 8
        %1713 = vbcast.lane.b32.xlu0 %v1707, %s1712
        %v1714 = vpop.permute.xlu0 %1713
        %v1715 = vlaneseq
        %v1716 = vshrl.u32 %v1715, 7
        %v1717 = vsub.s32 3, %v1716
        %v1718 = vrot.slane %v1504, %v1717
        %1720 = vbcast.lane.b32.xlu0 %v1718, 256
        %v1721 = vpop.permute.xlu0 %1720
        %s1723 = sor.u32 256, 8
        %1724 = vbcast.lane.b32.xlu0 %v1718, %s1723
        %v1725 = vpop.permute.xlu0 %1724
        %v1726 = vlaneseq
        %v1727 = vshrl.u32 %v1726, 7
        %v1728 = vsub.s32 4, %v1727
        %v1729 = vrot.slane %v1504, %v1728
        %1731 = vbcast.lane.b32.xlu0 %v1729, 256
        %v1732 = vpop.permute.xlu0 %1731
        %s1734 = sor.u32 256, 8
        %1735 = vbcast.lane.b32.xlu0 %v1729, %s1734
        %v1736 = vpop.permute.xlu0 %1735
        %v1737 = vlaneseq
        %v1738 = vshrl.u32 %v1737, 7
        %v1739 = vsub.s32 5, %v1738
        %v1740 = vrot.slane %v1504, %v1739
        %1742 = vbcast.lane.b32.xlu0 %v1740, 256
        %v1743 = vpop.permute.xlu0 %1742
        %s1745 = sor.u32 256, 8
        %1746 = vbcast.lane.b32.xlu0 %v1740, %s1745
        %v1747 = vpop.permute.xlu0 %1746
        %v1748 = vlaneseq
        %v1749 = vshrl.u32 %v1748, 7
        %v1750 = vsub.s32 6, %v1749
        %v1751 = vrot.slane %v1504, %v1750
        %1753 = vbcast.lane.b32.xlu0 %v1751, 256
        %v1754 = vpop.permute.xlu0 %1753
        %s1756 = sor.u32 256, 8
        %1757 = vbcast.lane.b32.xlu0 %v1751, %s1756
        %v1758 = vpop.permute.xlu0 %1757
        %v1759 = vlaneseq
        %v1760 = vshrl.u32 %v1759, 7
        %v1761 = vsub.s32 7, %v1760
        %v1762 = vrot.slane %v1504, %v1761
        %1764 = vbcast.lane.b32.xlu0 %v1762, 256
        %v1765 = vpop.permute.xlu0 %1764
        %s1767 = sor.u32 256, 8
        %1768 = vbcast.lane.b32.xlu0 %v1762, %s1767
        %v1769 = vpop.permute.xlu0 %1768
        %v1770 = vlaneseq
        %v1771 = vshrl.u32 %v1770, 7
        %v1772 = vsub.s32 0, %v1771
        %v1773 = vrot.slane %v1505, %v1772
        %1775 = vbcast.lane.b32.xlu0 %v1773, 256
        %v1776 = vpop.permute.xlu0 %1775
        %s1778 = sor.u32 256, 8
        %1779 = vbcast.lane.b32.xlu0 %v1773, %s1778
        %v1780 = vpop.permute.xlu0 %1779
        %v1781 = vlaneseq
        %v1782 = vshrl.u32 %v1781, 7
        %v1783 = vsub.s32 1, %v1782
        %v1784 = vrot.slane %v1505, %v1783
        %1786 = vbcast.lane.b32.xlu0 %v1784, 256
        %v1787 = vpop.permute.xlu0 %1786
        %s1789 = sor.u32 256, 8
        %1790 = vbcast.lane.b32.xlu0 %v1784, %s1789
        %v1791 = vpop.permute.xlu0 %1790
        %v1792 = vlaneseq
        %v1793 = vshrl.u32 %v1792, 7
        %v1794 = vsub.s32 2, %v1793
        %v1795 = vrot.slane %v1505, %v1794
        %1797 = vbcast.lane.b32.xlu0 %v1795, 256
        %v1798 = vpop.permute.xlu0 %1797
        %s1800 = sor.u32 256, 8
        %1801 = vbcast.lane.b32.xlu0 %v1795, %s1800
        %v1802 = vpop.permute.xlu0 %1801
        %v1803 = vlaneseq
        %v1804 = vshrl.u32 %v1803, 7
        %v1805 = vsub.s32 3, %v1804
        %v1806 = vrot.slane %v1505, %v1805
        %1808 = vbcast.lane.b32.xlu0 %v1806, 256
        %v1809 = vpop.permute.xlu0 %1808
        %s1811 = sor.u32 256, 8
        %1812 = vbcast.lane.b32.xlu0 %v1806, %s1811
        %v1813 = vpop.permute.xlu0 %1812
        %v1814 = vlaneseq
        %v1815 = vshrl.u32 %v1814, 7
        %v1816 = vsub.s32 4, %v1815
        %v1817 = vrot.slane %v1505, %v1816
        %1819 = vbcast.lane.b32.xlu0 %v1817, 256
        %v1820 = vpop.permute.xlu0 %1819
        %s1822 = sor.u32 256, 8
        %1823 = vbcast.lane.b32.xlu0 %v1817, %s1822
        %v1824 = vpop.permute.xlu0 %1823
        %v1825 = vlaneseq
        %v1826 = vshrl.u32 %v1825, 7
        %v1827 = vsub.s32 5, %v1826
        %v1828 = vrot.slane %v1505, %v1827
        %1830 = vbcast.lane.b32.xlu0 %v1828, 256
        %v1831 = vpop.permute.xlu0 %1830
        %s1833 = sor.u32 256, 8
        %1834 = vbcast.lane.b32.xlu0 %v1828, %s1833
        %v1835 = vpop.permute.xlu0 %1834
        %v1836 = vlaneseq
        %v1837 = vshrl.u32 %v1836, 7
        %v1838 = vsub.s32 6, %v1837
        %v1839 = vrot.slane %v1505, %v1838
        %1841 = vbcast.lane.b32.xlu0 %v1839, 256
        %v1842 = vpop.permute.xlu0 %1841
        %s1844 = sor.u32 256, 8
        %1845 = vbcast.lane.b32.xlu0 %v1839, %s1844
        %v1846 = vpop.permute.xlu0 %1845
        %v1847 = vlaneseq
        %v1848 = vshrl.u32 %v1847, 7
        %v1849 = vsub.s32 7, %v1848
        %v1850 = vrot.slane %v1505, %v1849
        %1852 = vbcast.lane.b32.xlu0 %v1850, 256
        %v1853 = vpop.permute.xlu0 %1852
        %s1855 = sor.u32 256, 8
        %1856 = vbcast.lane.b32.xlu0 %v1850, %s1855
        %v1857 = vpop.permute.xlu0 %1856
        %vm1922 = vcmask 1040384
        %v1923 = vrot.slane %v1155, 7
        %v1924 = vrot.slane %v1159, 7
        %v1925 = vsel %vm1922, %v1923, %v1924
        %v1926 = vrot.slane %v1166, 7
        %v1927 = vrot.slane %v1170, 7
        %v1928 = vsel %vm1922, %v1926, %v1927
        %v1929 = vrot.slane %v1177, 7
        %v1930 = vrot.slane %v1181, 7
        %v1931 = vsel %vm1922, %v1929, %v1930
        %v1932 = vrot.slane %v1188, 7
        %v1933 = vrot.slane %v1192, 7
        %v1934 = vsel %vm1922, %v1932, %v1933
        %v1935 = vrot.slane %v1199, 7
        %v1936 = vrot.slane %v1203, 7
        %v1937 = vsel %vm1922, %v1935, %v1936
        %v1938 = vrot.slane %v1210, 7
        %v1939 = vrot.slane %v1214, 7
        %v1940 = vsel %vm1922, %v1938, %v1939
        %v1941 = vrot.slane %v1221, 7
        %v1942 = vrot.slane %v1225, 7
        %v1943 = vsel %vm1922, %v1941, %v1942
        %v1944 = vrot.slane %v1232, 7
        %v1945 = vrot.slane %v1236, 7
        %v1946 = vsel %vm1922, %v1944, %v1945
        %v1947 = vrot.slane %v1243, 7
        %v1948 = vrot.slane %v1247, 7
        %v1949 = vsel %vm1922, %v1947, %v1948
        %v1950 = vrot.slane %v1254, 7
        %v1951 = vrot.slane %v1258, 7
        %v1952 = vsel %vm1922, %v1950, %v1951
        %v1953 = vrot.slane %v1265, 7
        %v1954 = vrot.slane %v1269, 7
        %v1955 = vsel %vm1922, %v1953, %v1954
        %v1956 = vrot.slane %v1276, 7
        %v1957 = vrot.slane %v1280, 7
        %v1958 = vsel %vm1922, %v1956, %v1957
        %v1959 = vrot.slane %v1287, 7
        %v1960 = vrot.slane %v1291, 7
        %v1961 = vsel %vm1922, %v1959, %v1960
        %v1962 = vrot.slane %v1298, 7
        %v1963 = vrot.slane %v1302, 7
        %v1964 = vsel %vm1922, %v1962, %v1963
        %v1965 = vrot.slane %v1309, 7
        %v1966 = vrot.slane %v1313, 7
        %v1967 = vsel %vm1922, %v1965, %v1966
        %v1968 = vrot.slane %v1320, 7
        %v1969 = vrot.slane %v1324, 7
        %v1970 = vsel %vm1922, %v1968, %v1969
        %v1971 = vrot.slane %v1331, 7
        %v1972 = vrot.slane %v1335, 7
        %v1973 = vsel %vm1922, %v1971, %v1972
        %v1974 = vrot.slane %v1342, 7
        %v1975 = vrot.slane %v1346, 7
        %v1976 = vsel %vm1922, %v1974, %v1975
        %v1977 = vrot.slane %v1353, 7
        %v1978 = vrot.slane %v1357, 7
        %v1979 = vsel %vm1922, %v1977, %v1978
        %v1980 = vrot.slane %v1364, 7
        %v1981 = vrot.slane %v1368, 7
        %v1982 = vsel %vm1922, %v1980, %v1981
        %v1983 = vrot.slane %v1375, 7
        %v1984 = vrot.slane %v1379, 7
        %v1985 = vsel %vm1922, %v1983, %v1984
        %v1986 = vrot.slane %v1386, 7
        %v1987 = vrot.slane %v1390, 7
        %v1988 = vsel %vm1922, %v1986, %v1987
        %v1989 = vrot.slane %v1397, 7
        %v1990 = vrot.slane %v1401, 7
        %v1991 = vsel %vm1922, %v1989, %v1990
        %v1992 = vrot.slane %v1408, 7
        %v1993 = vrot.slane %v1412, 7
        %v1994 = vsel %vm1922, %v1992, %v1993
        %v1995 = vrot.slane %v1419, 7
        %v1996 = vrot.slane %v1423, 7
        %v1997 = vsel %vm1922, %v1995, %v1996
        %v1998 = vrot.slane %v1430, 7
        %v1999 = vrot.slane %v1434, 7
        %v2000 = vsel %vm1922, %v1998, %v1999
        %v2001 = vrot.slane %v1441, 7
        %v2002 = vrot.slane %v1445, 7
        %v2003 = vsel %vm1922, %v2001, %v2002
        %v2004 = vrot.slane %v1452, 7
        %v2005 = vrot.slane %v1456, 7
        %v2006 = vsel %vm1922, %v2004, %v2005
        %v2007 = vrot.slane %v1463, 7
        %v2008 = vrot.slane %v1467, 7
        %v2009 = vsel %vm1922, %v2007, %v2008
        %v2010 = vrot.slane %v1474, 7
        %v2011 = vrot.slane %v1478, 7
        %v2012 = vsel %vm1922, %v2010, %v2011
        %v2013 = vrot.slane %v1485, 7
        %v2014 = vrot.slane %v1489, 7
        %v2015 = vsel %vm1922, %v2013, %v2014
        %v2016 = vrot.slane %v1496, 7
        %v2017 = vrot.slane %v1500, 7
        %v2018 = vsel %vm1922, %v2016, %v2017
        %v2051 = vsel %vm1922, 0.0, %v1923
        %v2052 = vsel %vm1922, 0.0, %v1926
        %v2053 = vsel %vm1922, 0.0, %v1929
        %v2054 = vsel %vm1922, 0.0, %v1932
        %v2055 = vsel %vm1922, 0.0, %v1935
        %v2056 = vsel %vm1922, 0.0, %v1938
        %v2057 = vsel %vm1922, 0.0, %v1941
        %v2058 = vsel %vm1922, 0.0, %v1944
        %v2059 = vsel %vm1922, 0.0, %v1947
        %v2060 = vsel %vm1922, 0.0, %v1950
        %v2061 = vsel %vm1922, 0.0, %v1953
        %v2062 = vsel %vm1922, 0.0, %v1956
        %v2063 = vsel %vm1922, 0.0, %v1959
        %v2064 = vsel %vm1922, 0.0, %v1962
        %v2065 = vsel %vm1922, 0.0, %v1965
        %v2066 = vsel %vm1922, 0.0, %v1968
        %v2067 = vsel %vm1922, 0.0, %v1971
        %v2068 = vsel %vm1922, 0.0, %v1974
        %v2069 = vsel %vm1922, 0.0, %v1977
        %v2070 = vsel %vm1922, 0.0, %v1980
        %v2071 = vsel %vm1922, 0.0, %v1983
        %v2072 = vsel %vm1922, 0.0, %v1986
        %v2073 = vsel %vm1922, 0.0, %v1989
        %v2074 = vsel %vm1922, 0.0, %v1992
        %v2075 = vsel %vm1922, 0.0, %v1995
        %v2076 = vsel %vm1922, 0.0, %v1998
        %v2077 = vsel %vm1922, 0.0, %v2001
        %v2078 = vsel %vm1922, 0.0, %v2004
        %v2079 = vsel %vm1922, 0.0, %v2007
        %v2080 = vsel %vm1922, 0.0, %v2010
        %v2081 = vsel %vm1922, 0.0, %v2013
        %v2082 = vsel %vm1922, 0.0, %v2016
        %v2147 = vrot.slane %v1512, 7
        %v2148 = vrot.slane %v1516, 7
        %v2149 = vsel %vm1922, %v2147, %v2148
        %v2150 = vrot.slane %v1523, 7
        %v2151 = vrot.slane %v1527, 7
        %v2152 = vsel %vm1922, %v2150, %v2151
        %v2153 = vrot.slane %v1534, 7
        %v2154 = vrot.slane %v1538, 7
        %v2155 = vsel %vm1922, %v2153, %v2154
        %v2156 = vrot.slane %v1545, 7
        %v2157 = vrot.slane %v1549, 7
        %v2158 = vsel %vm1922, %v2156, %v2157
        %v2159 = vrot.slane %v1556, 7
        %v2160 = vrot.slane %v1560, 7
        %v2161 = vsel %vm1922, %v2159, %v2160
        %v2162 = vrot.slane %v1567, 7
        %v2163 = vrot.slane %v1571, 7
        %v2164 = vsel %vm1922, %v2162, %v2163
        %v2165 = vrot.slane %v1578, 7
        %v2166 = vrot.slane %v1582, 7
        %v2167 = vsel %vm1922, %v2165, %v2166
        %v2168 = vrot.slane %v1589, 7
        %v2169 = vrot.slane %v1593, 7
        %v2170 = vsel %vm1922, %v2168, %v2169
        %v2171 = vrot.slane %v1600, 7
        %v2172 = vrot.slane %v1604, 7
        %v2173 = vsel %vm1922, %v2171, %v2172
        %v2174 = vrot.slane %v1611, 7
        %v2175 = vrot.slane %v1615, 7
        %v2176 = vsel %vm1922, %v2174, %v2175
        %v2177 = vrot.slane %v1622, 7
        %v2178 = vrot.slane %v1626, 7
        %v2179 = vsel %vm1922, %v2177, %v2178
        %v2180 = vrot.slane %v1633, 7
        %v2181 = vrot.slane %v1637, 7
        %v2182 = vsel %vm1922, %v2180, %v2181
        %v2183 = vrot.slane %v1644, 7
        %v2184 = vrot.slane %v1648, 7
        %v2185 = vsel %vm1922, %v2183, %v2184
        %v2186 = vrot.slane %v1655, 7
        %v2187 = vrot.slane %v1659, 7
        %v2188 = vsel %vm1922, %v2186, %v2187
        %v2189 = vrot.slane %v1666, 7
        %v2190 = vrot.slane %v1670, 7
        %v2191 = vsel %vm1922, %v2189, %v2190
        %v2192 = vrot.slane %v1677, 7
        %v2193 = vrot.slane %v1681, 7
        %v2194 = vsel %vm1922, %v2192, %v2193
        %v2195 = vrot.slane %v1688, 7
        %v2196 = vrot.slane %v1692, 7
        %v2197 = vsel %vm1922, %v2195, %v2196
        %v2198 = vrot.slane %v1699, 7
        %v2199 = vrot.slane %v1703, 7
        %v2200 = vsel %vm1922, %v2198, %v2199
        %v2201 = vrot.slane %v1710, 7
        %v2202 = vrot.slane %v1714, 7
        %v2203 = vsel %vm1922, %v2201, %v2202
        %v2204 = vrot.slane %v1721, 7
        %v2205 = vrot.slane %v1725, 7
        %v2206 = vsel %vm1922, %v2204, %v2205
        %v2207 = vrot.slane %v1732, 7
        %v2208 = vrot.slane %v1736, 7
        %v2209 = vsel %vm1922, %v2207, %v2208
        %v2210 = vrot.slane %v1743, 7
        %v2211 = vrot.slane %v1747, 7
        %v2212 = vsel %vm1922, %v2210, %v2211
        %v2213 = vrot.slane %v1754, 7
        %v2214 = vrot.slane %v1758, 7
        %v2215 = vsel %vm1922, %v2213, %v2214
        %v2216 = vrot.slane %v1765, 7
        %v2217 = vrot.slane %v1769, 7
        %v2218 = vsel %vm1922, %v2216, %v2217
        %v2219 = vrot.slane %v1776, 7
        %v2220 = vrot.slane %v1780, 7
        %v2221 = vsel %vm1922, %v2219, %v2220
        %v2222 = vrot.slane %v1787, 7
        %v2223 = vrot.slane %v1791, 7
        %v2224 = vsel %vm1922, %v2222, %v2223
        %v2225 = vrot.slane %v1798, 7
        %v2226 = vrot.slane %v1802, 7
        %v2227 = vsel %vm1922, %v2225, %v2226
        %v2228 = vrot.slane %v1809, 7
        %v2229 = vrot.slane %v1813, 7
        %v2230 = vsel %vm1922, %v2228, %v2229
        %v2231 = vrot.slane %v1820, 7
        %v2232 = vrot.slane %v1824, 7
        %v2233 = vsel %vm1922, %v2231, %v2232
        %v2234 = vrot.slane %v1831, 7
        %v2235 = vrot.slane %v1835, 7
        %v2236 = vsel %vm1922, %v2234, %v2235
        %v2237 = vrot.slane %v1842, 7
        %v2238 = vrot.slane %v1846, 7
        %v2239 = vsel %vm1922, %v2237, %v2238
        %v2240 = vrot.slane %v1853, 7
        %v2241 = vrot.slane %v1857, 7
        %v2242 = vsel %vm1922, %v2240, %v2241
        %v2275 = vsel %vm1922, 0.0, %v2147
        %v2276 = vsel %vm1922, 0.0, %v2150
        %v2277 = vsel %vm1922, 0.0, %v2153
        %v2278 = vsel %vm1922, 0.0, %v2156
        %v2279 = vsel %vm1922, 0.0, %v2159
        %v2280 = vsel %vm1922, 0.0, %v2162
        %v2281 = vsel %vm1922, 0.0, %v2165
        %v2282 = vsel %vm1922, 0.0, %v2168
        %v2283 = vsel %vm1922, 0.0, %v2171
        %v2284 = vsel %vm1922, 0.0, %v2174
        %v2285 = vsel %vm1922, 0.0, %v2177
        %v2286 = vsel %vm1922, 0.0, %v2180
        %v2287 = vsel %vm1922, 0.0, %v2183
        %v2288 = vsel %vm1922, 0.0, %v2186
        %v2289 = vsel %vm1922, 0.0, %v2189
        %v2290 = vsel %vm1922, 0.0, %v2192
        %v2291 = vsel %vm1922, 0.0, %v2195
        %v2292 = vsel %vm1922, 0.0, %v2198
        %v2293 = vsel %vm1922, 0.0, %v2201
        %v2294 = vsel %vm1922, 0.0, %v2204
        %v2295 = vsel %vm1922, 0.0, %v2207
        %v2296 = vsel %vm1922, 0.0, %v2210
        %v2297 = vsel %vm1922, 0.0, %v2213
        %v2298 = vsel %vm1922, 0.0, %v2216
        %v2299 = vsel %vm1922, 0.0, %v2219
        %v2300 = vsel %vm1922, 0.0, %v2222
        %v2301 = vsel %vm1922, 0.0, %v2225
        %v2302 = vsel %vm1922, 0.0, %v2228
        %v2303 = vsel %vm1922, 0.0, %v2231
        %v2304 = vsel %vm1922, 0.0, %v2234
        %v2305 = vsel %vm1922, 0.0, %v2237
        %v2306 = vsel %vm1922, 0.0, %v2240
        %vm2371 = vcmask 1046528
        %v2372 = vrot.slane %v441, 1
        %v2373 = vrot.slane %v445, 1
        %v2374 = vsel %vm2371, %v2372, %v2373
        %v2375 = vrot.slane %v452, 1
        %v2376 = vrot.slane %v456, 1
        %v2377 = vsel %vm2371, %v2375, %v2376
        %v2378 = vrot.slane %v463, 1
        %v2379 = vrot.slane %v467, 1
        %v2380 = vsel %vm2371, %v2378, %v2379
        %v2381 = vrot.slane %v474, 1
        %v2382 = vrot.slane %v478, 1
        %v2383 = vsel %vm2371, %v2381, %v2382
        %v2384 = vrot.slane %v485, 1
        %v2385 = vrot.slane %v489, 1
        %v2386 = vsel %vm2371, %v2384, %v2385
        %v2387 = vrot.slane %v496, 1
        %v2388 = vrot.slane %v500, 1
        %v2389 = vsel %vm2371, %v2387, %v2388
        %v2390 = vrot.slane %v507, 1
        %v2391 = vrot.slane %v511, 1
        %v2392 = vsel %vm2371, %v2390, %v2391
        %v2393 = vrot.slane %v518, 1
        %v2394 = vrot.slane %v522, 1
        %v2395 = vsel %vm2371, %v2393, %v2394
        %v2396 = vrot.slane %v529, 1
        %v2397 = vrot.slane %v533, 1
        %v2398 = vsel %vm2371, %v2396, %v2397
        %v2399 = vrot.slane %v540, 1
        %v2400 = vrot.slane %v544, 1
        %v2401 = vsel %vm2371, %v2399, %v2400
        %v2402 = vrot.slane %v551, 1
        %v2403 = vrot.slane %v555, 1
        %v2404 = vsel %vm2371, %v2402, %v2403
        %v2405 = vrot.slane %v562, 1
        %v2406 = vrot.slane %v566, 1
        %v2407 = vsel %vm2371, %v2405, %v2406
        %v2408 = vrot.slane %v573, 1
        %v2409 = vrot.slane %v577, 1
        %v2410 = vsel %vm2371, %v2408, %v2409
        %v2411 = vrot.slane %v584, 1
        %v2412 = vrot.slane %v588, 1
        %v2413 = vsel %vm2371, %v2411, %v2412
        %v2414 = vrot.slane %v595, 1
        %v2415 = vrot.slane %v599, 1
        %v2416 = vsel %vm2371, %v2414, %v2415
        %v2417 = vrot.slane %v606, 1
        %v2418 = vrot.slane %v610, 1
        %v2419 = vsel %vm2371, %v2417, %v2418
        %v2420 = vrot.slane %v617, 1
        %v2421 = vrot.slane %v621, 1
        %v2422 = vsel %vm2371, %v2420, %v2421
        %v2423 = vrot.slane %v628, 1
        %v2424 = vrot.slane %v632, 1
        %v2425 = vsel %vm2371, %v2423, %v2424
        %v2426 = vrot.slane %v639, 1
        %v2427 = vrot.slane %v643, 1
        %v2428 = vsel %vm2371, %v2426, %v2427
        %v2429 = vrot.slane %v650, 1
        %v2430 = vrot.slane %v654, 1
        %v2431 = vsel %vm2371, %v2429, %v2430
        %v2432 = vrot.slane %v661, 1
        %v2433 = vrot.slane %v665, 1
        %v2434 = vsel %vm2371, %v2432, %v2433
        %v2435 = vrot.slane %v672, 1
        %v2436 = vrot.slane %v676, 1
        %v2437 = vsel %vm2371, %v2435, %v2436
        %v2438 = vrot.slane %v683, 1
        %v2439 = vrot.slane %v687, 1
        %v2440 = vsel %vm2371, %v2438, %v2439
        %v2441 = vrot.slane %v694, 1
        %v2442 = vrot.slane %v698, 1
        %v2443 = vsel %vm2371, %v2441, %v2442
        %v2444 = vrot.slane %v705, 1
        %v2445 = vrot.slane %v709, 1
        %v2446 = vsel %vm2371, %v2444, %v2445
        %v2447 = vrot.slane %v716, 1
        %v2448 = vrot.slane %v720, 1
        %v2449 = vsel %vm2371, %v2447, %v2448
        %v2450 = vrot.slane %v727, 1
        %v2451 = vrot.slane %v731, 1
        %v2452 = vsel %vm2371, %v2450, %v2451
        %v2453 = vrot.slane %v738, 1
        %v2454 = vrot.slane %v742, 1
        %v2455 = vsel %vm2371, %v2453, %v2454
        %v2456 = vrot.slane %v749, 1
        %v2457 = vrot.slane %v753, 1
        %v2458 = vsel %vm2371, %v2456, %v2457
        %v2459 = vrot.slane %v760, 1
        %v2460 = vrot.slane %v764, 1
        %v2461 = vsel %vm2371, %v2459, %v2460
        %v2462 = vrot.slane %v771, 1
        %v2463 = vrot.slane %v775, 1
        %v2464 = vsel %vm2371, %v2462, %v2463
        %v2465 = vrot.slane %v782, 1
        %v2466 = vrot.slane %v786, 1
        %v2467 = vsel %vm2371, %v2465, %v2466
        %v2500 = vsel %vm2371, %v2373, 0.0
        %v2501 = vsel %vm2371, %v2376, 0.0
        %v2502 = vsel %vm2371, %v2379, 0.0
        %v2503 = vsel %vm2371, %v2382, 0.0
        %v2504 = vsel %vm2371, %v2385, 0.0
        %v2505 = vsel %vm2371, %v2388, 0.0
        %v2506 = vsel %vm2371, %v2391, 0.0
        %v2507 = vsel %vm2371, %v2394, 0.0
        %v2508 = vsel %vm2371, %v2397, 0.0
        %v2509 = vsel %vm2371, %v2400, 0.0
        %v2510 = vsel %vm2371, %v2403, 0.0
        %v2511 = vsel %vm2371, %v2406, 0.0
        %v2512 = vsel %vm2371, %v2409, 0.0
        %v2513 = vsel %vm2371, %v2412, 0.0
        %v2514 = vsel %vm2371, %v2415, 0.0
        %v2515 = vsel %vm2371, %v2418, 0.0
        %v2516 = vsel %vm2371, %v2421, 0.0
        %v2517 = vsel %vm2371, %v2424, 0.0
        %v2518 = vsel %vm2371, %v2427, 0.0
        %v2519 = vsel %vm2371, %v2430, 0.0
        %v2520 = vsel %vm2371, %v2433, 0.0
        %v2521 = vsel %vm2371, %v2436, 0.0
        %v2522 = vsel %vm2371, %v2439, 0.0
        %v2523 = vsel %vm2371, %v2442, 0.0
        %v2524 = vsel %vm2371, %v2445, 0.0
        %v2525 = vsel %vm2371, %v2448, 0.0
        %v2526 = vsel %vm2371, %v2451, 0.0
        %v2527 = vsel %vm2371, %v2454, 0.0
        %v2528 = vsel %vm2371, %v2457, 0.0
        %v2529 = vsel %vm2371, %v2460, 0.0
        %v2530 = vsel %vm2371, %v2463, 0.0
        %v2531 = vsel %vm2371, %v2466, 0.0
        %v2532 = vld [vmem:[%s1] sm:$0x1f]
        %2534 = vset.pattern.permute.xlu0 0
        %2535 = vperm.xlu0 %2534, %v2051
        %v2536 = vpop.permute.xlu0 %2535
        %2538 = vset.pattern.permute.xlu0 0
        %2539 = vperm.xlu0 %2538, %v1925
        %v2540 = vpop.permute.xlu0 %2539
        %2543 = vset.pattern.permute.xlu0 0
        %2544 = vperm.xlu0 %2543, %v2052
        %v2545 = vpop.permute.xlu0 %2544
        %2547 = vset.pattern.permute.xlu0 0
        %2548 = vperm.xlu0 %2547, %v1928
        %v2549 = vpop.permute.xlu0 %2548
        %2552 = vset.pattern.permute.xlu0 0
        %2553 = vperm.xlu0 %2552, %v2053
        %v2554 = vpop.permute.xlu0 %2553
        %2556 = vset.pattern.permute.xlu0 0
        %2557 = vperm.xlu0 %2556, %v1931
        %v2558 = vpop.permute.xlu0 %2557
        %2561 = vset.pattern.permute.xlu0 0
        %2562 = vperm.xlu0 %2561, %v2054
        %v2563 = vpop.permute.xlu0 %2562
        %2565 = vset.pattern.permute.xlu0 0
        %2566 = vperm.xlu0 %2565, %v1934
        %v2567 = vpop.permute.xlu0 %2566
        %2570 = vset.pattern.permute.xlu0 0
        %2571 = vperm.xlu0 %2570, %v2055
        %v2572 = vpop.permute.xlu0 %2571
        %2574 = vset.pattern.permute.xlu0 0
        %2575 = vperm.xlu0 %2574, %v1937
        %v2576 = vpop.permute.xlu0 %2575
        %2579 = vset.pattern.permute.xlu0 0
        %2580 = vperm.xlu0 %2579, %v2056
        %v2581 = vpop.permute.xlu0 %2580
        %2583 = vset.pattern.permute.xlu0 0
        %2584 = vperm.xlu0 %2583, %v1940
        %v2585 = vpop.permute.xlu0 %2584
        %2588 = vset.pattern.permute.xlu0 0
        %2589 = vperm.xlu0 %2588, %v2057
        %v2590 = vpop.permute.xlu0 %2589
        %2592 = vset.pattern.permute.xlu0 0
        %2593 = vperm.xlu0 %2592, %v1943
        %v2594 = vpop.permute.xlu0 %2593
        %2597 = vset.pattern.permute.xlu0 0
        %2598 = vperm.xlu0 %2597, %v2058
        %v2599 = vpop.permute.xlu0 %2598
        %2601 = vset.pattern.permute.xlu0 0
        %2602 = vperm.xlu0 %2601, %v1946
        %v2603 = vpop.permute.xlu0 %2602
        %2606 = vset.pattern.permute.xlu0 0
        %2607 = vperm.xlu0 %2606, %v2059
        %v2608 = vpop.permute.xlu0 %2607
        %2610 = vset.pattern.permute.xlu0 0
        %2611 = vperm.xlu0 %2610, %v1949
        %v2612 = vpop.permute.xlu0 %2611
        %2615 = vset.pattern.permute.xlu0 0
        %2616 = vperm.xlu0 %2615, %v2060
        %v2617 = vpop.permute.xlu0 %2616
        %2619 = vset.pattern.permute.xlu0 0
        %2620 = vperm.xlu0 %2619, %v1952
        %v2621 = vpop.permute.xlu0 %2620
        %2624 = vset.pattern.permute.xlu0 0
        %2625 = vperm.xlu0 %2624, %v2061
        %v2626 = vpop.permute.xlu0 %2625
        %2628 = vset.pattern.permute.xlu0 0
        %2629 = vperm.xlu0 %2628, %v1955
        %v2630 = vpop.permute.xlu0 %2629
        %2633 = vset.pattern.permute.xlu0 0
        %2634 = vperm.xlu0 %2633, %v2062
        %v2635 = vpop.permute.xlu0 %2634
        %2637 = vset.pattern.permute.xlu0 0
        %2638 = vperm.xlu0 %2637, %v1958
        %v2639 = vpop.permute.xlu0 %2638
        %2642 = vset.pattern.permute.xlu0 0
        %2643 = vperm.xlu0 %2642, %v2063
        %v2644 = vpop.permute.xlu0 %2643
        %2646 = vset.pattern.permute.xlu0 0
        %2647 = vperm.xlu0 %2646, %v1961
        %v2648 = vpop.permute.xlu0 %2647
        %2651 = vset.pattern.permute.xlu0 0
        %2652 = vperm.xlu0 %2651, %v2064
        %v2653 = vpop.permute.xlu0 %2652
        %2655 = vset.pattern.permute.xlu0 0
        %2656 = vperm.xlu0 %2655, %v1964
        %v2657 = vpop.permute.xlu0 %2656
        %2660 = vset.pattern.permute.xlu0 0
        %2661 = vperm.xlu0 %2660, %v2065
        %v2662 = vpop.permute.xlu0 %2661
        %2664 = vset.pattern.permute.xlu0 0
        %2665 = vperm.xlu0 %2664, %v1967
        %v2666 = vpop.permute.xlu0 %2665
        %2669 = vset.pattern.permute.xlu0 0
        %2670 = vperm.xlu0 %2669, %v2066
        %v2671 = vpop.permute.xlu0 %2670
        %2673 = vset.pattern.permute.xlu0 0
        %2674 = vperm.xlu0 %2673, %v1970
        %v2675 = vpop.permute.xlu0 %2674
        %2678 = vset.pattern.permute.xlu0 0
        %2679 = vperm.xlu0 %2678, %v2067
        %v2680 = vpop.permute.xlu0 %2679
        %2682 = vset.pattern.permute.xlu0 0
        %2683 = vperm.xlu0 %2682, %v1973
        %v2684 = vpop.permute.xlu0 %2683
        %2687 = vset.pattern.permute.xlu0 0
        %2688 = vperm.xlu0 %2687, %v2068
        %v2689 = vpop.permute.xlu0 %2688
        %2691 = vset.pattern.permute.xlu0 0
        %2692 = vperm.xlu0 %2691, %v1976
        %v2693 = vpop.permute.xlu0 %2692
        %2696 = vset.pattern.permute.xlu0 0
        %2697 = vperm.xlu0 %2696, %v2069
        %v2698 = vpop.permute.xlu0 %2697
        %2700 = vset.pattern.permute.xlu0 0
        %2701 = vperm.xlu0 %2700, %v1979
        %v2702 = vpop.permute.xlu0 %2701
        %2705 = vset.pattern.permute.xlu0 0
        %2706 = vperm.xlu0 %2705, %v2070
        %v2707 = vpop.permute.xlu0 %2706
        %2709 = vset.pattern.permute.xlu0 0
        %2710 = vperm.xlu0 %2709, %v1982
        %v2711 = vpop.permute.xlu0 %2710
        %2714 = vset.pattern.permute.xlu0 0
        %2715 = vperm.xlu0 %2714, %v2071
        %v2716 = vpop.permute.xlu0 %2715
        %2718 = vset.pattern.permute.xlu0 0
        %2719 = vperm.xlu0 %2718, %v1985
        %v2720 = vpop.permute.xlu0 %2719
        %2723 = vset.pattern.permute.xlu0 0
        %2724 = vperm.xlu0 %2723, %v2072
        %v2725 = vpop.permute.xlu0 %2724
        %2727 = vset.pattern.permute.xlu0 0
        %2728 = vperm.xlu0 %2727, %v1988
        %v2729 = vpop.permute.xlu0 %2728
        %2732 = vset.pattern.permute.xlu0 0
        %2733 = vperm.xlu0 %2732, %v2073
        %v2734 = vpop.permute.xlu0 %2733
        %2736 = vset.pattern.permute.xlu0 0
        %2737 = vperm.xlu0 %2736, %v1991
        %v2738 = vpop.permute.xlu0 %2737
        %2741 = vset.pattern.permute.xlu0 0
        %2742 = vperm.xlu0 %2741, %v2074
        %v2743 = vpop.permute.xlu0 %2742
        %2745 = vset.pattern.permute.xlu0 0
        %2746 = vperm.xlu0 %2745, %v1994
        %v2747 = vpop.permute.xlu0 %2746
        %2750 = vset.pattern.permute.xlu0 0
        %2751 = vperm.xlu0 %2750, %v2075
        %v2752 = vpop.permute.xlu0 %2751
        %2754 = vset.pattern.permute.xlu0 0
        %2755 = vperm.xlu0 %2754, %v1997
        %v2756 = vpop.permute.xlu0 %2755
        %2759 = vset.pattern.permute.xlu0 0
        %2760 = vperm.xlu0 %2759, %v2076
        %v2761 = vpop.permute.xlu0 %2760
        %2763 = vset.pattern.permute.xlu0 0
        %2764 = vperm.xlu0 %2763, %v2000
        %v2765 = vpop.permute.xlu0 %2764
        %2768 = vset.pattern.permute.xlu0 0
        %2769 = vperm.xlu0 %2768, %v2077
        %v2770 = vpop.permute.xlu0 %2769
        %2772 = vset.pattern.permute.xlu0 0
        %2773 = vperm.xlu0 %2772, %v2003
        %v2774 = vpop.permute.xlu0 %2773
        %2777 = vset.pattern.permute.xlu0 0
        %2778 = vperm.xlu0 %2777, %v2078
        %v2779 = vpop.permute.xlu0 %2778
        %2781 = vset.pattern.permute.xlu0 0
        %2782 = vperm.xlu0 %2781, %v2006
        %v2783 = vpop.permute.xlu0 %2782
        %2786 = vset.pattern.permute.xlu0 0
        %2787 = vperm.xlu0 %2786, %v2079
        %v2788 = vpop.permute.xlu0 %2787
        %2790 = vset.pattern.permute.xlu0 0
        %2791 = vperm.xlu0 %2790, %v2009
        %v2792 = vpop.permute.xlu0 %2791
        %2795 = vset.pattern.permute.xlu0 0
        %2796 = vperm.xlu0 %2795, %v2080
        %v2797 = vpop.permute.xlu0 %2796
        %2799 = vset.pattern.permute.xlu0 0
        %2800 = vperm.xlu0 %2799, %v2012
        %v2801 = vpop.permute.xlu0 %2800
        %2804 = vset.pattern.permute.xlu0 0
        %2805 = vperm.xlu0 %2804, %v2081
        %v2806 = vpop.permute.xlu0 %2805
        %2808 = vset.pattern.permute.xlu0 0
        %2809 = vperm.xlu0 %2808, %v2015
        %v2810 = vpop.permute.xlu0 %2809
        %2813 = vset.pattern.permute.xlu0 0
        %2814 = vperm.xlu0 %2813, %v2082
        %v2815 = vpop.permute.xlu0 %2814
        %2817 = vset.pattern.permute.xlu0 0
        %2818 = vperm.xlu0 %2817, %v2018
        %v2819 = vpop.permute.xlu0 %2818
        %v2821 = vlaneseq
        %v2822 = vshrl.u32 %v2821, 7
        %v2823 = vsub.s32 0, %v2822
        %v2824 = vrot.slane %v2532, %v2823
        %v2825 = vmul.f32 %v2536, %v2824
        %v2826 = vmul.f32 %v2540, %v2824
        %v2827 = vmul.f32 %v2545, %v2824
        %v2828 = vmul.f32 %v2549, %v2824
        %v2829 = vmul.f32 %v2554, %v2824
        %v2830 = vmul.f32 %v2558, %v2824
        %v2831 = vmul.f32 %v2563, %v2824
        %v2832 = vmul.f32 %v2567, %v2824
        %v2833 = vmul.f32 %v2572, %v2824
        %v2834 = vmul.f32 %v2576, %v2824
        %v2835 = vmul.f32 %v2581, %v2824
        %v2836 = vmul.f32 %v2585, %v2824
        %v2837 = vmul.f32 %v2590, %v2824
        %v2838 = vmul.f32 %v2594, %v2824
        %v2839 = vmul.f32 %v2599, %v2824
        %v2840 = vmul.f32 %v2603, %v2824
        %v2841 = vmul.f32 %v2608, %v2824
        %v2842 = vmul.f32 %v2612, %v2824
        %v2843 = vmul.f32 %v2617, %v2824
        %v2844 = vmul.f32 %v2621, %v2824
        %v2845 = vmul.f32 %v2626, %v2824
        %v2846 = vmul.f32 %v2630, %v2824
        %v2847 = vmul.f32 %v2635, %v2824
        %v2848 = vmul.f32 %v2639, %v2824
        %v2849 = vmul.f32 %v2644, %v2824
        %v2850 = vmul.f32 %v2648, %v2824
        %v2851 = vmul.f32 %v2653, %v2824
        %v2852 = vmul.f32 %v2657, %v2824
        %v2853 = vmul.f32 %v2662, %v2824
        %v2854 = vmul.f32 %v2666, %v2824
        %v2855 = vmul.f32 %v2671, %v2824
        %v2856 = vmul.f32 %v2675, %v2824
        %v2857 = vmul.f32 %v2680, %v2824
        %v2858 = vmul.f32 %v2684, %v2824
        %v2859 = vmul.f32 %v2689, %v2824
        %v2860 = vmul.f32 %v2693, %v2824
        %v2861 = vmul.f32 %v2698, %v2824
        %v2862 = vmul.f32 %v2702, %v2824
        %v2863 = vmul.f32 %v2707, %v2824
        %v2864 = vmul.f32 %v2711, %v2824
        %v2865 = vmul.f32 %v2716, %v2824
        %v2866 = vmul.f32 %v2720, %v2824
        %v2867 = vmul.f32 %v2725, %v2824
        %v2868 = vmul.f32 %v2729, %v2824
        %v2869 = vmul.f32 %v2734, %v2824
        %v2870 = vmul.f32 %v2738, %v2824
        %v2871 = vmul.f32 %v2743, %v2824
        %v2872 = vmul.f32 %v2747, %v2824
        %v2873 = vmul.f32 %v2752, %v2824
        %v2874 = vmul.f32 %v2756, %v2824
        %v2875 = vmul.f32 %v2761, %v2824
        %v2876 = vmul.f32 %v2765, %v2824
        %v2877 = vmul.f32 %v2770, %v2824
        %v2878 = vmul.f32 %v2774, %v2824
        %v2879 = vmul.f32 %v2779, %v2824
        %v2880 = vmul.f32 %v2783, %v2824
        %v2881 = vmul.f32 %v2788, %v2824
        %v2882 = vmul.f32 %v2792, %v2824
        %v2883 = vmul.f32 %v2797, %v2824
        %v2884 = vmul.f32 %v2801, %v2824
        %v2885 = vmul.f32 %v2806, %v2824
        %v2886 = vmul.f32 %v2810, %v2824
        %v2887 = vmul.f32 %v2815, %v2824
        %v2888 = vmul.f32 %v2819, %v2824
        %2890 = vset.pattern.permute.xlu0 0
        %2891 = vperm.xlu0 %2890, %v2275
        %v2892 = vpop.permute.xlu0 %2891
        %2894 = vset.pattern.permute.xlu0 0
        %2895 = vperm.xlu0 %2894, %v2149
        %v2896 = vpop.permute.xlu0 %2895
        %2899 = vset.pattern.permute.xlu0 0
        %2900 = vperm.xlu0 %2899, %v2276
        %v2901 = vpop.permute.xlu0 %2900
        %2903 = vset.pattern.permute.xlu0 0
        %2904 = vperm.xlu0 %2903, %v2152
        %v2905 = vpop.permute.xlu0 %2904
        %2908 = vset.pattern.permute.xlu0 0
        %2909 = vperm.xlu0 %2908, %v2277
        %v2910 = vpop.permute.xlu0 %2909
        %2912 = vset.pattern.permute.xlu0 0
        %2913 = vperm.xlu0 %2912, %v2155
        %v2914 = vpop.permute.xlu0 %2913
        %2917 = vset.pattern.permute.xlu0 0
        %2918 = vperm.xlu0 %2917, %v2278
        %v2919 = vpop.permute.xlu0 %2918
        %2921 = vset.pattern.permute.xlu0 0
        %2922 = vperm.xlu0 %2921, %v2158
        %v2923 = vpop.permute.xlu0 %2922
        %2926 = vset.pattern.permute.xlu0 0
        %2927 = vperm.xlu0 %2926, %v2279
        %v2928 = vpop.permute.xlu0 %2927
        %2930 = vset.pattern.permute.xlu0 0
        %2931 = vperm.xlu0 %2930, %v2161
        %v2932 = vpop.permute.xlu0 %2931
        %2935 = vset.pattern.permute.xlu0 0
        %2936 = vperm.xlu0 %2935, %v2280
        %v2937 = vpop.permute.xlu0 %2936
        %2939 = vset.pattern.permute.xlu0 0
        %2940 = vperm.xlu0 %2939, %v2164
        %v2941 = vpop.permute.xlu0 %2940
        %2944 = vset.pattern.permute.xlu0 0
        %2945 = vperm.xlu0 %2944, %v2281
        %v2946 = vpop.permute.xlu0 %2945
        %2948 = vset.pattern.permute.xlu0 0
        %2949 = vperm.xlu0 %2948, %v2167
        %v2950 = vpop.permute.xlu0 %2949
        %2953 = vset.pattern.permute.xlu0 0
        %2954 = vperm.xlu0 %2953, %v2282
        %v2955 = vpop.permute.xlu0 %2954
        %2957 = vset.pattern.permute.xlu0 0
        %2958 = vperm.xlu0 %2957, %v2170
        %v2959 = vpop.permute.xlu0 %2958
        %2962 = vset.pattern.permute.xlu0 0
        %2963 = vperm.xlu0 %2962, %v2283
        %v2964 = vpop.permute.xlu0 %2963
        %2966 = vset.pattern.permute.xlu0 0
        %2967 = vperm.xlu0 %2966, %v2173
        %v2968 = vpop.permute.xlu0 %2967
        %2971 = vset.pattern.permute.xlu0 0
        %2972 = vperm.xlu0 %2971, %v2284
        %v2973 = vpop.permute.xlu0 %2972
        %2975 = vset.pattern.permute.xlu0 0
        %2976 = vperm.xlu0 %2975, %v2176
        %v2977 = vpop.permute.xlu0 %2976
        %2980 = vset.pattern.permute.xlu0 0
        %2981 = vperm.xlu0 %2980, %v2285
        %v2982 = vpop.permute.xlu0 %2981
        %2984 = vset.pattern.permute.xlu0 0
        %2985 = vperm.xlu0 %2984, %v2179
        %v2986 = vpop.permute.xlu0 %2985
        %2989 = vset.pattern.permute.xlu0 0
        %2990 = vperm.xlu0 %2989, %v2286
        %v2991 = vpop.permute.xlu0 %2990
        %2993 = vset.pattern.permute.xlu0 0
        %2994 = vperm.xlu0 %2993, %v2182
        %v2995 = vpop.permute.xlu0 %2994
        %2998 = vset.pattern.permute.xlu0 0
        %2999 = vperm.xlu0 %2998, %v2287
        %v3000 = vpop.permute.xlu0 %2999
        %3002 = vset.pattern.permute.xlu0 0
        %3003 = vperm.xlu0 %3002, %v2185
        %v3004 = vpop.permute.xlu0 %3003
        %3007 = vset.pattern.permute.xlu0 0
        %3008 = vperm.xlu0 %3007, %v2288
        %v3009 = vpop.permute.xlu0 %3008
        %3011 = vset.pattern.permute.xlu0 0
        %3012 = vperm.xlu0 %3011, %v2188
        %v3013 = vpop.permute.xlu0 %3012
        %3016 = vset.pattern.permute.xlu0 0
        %3017 = vperm.xlu0 %3016, %v2289
        %v3018 = vpop.permute.xlu0 %3017
        %3020 = vset.pattern.permute.xlu0 0
        %3021 = vperm.xlu0 %3020, %v2191
        %v3022 = vpop.permute.xlu0 %3021
        %3025 = vset.pattern.permute.xlu0 0
        %3026 = vperm.xlu0 %3025, %v2290
        %v3027 = vpop.permute.xlu0 %3026
        %3029 = vset.pattern.permute.xlu0 0
        %3030 = vperm.xlu0 %3029, %v2194
        %v3031 = vpop.permute.xlu0 %3030
        %3034 = vset.pattern.permute.xlu0 0
        %3035 = vperm.xlu0 %3034, %v2291
        %v3036 = vpop.permute.xlu0 %3035
        %3038 = vset.pattern.permute.xlu0 0
        %3039 = vperm.xlu0 %3038, %v2197
        %v3040 = vpop.permute.xlu0 %3039
        %3043 = vset.pattern.permute.xlu0 0
        %3044 = vperm.xlu0 %3043, %v2292
        %v3045 = vpop.permute.xlu0 %3044
        %3047 = vset.pattern.permute.xlu0 0
        %3048 = vperm.xlu0 %3047, %v2200
        %v3049 = vpop.permute.xlu0 %3048
        %3052 = vset.pattern.permute.xlu0 0
        %3053 = vperm.xlu0 %3052, %v2293
        %v3054 = vpop.permute.xlu0 %3053
        %3056 = vset.pattern.permute.xlu0 0
        %3057 = vperm.xlu0 %3056, %v2203
        %v3058 = vpop.permute.xlu0 %3057
        %3061 = vset.pattern.permute.xlu0 0
        %3062 = vperm.xlu0 %3061, %v2294
        %v3063 = vpop.permute.xlu0 %3062
        %3065 = vset.pattern.permute.xlu0 0
        %3066 = vperm.xlu0 %3065, %v2206
        %v3067 = vpop.permute.xlu0 %3066
        %3070 = vset.pattern.permute.xlu0 0
        %3071 = vperm.xlu0 %3070, %v2295
        %v3072 = vpop.permute.xlu0 %3071
        %3074 = vset.pattern.permute.xlu0 0
        %3075 = vperm.xlu0 %3074, %v2209
        %v3076 = vpop.permute.xlu0 %3075
        %3079 = vset.pattern.permute.xlu0 0
        %3080 = vperm.xlu0 %3079, %v2296
        %v3081 = vpop.permute.xlu0 %3080
        %3083 = vset.pattern.permute.xlu0 0
        %3084 = vperm.xlu0 %3083, %v2212
        %v3085 = vpop.permute.xlu0 %3084
        %3088 = vset.pattern.permute.xlu0 0
        %3089 = vperm.xlu0 %3088, %v2297
        %v3090 = vpop.permute.xlu0 %3089
        %3092 = vset.pattern.permute.xlu0 0
        %3093 = vperm.xlu0 %3092, %v2215
        %v3094 = vpop.permute.xlu0 %3093
        %3097 = vset.pattern.permute.xlu0 0
        %3098 = vperm.xlu0 %3097, %v2298
        %v3099 = vpop.permute.xlu0 %3098
        %3101 = vset.pattern.permute.xlu0 0
        %3102 = vperm.xlu0 %3101, %v2218
        %v3103 = vpop.permute.xlu0 %3102
        %3106 = vset.pattern.permute.xlu0 0
        %3107 = vperm.xlu0 %3106, %v2299
        %v3108 = vpop.permute.xlu0 %3107
        %3110 = vset.pattern.permute.xlu0 0
        %3111 = vperm.xlu0 %3110, %v2221
        %v3112 = vpop.permute.xlu0 %3111
        %3115 = vset.pattern.permute.xlu0 0
        %3116 = vperm.xlu0 %3115, %v2300
        %v3117 = vpop.permute.xlu0 %3116
        %3119 = vset.pattern.permute.xlu0 0
        %3120 = vperm.xlu0 %3119, %v2224
        %v3121 = vpop.permute.xlu0 %3120
        %3124 = vset.pattern.permute.xlu0 0
        %3125 = vperm.xlu0 %3124, %v2301
        %v3126 = vpop.permute.xlu0 %3125
        %3128 = vset.pattern.permute.xlu0 0
        %3129 = vperm.xlu0 %3128, %v2227
        %v3130 = vpop.permute.xlu0 %3129
        %3133 = vset.pattern.permute.xlu0 0
        %3134 = vperm.xlu0 %3133, %v2302
        %v3135 = vpop.permute.xlu0 %3134
        %3137 = vset.pattern.permute.xlu0 0
        %3138 = vperm.xlu0 %3137, %v2230
        %v3139 = vpop.permute.xlu0 %3138
        %3142 = vset.pattern.permute.xlu0 0
        %3143 = vperm.xlu0 %3142, %v2303
        %v3144 = vpop.permute.xlu0 %3143
        %3146 = vset.pattern.permute.xlu0 0
        %3147 = vperm.xlu0 %3146, %v2233
        %v3148 = vpop.permute.xlu0 %3147
        %3151 = vset.pattern.permute.xlu0 0
        %3152 = vperm.xlu0 %3151, %v2304
        %v3153 = vpop.permute.xlu0 %3152
        %3155 = vset.pattern.permute.xlu0 0
        %3156 = vperm.xlu0 %3155, %v2236
        %v3157 = vpop.permute.xlu0 %3156
        %3160 = vset.pattern.permute.xlu0 0
        %3161 = vperm.xlu0 %3160, %v2305
        %v3162 = vpop.permute.xlu0 %3161
        %3164 = vset.pattern.permute.xlu0 0
        %3165 = vperm.xlu0 %3164, %v2239
        %v3166 = vpop.permute.xlu0 %3165
        %3169 = vset.pattern.permute.xlu0 0
        %3170 = vperm.xlu0 %3169, %v2306
        %v3171 = vpop.permute.xlu0 %3170
        %3173 = vset.pattern.permute.xlu0 0
        %3174 = vperm.xlu0 %3173, %v2242
        %v3175 = vpop.permute.xlu0 %3174
        %v3177 = vlaneseq
        %v3178 = vshrl.u32 %v3177, 7
        %v3179 = vsub.s32 1, %v3178
        %v3180 = vrot.slane %v2532, %v3179
        %v3181 = vmul.f32 %v2892, %v3180
        %v3182 = vmul.f32 %v2896, %v3180
        %v3183 = vmul.f32 %v2901, %v3180
        %v3184 = vmul.f32 %v2905, %v3180
        %v3185 = vmul.f32 %v2910, %v3180
        %v3186 = vmul.f32 %v2914, %v3180
        %v3187 = vmul.f32 %v2919, %v3180
        %v3188 = vmul.f32 %v2923, %v3180
        %v3189 = vmul.f32 %v2928, %v3180
        %v3190 = vmul.f32 %v2932, %v3180
        %v3191 = vmul.f32 %v2937, %v3180
        %v3192 = vmul.f32 %v2941, %v3180
        %v3193 = vmul.f32 %v2946, %v3180
        %v3194 = vmul.f32 %v2950, %v3180
        %v3195 = vmul.f32 %v2955, %v3180
        %v3196 = vmul.f32 %v2959, %v3180
        %v3197 = vmul.f32 %v2964, %v3180
        %v3198 = vmul.f32 %v2968, %v3180
        %v3199 = vmul.f32 %v2973, %v3180
        %v3200 = vmul.f32 %v2977, %v3180
        %v3201 = vmul.f32 %v2982, %v3180
        %v3202 = vmul.f32 %v2986, %v3180
        %v3203 = vmul.f32 %v2991, %v3180
        %v3204 = vmul.f32 %v2995, %v3180
        %v3205 = vmul.f32 %v3000, %v3180
        %v3206 = vmul.f32 %v3004, %v3180
        %v3207 = vmul.f32 %v3009, %v3180
        %v3208 = vmul.f32 %v3013, %v3180
        %v3209 = vmul.f32 %v3018, %v3180
        %v3210 = vmul.f32 %v3022, %v3180
        %v3211 = vmul.f32 %v3027, %v3180
        %v3212 = vmul.f32 %v3031, %v3180
        %v3213 = vmul.f32 %v3036, %v3180
        %v3214 = vmul.f32 %v3040, %v3180
        %v3215 = vmul.f32 %v3045, %v3180
        %v3216 = vmul.f32 %v3049, %v3180
        %v3217 = vmul.f32 %v3054, %v3180
        %v3218 = vmul.f32 %v3058, %v3180
        %v3219 = vmul.f32 %v3063, %v3180
        %v3220 = vmul.f32 %v3067, %v3180
        %v3221 = vmul.f32 %v3072, %v3180
        %v3222 = vmul.f32 %v3076, %v3180
        %v3223 = vmul.f32 %v3081, %v3180
        %v3224 = vmul.f32 %v3085, %v3180
        %v3225 = vmul.f32 %v3090, %v3180
        %v3226 = vmul.f32 %v3094, %v3180
        %v3227 = vmul.f32 %v3099, %v3180
        %v3228 = vmul.f32 %v3103, %v3180
        %v3229 = vmul.f32 %v3108, %v3180
        %v3230 = vmul.f32 %v3112, %v3180
        %v3231 = vmul.f32 %v3117, %v3180
        %v3232 = vmul.f32 %v3121, %v3180
        %v3233 = vmul.f32 %v3126, %v3180
        %v3234 = vmul.f32 %v3130, %v3180
        %v3235 = vmul.f32 %v3135, %v3180
        %v3236 = vmul.f32 %v3139, %v3180
        %v3237 = vmul.f32 %v3144, %v3180
        %v3238 = vmul.f32 %v3148, %v3180
        %v3239 = vmul.f32 %v3153, %v3180
        %v3240 = vmul.f32 %v3157, %v3180
        %v3241 = vmul.f32 %v3162, %v3180
        %v3242 = vmul.f32 %v3166, %v3180
        %v3243 = vmul.f32 %v3171, %v3180
        %v3244 = vmul.f32 %v3175, %v3180
        %v3245 = vadd.f32 %v2825, %v3181
        %v3246 = vadd.f32 %v2826, %v3182
        %v3247 = vadd.f32 %v2827, %v3183
        %v3248 = vadd.f32 %v2828, %v3184
        %v3249 = vadd.f32 %v2829, %v3185
        %v3250 = vadd.f32 %v2830, %v3186
        %v3251 = vadd.f32 %v2831, %v3187
        %v3252 = vadd.f32 %v2832, %v3188
        %v3253 = vadd.f32 %v2833, %v3189
        %v3254 = vadd.f32 %v2834, %v3190
        %v3255 = vadd.f32 %v2835, %v3191
        %v3256 = vadd.f32 %v2836, %v3192
        %v3257 = vadd.f32 %v2837, %v3193
        %v3258 = vadd.f32 %v2838, %v3194
        %v3259 = vadd.f32 %v2839, %v3195
        %v3260 = vadd.f32 %v2840, %v3196
        %v3261 = vadd.f32 %v2841, %v3197
        %v3262 = vadd.f32 %v2842, %v3198
        %v3263 = vadd.f32 %v2843, %v3199
        %v3264 = vadd.f32 %v2844, %v3200
        %v3265 = vadd.f32 %v2845, %v3201
        %v3266 = vadd.f32 %v2846, %v3202
        %v3267 = vadd.f32 %v2847, %v3203
        %v3268 = vadd.f32 %v2848, %v3204
        %v3269 = vadd.f32 %v2849, %v3205
        %v3270 = vadd.f32 %v2850, %v3206
        %v3271 = vadd.f32 %v2851, %v3207
        %v3272 = vadd.f32 %v2852, %v3208
        %v3273 = vadd.f32 %v2853, %v3209
        %v3274 = vadd.f32 %v2854, %v3210
        %v3275 = vadd.f32 %v2855, %v3211
        %v3276 = vadd.f32 %v2856, %v3212
        %v3277 = vadd.f32 %v2857, %v3213
        %v3278 = vadd.f32 %v2858, %v3214
        %v3279 = vadd.f32 %v2859, %v3215
        %v3280 = vadd.f32 %v2860, %v3216
        %v3281 = vadd.f32 %v2861, %v3217
        %v3282 = vadd.f32 %v2862, %v3218
        %v3283 = vadd.f32 %v2863, %v3219
        %v3284 = vadd.f32 %v2864, %v3220
        %v3285 = vadd.f32 %v2865, %v3221
        %v3286 = vadd.f32 %v2866, %v3222
        %v3287 = vadd.f32 %v2867, %v3223
        %v3288 = vadd.f32 %v2868, %v3224
        %v3289 = vadd.f32 %v2869, %v3225
        %v3290 = vadd.f32 %v2870, %v3226
        %v3291 = vadd.f32 %v2871, %v3227
        %v3292 = vadd.f32 %v2872, %v3228
        %v3293 = vadd.f32 %v2873, %v3229
        %v3294 = vadd.f32 %v2874, %v3230
        %v3295 = vadd.f32 %v2875, %v3231
        %v3296 = vadd.f32 %v2876, %v3232
        %v3297 = vadd.f32 %v2877, %v3233
        %v3298 = vadd.f32 %v2878, %v3234
        %v3299 = vadd.f32 %v2879, %v3235
        %v3300 = vadd.f32 %v2880, %v3236
        %v3301 = vadd.f32 %v2881, %v3237
        %v3302 = vadd.f32 %v2882, %v3238
        %v3303 = vadd.f32 %v2883, %v3239
        %v3304 = vadd.f32 %v2884, %v3240
        %v3305 = vadd.f32 %v2885, %v3241
        %v3306 = vadd.f32 %v2886, %v3242
        %v3307 = vadd.f32 %v2887, %v3243
        %v3308 = vadd.f32 %v2888, %v3244
        %v3309 = vlaneseq
        %v3310 = vshrl.u32 %v3309, 7
        %v3311 = vsub.s32 2, %v3310
        %v3312 = vrot.slane %v2532, %v3311
        %v3313 = vmul.f32 %v441, %v3312
        %v3314 = vmul.f32 %v445, %v3312
        %v3315 = vmul.f32 %v452, %v3312
        %v3316 = vmul.f32 %v456, %v3312
        %v3317 = vmul.f32 %v463, %v3312
        %v3318 = vmul.f32 %v467, %v3312
        %v3319 = vmul.f32 %v474, %v3312
        %v3320 = vmul.f32 %v478, %v3312
        %v3321 = vmul.f32 %v485, %v3312
        %v3322 = vmul.f32 %v489, %v3312
        %v3323 = vmul.f32 %v496, %v3312
        %v3324 = vmul.f32 %v500, %v3312
        %v3325 = vmul.f32 %v507, %v3312
        %v3326 = vmul.f32 %v511, %v3312
        %v3327 = vmul.f32 %v518, %v3312
        %v3328 = vmul.f32 %v522, %v3312
        %v3329 = vmul.f32 %v529, %v3312
        %v3330 = vmul.f32 %v533, %v3312
        %v3331 = vmul.f32 %v540, %v3312
        %v3332 = vmul.f32 %v544, %v3312
        %v3333 = vmul.f32 %v551, %v3312
        %v3334 = vmul.f32 %v555, %v3312
        %v3335 = vmul.f32 %v562, %v3312
        %v3336 = vmul.f32 %v566, %v3312
        %v3337 = vmul.f32 %v573, %v3312
        %v3338 = vmul.f32 %v577, %v3312
        %v3339 = vmul.f32 %v584, %v3312
        %v3340 = vmul.f32 %v588, %v3312
        %v3341 = vmul.f32 %v595, %v3312
        %v3342 = vmul.f32 %v599, %v3312
        %v3343 = vmul.f32 %v606, %v3312
        %v3344 = vmul.f32 %v610, %v3312
        %v3345 = vmul.f32 %v617, %v3312
        %v3346 = vmul.f32 %v621, %v3312
        %v3347 = vmul.f32 %v628, %v3312
        %v3348 = vmul.f32 %v632, %v3312
        %v3349 = vmul.f32 %v639, %v3312
        %v3350 = vmul.f32 %v643, %v3312
        %v3351 = vmul.f32 %v650, %v3312
        %v3352 = vmul.f32 %v654, %v3312
        %v3353 = vmul.f32 %v661, %v3312
        %v3354 = vmul.f32 %v665, %v3312
        %v3355 = vmul.f32 %v672, %v3312
        %v3356 = vmul.f32 %v676, %v3312
        %v3357 = vmul.f32 %v683, %v3312
        %v3358 = vmul.f32 %v687, %v3312
        %v3359 = vmul.f32 %v694, %v3312
        %v3360 = vmul.f32 %v698, %v3312
        %v3361 = vmul.f32 %v705, %v3312
        %v3362 = vmul.f32 %v709, %v3312
        %v3363 = vmul.f32 %v716, %v3312
        %v3364 = vmul.f32 %v720, %v3312
        %v3365 = vmul.f32 %v727, %v3312
        %v3366 = vmul.f32 %v731, %v3312
        %v3367 = vmul.f32 %v738, %v3312
        %v3368 = vmul.f32 %v742, %v3312
        %v3369 = vmul.f32 %v749, %v3312
        %v3370 = vmul.f32 %v753, %v3312
        %v3371 = vmul.f32 %v760, %v3312
        %v3372 = vmul.f32 %v764, %v3312
        %v3373 = vmul.f32 %v771, %v3312
        %v3374 = vmul.f32 %v775, %v3312
        %v3375 = vmul.f32 %v782, %v3312
        %v3376 = vmul.f32 %v786, %v3312
        %v3377 = vadd.f32 %v3245, %v3313
        %v3378 = vadd.f32 %v3246, %v3314
        %v3379 = vadd.f32 %v3247, %v3315
        %v3380 = vadd.f32 %v3248, %v3316
        %v3381 = vadd.f32 %v3249, %v3317
        %v3382 = vadd.f32 %v3250, %v3318
        %v3383 = vadd.f32 %v3251, %v3319
        %v3384 = vadd.f32 %v3252, %v3320
        %v3385 = vadd.f32 %v3253, %v3321
        %v3386 = vadd.f32 %v3254, %v3322
        %v3387 = vadd.f32 %v3255, %v3323
        %v3388 = vadd.f32 %v3256, %v3324
        %v3389 = vadd.f32 %v3257, %v3325
        %v3390 = vadd.f32 %v3258, %v3326
        %v3391 = vadd.f32 %v3259, %v3327
        %v3392 = vadd.f32 %v3260, %v3328
        %v3393 = vadd.f32 %v3261, %v3329
        %v3394 = vadd.f32 %v3262, %v3330
        %v3395 = vadd.f32 %v3263, %v3331
        %v3396 = vadd.f32 %v3264, %v3332
        %v3397 = vadd.f32 %v3265, %v3333
        %v3398 = vadd.f32 %v3266, %v3334
        %v3399 = vadd.f32 %v3267, %v3335
        %v3400 = vadd.f32 %v3268, %v3336
        %v3401 = vadd.f32 %v3269, %v3337
        %v3402 = vadd.f32 %v3270, %v3338
        %v3403 = vadd.f32 %v3271, %v3339
        %v3404 = vadd.f32 %v3272, %v3340
        %v3405 = vadd.f32 %v3273, %v3341
        %v3406 = vadd.f32 %v3274, %v3342
        %v3407 = vadd.f32 %v3275, %v3343
        %v3408 = vadd.f32 %v3276, %v3344
        %v3409 = vadd.f32 %v3277, %v3345
        %v3410 = vadd.f32 %v3278, %v3346
        %v3411 = vadd.f32 %v3279, %v3347
        %v3412 = vadd.f32 %v3280, %v3348
        %v3413 = vadd.f32 %v3281, %v3349
        %v3414 = vadd.f32 %v3282, %v3350
        %v3415 = vadd.f32 %v3283, %v3351
        %v3416 = vadd.f32 %v3284, %v3352
        %v3417 = vadd.f32 %v3285, %v3353
        %v3418 = vadd.f32 %v3286, %v3354
        %v3419 = vadd.f32 %v3287, %v3355
        %v3420 = vadd.f32 %v3288, %v3356
        %v3421 = vadd.f32 %v3289, %v3357
        %v3422 = vadd.f32 %v3290, %v3358
        %v3423 = vadd.f32 %v3291, %v3359
        %v3424 = vadd.f32 %v3292, %v3360
        %v3425 = vadd.f32 %v3293, %v3361
        %v3426 = vadd.f32 %v3294, %v3362
        %v3427 = vadd.f32 %v3295, %v3363
        %v3428 = vadd.f32 %v3296, %v3364
        %v3429 = vadd.f32 %v3297, %v3365
        %v3430 = vadd.f32 %v3298, %v3366
        %v3431 = vadd.f32 %v3299, %v3367
        %v3432 = vadd.f32 %v3300, %v3368
        %v3433 = vadd.f32 %v3301, %v3369
        %v3434 = vadd.f32 %v3302, %v3370
        %v3435 = vadd.f32 %v3303, %v3371
        %v3436 = vadd.f32 %v3304, %v3372
        %v3437 = vadd.f32 %v3305, %v3373
        %v3438 = vadd.f32 %v3306, %v3374
        %v3439 = vadd.f32 %v3307, %v3375
        %v3440 = vadd.f32 %v3308, %v3376
        %v3441 = vlaneseq
        %v3442 = vshrl.u32 %v3441, 7
        %v3443 = vsub.s32 3, %v3442
        %v3444 = vrot.slane %v2532, %v3443
        %v3445 = vmul.f32 %v798, %v3444
        %v3446 = vmul.f32 %v802, %v3444
        %v3447 = vmul.f32 %v809, %v3444
        %v3448 = vmul.f32 %v813, %v3444
        %v3449 = vmul.f32 %v820, %v3444
        %v3450 = vmul.f32 %v824, %v3444
        %v3451 = vmul.f32 %v831, %v3444
        %v3452 = vmul.f32 %v835, %v3444
        %v3453 = vmul.f32 %v842, %v3444
        %v3454 = vmul.f32 %v846, %v3444
        %v3455 = vmul.f32 %v853, %v3444
        %v3456 = vmul.f32 %v857, %v3444
        %v3457 = vmul.f32 %v864, %v3444
        %v3458 = vmul.f32 %v868, %v3444
        %v3459 = vmul.f32 %v875, %v3444
        %v3460 = vmul.f32 %v879, %v3444
        %v3461 = vmul.f32 %v886, %v3444
        %v3462 = vmul.f32 %v890, %v3444
        %v3463 = vmul.f32 %v897, %v3444
        %v3464 = vmul.f32 %v901, %v3444
        %v3465 = vmul.f32 %v908, %v3444
        %v3466 = vmul.f32 %v912, %v3444
        %v3467 = vmul.f32 %v919, %v3444
        %v3468 = vmul.f32 %v923, %v3444
        %v3469 = vmul.f32 %v930, %v3444
        %v3470 = vmul.f32 %v934, %v3444
        %v3471 = vmul.f32 %v941, %v3444
        %v3472 = vmul.f32 %v945, %v3444
        %v3473 = vmul.f32 %v952, %v3444
        %v3474 = vmul.f32 %v956, %v3444
        %v3475 = vmul.f32 %v963, %v3444
        %v3476 = vmul.f32 %v967, %v3444
        %v3477 = vmul.f32 %v974, %v3444
        %v3478 = vmul.f32 %v978, %v3444
        %v3479 = vmul.f32 %v985, %v3444
        %v3480 = vmul.f32 %v989, %v3444
        %v3481 = vmul.f32 %v996, %v3444
        %v3482 = vmul.f32 %v1000, %v3444
        %v3483 = vmul.f32 %v1007, %v3444
        %v3484 = vmul.f32 %v1011, %v3444
        %v3485 = vmul.f32 %v1018, %v3444
        %v3486 = vmul.f32 %v1022, %v3444
        %v3487 = vmul.f32 %v1029, %v3444
        %v3488 = vmul.f32 %v1033, %v3444
        %v3489 = vmul.f32 %v1040, %v3444
        %v3490 = vmul.f32 %v1044, %v3444
        %v3491 = vmul.f32 %v1051, %v3444
        %v3492 = vmul.f32 %v1055, %v3444
        %v3493 = vmul.f32 %v1062, %v3444
        %v3494 = vmul.f32 %v1066, %v3444
        %v3495 = vmul.f32 %v1073, %v3444
        %v3496 = vmul.f32 %v1077, %v3444
        %v3497 = vmul.f32 %v1084, %v3444
        %v3498 = vmul.f32 %v1088, %v3444
        %v3499 = vmul.f32 %v1095, %v3444
        %v3500 = vmul.f32 %v1099, %v3444
        %v3501 = vmul.f32 %v1106, %v3444
        %v3502 = vmul.f32 %v1110, %v3444
        %v3503 = vmul.f32 %v1117, %v3444
        %v3504 = vmul.f32 %v1121, %v3444
        %v3505 = vmul.f32 %v1128, %v3444
        %v3506 = vmul.f32 %v1132, %v3444
        %v3507 = vmul.f32 %v1139, %v3444
        %v3508 = vmul.f32 %v1143, %v3444
        %v3509 = vadd.f32 %v3377, %v3445
        %v3510 = vadd.f32 %v3378, %v3446
        %v3511 = vadd.f32 %v3379, %v3447
        %v3512 = vadd.f32 %v3380, %v3448
        %v3513 = vadd.f32 %v3381, %v3449
        %v3514 = vadd.f32 %v3382, %v3450
        %v3515 = vadd.f32 %v3383, %v3451
        %v3516 = vadd.f32 %v3384, %v3452
        %v3517 = vadd.f32 %v3385, %v3453
        %v3518 = vadd.f32 %v3386, %v3454
        %v3519 = vadd.f32 %v3387, %v3455
        %v3520 = vadd.f32 %v3388, %v3456
        %v3521 = vadd.f32 %v3389, %v3457
        %v3522 = vadd.f32 %v3390, %v3458
        %v3523 = vadd.f32 %v3391, %v3459
        %v3524 = vadd.f32 %v3392, %v3460
        %v3525 = vadd.f32 %v3393, %v3461
        %v3526 = vadd.f32 %v3394, %v3462
        %v3527 = vadd.f32 %v3395, %v3463
        %v3528 = vadd.f32 %v3396, %v3464
        %v3529 = vadd.f32 %v3397, %v3465
        %v3530 = vadd.f32 %v3398, %v3466
        %v3531 = vadd.f32 %v3399, %v3467
        %v3532 = vadd.f32 %v3400, %v3468
        %v3533 = vadd.f32 %v3401, %v3469
        %v3534 = vadd.f32 %v3402, %v3470
        %v3535 = vadd.f32 %v3403, %v3471
        %v3536 = vadd.f32 %v3404, %v3472
        %v3537 = vadd.f32 %v3405, %v3473
        %v3538 = vadd.f32 %v3406, %v3474
        %v3539 = vadd.f32 %v3407, %v3475
        %v3540 = vadd.f32 %v3408, %v3476
        %v3541 = vadd.f32 %v3409, %v3477
        %v3542 = vadd.f32 %v3410, %v3478
        %v3543 = vadd.f32 %v3411, %v3479
        %v3544 = vadd.f32 %v3412, %v3480
        %v3545 = vadd.f32 %v3413, %v3481
        %v3546 = vadd.f32 %v3414, %v3482
        %v3547 = vadd.f32 %v3415, %v3483
        %v3548 = vadd.f32 %v3416, %v3484
        %v3549 = vadd.f32 %v3417, %v3485
        %v3550 = vadd.f32 %v3418, %v3486
        %v3551 = vadd.f32 %v3419, %v3487
        %v3552 = vadd.f32 %v3420, %v3488
        %v3553 = vadd.f32 %v3421, %v3489
        %v3554 = vadd.f32 %v3422, %v3490
        %v3555 = vadd.f32 %v3423, %v3491
        %v3556 = vadd.f32 %v3424, %v3492
        %v3557 = vadd.f32 %v3425, %v3493
        %v3558 = vadd.f32 %v3426, %v3494
        %v3559 = vadd.f32 %v3427, %v3495
        %v3560 = vadd.f32 %v3428, %v3496
        %v3561 = vadd.f32 %v3429, %v3497
        %v3562 = vadd.f32 %v3430, %v3498
        %v3563 = vadd.f32 %v3431, %v3499
        %v3564 = vadd.f32 %v3432, %v3500
        %v3565 = vadd.f32 %v3433, %v3501
        %v3566 = vadd.f32 %v3434, %v3502
        %v3567 = vadd.f32 %v3435, %v3503
        %v3568 = vadd.f32 %v3436, %v3504
        %v3569 = vadd.f32 %v3437, %v3505
        %v3570 = vadd.f32 %v3438, %v3506
        %v3571 = vadd.f32 %v3439, %v3507
        %v3572 = vadd.f32 %v3440, %v3508
        %v3573 = vlaneseq
        %v3574 = vshrl.u32 %v3573, 7
        %v3575 = vsub.s32 4, %v3574
        %v3576 = vrot.slane %v2532, %v3575
        %v3577 = vmul.f32 %v1155, %v3576
        %v3578 = vmul.f32 %v1159, %v3576
        %v3579 = vmul.f32 %v1166, %v3576
        %v3580 = vmul.f32 %v1170, %v3576
        %v3581 = vmul.f32 %v1177, %v3576
        %v3582 = vmul.f32 %v1181, %v3576
        %v3583 = vmul.f32 %v1188, %v3576
        %v3584 = vmul.f32 %v1192, %v3576
        %v3585 = vmul.f32 %v1199, %v3576
        %v3586 = vmul.f32 %v1203, %v3576
        %v3587 = vmul.f32 %v1210, %v3576
        %v3588 = vmul.f32 %v1214, %v3576
        %v3589 = vmul.f32 %v1221, %v3576
        %v3590 = vmul.f32 %v1225, %v3576
        %v3591 = vmul.f32 %v1232, %v3576
        %v3592 = vmul.f32 %v1236, %v3576
        %v3593 = vmul.f32 %v1243, %v3576
        %v3594 = vmul.f32 %v1247, %v3576
        %v3595 = vmul.f32 %v1254, %v3576
        %v3596 = vmul.f32 %v1258, %v3576
        %v3597 = vmul.f32 %v1265, %v3576
        %v3598 = vmul.f32 %v1269, %v3576
        %v3599 = vmul.f32 %v1276, %v3576
        %v3600 = vmul.f32 %v1280, %v3576
        %v3601 = vmul.f32 %v1287, %v3576
        %v3602 = vmul.f32 %v1291, %v3576
        %v3603 = vmul.f32 %v1298, %v3576
        %v3604 = vmul.f32 %v1302, %v3576
        %v3605 = vmul.f32 %v1309, %v3576
        %v3606 = vmul.f32 %v1313, %v3576
        %v3607 = vmul.f32 %v1320, %v3576
        %v3608 = vmul.f32 %v1324, %v3576
        %v3609 = vmul.f32 %v1331, %v3576
        %v3610 = vmul.f32 %v1335, %v3576
        %v3611 = vmul.f32 %v1342, %v3576
        %v3612 = vmul.f32 %v1346, %v3576
        %v3613 = vmul.f32 %v1353, %v3576
        %v3614 = vmul.f32 %v1357, %v3576
        %v3615 = vmul.f32 %v1364, %v3576
        %v3616 = vmul.f32 %v1368, %v3576
        %v3617 = vmul.f32 %v1375, %v3576
        %v3618 = vmul.f32 %v1379, %v3576
        %v3619 = vmul.f32 %v1386, %v3576
        %v3620 = vmul.f32 %v1390, %v3576
        %v3621 = vmul.f32 %v1397, %v3576
        %v3622 = vmul.f32 %v1401, %v3576
        %v3623 = vmul.f32 %v1408, %v3576
        %v3624 = vmul.f32 %v1412, %v3576
        %v3625 = vmul.f32 %v1419, %v3576
        %v3626 = vmul.f32 %v1423, %v3576
        %v3627 = vmul.f32 %v1430, %v3576
        %v3628 = vmul.f32 %v1434, %v3576
        %v3629 = vmul.f32 %v1441, %v3576
        %v3630 = vmul.f32 %v1445, %v3576
        %v3631 = vmul.f32 %v1452, %v3576
        %v3632 = vmul.f32 %v1456, %v3576
        %v3633 = vmul.f32 %v1463, %v3576
        %v3634 = vmul.f32 %v1467, %v3576
        %v3635 = vmul.f32 %v1474, %v3576
        %v3636 = vmul.f32 %v1478, %v3576
        %v3637 = vmul.f32 %v1485, %v3576
        %v3638 = vmul.f32 %v1489, %v3576
        %v3639 = vmul.f32 %v1496, %v3576
        %v3640 = vmul.f32 %v1500, %v3576
        %v3641 = vadd.f32 %v3509, %v3577
        %v3642 = vadd.f32 %v3510, %v3578
        %v3643 = vadd.f32 %v3511, %v3579
        %v3644 = vadd.f32 %v3512, %v3580
        %v3645 = vadd.f32 %v3513, %v3581
        %v3646 = vadd.f32 %v3514, %v3582
        %v3647 = vadd.f32 %v3515, %v3583
        %v3648 = vadd.f32 %v3516, %v3584
        %v3649 = vadd.f32 %v3517, %v3585
        %v3650 = vadd.f32 %v3518, %v3586
        %v3651 = vadd.f32 %v3519, %v3587
        %v3652 = vadd.f32 %v3520, %v3588
        %v3653 = vadd.f32 %v3521, %v3589
        %v3654 = vadd.f32 %v3522, %v3590
        %v3655 = vadd.f32 %v3523, %v3591
        %v3656 = vadd.f32 %v3524, %v3592
        %v3657 = vadd.f32 %v3525, %v3593
        %v3658 = vadd.f32 %v3526, %v3594
        %v3659 = vadd.f32 %v3527, %v3595
        %v3660 = vadd.f32 %v3528, %v3596
        %v3661 = vadd.f32 %v3529, %v3597
        %v3662 = vadd.f32 %v3530, %v3598
        %v3663 = vadd.f32 %v3531, %v3599
        %v3664 = vadd.f32 %v3532, %v3600
        %v3665 = vadd.f32 %v3533, %v3601
        %v3666 = vadd.f32 %v3534, %v3602
        %v3667 = vadd.f32 %v3535, %v3603
        %v3668 = vadd.f32 %v3536, %v3604
        %v3669 = vadd.f32 %v3537, %v3605
        %v3670 = vadd.f32 %v3538, %v3606
        %v3671 = vadd.f32 %v3539, %v3607
        %v3672 = vadd.f32 %v3540, %v3608
        %v3673 = vadd.f32 %v3541, %v3609
        %v3674 = vadd.f32 %v3542, %v3610
        %v3675 = vadd.f32 %v3543, %v3611
        %v3676 = vadd.f32 %v3544, %v3612
        %v3677 = vadd.f32 %v3545, %v3613
        %v3678 = vadd.f32 %v3546, %v3614
        %v3679 = vadd.f32 %v3547, %v3615
        %v3680 = vadd.f32 %v3548, %v3616
        %v3681 = vadd.f32 %v3549, %v3617
        %v3682 = vadd.f32 %v3550, %v3618
        %v3683 = vadd.f32 %v3551, %v3619
        %v3684 = vadd.f32 %v3552, %v3620
        %v3685 = vadd.f32 %v3553, %v3621
        %v3686 = vadd.f32 %v3554, %v3622
        %v3687 = vadd.f32 %v3555, %v3623
        %v3688 = vadd.f32 %v3556, %v3624
        %v3689 = vadd.f32 %v3557, %v3625
        %v3690 = vadd.f32 %v3558, %v3626
        %v3691 = vadd.f32 %v3559, %v3627
        %v3692 = vadd.f32 %v3560, %v3628
        %v3693 = vadd.f32 %v3561, %v3629
        %v3694 = vadd.f32 %v3562, %v3630
        %v3695 = vadd.f32 %v3563, %v3631
        %v3696 = vadd.f32 %v3564, %v3632
        %v3697 = vadd.f32 %v3565, %v3633
        %v3698 = vadd.f32 %v3566, %v3634
        %v3699 = vadd.f32 %v3567, %v3635
        %v3700 = vadd.f32 %v3568, %v3636
        %v3701 = vadd.f32 %v3569, %v3637
        %v3702 = vadd.f32 %v3570, %v3638
        %v3703 = vadd.f32 %v3571, %v3639
        %v3704 = vadd.f32 %v3572, %v3640
        %v3705 = vmul.f32 %v441, %v2824
        %v3706 = vmul.f32 %v445, %v2824
        %v3707 = vmul.f32 %v452, %v2824
        %v3708 = vmul.f32 %v456, %v2824
        %v3709 = vmul.f32 %v463, %v2824
        %v3710 = vmul.f32 %v467, %v2824
        %v3711 = vmul.f32 %v474, %v2824
        %v3712 = vmul.f32 %v478, %v2824
        %v3713 = vmul.f32 %v485, %v2824
        %v3714 = vmul.f32 %v489, %v2824
        %v3715 = vmul.f32 %v496, %v2824
        %v3716 = vmul.f32 %v500, %v2824
        %v3717 = vmul.f32 %v507, %v2824
        %v3718 = vmul.f32 %v511, %v2824
        %v3719 = vmul.f32 %v518, %v2824
        %v3720 = vmul.f32 %v522, %v2824
        %v3721 = vmul.f32 %v529, %v2824
        %v3722 = vmul.f32 %v533, %v2824
        %v3723 = vmul.f32 %v540, %v2824
        %v3724 = vmul.f32 %v544, %v2824
        %v3725 = vmul.f32 %v551, %v2824
        %v3726 = vmul.f32 %v555, %v2824
        %v3727 = vmul.f32 %v562, %v2824
        %v3728 = vmul.f32 %v566, %v2824
        %v3729 = vmul.f32 %v573, %v2824
        %v3730 = vmul.f32 %v577, %v2824
        %v3731 = vmul.f32 %v584, %v2824
        %v3732 = vmul.f32 %v588, %v2824
        %v3733 = vmul.f32 %v595, %v2824
        %v3734 = vmul.f32 %v599, %v2824
        %v3735 = vmul.f32 %v606, %v2824
        %v3736 = vmul.f32 %v610, %v2824
        %v3737 = vmul.f32 %v617, %v2824
        %v3738 = vmul.f32 %v621, %v2824
        %v3739 = vmul.f32 %v628, %v2824
        %v3740 = vmul.f32 %v632, %v2824
        %v3741 = vmul.f32 %v639, %v2824
        %v3742 = vmul.f32 %v643, %v2824
        %v3743 = vmul.f32 %v650, %v2824
        %v3744 = vmul.f32 %v654, %v2824
        %v3745 = vmul.f32 %v661, %v2824
        %v3746 = vmul.f32 %v665, %v2824
        %v3747 = vmul.f32 %v672, %v2824
        %v3748 = vmul.f32 %v676, %v2824
        %v3749 = vmul.f32 %v683, %v2824
        %v3750 = vmul.f32 %v687, %v2824
        %v3751 = vmul.f32 %v694, %v2824
        %v3752 = vmul.f32 %v698, %v2824
        %v3753 = vmul.f32 %v705, %v2824
        %v3754 = vmul.f32 %v709, %v2824
        %v3755 = vmul.f32 %v716, %v2824
        %v3756 = vmul.f32 %v720, %v2824
        %v3757 = vmul.f32 %v727, %v2824
        %v3758 = vmul.f32 %v731, %v2824
        %v3759 = vmul.f32 %v738, %v2824
        %v3760 = vmul.f32 %v742, %v2824
        %v3761 = vmul.f32 %v749, %v2824
        %v3762 = vmul.f32 %v753, %v2824
        %v3763 = vmul.f32 %v760, %v2824
        %v3764 = vmul.f32 %v764, %v2824
        %v3765 = vmul.f32 %v771, %v2824
        %v3766 = vmul.f32 %v775, %v2824
        %v3767 = vmul.f32 %v782, %v2824
        %v3768 = vmul.f32 %v786, %v2824
        %v3769 = vmul.f32 %v798, %v3180
        %v3770 = vmul.f32 %v802, %v3180
        %v3771 = vmul.f32 %v809, %v3180
        %v3772 = vmul.f32 %v813, %v3180
        %v3773 = vmul.f32 %v820, %v3180
        %v3774 = vmul.f32 %v824, %v3180
        %v3775 = vmul.f32 %v831, %v3180
        %v3776 = vmul.f32 %v835, %v3180
        %v3777 = vmul.f32 %v842, %v3180
        %v3778 = vmul.f32 %v846, %v3180
        %v3779 = vmul.f32 %v853, %v3180
        %v3780 = vmul.f32 %v857, %v3180
        %v3781 = vmul.f32 %v864, %v3180
        %v3782 = vmul.f32 %v868, %v3180
        %v3783 = vmul.f32 %v875, %v3180
        %v3784 = vmul.f32 %v879, %v3180
        %v3785 = vmul.f32 %v886, %v3180
        %v3786 = vmul.f32 %v890, %v3180
        %v3787 = vmul.f32 %v897, %v3180
        %v3788 = vmul.f32 %v901, %v3180
        %v3789 = vmul.f32 %v908, %v3180
        %v3790 = vmul.f32 %v912, %v3180
        %v3791 = vmul.f32 %v919, %v3180
        %v3792 = vmul.f32 %v923, %v3180
        %v3793 = vmul.f32 %v930, %v3180
        %v3794 = vmul.f32 %v934, %v3180
        %v3795 = vmul.f32 %v941, %v3180
        %v3796 = vmul.f32 %v945, %v3180
        %v3797 = vmul.f32 %v952, %v3180
        %v3798 = vmul.f32 %v956, %v3180
        %v3799 = vmul.f32 %v963, %v3180
        %v3800 = vmul.f32 %v967, %v3180
        %v3801 = vmul.f32 %v974, %v3180
        %v3802 = vmul.f32 %v978, %v3180
        %v3803 = vmul.f32 %v985, %v3180
        %v3804 = vmul.f32 %v989, %v3180
        %v3805 = vmul.f32 %v996, %v3180
        %v3806 = vmul.f32 %v1000, %v3180
        %v3807 = vmul.f32 %v1007, %v3180
        %v3808 = vmul.f32 %v1011, %v3180
        %v3809 = vmul.f32 %v1018, %v3180
        %v3810 = vmul.f32 %v1022, %v3180
        %v3811 = vmul.f32 %v1029, %v3180
        %v3812 = vmul.f32 %v1033, %v3180
        %v3813 = vmul.f32 %v1040, %v3180
        %v3814 = vmul.f32 %v1044, %v3180
        %v3815 = vmul.f32 %v1051, %v3180
        %v3816 = vmul.f32 %v1055, %v3180
        %v3817 = vmul.f32 %v1062, %v3180
        %v3818 = vmul.f32 %v1066, %v3180
        %v3819 = vmul.f32 %v1073, %v3180
        %v3820 = vmul.f32 %v1077, %v3180
        %v3821 = vmul.f32 %v1084, %v3180
        %v3822 = vmul.f32 %v1088, %v3180
        %v3823 = vmul.f32 %v1095, %v3180
        %v3824 = vmul.f32 %v1099, %v3180
        %v3825 = vmul.f32 %v1106, %v3180
        %v3826 = vmul.f32 %v1110, %v3180
        %v3827 = vmul.f32 %v1117, %v3180
        %v3828 = vmul.f32 %v1121, %v3180
        %v3829 = vmul.f32 %v1128, %v3180
        %v3830 = vmul.f32 %v1132, %v3180
        %v3831 = vmul.f32 %v1139, %v3180
        %v3832 = vmul.f32 %v1143, %v3180
        %v3833 = vadd.f32 %v3705, %v3769
        %v3834 = vadd.f32 %v3706, %v3770
        %v3835 = vadd.f32 %v3707, %v3771
        %v3836 = vadd.f32 %v3708, %v3772
        %v3837 = vadd.f32 %v3709, %v3773
        %v3838 = vadd.f32 %v3710, %v3774
        %v3839 = vadd.f32 %v3711, %v3775
        %v3840 = vadd.f32 %v3712, %v3776
        %v3841 = vadd.f32 %v3713, %v3777
        %v3842 = vadd.f32 %v3714, %v3778
        %v3843 = vadd.f32 %v3715, %v3779
        %v3844 = vadd.f32 %v3716, %v3780
        %v3845 = vadd.f32 %v3717, %v3781
        %v3846 = vadd.f32 %v3718, %v3782
        %v3847 = vadd.f32 %v3719, %v3783
        %v3848 = vadd.f32 %v3720, %v3784
        %v3849 = vadd.f32 %v3721, %v3785
        %v3850 = vadd.f32 %v3722, %v3786
        %v3851 = vadd.f32 %v3723, %v3787
        %v3852 = vadd.f32 %v3724, %v3788
        %v3853 = vadd.f32 %v3725, %v3789
        %v3854 = vadd.f32 %v3726, %v3790
        %v3855 = vadd.f32 %v3727, %v3791
        %v3856 = vadd.f32 %v3728, %v3792
        %v3857 = vadd.f32 %v3729, %v3793
        %v3858 = vadd.f32 %v3730, %v3794
        %v3859 = vadd.f32 %v3731, %v3795
        %v3860 = vadd.f32 %v3732, %v3796
        %v3861 = vadd.f32 %v3733, %v3797
        %v3862 = vadd.f32 %v3734, %v3798
        %v3863 = vadd.f32 %v3735, %v3799
        %v3864 = vadd.f32 %v3736, %v3800
        %v3865 = vadd.f32 %v3737, %v3801
        %v3866 = vadd.f32 %v3738, %v3802
        %v3867 = vadd.f32 %v3739, %v3803
        %v3868 = vadd.f32 %v3740, %v3804
        %v3869 = vadd.f32 %v3741, %v3805
        %v3870 = vadd.f32 %v3742, %v3806
        %v3871 = vadd.f32 %v3743, %v3807
        %v3872 = vadd.f32 %v3744, %v3808
        %v3873 = vadd.f32 %v3745, %v3809
        %v3874 = vadd.f32 %v3746, %v3810
        %v3875 = vadd.f32 %v3747, %v3811
        %v3876 = vadd.f32 %v3748, %v3812
        %v3877 = vadd.f32 %v3749, %v3813
        %v3878 = vadd.f32 %v3750, %v3814
        %v3879 = vadd.f32 %v3751, %v3815
        %v3880 = vadd.f32 %v3752, %v3816
        %v3881 = vadd.f32 %v3753, %v3817
        %v3882 = vadd.f32 %v3754, %v3818
        %v3883 = vadd.f32 %v3755, %v3819
        %v3884 = vadd.f32 %v3756, %v3820
        %v3885 = vadd.f32 %v3757, %v3821
        %v3886 = vadd.f32 %v3758, %v3822
        %v3887 = vadd.f32 %v3759, %v3823
        %v3888 = vadd.f32 %v3760, %v3824
        %v3889 = vadd.f32 %v3761, %v3825
        %v3890 = vadd.f32 %v3762, %v3826
        %v3891 = vadd.f32 %v3763, %v3827
        %v3892 = vadd.f32 %v3764, %v3828
        %v3893 = vadd.f32 %v3765, %v3829
        %v3894 = vadd.f32 %v3766, %v3830
        %v3895 = vadd.f32 %v3767, %v3831
        %v3896 = vadd.f32 %v3768, %v3832
        %v3897 = vmul.f32 %v1155, %v3312
        %v3898 = vmul.f32 %v1159, %v3312
        %v3899 = vmul.f32 %v1166, %v3312
        %v3900 = vmul.f32 %v1170, %v3312
        %v3901 = vmul.f32 %v1177, %v3312
        %v3902 = vmul.f32 %v1181, %v3312
        %v3903 = vmul.f32 %v1188, %v3312
        %v3904 = vmul.f32 %v1192, %v3312
        %v3905 = vmul.f32 %v1199, %v3312
        %v3906 = vmul.f32 %v1203, %v3312
        %v3907 = vmul.f32 %v1210, %v3312
        %v3908 = vmul.f32 %v1214, %v3312
        %v3909 = vmul.f32 %v1221, %v3312
        %v3910 = vmul.f32 %v1225, %v3312
        %v3911 = vmul.f32 %v1232, %v3312
        %v3912 = vmul.f32 %v1236, %v3312
        %v3913 = vmul.f32 %v1243, %v3312
        %v3914 = vmul.f32 %v1247, %v3312
        %v3915 = vmul.f32 %v1254, %v3312
        %v3916 = vmul.f32 %v1258, %v3312
        %v3917 = vmul.f32 %v1265, %v3312
        %v3918 = vmul.f32 %v1269, %v3312
        %v3919 = vmul.f32 %v1276, %v3312
        %v3920 = vmul.f32 %v1280, %v3312
        %v3921 = vmul.f32 %v1287, %v3312
        %v3922 = vmul.f32 %v1291, %v3312
        %v3923 = vmul.f32 %v1298, %v3312
        %v3924 = vmul.f32 %v1302, %v3312
        %v3925 = vmul.f32 %v1309, %v3312
        %v3926 = vmul.f32 %v1313, %v3312
        %v3927 = vmul.f32 %v1320, %v3312
        %v3928 = vmul.f32 %v1324, %v3312
        %v3929 = vmul.f32 %v1331, %v3312
        %v3930 = vmul.f32 %v1335, %v3312
        %v3931 = vmul.f32 %v1342, %v3312
        %v3932 = vmul.f32 %v1346, %v3312
        %v3933 = vmul.f32 %v1353, %v3312
        %v3934 = vmul.f32 %v1357, %v3312
        %v3935 = vmul.f32 %v1364, %v3312
        %v3936 = vmul.f32 %v1368, %v3312
        %v3937 = vmul.f32 %v1375, %v3312
        %v3938 = vmul.f32 %v1379, %v3312
        %v3939 = vmul.f32 %v1386, %v3312
        %v3940 = vmul.f32 %v1390, %v3312
        %v3941 = vmul.f32 %v1397, %v3312
        %v3942 = vmul.f32 %v1401, %v3312
        %v3943 = vmul.f32 %v1408, %v3312
        %v3944 = vmul.f32 %v1412, %v3312
        %v3945 = vmul.f32 %v1419, %v3312
        %v3946 = vmul.f32 %v1423, %v3312
        %v3947 = vmul.f32 %v1430, %v3312
        %v3948 = vmul.f32 %v1434, %v3312
        %v3949 = vmul.f32 %v1441, %v3312
        %v3950 = vmul.f32 %v1445, %v3312
        %v3951 = vmul.f32 %v1452, %v3312
        %v3952 = vmul.f32 %v1456, %v3312
        %v3953 = vmul.f32 %v1463, %v3312
        %v3954 = vmul.f32 %v1467, %v3312
        %v3955 = vmul.f32 %v1474, %v3312
        %v3956 = vmul.f32 %v1478, %v3312
        %v3957 = vmul.f32 %v1485, %v3312
        %v3958 = vmul.f32 %v1489, %v3312
        %v3959 = vmul.f32 %v1496, %v3312
        %v3960 = vmul.f32 %v1500, %v3312
        %v3961 = vadd.f32 %v3833, %v3897
        %v3962 = vadd.f32 %v3834, %v3898
        %v3963 = vadd.f32 %v3835, %v3899
        %v3964 = vadd.f32 %v3836, %v3900
        %v3965 = vadd.f32 %v3837, %v3901
        %v3966 = vadd.f32 %v3838, %v3902
        %v3967 = vadd.f32 %v3839, %v3903
        %v3968 = vadd.f32 %v3840, %v3904
        %v3969 = vadd.f32 %v3841, %v3905
        %v3970 = vadd.f32 %v3842, %v3906
        %v3971 = vadd.f32 %v3843, %v3907
        %v3972 = vadd.f32 %v3844, %v3908
        %v3973 = vadd.f32 %v3845, %v3909
        %v3974 = vadd.f32 %v3846, %v3910
        %v3975 = vadd.f32 %v3847, %v3911
        %v3976 = vadd.f32 %v3848, %v3912
        %v3977 = vadd.f32 %v3849, %v3913
        %v3978 = vadd.f32 %v3850, %v3914
        %v3979 = vadd.f32 %v3851, %v3915
        %v3980 = vadd.f32 %v3852, %v3916
        %v3981 = vadd.f32 %v3853, %v3917
        %v3982 = vadd.f32 %v3854, %v3918
        %v3983 = vadd.f32 %v3855, %v3919
        %v3984 = vadd.f32 %v3856, %v3920
        %v3985 = vadd.f32 %v3857, %v3921
        %v3986 = vadd.f32 %v3858, %v3922
        %v3987 = vadd.f32 %v3859, %v3923
        %v3988 = vadd.f32 %v3860, %v3924
        %v3989 = vadd.f32 %v3861, %v3925
        %v3990 = vadd.f32 %v3862, %v3926
        %v3991 = vadd.f32 %v3863, %v3927
        %v3992 = vadd.f32 %v3864, %v3928
        %v3993 = vadd.f32 %v3865, %v3929
        %v3994 = vadd.f32 %v3866, %v3930
        %v3995 = vadd.f32 %v3867, %v3931
        %v3996 = vadd.f32 %v3868, %v3932
        %v3997 = vadd.f32 %v3869, %v3933
        %v3998 = vadd.f32 %v3870, %v3934
        %v3999 = vadd.f32 %v3871, %v3935
        %v4000 = vadd.f32 %v3872, %v3936
        %v4001 = vadd.f32 %v3873, %v3937
        %v4002 = vadd.f32 %v3874, %v3938
        %v4003 = vadd.f32 %v3875, %v3939
        %v4004 = vadd.f32 %v3876, %v3940
        %v4005 = vadd.f32 %v3877, %v3941
        %v4006 = vadd.f32 %v3878, %v3942
        %v4007 = vadd.f32 %v3879, %v3943
        %v4008 = vadd.f32 %v3880, %v3944
        %v4009 = vadd.f32 %v3881, %v3945
        %v4010 = vadd.f32 %v3882, %v3946
        %v4011 = vadd.f32 %v3883, %v3947
        %v4012 = vadd.f32 %v3884, %v3948
        %v4013 = vadd.f32 %v3885, %v3949
        %v4014 = vadd.f32 %v3886, %v3950
        %v4015 = vadd.f32 %v3887, %v3951
        %v4016 = vadd.f32 %v3888, %v3952
        %v4017 = vadd.f32 %v3889, %v3953
        %v4018 = vadd.f32 %v3890, %v3954
        %v4019 = vadd.f32 %v3891, %v3955
        %v4020 = vadd.f32 %v3892, %v3956
        %v4021 = vadd.f32 %v3893, %v3957
        %v4022 = vadd.f32 %v3894, %v3958
        %v4023 = vadd.f32 %v3895, %v3959
        %v4024 = vadd.f32 %v3896, %v3960
        %v4025 = vmul.f32 %v1512, %v3444
        %v4026 = vmul.f32 %v1516, %v3444
        %v4027 = vmul.f32 %v1523, %v3444
        %v4028 = vmul.f32 %v1527, %v3444
        %v4029 = vmul.f32 %v1534, %v3444
        %v4030 = vmul.f32 %v1538, %v3444
        %v4031 = vmul.f32 %v1545, %v3444
        %v4032 = vmul.f32 %v1549, %v3444
        %v4033 = vmul.f32 %v1556, %v3444
        %v4034 = vmul.f32 %v1560, %v3444
        %v4035 = vmul.f32 %v1567, %v3444
        %v4036 = vmul.f32 %v1571, %v3444
        %v4037 = vmul.f32 %v1578, %v3444
        %v4038 = vmul.f32 %v1582, %v3444
        %v4039 = vmul.f32 %v1589, %v3444
        %v4040 = vmul.f32 %v1593, %v3444
        %v4041 = vmul.f32 %v1600, %v3444
        %v4042 = vmul.f32 %v1604, %v3444
        %v4043 = vmul.f32 %v1611, %v3444
        %v4044 = vmul.f32 %v1615, %v3444
        %v4045 = vmul.f32 %v1622, %v3444
        %v4046 = vmul.f32 %v1626, %v3444
        %v4047 = vmul.f32 %v1633, %v3444
        %v4048 = vmul.f32 %v1637, %v3444
        %v4049 = vmul.f32 %v1644, %v3444
        %v4050 = vmul.f32 %v1648, %v3444
        %v4051 = vmul.f32 %v1655, %v3444
        %v4052 = vmul.f32 %v1659, %v3444
        %v4053 = vmul.f32 %v1666, %v3444
        %v4054 = vmul.f32 %v1670, %v3444
        %v4055 = vmul.f32 %v1677, %v3444
        %v4056 = vmul.f32 %v1681, %v3444
        %v4057 = vmul.f32 %v1688, %v3444
        %v4058 = vmul.f32 %v1692, %v3444
        %v4059 = vmul.f32 %v1699, %v3444
        %v4060 = vmul.f32 %v1703, %v3444
        %v4061 = vmul.f32 %v1710, %v3444
        %v4062 = vmul.f32 %v1714, %v3444
        %v4063 = vmul.f32 %v1721, %v3444
        %v4064 = vmul.f32 %v1725, %v3444
        %v4065 = vmul.f32 %v1732, %v3444
        %v4066 = vmul.f32 %v1736, %v3444
        %v4067 = vmul.f32 %v1743, %v3444
        %v4068 = vmul.f32 %v1747, %v3444
        %v4069 = vmul.f32 %v1754, %v3444
        %v4070 = vmul.f32 %v1758, %v3444
        %v4071 = vmul.f32 %v1765, %v3444
        %v4072 = vmul.f32 %v1769, %v3444
        %v4073 = vmul.f32 %v1776, %v3444
        %v4074 = vmul.f32 %v1780, %v3444
        %v4075 = vmul.f32 %v1787, %v3444
        %v4076 = vmul.f32 %v1791, %v3444
        %v4077 = vmul.f32 %v1798, %v3444
        %v4078 = vmul.f32 %v1802, %v3444
        %v4079 = vmul.f32 %v1809, %v3444
        %v4080 = vmul.f32 %v1813, %v3444
        %v4081 = vmul.f32 %v1820, %v3444
        %v4082 = vmul.f32 %v1824, %v3444
        %v4083 = vmul.f32 %v1831, %v3444
        %v4084 = vmul.f32 %v1835, %v3444
        %v4085 = vmul.f32 %v1842, %v3444
        %v4086 = vmul.f32 %v1846, %v3444
        %v4087 = vmul.f32 %v1853, %v3444
        %v4088 = vmul.f32 %v1857, %v3444
        %v4089 = vadd.f32 %v3961, %v4025
        %v4090 = vadd.f32 %v3962, %v4026
        %v4091 = vadd.f32 %v3963, %v4027
        %v4092 = vadd.f32 %v3964, %v4028
        %v4093 = vadd.f32 %v3965, %v4029
        %v4094 = vadd.f32 %v3966, %v4030
        %v4095 = vadd.f32 %v3967, %v4031
        %v4096 = vadd.f32 %v3968, %v4032
        %v4097 = vadd.f32 %v3969, %v4033
        %v4098 = vadd.f32 %v3970, %v4034
        %v4099 = vadd.f32 %v3971, %v4035
        %v4100 = vadd.f32 %v3972, %v4036
        %v4101 = vadd.f32 %v3973, %v4037
        %v4102 = vadd.f32 %v3974, %v4038
        %v4103 = vadd.f32 %v3975, %v4039
        %v4104 = vadd.f32 %v3976, %v4040
        %v4105 = vadd.f32 %v3977, %v4041
        %v4106 = vadd.f32 %v3978, %v4042
        %v4107 = vadd.f32 %v3979, %v4043
        %v4108 = vadd.f32 %v3980, %v4044
        %v4109 = vadd.f32 %v3981, %v4045
        %v4110 = vadd.f32 %v3982, %v4046
        %v4111 = vadd.f32 %v3983, %v4047
        %v4112 = vadd.f32 %v3984, %v4048
        %v4113 = vadd.f32 %v3985, %v4049
        %v4114 = vadd.f32 %v3986, %v4050
        %v4115 = vadd.f32 %v3987, %v4051
        %v4116 = vadd.f32 %v3988, %v4052
        %v4117 = vadd.f32 %v3989, %v4053
        %v4118 = vadd.f32 %v3990, %v4054
        %v4119 = vadd.f32 %v3991, %v4055
        %v4120 = vadd.f32 %v3992, %v4056
        %v4121 = vadd.f32 %v3993, %v4057
        %v4122 = vadd.f32 %v3994, %v4058
        %v4123 = vadd.f32 %v3995, %v4059
        %v4124 = vadd.f32 %v3996, %v4060
        %v4125 = vadd.f32 %v3997, %v4061
        %v4126 = vadd.f32 %v3998, %v4062
        %v4127 = vadd.f32 %v3999, %v4063
        %v4128 = vadd.f32 %v4000, %v4064
        %v4129 = vadd.f32 %v4001, %v4065
        %v4130 = vadd.f32 %v4002, %v4066
        %v4131 = vadd.f32 %v4003, %v4067
        %v4132 = vadd.f32 %v4004, %v4068
        %v4133 = vadd.f32 %v4005, %v4069
        %v4134 = vadd.f32 %v4006, %v4070
        %v4135 = vadd.f32 %v4007, %v4071
        %v4136 = vadd.f32 %v4008, %v4072
        %v4137 = vadd.f32 %v4009, %v4073
        %v4138 = vadd.f32 %v4010, %v4074
        %v4139 = vadd.f32 %v4011, %v4075
        %v4140 = vadd.f32 %v4012, %v4076
        %v4141 = vadd.f32 %v4013, %v4077
        %v4142 = vadd.f32 %v4014, %v4078
        %v4143 = vadd.f32 %v4015, %v4079
        %v4144 = vadd.f32 %v4016, %v4080
        %v4145 = vadd.f32 %v4017, %v4081
        %v4146 = vadd.f32 %v4018, %v4082
        %v4147 = vadd.f32 %v4019, %v4083
        %v4148 = vadd.f32 %v4020, %v4084
        %v4149 = vadd.f32 %v4021, %v4085
        %v4150 = vadd.f32 %v4022, %v4086
        %v4151 = vadd.f32 %v4023, %v4087
        %v4152 = vadd.f32 %v4024, %v4088
        %4153 = vset.pattern.permute.xlu0 0
        %4154 = vperm.xlu0 %4153, %v2374
        %v4155 = vpop.permute.xlu0 %4154
        %4158 = vset.pattern.permute.xlu0 0
        %4159 = vperm.xlu0 %4158, %v2500
        %v4160 = vpop.permute.xlu0 %4159
        %4162 = vset.pattern.permute.xlu0 0
        %4163 = vperm.xlu0 %4162, %v2377
        %v4164 = vpop.permute.xlu0 %4163
        %4167 = vset.pattern.permute.xlu0 0
        %4168 = vperm.xlu0 %4167, %v2501
        %v4169 = vpop.permute.xlu0 %4168
        %4171 = vset.pattern.permute.xlu0 0
        %4172 = vperm.xlu0 %4171, %v2380
        %v4173 = vpop.permute.xlu0 %4172
        %4176 = vset.pattern.permute.xlu0 0
        %4177 = vperm.xlu0 %4176, %v2502
        %v4178 = vpop.permute.xlu0 %4177
        %4180 = vset.pattern.permute.xlu0 0
        %4181 = vperm.xlu0 %4180, %v2383
        %v4182 = vpop.permute.xlu0 %4181
        %4185 = vset.pattern.permute.xlu0 0
        %4186 = vperm.xlu0 %4185, %v2503
        %v4187 = vpop.permute.xlu0 %4186
        %4189 = vset.pattern.permute.xlu0 0
        %4190 = vperm.xlu0 %4189, %v2386
        %v4191 = vpop.permute.xlu0 %4190
        %4194 = vset.pattern.permute.xlu0 0
        %4195 = vperm.xlu0 %4194, %v2504
        %v4196 = vpop.permute.xlu0 %4195
        %4198 = vset.pattern.permute.xlu0 0
        %4199 = vperm.xlu0 %4198, %v2389
        %v4200 = vpop.permute.xlu0 %4199
        %4203 = vset.pattern.permute.xlu0 0
        %4204 = vperm.xlu0 %4203, %v2505
        %v4205 = vpop.permute.xlu0 %4204
        %4207 = vset.pattern.permute.xlu0 0
        %4208 = vperm.xlu0 %4207, %v2392
        %v4209 = vpop.permute.xlu0 %4208
        %4212 = vset.pattern.permute.xlu0 0
        %4213 = vperm.xlu0 %4212, %v2506
        %v4214 = vpop.permute.xlu0 %4213
        %4216 = vset.pattern.permute.xlu0 0
        %4217 = vperm.xlu0 %4216, %v2395
        %v4218 = vpop.permute.xlu0 %4217
        %4221 = vset.pattern.permute.xlu0 0
        %4222 = vperm.xlu0 %4221, %v2507
        %v4223 = vpop.permute.xlu0 %4222
        %4225 = vset.pattern.permute.xlu0 0
        %4226 = vperm.xlu0 %4225, %v2398
        %v4227 = vpop.permute.xlu0 %4226
        %4230 = vset.pattern.permute.xlu0 0
        %4231 = vperm.xlu0 %4230, %v2508
        %v4232 = vpop.permute.xlu0 %4231
        %4234 = vset.pattern.permute.xlu0 0
        %4235 = vperm.xlu0 %4234, %v2401
        %v4236 = vpop.permute.xlu0 %4235
        %4239 = vset.pattern.permute.xlu0 0
        %4240 = vperm.xlu0 %4239, %v2509
        %v4241 = vpop.permute.xlu0 %4240
        %4243 = vset.pattern.permute.xlu0 0
        %4244 = vperm.xlu0 %4243, %v2404
        %v4245 = vpop.permute.xlu0 %4244
        %4248 = vset.pattern.permute.xlu0 0
        %4249 = vperm.xlu0 %4248, %v2510
        %v4250 = vpop.permute.xlu0 %4249
        %4252 = vset.pattern.permute.xlu0 0
        %4253 = vperm.xlu0 %4252, %v2407
        %v4254 = vpop.permute.xlu0 %4253
        %4257 = vset.pattern.permute.xlu0 0
        %4258 = vperm.xlu0 %4257, %v2511
        %v4259 = vpop.permute.xlu0 %4258
        %4261 = vset.pattern.permute.xlu0 0
        %4262 = vperm.xlu0 %4261, %v2410
        %v4263 = vpop.permute.xlu0 %4262
        %4266 = vset.pattern.permute.xlu0 0
        %4267 = vperm.xlu0 %4266, %v2512
        %v4268 = vpop.permute.xlu0 %4267
        %4270 = vset.pattern.permute.xlu0 0
        %4271 = vperm.xlu0 %4270, %v2413
        %v4272 = vpop.permute.xlu0 %4271
        %4275 = vset.pattern.permute.xlu0 0
        %4276 = vperm.xlu0 %4275, %v2513
        %v4277 = vpop.permute.xlu0 %4276
        %4279 = vset.pattern.permute.xlu0 0
        %4280 = vperm.xlu0 %4279, %v2416
        %v4281 = vpop.permute.xlu0 %4280
        %4284 = vset.pattern.permute.xlu0 0
        %4285 = vperm.xlu0 %4284, %v2514
        %v4286 = vpop.permute.xlu0 %4285
        %4288 = vset.pattern.permute.xlu0 0
        %4289 = vperm.xlu0 %4288, %v2419
        %v4290 = vpop.permute.xlu0 %4289
        %4293 = vset.pattern.permute.xlu0 0
        %4294 = vperm.xlu0 %4293, %v2515
        %v4295 = vpop.permute.xlu0 %4294
        %4297 = vset.pattern.permute.xlu0 0
        %4298 = vperm.xlu0 %4297, %v2422
        %v4299 = vpop.permute.xlu0 %4298
        %4302 = vset.pattern.permute.xlu0 0
        %4303 = vperm.xlu0 %4302, %v2516
        %v4304 = vpop.permute.xlu0 %4303
        %4306 = vset.pattern.permute.xlu0 0
        %4307 = vperm.xlu0 %4306, %v2425
        %v4308 = vpop.permute.xlu0 %4307
        %4311 = vset.pattern.permute.xlu0 0
        %4312 = vperm.xlu0 %4311, %v2517
        %v4313 = vpop.permute.xlu0 %4312
        %4315 = vset.pattern.permute.xlu0 0
        %4316 = vperm.xlu0 %4315, %v2428
        %v4317 = vpop.permute.xlu0 %4316
        %4320 = vset.pattern.permute.xlu0 0
        %4321 = vperm.xlu0 %4320, %v2518
        %v4322 = vpop.permute.xlu0 %4321
        %4324 = vset.pattern.permute.xlu0 0
        %4325 = vperm.xlu0 %4324, %v2431
        %v4326 = vpop.permute.xlu0 %4325
        %4329 = vset.pattern.permute.xlu0 0
        %4330 = vperm.xlu0 %4329, %v2519
        %v4331 = vpop.permute.xlu0 %4330
        %4333 = vset.pattern.permute.xlu0 0
        %4334 = vperm.xlu0 %4333, %v2434
        %v4335 = vpop.permute.xlu0 %4334
        %4338 = vset.pattern.permute.xlu0 0
        %4339 = vperm.xlu0 %4338, %v2520
        %v4340 = vpop.permute.xlu0 %4339
        %4342 = vset.pattern.permute.xlu0 0
        %4343 = vperm.xlu0 %4342, %v2437
        %v4344 = vpop.permute.xlu0 %4343
        %4347 = vset.pattern.permute.xlu0 0
        %4348 = vperm.xlu0 %4347, %v2521
        %v4349 = vpop.permute.xlu0 %4348
        %4351 = vset.pattern.permute.xlu0 0
        %4352 = vperm.xlu0 %4351, %v2440
        %v4353 = vpop.permute.xlu0 %4352
        %4356 = vset.pattern.permute.xlu0 0
        %4357 = vperm.xlu0 %4356, %v2522
        %v4358 = vpop.permute.xlu0 %4357
        %4360 = vset.pattern.permute.xlu0 0
        %4361 = vperm.xlu0 %4360, %v2443
        %v4362 = vpop.permute.xlu0 %4361
        %4365 = vset.pattern.permute.xlu0 0
        %4366 = vperm.xlu0 %4365, %v2523
        %v4367 = vpop.permute.xlu0 %4366
        %4369 = vset.pattern.permute.xlu0 0
        %4370 = vperm.xlu0 %4369, %v2446
        %v4371 = vpop.permute.xlu0 %4370
        %4374 = vset.pattern.permute.xlu0 0
        %4375 = vperm.xlu0 %4374, %v2524
        %v4376 = vpop.permute.xlu0 %4375
        %4378 = vset.pattern.permute.xlu0 0
        %4379 = vperm.xlu0 %4378, %v2449
        %v4380 = vpop.permute.xlu0 %4379
        %4383 = vset.pattern.permute.xlu0 0
        %4384 = vperm.xlu0 %4383, %v2525
        %v4385 = vpop.permute.xlu0 %4384
        %4387 = vset.pattern.permute.xlu0 0
        %4388 = vperm.xlu0 %4387, %v2452
        %v4389 = vpop.permute.xlu0 %4388
        %4392 = vset.pattern.permute.xlu0 0
        %4393 = vperm.xlu0 %4392, %v2526
        %v4394 = vpop.permute.xlu0 %4393
        %4396 = vset.pattern.permute.xlu0 0
        %4397 = vperm.xlu0 %4396, %v2455
        %v4398 = vpop.permute.xlu0 %4397
        %4401 = vset.pattern.permute.xlu0 0
        %4402 = vperm.xlu0 %4401, %v2527
        %v4403 = vpop.permute.xlu0 %4402
        %4405 = vset.pattern.permute.xlu0 0
        %4406 = vperm.xlu0 %4405, %v2458
        %v4407 = vpop.permute.xlu0 %4406
        %4410 = vset.pattern.permute.xlu0 0
        %4411 = vperm.xlu0 %4410, %v2528
        %v4412 = vpop.permute.xlu0 %4411
        %4414 = vset.pattern.permute.xlu0 0
        %4415 = vperm.xlu0 %4414, %v2461
        %v4416 = vpop.permute.xlu0 %4415
        %4419 = vset.pattern.permute.xlu0 0
        %4420 = vperm.xlu0 %4419, %v2529
        %v4421 = vpop.permute.xlu0 %4420
        %4423 = vset.pattern.permute.xlu0 0
        %4424 = vperm.xlu0 %4423, %v2464
        %v4425 = vpop.permute.xlu0 %4424
        %4428 = vset.pattern.permute.xlu0 0
        %4429 = vperm.xlu0 %4428, %v2530
        %v4430 = vpop.permute.xlu0 %4429
        %4432 = vset.pattern.permute.xlu0 0
        %4433 = vperm.xlu0 %4432, %v2467
        %v4434 = vpop.permute.xlu0 %4433
        %4437 = vset.pattern.permute.xlu0 0
        %4438 = vperm.xlu0 %4437, %v2531
        %v4439 = vpop.permute.xlu0 %4438
        %v4441 = vmul.f32 %v4155, %v3576
        %v4442 = vmul.f32 %v4160, %v3576
        %v4443 = vmul.f32 %v4164, %v3576
        %v4444 = vmul.f32 %v4169, %v3576
        %v4445 = vmul.f32 %v4173, %v3576
        %v4446 = vmul.f32 %v4178, %v3576
        %v4447 = vmul.f32 %v4182, %v3576
        %v4448 = vmul.f32 %v4187, %v3576
        %v4449 = vmul.f32 %v4191, %v3576
        %v4450 = vmul.f32 %v4196, %v3576
        %v4451 = vmul.f32 %v4200, %v3576
        %v4452 = vmul.f32 %v4205, %v3576
        %v4453 = vmul.f32 %v4209, %v3576
        %v4454 = vmul.f32 %v4214, %v3576
        %v4455 = vmul.f32 %v4218, %v3576
        %v4456 = vmul.f32 %v4223, %v3576
        %v4457 = vmul.f32 %v4227, %v3576
        %v4458 = vmul.f32 %v4232, %v3576
        %v4459 = vmul.f32 %v4236, %v3576
        %v4460 = vmul.f32 %v4241, %v3576
        %v4461 = vmul.f32 %v4245, %v3576
        %v4462 = vmul.f32 %v4250, %v3576
        %v4463 = vmul.f32 %v4254, %v3576
        %v4464 = vmul.f32 %v4259, %v3576
        %v4465 = vmul.f32 %v4263, %v3576
        %v4466 = vmul.f32 %v4268, %v3576
        %v4467 = vmul.f32 %v4272, %v3576
        %v4468 = vmul.f32 %v4277, %v3576
        %v4469 = vmul.f32 %v4281, %v3576
        %v4470 = vmul.f32 %v4286, %v3576
        %v4471 = vmul.f32 %v4290, %v3576
        %v4472 = vmul.f32 %v4295, %v3576
        %v4473 = vmul.f32 %v4299, %v3576
        %v4474 = vmul.f32 %v4304, %v3576
        %v4475 = vmul.f32 %v4308, %v3576
        %v4476 = vmul.f32 %v4313, %v3576
        %v4477 = vmul.f32 %v4317, %v3576
        %v4478 = vmul.f32 %v4322, %v3576
        %v4479 = vmul.f32 %v4326, %v3576
        %v4480 = vmul.f32 %v4331, %v3576
        %v4481 = vmul.f32 %v4335, %v3576
        %v4482 = vmul.f32 %v4340, %v3576
        %v4483 = vmul.f32 %v4344, %v3576
        %v4484 = vmul.f32 %v4349, %v3576
        %v4485 = vmul.f32 %v4353, %v3576
        %v4486 = vmul.f32 %v4358, %v3576
        %v4487 = vmul.f32 %v4362, %v3576
        %v4488 = vmul.f32 %v4367, %v3576
        %v4489 = vmul.f32 %v4371, %v3576
        %v4490 = vmul.f32 %v4376, %v3576
        %v4491 = vmul.f32 %v4380, %v3576
        %v4492 = vmul.f32 %v4385, %v3576
        %v4493 = vmul.f32 %v4389, %v3576
        %v4494 = vmul.f32 %v4394, %v3576
        %v4495 = vmul.f32 %v4398, %v3576
        %v4496 = vmul.f32 %v4403, %v3576
        %v4497 = vmul.f32 %v4407, %v3576
        %v4498 = vmul.f32 %v4412, %v3576
        %v4499 = vmul.f32 %v4416, %v3576
        %v4500 = vmul.f32 %v4421, %v3576
        %v4501 = vmul.f32 %v4425, %v3576
        %v4502 = vmul.f32 %v4430, %v3576
        %v4503 = vmul.f32 %v4434, %v3576
        %v4504 = vmul.f32 %v4439, %v3576
        %v4505 = vadd.f32 %v4089, %v4441
        %v4506 = vadd.f32 %v4090, %v4442
        %v4507 = vadd.f32 %v4091, %v4443
        %v4508 = vadd.f32 %v4092, %v4444
        %v4509 = vadd.f32 %v4093, %v4445
        %v4510 = vadd.f32 %v4094, %v4446
        %v4511 = vadd.f32 %v4095, %v4447
        %v4512 = vadd.f32 %v4096, %v4448
        %v4513 = vadd.f32 %v4097, %v4449
        %v4514 = vadd.f32 %v4098, %v4450
        %v4515 = vadd.f32 %v4099, %v4451
        %v4516 = vadd.f32 %v4100, %v4452
        %v4517 = vadd.f32 %v4101, %v4453
        %v4518 = vadd.f32 %v4102, %v4454
        %v4519 = vadd.f32 %v4103, %v4455
        %v4520 = vadd.f32 %v4104, %v4456
        %v4521 = vadd.f32 %v4105, %v4457
        %v4522 = vadd.f32 %v4106, %v4458
        %v4523 = vadd.f32 %v4107, %v4459
        %v4524 = vadd.f32 %v4108, %v4460
        %v4525 = vadd.f32 %v4109, %v4461
        %v4526 = vadd.f32 %v4110, %v4462
        %v4527 = vadd.f32 %v4111, %v4463
        %v4528 = vadd.f32 %v4112, %v4464
        %v4529 = vadd.f32 %v4113, %v4465
        %v4530 = vadd.f32 %v4114, %v4466
        %v4531 = vadd.f32 %v4115, %v4467
        %v4532 = vadd.f32 %v4116, %v4468
        %v4533 = vadd.f32 %v4117, %v4469
        %v4534 = vadd.f32 %v4118, %v4470
        %v4535 = vadd.f32 %v4119, %v4471
        %v4536 = vadd.f32 %v4120, %v4472
        %v4537 = vadd.f32 %v4121, %v4473
        %v4538 = vadd.f32 %v4122, %v4474
        %v4539 = vadd.f32 %v4123, %v4475
        %v4540 = vadd.f32 %v4124, %v4476
        %v4541 = vadd.f32 %v4125, %v4477
        %v4542 = vadd.f32 %v4126, %v4478
        %v4543 = vadd.f32 %v4127, %v4479
        %v4544 = vadd.f32 %v4128, %v4480
        %v4545 = vadd.f32 %v4129, %v4481
        %v4546 = vadd.f32 %v4130, %v4482
        %v4547 = vadd.f32 %v4131, %v4483
        %v4548 = vadd.f32 %v4132, %v4484
        %v4549 = vadd.f32 %v4133, %v4485
        %v4550 = vadd.f32 %v4134, %v4486
        %v4551 = vadd.f32 %v4135, %v4487
        %v4552 = vadd.f32 %v4136, %v4488
        %v4553 = vadd.f32 %v4137, %v4489
        %v4554 = vadd.f32 %v4138, %v4490
        %v4555 = vadd.f32 %v4139, %v4491
        %v4556 = vadd.f32 %v4140, %v4492
        %v4557 = vadd.f32 %v4141, %v4493
        %v4558 = vadd.f32 %v4142, %v4494
        %v4559 = vadd.f32 %v4143, %v4495
        %v4560 = vadd.f32 %v4144, %v4496
        %v4561 = vadd.f32 %v4145, %v4497
        %v4562 = vadd.f32 %v4146, %v4498
        %v4563 = vadd.f32 %v4147, %v4499
        %v4564 = vadd.f32 %v4148, %v4500
        %v4565 = vadd.f32 %v4149, %v4501
        %v4566 = vadd.f32 %v4150, %v4502
        %v4567 = vadd.f32 %v4151, %v4503
        %v4568 = vadd.f32 %v4152, %v4504
        %v4569 = vmax.f32 %v3641, %v4505
        %v4570 = vmax.f32 %v3642, %v4506
        %v4571 = vmax.f32 %v3643, %v4507
        %v4572 = vmax.f32 %v3644, %v4508
        %v4573 = vmax.f32 %v3645, %v4509
        %v4574 = vmax.f32 %v3646, %v4510
        %v4575 = vmax.f32 %v3647, %v4511
        %v4576 = vmax.f32 %v3648, %v4512
        %v4577 = vmax.f32 %v3649, %v4513
        %v4578 = vmax.f32 %v3650, %v4514
        %v4579 = vmax.f32 %v3651, %v4515
        %v4580 = vmax.f32 %v3652, %v4516
        %v4581 = vmax.f32 %v3653, %v4517
        %v4582 = vmax.f32 %v3654, %v4518
        %v4583 = vmax.f32 %v3655, %v4519
        %v4584 = vmax.f32 %v3656, %v4520
        %v4585 = vmax.f32 %v3657, %v4521
        %v4586 = vmax.f32 %v3658, %v4522
        %v4587 = vmax.f32 %v3659, %v4523
        %v4588 = vmax.f32 %v3660, %v4524
        %v4589 = vmax.f32 %v3661, %v4525
        %v4590 = vmax.f32 %v3662, %v4526
        %v4591 = vmax.f32 %v3663, %v4527
        %v4592 = vmax.f32 %v3664, %v4528
        %v4593 = vmax.f32 %v3665, %v4529
        %v4594 = vmax.f32 %v3666, %v4530
        %v4595 = vmax.f32 %v3667, %v4531
        %v4596 = vmax.f32 %v3668, %v4532
        %v4597 = vmax.f32 %v3669, %v4533
        %v4598 = vmax.f32 %v3670, %v4534
        %v4599 = vmax.f32 %v3671, %v4535
        %v4600 = vmax.f32 %v3672, %v4536
        %v4601 = vmax.f32 %v3673, %v4537
        %v4602 = vmax.f32 %v3674, %v4538
        %v4603 = vmax.f32 %v3675, %v4539
        %v4604 = vmax.f32 %v3676, %v4540
        %v4605 = vmax.f32 %v3677, %v4541
        %v4606 = vmax.f32 %v3678, %v4542
        %v4607 = vmax.f32 %v3679, %v4543
        %v4608 = vmax.f32 %v3680, %v4544
        %v4609 = vmax.f32 %v3681, %v4545
        %v4610 = vmax.f32 %v3682, %v4546
        %v4611 = vmax.f32 %v3683, %v4547
        %v4612 = vmax.f32 %v3684, %v4548
        %v4613 = vmax.f32 %v3685, %v4549
        %v4614 = vmax.f32 %v3686, %v4550
        %v4615 = vmax.f32 %v3687, %v4551
        %v4616 = vmax.f32 %v3688, %v4552
        %v4617 = vmax.f32 %v3689, %v4553
        %v4618 = vmax.f32 %v3690, %v4554
        %v4619 = vmax.f32 %v3691, %v4555
        %v4620 = vmax.f32 %v3692, %v4556
        %v4621 = vmax.f32 %v3693, %v4557
        %v4622 = vmax.f32 %v3694, %v4558
        %v4623 = vmax.f32 %v3695, %v4559
        %v4624 = vmax.f32 %v3696, %v4560
        %v4625 = vmax.f32 %v3697, %v4561
        %v4626 = vmax.f32 %v3698, %v4562
        %v4627 = vmax.f32 %v3699, %v4563
        %v4628 = vmax.f32 %v3700, %v4564
        %v4629 = vmax.f32 %v3701, %v4565
        %v4630 = vmax.f32 %v3702, %v4566
        %v4631 = vmax.f32 %v3703, %v4567
        %v4632 = vmax.f32 %v3704, %v4568
        %v4633 = vld [vmem:[%s2] sm:$0x1]
        %v4635 = vlaneseq
        %v4636 = vshrl.u32 %v4635, 7
        %v4637 = vsub.s32 0, %v4636
        %v4638 = vrot.slane %v4633, %v4637
        %v4640 = vadd.f32 %v4569, %v4638
        %v4641 = vadd.f32 %v4570, %v4638
        %v4642 = vadd.f32 %v4571, %v4638
        %v4643 = vadd.f32 %v4572, %v4638
        %v4644 = vadd.f32 %v4573, %v4638
        %v4645 = vadd.f32 %v4574, %v4638
        %v4646 = vadd.f32 %v4575, %v4638
        %v4647 = vadd.f32 %v4576, %v4638
        %v4648 = vadd.f32 %v4577, %v4638
        %v4649 = vadd.f32 %v4578, %v4638
        %v4650 = vadd.f32 %v4579, %v4638
        %v4651 = vadd.f32 %v4580, %v4638
        %v4652 = vadd.f32 %v4581, %v4638
        %v4653 = vadd.f32 %v4582, %v4638
        %v4654 = vadd.f32 %v4583, %v4638
        %v4655 = vadd.f32 %v4584, %v4638
        %v4656 = vadd.f32 %v4585, %v4638
        %v4657 = vadd.f32 %v4586, %v4638
        %v4658 = vadd.f32 %v4587, %v4638
        %v4659 = vadd.f32 %v4588, %v4638
        %v4660 = vadd.f32 %v4589, %v4638
        %v4661 = vadd.f32 %v4590, %v4638
        %v4662 = vadd.f32 %v4591, %v4638
        %v4663 = vadd.f32 %v4592, %v4638
        %v4664 = vadd.f32 %v4593, %v4638
        %v4665 = vadd.f32 %v4594, %v4638
        %v4666 = vadd.f32 %v4595, %v4638
        %v4667 = vadd.f32 %v4596, %v4638
        %v4668 = vadd.f32 %v4597, %v4638
        %v4669 = vadd.f32 %v4598, %v4638
        %v4670 = vadd.f32 %v4599, %v4638
        %v4671 = vadd.f32 %v4600, %v4638
        %v4672 = vadd.f32 %v4601, %v4638
        %v4673 = vadd.f32 %v4602, %v4638
        %v4674 = vadd.f32 %v4603, %v4638
        %v4675 = vadd.f32 %v4604, %v4638
        %v4676 = vadd.f32 %v4605, %v4638
        %v4677 = vadd.f32 %v4606, %v4638
        %v4678 = vadd.f32 %v4607, %v4638
        %v4679 = vadd.f32 %v4608, %v4638
        %v4680 = vadd.f32 %v4609, %v4638
        %v4681 = vadd.f32 %v4610, %v4638
        %v4682 = vadd.f32 %v4611, %v4638
        %v4683 = vadd.f32 %v4612, %v4638
        %v4684 = vadd.f32 %v4613, %v4638
        %v4685 = vadd.f32 %v4614, %v4638
        %v4686 = vadd.f32 %v4615, %v4638
        %v4687 = vadd.f32 %v4616, %v4638
        %v4688 = vadd.f32 %v4617, %v4638
        %v4689 = vadd.f32 %v4618, %v4638
        %v4690 = vadd.f32 %v4619, %v4638
        %v4691 = vadd.f32 %v4620, %v4638
        %v4692 = vadd.f32 %v4621, %v4638
        %v4693 = vadd.f32 %v4622, %v4638
        %v4694 = vadd.f32 %v4623, %v4638
        %v4695 = vadd.f32 %v4624, %v4638
        %v4696 = vadd.f32 %v4625, %v4638
        %v4697 = vadd.f32 %v4626, %v4638
        %v4698 = vadd.f32 %v4627, %v4638
        %v4699 = vadd.f32 %v4628, %v4638
        %v4700 = vadd.f32 %v4629, %v4638
        %v4701 = vadd.f32 %v4630, %v4638
        %v4702 = vadd.f32 %v4631, %v4638
        %v4703 = vadd.f32 %v4632, %v4638
        %v4704 = vmax.f32 %v4640, 0.0
        %v4705 = vmax.f32 %v4641, 0.0
        %v4706 = vmax.f32 %v4642, 0.0
        %v4707 = vmax.f32 %v4643, 0.0
        %v4708 = vmax.f32 %v4644, 0.0
        %v4709 = vmax.f32 %v4645, 0.0
        %v4710 = vmax.f32 %v4646, 0.0
        %v4711 = vmax.f32 %v4647, 0.0
        %v4712 = vmax.f32 %v4648, 0.0
        %v4713 = vmax.f32 %v4649, 0.0
        %v4714 = vmax.f32 %v4650, 0.0
        %v4715 = vmax.f32 %v4651, 0.0
        %v4716 = vmax.f32 %v4652, 0.0
        %v4717 = vmax.f32 %v4653, 0.0
        %v4718 = vmax.f32 %v4654, 0.0
        %v4719 = vmax.f32 %v4655, 0.0
        %v4720 = vmax.f32 %v4656, 0.0
        %v4721 = vmax.f32 %v4657, 0.0
        %v4722 = vmax.f32 %v4658, 0.0
        %v4723 = vmax.f32 %v4659, 0.0
        %v4724 = vmax.f32 %v4660, 0.0
        %v4725 = vmax.f32 %v4661, 0.0
        %v4726 = vmax.f32 %v4662, 0.0
        %v4727 = vmax.f32 %v4663, 0.0
        %v4728 = vmax.f32 %v4664, 0.0
        %v4729 = vmax.f32 %v4665, 0.0
        %v4730 = vmax.f32 %v4666, 0.0
        %v4731 = vmax.f32 %v4667, 0.0
        %v4732 = vmax.f32 %v4668, 0.0
        %v4733 = vmax.f32 %v4669, 0.0
        %v4734 = vmax.f32 %v4670, 0.0
        %v4735 = vmax.f32 %v4671, 0.0
        %v4736 = vmax.f32 %v4672, 0.0
        %v4737 = vmax.f32 %v4673, 0.0
        %v4738 = vmax.f32 %v4674, 0.0
        %v4739 = vmax.f32 %v4675, 0.0
        %v4740 = vmax.f32 %v4676, 0.0
        %v4741 = vmax.f32 %v4677, 0.0
        %v4742 = vmax.f32 %v4678, 0.0
        %v4743 = vmax.f32 %v4679, 0.0
        %v4744 = vmax.f32 %v4680, 0.0
        %v4745 = vmax.f32 %v4681, 0.0
        %v4746 = vmax.f32 %v4682, 0.0
        %v4747 = vmax.f32 %v4683, 0.0
        %v4748 = vmax.f32 %v4684, 0.0
        %v4749 = vmax.f32 %v4685, 0.0
        %v4750 = vmax.f32 %v4686, 0.0
        %v4751 = vmax.f32 %v4687, 0.0
        %v4752 = vmax.f32 %v4688, 0.0
        %v4753 = vmax.f32 %v4689, 0.0
        %v4754 = vmax.f32 %v4690, 0.0
        %v4755 = vmax.f32 %v4691, 0.0
        %v4756 = vmax.f32 %v4692, 0.0
        %v4757 = vmax.f32 %v4693, 0.0
        %v4758 = vmax.f32 %v4694, 0.0
        %v4759 = vmax.f32 %v4695, 0.0
        %v4760 = vmax.f32 %v4696, 0.0
        %v4761 = vmax.f32 %v4697, 0.0
        %v4762 = vmax.f32 %v4698, 0.0
        %v4763 = vmax.f32 %v4699, 0.0
        %v4764 = vmax.f32 %v4700, 0.0
        %v4765 = vmax.f32 %v4701, 0.0
        %v4766 = vmax.f32 %v4702, 0.0
        %v4767 = vmax.f32 %v4703, 0.0
        %v4768 = vpack.c.bf16 %v4705, %v4704
        %v4769 = vpack.c.bf16 %v4707, %v4706
        %v4770 = vpack.c.bf16 %v4709, %v4708
        %v4771 = vpack.c.bf16 %v4711, %v4710
        %v4772 = vpack.c.bf16 %v4713, %v4712
        %v4773 = vpack.c.bf16 %v4715, %v4714
        %v4774 = vpack.c.bf16 %v4717, %v4716
        %v4775 = vpack.c.bf16 %v4719, %v4718
        %v4776 = vpack.c.bf16 %v4721, %v4720
        %v4777 = vpack.c.bf16 %v4723, %v4722
        %v4778 = vpack.c.bf16 %v4725, %v4724
        %v4779 = vpack.c.bf16 %v4727, %v4726
        %v4780 = vpack.c.bf16 %v4729, %v4728
        %v4781 = vpack.c.bf16 %v4731, %v4730
        %v4782 = vpack.c.bf16 %v4733, %v4732
        %v4783 = vpack.c.bf16 %v4735, %v4734
        %v4784 = vpack.c.bf16 %v4737, %v4736
        %v4785 = vpack.c.bf16 %v4739, %v4738
        %v4786 = vpack.c.bf16 %v4741, %v4740
        %v4787 = vpack.c.bf16 %v4743, %v4742
        %v4788 = vpack.c.bf16 %v4745, %v4744
        %v4789 = vpack.c.bf16 %v4747, %v4746
        %v4790 = vpack.c.bf16 %v4749, %v4748
        %v4791 = vpack.c.bf16 %v4751, %v4750
        %v4792 = vpack.c.bf16 %v4753, %v4752
        %v4793 = vpack.c.bf16 %v4755, %v4754
        %v4794 = vpack.c.bf16 %v4757, %v4756
        %v4795 = vpack.c.bf16 %v4759, %v4758
        %v4796 = vpack.c.bf16 %v4761, %v4760
        %v4797 = vpack.c.bf16 %v4763, %v4762
        %v4798 = vpack.c.bf16 %v4765, %v4764
        %v4799 = vpack.c.bf16 %v4767, %v4766
        %v4832 = vrot.slane %v4768, 7
        %v4833 = vrot.slane %v4769, 7
        %v4834 = vrot.slane %v4770, 7
        %v4835 = vrot.slane %v4771, 7
        %v4836 = vrot.slane %v4772, 7
        %v4837 = vrot.slane %v4773, 7
        %v4838 = vrot.slane %v4774, 7
        %v4839 = vrot.slane %v4775, 7
        %v4840 = vrot.slane %v4776, 7
        %v4841 = vrot.slane %v4777, 7
        %v4842 = vrot.slane %v4778, 7
        %v4843 = vrot.slane %v4779, 7
        %v4844 = vrot.slane %v4780, 7
        %v4845 = vrot.slane %v4781, 7
        %v4846 = vrot.slane %v4782, 7
        %v4847 = vrot.slane %v4783, 7
        %v4848 = vrot.slane %v4784, 7
        %v4849 = vrot.slane %v4785, 7
        %v4850 = vrot.slane %v4786, 7
        %v4851 = vrot.slane %v4787, 7
        %v4852 = vrot.slane %v4788, 7
        %v4853 = vrot.slane %v4789, 7
        %v4854 = vrot.slane %v4790, 7
        %v4855 = vrot.slane %v4791, 7
        %v4856 = vrot.slane %v4792, 7
        %v4857 = vrot.slane %v4793, 7
        %v4858 = vrot.slane %v4794, 7
        %v4859 = vrot.slane %v4795, 7
        %v4860 = vrot.slane %v4796, 7
        %v4861 = vrot.slane %v4797, 7
        %v4862 = vrot.slane %v4798, 7
        %v4863 = vrot.slane %v4799, 7
        %v4866 = vsel %vm1922, 0, %v4832
        %v4869 = vsel %vm1922, 0, %v4833
        %v4872 = vsel %vm1922, 0, %v4834
        %v4875 = vsel %vm1922, 0, %v4835
        %v4878 = vsel %vm1922, 0, %v4836
        %v4881 = vsel %vm1922, 0, %v4837
        %v4884 = vsel %vm1922, 0, %v4838
        %v4887 = vsel %vm1922, 0, %v4839
        %v4890 = vsel %vm1922, 0, %v4840
        %v4893 = vsel %vm1922, 0, %v4841
        %v4896 = vsel %vm1922, 0, %v4842
        %v4899 = vsel %vm1922, 0, %v4843
        %v4902 = vsel %vm1922, 0, %v4844
        %v4905 = vsel %vm1922, 0, %v4845
        %v4908 = vsel %vm1922, 0, %v4846
        %v4911 = vsel %vm1922, 0, %v4847
        %v4914 = vsel %vm1922, 0, %v4848
        %v4917 = vsel %vm1922, 0, %v4849
        %v4920 = vsel %vm1922, 0, %v4850
        %v4923 = vsel %vm1922, 0, %v4851
        %v4926 = vsel %vm1922, 0, %v4852
        %v4929 = vsel %vm1922, 0, %v4853
        %v4932 = vsel %vm1922, 0, %v4854
        %v4935 = vsel %vm1922, 0, %v4855
        %v4938 = vsel %vm1922, 0, %v4856
        %v4941 = vsel %vm1922, 0, %v4857
        %v4944 = vsel %vm1922, 0, %v4858
        %v4947 = vsel %vm1922, 0, %v4859
        %v4950 = vsel %vm1922, 0, %v4860
        %v4953 = vsel %vm1922, 0, %v4861
        %v4956 = vsel %vm1922, 0, %v4862
        %v4959 = vsel %vm1922, 0, %v4863
        %v4962 = vshrl.u32 %v4768, 16
        %v4964 = vrot.slane %v4962, 7
        %v4965 = vshll.u32 %v4768, 16
        %v4967 = vor.u32 %v4964, %v4965
        %v4969 = vshrl.u32 %v4769, 16
        %v4971 = vrot.slane %v4969, 7
        %v4972 = vshll.u32 %v4769, 16
        %v4974 = vor.u32 %v4971, %v4972
        %v4976 = vshrl.u32 %v4770, 16
        %v4978 = vrot.slane %v4976, 7
        %v4979 = vshll.u32 %v4770, 16
        %v4981 = vor.u32 %v4978, %v4979
        %v4983 = vshrl.u32 %v4771, 16
        %v4985 = vrot.slane %v4983, 7
        %v4986 = vshll.u32 %v4771, 16
        %v4988 = vor.u32 %v4985, %v4986
        %v4990 = vshrl.u32 %v4772, 16
        %v4992 = vrot.slane %v4990, 7
        %v4993 = vshll.u32 %v4772, 16
        %v4995 = vor.u32 %v4992, %v4993
        %v4997 = vshrl.u32 %v4773, 16
        %v4999 = vrot.slane %v4997, 7
        %v5000 = vshll.u32 %v4773, 16
        %v5002 = vor.u32 %v4999, %v5000
        %v5004 = vshrl.u32 %v4774, 16
        %v5006 = vrot.slane %v5004, 7
        %v5007 = vshll.u32 %v4774, 16
        %v5009 = vor.u32 %v5006, %v5007
        %v5011 = vshrl.u32 %v4775, 16
        %v5013 = vrot.slane %v5011, 7
        %v5014 = vshll.u32 %v4775, 16
        %v5016 = vor.u32 %v5013, %v5014
        %v5018 = vshrl.u32 %v4776, 16
        %v5020 = vrot.slane %v5018, 7
        %v5021 = vshll.u32 %v4776, 16
        %v5023 = vor.u32 %v5020, %v5021
        %v5025 = vshrl.u32 %v4777, 16
        %v5027 = vrot.slane %v5025, 7
        %v5028 = vshll.u32 %v4777, 16
        %v5030 = vor.u32 %v5027, %v5028
        %v5032 = vshrl.u32 %v4778, 16
        %v5034 = vrot.slane %v5032, 7
        %v5035 = vshll.u32 %v4778, 16
        %v5037 = vor.u32 %v5034, %v5035
        %v5039 = vshrl.u32 %v4779, 16
        %v5041 = vrot.slane %v5039, 7
        %v5042 = vshll.u32 %v4779, 16
        %v5044 = vor.u32 %v5041, %v5042
        %v5046 = vshrl.u32 %v4780, 16
        %v5048 = vrot.slane %v5046, 7
        %v5049 = vshll.u32 %v4780, 16
        %v5051 = vor.u32 %v5048, %v5049
        %v5053 = vshrl.u32 %v4781, 16
        %v5055 = vrot.slane %v5053, 7
        %v5056 = vshll.u32 %v4781, 16
        %v5058 = vor.u32 %v5055, %v5056
        %v5060 = vshrl.u32 %v4782, 16
        %v5062 = vrot.slane %v5060, 7
        %v5063 = vshll.u32 %v4782, 16
        %v5065 = vor.u32 %v5062, %v5063
        %v5067 = vshrl.u32 %v4783, 16
        %v5069 = vrot.slane %v5067, 7
        %v5070 = vshll.u32 %v4783, 16
        %v5072 = vor.u32 %v5069, %v5070
        %v5074 = vshrl.u32 %v4784, 16
        %v5076 = vrot.slane %v5074, 7
        %v5077 = vshll.u32 %v4784, 16
        %v5079 = vor.u32 %v5076, %v5077
        %v5081 = vshrl.u32 %v4785, 16
        %v5083 = vrot.slane %v5081, 7
        %v5084 = vshll.u32 %v4785, 16
        %v5086 = vor.u32 %v5083, %v5084
        %v5088 = vshrl.u32 %v4786, 16
        %v5090 = vrot.slane %v5088, 7
        %v5091 = vshll.u32 %v4786, 16
        %v5093 = vor.u32 %v5090, %v5091
        %v5095 = vshrl.u32 %v4787, 16
        %v5097 = vrot.slane %v5095, 7
        %v5098 = vshll.u32 %v4787, 16
        %v5100 = vor.u32 %v5097, %v5098
        %v5102 = vshrl.u32 %v4788, 16
        %v5104 = vrot.slane %v5102, 7
        %v5105 = vshll.u32 %v4788, 16
        %v5107 = vor.u32 %v5104, %v5105
        %v5109 = vshrl.u32 %v4789, 16
        %v5111 = vrot.slane %v5109, 7
        %v5112 = vshll.u32 %v4789, 16
        %v5114 = vor.u32 %v5111, %v5112
        %v5116 = vshrl.u32 %v4790, 16
        %v5118 = vrot.slane %v5116, 7
        %v5119 = vshll.u32 %v4790, 16
        %v5121 = vor.u32 %v5118, %v5119
        %v5123 = vshrl.u32 %v4791, 16
        %v5125 = vrot.slane %v5123, 7
        %v5126 = vshll.u32 %v4791, 16
        %v5128 = vor.u32 %v5125, %v5126
        %v5130 = vshrl.u32 %v4792, 16
        %v5132 = vrot.slane %v5130, 7
        %v5133 = vshll.u32 %v4792, 16
        %v5135 = vor.u32 %v5132, %v5133
        %v5137 = vshrl.u32 %v4793, 16
        %v5139 = vrot.slane %v5137, 7
        %v5140 = vshll.u32 %v4793, 16
        %v5142 = vor.u32 %v5139, %v5140
        %v5144 = vshrl.u32 %v4794, 16
        %v5146 = vrot.slane %v5144, 7
        %v5147 = vshll.u32 %v4794, 16
        %v5149 = vor.u32 %v5146, %v5147
        %v5151 = vshrl.u32 %v4795, 16
        %v5153 = vrot.slane %v5151, 7
        %v5154 = vshll.u32 %v4795, 16
        %v5156 = vor.u32 %v5153, %v5154
        %v5158 = vshrl.u32 %v4796, 16
        %v5160 = vrot.slane %v5158, 7
        %v5161 = vshll.u32 %v4796, 16
        %v5163 = vor.u32 %v5160, %v5161
        %v5165 = vshrl.u32 %v4797, 16
        %v5167 = vrot.slane %v5165, 7
        %v5168 = vshll.u32 %v4797, 16
        %v5170 = vor.u32 %v5167, %v5168
        %v5172 = vshrl.u32 %v4798, 16
        %v5174 = vrot.slane %v5172, 7
        %v5175 = vshll.u32 %v4798, 16
        %v5177 = vor.u32 %v5174, %v5175
        %v5179 = vshrl.u32 %v4799, 16
        %v5181 = vrot.slane %v5179, 7
        %v5182 = vshll.u32 %v4799, 16
        %v5184 = vor.u32 %v5181, %v5182
        %vm5217 = vcmask 1040384
        %vm5218 = vsmask.f32 256
        %vm5219 = vmand %vm5217, %vm5218
        %v5220 = vsel %vm5219, 0, %v4967
        %v5221 = vsel %vm5219, 0, %v4974
        %v5222 = vsel %vm5219, 0, %v4981
        %v5223 = vsel %vm5219, 0, %v4988
        %v5224 = vsel %vm5219, 0, %v4995
        %v5225 = vsel %vm5219, 0, %v5002
        %v5226 = vsel %vm5219, 0, %v5009
        %v5227 = vsel %vm5219, 0, %v5016
        %v5228 = vsel %vm5219, 0, %v5023
        %v5229 = vsel %vm5219, 0, %v5030
        %v5230 = vsel %vm5219, 0, %v5037
        %v5231 = vsel %vm5219, 0, %v5044
        %v5232 = vsel %vm5219, 0, %v5051
        %v5233 = vsel %vm5219, 0, %v5058
        %v5234 = vsel %vm5219, 0, %v5065
        %v5235 = vsel %vm5219, 0, %v5072
        %v5236 = vsel %vm5219, 0, %v5079
        %v5237 = vsel %vm5219, 0, %v5086
        %v5238 = vsel %vm5219, 0, %v5093
        %v5239 = vsel %vm5219, 0, %v5100
        %v5240 = vsel %vm5219, 0, %v5107
        %v5241 = vsel %vm5219, 0, %v5114
        %v5242 = vsel %vm5219, 0, %v5121
        %v5243 = vsel %vm5219, 0, %v5128
        %v5244 = vsel %vm5219, 0, %v5135
        %v5245 = vsel %vm5219, 0, %v5142
        %v5246 = vsel %vm5219, 0, %v5149
        %v5247 = vsel %vm5219, 0, %v5156
        %v5248 = vsel %vm5219, 0, %v5163
        %v5249 = vsel %vm5219, 0, %v5170
        %v5250 = vsel %vm5219, 0, %v5177
        %v5251 = vsel %vm5219, 0, %v5184
        %v5252 = vrot.slane %v4965, 1
        %v5253 = vor.u32 %v4962, %v5252
        %v5254 = vrot.slane %v4972, 1
        %v5255 = vor.u32 %v4969, %v5254
        %v5256 = vrot.slane %v4979, 1
        %v5257 = vor.u32 %v4976, %v5256
        %v5258 = vrot.slane %v4986, 1
        %v5259 = vor.u32 %v4983, %v5258
        %v5260 = vrot.slane %v4993, 1
        %v5261 = vor.u32 %v4990, %v5260
        %v5262 = vrot.slane %v5000, 1
        %v5263 = vor.u32 %v4997, %v5262
        %v5264 = vrot.slane %v5007, 1
        %v5265 = vor.u32 %v5004, %v5264
        %v5266 = vrot.slane %v5014, 1
        %v5267 = vor.u32 %v5011, %v5266
        %v5268 = vrot.slane %v5021, 1
        %v5269 = vor.u32 %v5018, %v5268
        %v5270 = vrot.slane %v5028, 1
        %v5271 = vor.u32 %v5025, %v5270
        %v5272 = vrot.slane %v5035, 1
        %v5273 = vor.u32 %v5032, %v5272
        %v5274 = vrot.slane %v5042, 1
        %v5275 = vor.u32 %v5039, %v5274
        %v5276 = vrot.slane %v5049, 1
        %v5277 = vor.u32 %v5046, %v5276
        %v5278 = vrot.slane %v5056, 1
        %v5279 = vor.u32 %v5053, %v5278
        %v5280 = vrot.slane %v5063, 1
        %v5281 = vor.u32 %v5060, %v5280
        %v5282 = vrot.slane %v5070, 1
        %v5283 = vor.u32 %v5067, %v5282
        %v5284 = vrot.slane %v5077, 1
        %v5285 = vor.u32 %v5074, %v5284
        %v5286 = vrot.slane %v5084, 1
        %v5287 = vor.u32 %v5081, %v5286
        %v5288 = vrot.slane %v5091, 1
        %v5289 = vor.u32 %v5088, %v5288
        %v5290 = vrot.slane %v5098, 1
        %v5291 = vor.u32 %v5095, %v5290
        %v5292 = vrot.slane %v5105, 1
        %v5293 = vor.u32 %v5102, %v5292
        %v5294 = vrot.slane %v5112, 1
        %v5295 = vor.u32 %v5109, %v5294
        %v5296 = vrot.slane %v5119, 1
        %v5297 = vor.u32 %v5116, %v5296
        %v5298 = vrot.slane %v5126, 1
        %v5299 = vor.u32 %v5123, %v5298
        %v5300 = vrot.slane %v5133, 1
        %v5301 = vor.u32 %v5130, %v5300
        %v5302 = vrot.slane %v5140, 1
        %v5303 = vor.u32 %v5137, %v5302
        %v5304 = vrot.slane %v5147, 1
        %v5305 = vor.u32 %v5144, %v5304
        %v5306 = vrot.slane %v5154, 1
        %v5307 = vor.u32 %v5151, %v5306
        %v5308 = vrot.slane %v5161, 1
        %v5309 = vor.u32 %v5158, %v5308
        %v5310 = vrot.slane %v5168, 1
        %v5311 = vor.u32 %v5165, %v5310
        %v5312 = vrot.slane %v5175, 1
        %v5313 = vor.u32 %v5172, %v5312
        %v5314 = vrot.slane %v5182, 1
        %v5315 = vor.u32 %v5179, %v5314
        %vm5348 = vcmask 1047552
        %vm5349 = vsmask.f32 7424
        %vm5350 = vmand %vm5348, %vm5349
        %v5351 = vsel %vm5350, %v5253, 0
        %v5352 = vsel %vm5350, %v5255, 0
        %v5353 = vsel %vm5350, %v5257, 0
        %v5354 = vsel %vm5350, %v5259, 0
        %v5355 = vsel %vm5350, %v5261, 0
        %v5356 = vsel %vm5350, %v5263, 0
        %v5357 = vsel %vm5350, %v5265, 0
        %v5358 = vsel %vm5350, %v5267, 0
        %v5359 = vsel %vm5350, %v5269, 0
        %v5360 = vsel %vm5350, %v5271, 0
        %v5361 = vsel %vm5350, %v5273, 0
        %v5362 = vsel %vm5350, %v5275, 0
        %v5363 = vsel %vm5350, %v5277, 0
        %v5364 = vsel %vm5350, %v5279, 0
        %v5365 = vsel %vm5350, %v5281, 0
        %v5366 = vsel %vm5350, %v5283, 0
        %v5367 = vsel %vm5350, %v5285, 0
        %v5368 = vsel %vm5350, %v5287, 0
        %v5369 = vsel %vm5350, %v5289, 0
        %v5370 = vsel %vm5350, %v5291, 0
        %v5371 = vsel %vm5350, %v5293, 0
        %v5372 = vsel %vm5350, %v5295, 0
        %v5373 = vsel %vm5350, %v5297, 0
        %v5374 = vsel %vm5350, %v5299, 0
        %v5375 = vsel %vm5350, %v5301, 0
        %v5376 = vsel %vm5350, %v5303, 0
        %v5377 = vsel %vm5350, %v5305, 0
        %v5378 = vsel %vm5350, %v5307, 0
        %v5379 = vsel %vm5350, %v5309, 0
        %v5380 = vsel %vm5350, %v5311, 0
        %v5381 = vsel %vm5350, %v5313, 0
        %v5382 = vsel %vm5350, %v5315, 0
        %v5383 = vrot.slane %v4768, 1
        %v5384 = vrot.slane %v4769, 1
        %v5385 = vrot.slane %v4770, 1
        %v5386 = vrot.slane %v4771, 1
        %v5387 = vrot.slane %v4772, 1
        %v5388 = vrot.slane %v4773, 1
        %v5389 = vrot.slane %v4774, 1
        %v5390 = vrot.slane %v4775, 1
        %v5391 = vrot.slane %v4776, 1
        %v5392 = vrot.slane %v4777, 1
        %v5393 = vrot.slane %v4778, 1
        %v5394 = vrot.slane %v4779, 1
        %v5395 = vrot.slane %v4780, 1
        %v5396 = vrot.slane %v4781, 1
        %v5397 = vrot.slane %v4782, 1
        %v5398 = vrot.slane %v4783, 1
        %v5399 = vrot.slane %v4784, 1
        %v5400 = vrot.slane %v4785, 1
        %v5401 = vrot.slane %v4786, 1
        %v5402 = vrot.slane %v4787, 1
        %v5403 = vrot.slane %v4788, 1
        %v5404 = vrot.slane %v4789, 1
        %v5405 = vrot.slane %v4790, 1
        %v5406 = vrot.slane %v4791, 1
        %v5407 = vrot.slane %v4792, 1
        %v5408 = vrot.slane %v4793, 1
        %v5409 = vrot.slane %v4794, 1
        %v5410 = vrot.slane %v4795, 1
        %v5411 = vrot.slane %v4796, 1
        %v5412 = vrot.slane %v4797, 1
        %v5413 = vrot.slane %v4798, 1
        %v5414 = vrot.slane %v4799, 1
        %v5416 = vsel %vm2371, %v5383, 0
        %v5419 = vsel %vm2371, %v5384, 0
        %v5422 = vsel %vm2371, %v5385, 0
        %v5425 = vsel %vm2371, %v5386, 0
        %v5428 = vsel %vm2371, %v5387, 0
        %v5431 = vsel %vm2371, %v5388, 0
        %v5434 = vsel %vm2371, %v5389, 0
        %v5437 = vsel %vm2371, %v5390, 0
        %v5440 = vsel %vm2371, %v5391, 0
        %v5443 = vsel %vm2371, %v5392, 0
        %v5446 = vsel %vm2371, %v5393, 0
        %v5449 = vsel %vm2371, %v5394, 0
        %v5452 = vsel %vm2371, %v5395, 0
        %v5455 = vsel %vm2371, %v5396, 0
        %v5458 = vsel %vm2371, %v5397, 0
        %v5461 = vsel %vm2371, %v5398, 0
        %v5464 = vsel %vm2371, %v5399, 0
        %v5467 = vsel %vm2371, %v5400, 0
        %v5470 = vsel %vm2371, %v5401, 0
        %v5473 = vsel %vm2371, %v5402, 0
        %v5476 = vsel %vm2371, %v5403, 0
        %v5479 = vsel %vm2371, %v5404, 0
        %v5482 = vsel %vm2371, %v5405, 0
        %v5485 = vsel %vm2371, %v5406, 0
        %v5488 = vsel %vm2371, %v5407, 0
        %v5491 = vsel %vm2371, %v5408, 0
        %v5494 = vsel %vm2371, %v5409, 0
        %v5497 = vsel %vm2371, %v5410, 0
        %v5500 = vsel %vm2371, %v5411, 0
        %v5503 = vsel %vm2371, %v5412, 0
        %v5506 = vsel %vm2371, %v5413, 0
        %v5509 = vsel %vm2371, %v5414, 0
        %vm5511 = vcmask 261120
        %5512 = vst.msk [vmem:[#allocation2] sm:$0xff] %vm5511, %v4866
        %5513 = vst.msk [vmem:[#allocation2 + $0x10] sm:$0xff] %vm5511, %v4869
        %5514 = vst.msk [vmem:[#allocation2 + $0x20] sm:$0xff] %vm5511, %v4872
        %5515 = vst.msk [vmem:[#allocation2 + $0x30] sm:$0xff] %vm5511, %v4875
        %5516 = vst.msk [vmem:[#allocation2 + $0x40] sm:$0xff] %vm5511, %v4878
        %5517 = vst.msk [vmem:[#allocation2 + $0x50] sm:$0xff] %vm5511, %v4881
        %5518 = vst.msk [vmem:[#allocation2 + $0x60] sm:$0xff] %vm5511, %v4884
        %5519 = vst.msk [vmem:[#allocation2 + $0x70] sm:$0xff] %vm5511, %v4887
        %5520 = vst.msk [vmem:[#allocation2 + $0x80] sm:$0xff] %vm5511, %v4890
        %5521 = vst.msk [vmem:[#allocation2 + $0x90] sm:$0xff] %vm5511, %v4893
        %5522 = vst.msk [vmem:[#allocation2 + $0xa0] sm:$0xff] %vm5511, %v4896
        %5523 = vst.msk [vmem:[#allocation2 + $0xb0] sm:$0xff] %vm5511, %v4899
        %5524 = vst.msk [vmem:[#allocation2 + $0xc0] sm:$0xff] %vm5511, %v4902
        %5525 = vst.msk [vmem:[#allocation2 + $0xd0] sm:$0xff] %vm5511, %v4905
        %5526 = vst.msk [vmem:[#allocation2 + $0xe0] sm:$0xff] %vm5511, %v4908
        %5527 = vst.msk [vmem:[#allocation2 + $0xf0] sm:$0xff] %vm5511, %v4911
        %5528 = vst.msk [vmem:[#allocation2 + $0x100] sm:$0xff] %vm5511, %v4914
        %5529 = vst.msk [vmem:[#allocation2 + $0x110] sm:$0xff] %vm5511, %v4917
        %5530 = vst.msk [vmem:[#allocation2 + $0x120] sm:$0xff] %vm5511, %v4920
        %5531 = vst.msk [vmem:[#allocation2 + $0x130] sm:$0xff] %vm5511, %v4923
        %5532 = vst.msk [vmem:[#allocation2 + $0x140] sm:$0xff] %vm5511, %v4926
        %5533 = vst.msk [vmem:[#allocation2 + $0x150] sm:$0xff] %vm5511, %v4929
        %5534 = vst.msk [vmem:[#allocation2 + $0x160] sm:$0xff] %vm5511, %v4932
        %5535 = vst.msk [vmem:[#allocation2 + $0x170] sm:$0xff] %vm5511, %v4935
        %5536 = vst.msk [vmem:[#allocation2 + $0x180] sm:$0xff] %vm5511, %v4938
        %5537 = vst.msk [vmem:[#allocation2 + $0x190] sm:$0xff] %vm5511, %v4941
        %5538 = vst.msk [vmem:[#allocation2 + $0x1a0] sm:$0xff] %vm5511, %v4944
        %5539 = vst.msk [vmem:[#allocation2 + $0x1b0] sm:$0xff] %vm5511, %v4947
        %5540 = vst.msk [vmem:[#allocation2 + $0x1c0] sm:$0xff] %vm5511, %v4950
        %5541 = vst.msk [vmem:[#allocation2 + $0x1d0] sm:$0xff] %vm5511, %v4953
        %5542 = vst.msk [vmem:[#allocation2 + $0x1e0] sm:$0xff] %vm5511, %v4956
        %5543 = vst.msk [vmem:[#allocation2 + $0x1f0] sm:$0xff] %vm5511, %v4959
        %5576 = vrot.lane.b32.xlu0 %v5220, 32
        %v5577 = vpop.permute.xlu0 %5576
        %5578 = vrot.lane.b32.xlu0 %v5221, 32
        %v5579 = vpop.permute.xlu0 %5578
        %5580 = vrot.lane.b32.xlu0 %v5222, 32
        %v5581 = vpop.permute.xlu0 %5580
        %5582 = vrot.lane.b32.xlu0 %v5223, 32
        %v5583 = vpop.permute.xlu0 %5582
        %5584 = vrot.lane.b32.xlu0 %v5224, 32
        %v5585 = vpop.permute.xlu0 %5584
        %5586 = vrot.lane.b32.xlu0 %v5225, 32
        %v5587 = vpop.permute.xlu0 %5586
        %5588 = vrot.lane.b32.xlu0 %v5226, 32
        %v5589 = vpop.permute.xlu0 %5588
        %5590 = vrot.lane.b32.xlu0 %v5227, 32
        %v5591 = vpop.permute.xlu0 %5590
        %5592 = vrot.lane.b32.xlu0 %v5228, 32
        %v5593 = vpop.permute.xlu0 %5592
        %5594 = vrot.lane.b32.xlu0 %v5229, 32
        %v5595 = vpop.permute.xlu0 %5594
        %5596 = vrot.lane.b32.xlu0 %v5230, 32
        %v5597 = vpop.permute.xlu0 %5596
        %5598 = vrot.lane.b32.xlu0 %v5231, 32
        %v5599 = vpop.permute.xlu0 %5598
        %5600 = vrot.lane.b32.xlu0 %v5232, 32
        %v5601 = vpop.permute.xlu0 %5600
        %5602 = vrot.lane.b32.xlu0 %v5233, 32
        %v5603 = vpop.permute.xlu0 %5602
        %5604 = vrot.lane.b32.xlu0 %v5234, 32
        %v5605 = vpop.permute.xlu0 %5604
        %5606 = vrot.lane.b32.xlu0 %v5235, 32
        %v5607 = vpop.permute.xlu0 %5606
        %5608 = vrot.lane.b32.xlu0 %v5236, 32
        %v5609 = vpop.permute.xlu0 %5608
        %5610 = vrot.lane.b32.xlu0 %v5237, 32
        %v5611 = vpop.permute.xlu0 %5610
        %5612 = vrot.lane.b32.xlu0 %v5238, 32
        %v5613 = vpop.permute.xlu0 %5612
        %5614 = vrot.lane.b32.xlu0 %v5239, 32
        %v5615 = vpop.permute.xlu0 %5614
        %5616 = vrot.lane.b32.xlu0 %v5240, 32
        %v5617 = vpop.permute.xlu0 %5616
        %5618 = vrot.lane.b32.xlu0 %v5241, 32
        %v5619 = vpop.permute.xlu0 %5618
        %5620 = vrot.lane.b32.xlu0 %v5242, 32
        %v5621 = vpop.permute.xlu0 %5620
        %5622 = vrot.lane.b32.xlu0 %v5243, 32
        %v5623 = vpop.permute.xlu0 %5622
        %5624 = vrot.lane.b32.xlu0 %v5244, 32
        %v5625 = vpop.permute.xlu0 %5624
        %5626 = vrot.lane.b32.xlu0 %v5245, 32
        %v5627 = vpop.permute.xlu0 %5626
        %5628 = vrot.lane.b32.xlu0 %v5246, 32
        %v5629 = vpop.permute.xlu0 %5628
        %5630 = vrot.lane.b32.xlu0 %v5247, 32
        %v5631 = vpop.permute.xlu0 %5630
        %5632 = vrot.lane.b32.xlu0 %v5248, 32
        %v5633 = vpop.permute.xlu0 %5632
        %5634 = vrot.lane.b32.xlu0 %v5249, 32
        %v5635 = vpop.permute.xlu0 %5634
        %5636 = vrot.lane.b32.xlu0 %v5250, 32
        %v5637 = vpop.permute.xlu0 %5636
        %5638 = vrot.lane.b32.xlu0 %v5251, 32
        %v5639 = vpop.permute.xlu0 %5638
        %vm5672 = vcmask 523520
        %5673 = vst.msk [vmem:[#allocation2] sm:$0xff] %vm5672, %v5577
        %5674 = vst.msk [vmem:[#allocation2 + $0x10] sm:$0xff] %vm5672, %v5579
        %5675 = vst.msk [vmem:[#allocation2 + $0x20] sm:$0xff] %vm5672, %v5581
        %5676 = vst.msk [vmem:[#allocation2 + $0x30] sm:$0xff] %vm5672, %v5583
        %5677 = vst.msk [vmem:[#allocation2 + $0x40] sm:$0xff] %vm5672, %v5585
        %5678 = vst.msk [vmem:[#allocation2 + $0x50] sm:$0xff] %vm5672, %v5587
        %5679 = vst.msk [vmem:[#allocation2 + $0x60] sm:$0xff] %vm5672, %v5589
        %5680 = vst.msk [vmem:[#allocation2 + $0x70] sm:$0xff] %vm5672, %v5591
        %5681 = vst.msk [vmem:[#allocation2 + $0x80] sm:$0xff] %vm5672, %v5593
        %5682 = vst.msk [vmem:[#allocation2 + $0x90] sm:$0xff] %vm5672, %v5595
        %5683 = vst.msk [vmem:[#allocation2 + $0xa0] sm:$0xff] %vm5672, %v5597
        %5684 = vst.msk [vmem:[#allocation2 + $0xb0] sm:$0xff] %vm5672, %v5599
        %5685 = vst.msk [vmem:[#allocation2 + $0xc0] sm:$0xff] %vm5672, %v5601
        %5686 = vst.msk [vmem:[#allocation2 + $0xd0] sm:$0xff] %vm5672, %v5603
        %5687 = vst.msk [vmem:[#allocation2 + $0xe0] sm:$0xff] %vm5672, %v5605
        %5688 = vst.msk [vmem:[#allocation2 + $0xf0] sm:$0xff] %vm5672, %v5607
        %5689 = vst.msk [vmem:[#allocation2 + $0x100] sm:$0xff] %vm5672, %v5609
        %5690 = vst.msk [vmem:[#allocation2 + $0x110] sm:$0xff] %vm5672, %v5611
        %5691 = vst.msk [vmem:[#allocation2 + $0x120] sm:$0xff] %vm5672, %v5613
        %5692 = vst.msk [vmem:[#allocation2 + $0x130] sm:$0xff] %vm5672, %v5615
        %5693 = vst.msk [vmem:[#allocation2 + $0x140] sm:$0xff] %vm5672, %v5617
        %5694 = vst.msk [vmem:[#allocation2 + $0x150] sm:$0xff] %vm5672, %v5619
        %5695 = vst.msk [vmem:[#allocation2 + $0x160] sm:$0xff] %vm5672, %v5621
        %5696 = vst.msk [vmem:[#allocation2 + $0x170] sm:$0xff] %vm5672, %v5623
        %5697 = vst.msk [vmem:[#allocation2 + $0x180] sm:$0xff] %vm5672, %v5625
        %5698 = vst.msk [vmem:[#allocation2 + $0x190] sm:$0xff] %vm5672, %v5627
        %5699 = vst.msk [vmem:[#allocation2 + $0x1a0] sm:$0xff] %vm5672, %v5629
        %5700 = vst.msk [vmem:[#allocation2 + $0x1b0] sm:$0xff] %vm5672, %v5631
        %5701 = vst.msk [vmem:[#allocation2 + $0x1c0] sm:$0xff] %vm5672, %v5633
        %5702 = vst.msk [vmem:[#allocation2 + $0x1d0] sm:$0xff] %vm5672, %v5635
        %5703 = vst.msk [vmem:[#allocation2 + $0x1e0] sm:$0xff] %vm5672, %v5637
        %5704 = vst.msk [vmem:[#allocation2 + $0x1f0] sm:$0xff] %vm5672, %v5639
        %5705 = vrot.lane.b32.xlu0 %v4768, 64
        %v5706 = vpop.permute.xlu0 %5705
        %5707 = vrot.lane.b32.xlu0 %v4769, 64
        %v5708 = vpop.permute.xlu0 %5707
        %5709 = vrot.lane.b32.xlu0 %v4770, 64
        %v5710 = vpop.permute.xlu0 %5709
        %5711 = vrot.lane.b32.xlu0 %v4771, 64
        %v5712 = vpop.permute.xlu0 %5711
        %5713 = vrot.lane.b32.xlu0 %v4772, 64
        %v5714 = vpop.permute.xlu0 %5713
        %5715 = vrot.lane.b32.xlu0 %v4773, 64
        %v5716 = vpop.permute.xlu0 %5715
        %5717 = vrot.lane.b32.xlu0 %v4774, 64
        %v5718 = vpop.permute.xlu0 %5717
        %5719 = vrot.lane.b32.xlu0 %v4775, 64
        %v5720 = vpop.permute.xlu0 %5719
        %5721 = vrot.lane.b32.xlu0 %v4776, 64
        %v5722 = vpop.permute.xlu0 %5721
        %5723 = vrot.lane.b32.xlu0 %v4777, 64
        %v5724 = vpop.permute.xlu0 %5723
        %5725 = vrot.lane.b32.xlu0 %v4778, 64
        %v5726 = vpop.permute.xlu0 %5725
        %5727 = vrot.lane.b32.xlu0 %v4779, 64
        %v5728 = vpop.permute.xlu0 %5727
        %5729 = vrot.lane.b32.xlu0 %v4780, 64
        %v5730 = vpop.permute.xlu0 %5729
        %5731 = vrot.lane.b32.xlu0 %v4781, 64
        %v5732 = vpop.permute.xlu0 %5731
        %5733 = vrot.lane.b32.xlu0 %v4782, 64
        %v5734 = vpop.permute.xlu0 %5733
        %5735 = vrot.lane.b32.xlu0 %v4783, 64
        %v5736 = vpop.permute.xlu0 %5735
        %5737 = vrot.lane.b32.xlu0 %v4784, 64
        %v5738 = vpop.permute.xlu0 %5737
        %5739 = vrot.lane.b32.xlu0 %v4785, 64
        %v5740 = vpop.permute.xlu0 %5739
        %5741 = vrot.lane.b32.xlu0 %v4786, 64
        %v5742 = vpop.permute.xlu0 %5741
        %5743 = vrot.lane.b32.xlu0 %v4787, 64
        %v5744 = vpop.permute.xlu0 %5743
        %5745 = vrot.lane.b32.xlu0 %v4788, 64
        %v5746 = vpop.permute.xlu0 %5745
        %5747 = vrot.lane.b32.xlu0 %v4789, 64
        %v5748 = vpop.permute.xlu0 %5747
        %5749 = vrot.lane.b32.xlu0 %v4790, 64
        %v5750 = vpop.permute.xlu0 %5749
        %5751 = vrot.lane.b32.xlu0 %v4791, 64
        %v5752 = vpop.permute.xlu0 %5751
        %5753 = vrot.lane.b32.xlu0 %v4792, 64
        %v5754 = vpop.permute.xlu0 %5753
        %5755 = vrot.lane.b32.xlu0 %v4793, 64
        %v5756 = vpop.permute.xlu0 %5755
        %5757 = vrot.lane.b32.xlu0 %v4794, 64
        %v5758 = vpop.permute.xlu0 %5757
        %5759 = vrot.lane.b32.xlu0 %v4795, 64
        %v5760 = vpop.permute.xlu0 %5759
        %5761 = vrot.lane.b32.xlu0 %v4796, 64
        %v5762 = vpop.permute.xlu0 %5761
        %5763 = vrot.lane.b32.xlu0 %v4797, 64
        %v5764 = vpop.permute.xlu0 %5763
        %5765 = vrot.lane.b32.xlu0 %v4798, 64
        %v5766 = vpop.permute.xlu0 %5765
        %5767 = vrot.lane.b32.xlu0 %v4799, 64
        %v5768 = vpop.permute.xlu0 %5767
        %vm5801 = vcmask 785920
        %5802 = vst.msk [vmem:[#allocation2] sm:$0xff] %vm5801, %v5706
        %5803 = vst.msk [vmem:[#allocation2 + $0x10] sm:$0xff] %vm5801, %v5708
        %5804 = vst.msk [vmem:[#allocation2 + $0x20] sm:$0xff] %vm5801, %v5710
        %5805 = vst.msk [vmem:[#allocation2 + $0x30] sm:$0xff] %vm5801, %v5712
        %5806 = vst.msk [vmem:[#allocation2 + $0x40] sm:$0xff] %vm5801, %v5714
        %5807 = vst.msk [vmem:[#allocation2 + $0x50] sm:$0xff] %vm5801, %v5716
        %5808 = vst.msk [vmem:[#allocation2 + $0x60] sm:$0xff] %vm5801, %v5718
        %5809 = vst.msk [vmem:[#allocation2 + $0x70] sm:$0xff] %vm5801, %v5720
        %5810 = vst.msk [vmem:[#allocation2 + $0x80] sm:$0xff] %vm5801, %v5722
        %5811 = vst.msk [vmem:[#allocation2 + $0x90] sm:$0xff] %vm5801, %v5724
        %5812 = vst.msk [vmem:[#allocation2 + $0xa0] sm:$0xff] %vm5801, %v5726
        %5813 = vst.msk [vmem:[#allocation2 + $0xb0] sm:$0xff] %vm5801, %v5728
        %5814 = vst.msk [vmem:[#allocation2 + $0xc0] sm:$0xff] %vm5801, %v5730
        %5815 = vst.msk [vmem:[#allocation2 + $0xd0] sm:$0xff] %vm5801, %v5732
        %5816 = vst.msk [vmem:[#allocation2 + $0xe0] sm:$0xff] %vm5801, %v5734
        %5817 = vst.msk [vmem:[#allocation2 + $0xf0] sm:$0xff] %vm5801, %v5736
        %5818 = vst.msk [vmem:[#allocation2 + $0x100] sm:$0xff] %vm5801, %v5738
        %5819 = vst.msk [vmem:[#allocation2 + $0x110] sm:$0xff] %vm5801, %v5740
        %5820 = vst.msk [vmem:[#allocation2 + $0x120] sm:$0xff] %vm5801, %v5742
        %5821 = vst.msk [vmem:[#allocation2 + $0x130] sm:$0xff] %vm5801, %v5744
        %5822 = vst.msk [vmem:[#allocation2 + $0x140] sm:$0xff] %vm5801, %v5746
        %5823 = vst.msk [vmem:[#allocation2 + $0x150] sm:$0xff] %vm5801, %v5748
        %5824 = vst.msk [vmem:[#allocation2 + $0x160] sm:$0xff] %vm5801, %v5750
        %5825 = vst.msk [vmem:[#allocation2 + $0x170] sm:$0xff] %vm5801, %v5752
        %5826 = vst.msk [vmem:[#allocation2 + $0x180] sm:$0xff] %vm5801, %v5754
        %5827 = vst.msk [vmem:[#allocation2 + $0x190] sm:$0xff] %vm5801, %v5756
        %5828 = vst.msk [vmem:[#allocation2 + $0x1a0] sm:$0xff] %vm5801, %v5758
        %5829 = vst.msk [vmem:[#allocation2 + $0x1b0] sm:$0xff] %vm5801, %v5760
        %5830 = vst.msk [vmem:[#allocation2 + $0x1c0] sm:$0xff] %vm5801, %v5762
        %5831 = vst.msk [vmem:[#allocation2 + $0x1d0] sm:$0xff] %vm5801, %v5764
        %5832 = vst.msk [vmem:[#allocation2 + $0x1e0] sm:$0xff] %vm5801, %v5766
        %5833 = vst.msk [vmem:[#allocation2 + $0x1f0] sm:$0xff] %vm5801, %v5768
        %5866 = vrot.lane.b32.xlu0 %v5351, 96
        %v5867 = vpop.permute.xlu0 %5866
        %5868 = vrot.lane.b32.xlu0 %v5352, 96
        %v5869 = vpop.permute.xlu0 %5868
        %5870 = vrot.lane.b32.xlu0 %v5353, 96
        %v5871 = vpop.permute.xlu0 %5870
        %5872 = vrot.lane.b32.xlu0 %v5354, 96
        %v5873 = vpop.permute.xlu0 %5872
        %5874 = vrot.lane.b32.xlu0 %v5355, 96
        %v5875 = vpop.permute.xlu0 %5874
        %5876 = vrot.lane.b32.xlu0 %v5356, 96
        %v5877 = vpop.permute.xlu0 %5876
        %5878 = vrot.lane.b32.xlu0 %v5357, 96
        %v5879 = vpop.permute.xlu0 %5878
        %5880 = vrot.lane.b32.xlu0 %v5358, 96
        %v5881 = vpop.permute.xlu0 %5880
        %5882 = vrot.lane.b32.xlu0 %v5359, 96
        %v5883 = vpop.permute.xlu0 %5882
        %5884 = vrot.lane.b32.xlu0 %v5360, 96
        %v5885 = vpop.permute.xlu0 %5884
        %5886 = vrot.lane.b32.xlu0 %v5361, 96
        %v5887 = vpop.permute.xlu0 %5886
        %5888 = vrot.lane.b32.xlu0 %v5362, 96
        %v5889 = vpop.permute.xlu0 %5888
        %5890 = vrot.lane.b32.xlu0 %v5363, 96
        %v5891 = vpop.permute.xlu0 %5890
        %5892 = vrot.lane.b32.xlu0 %v5364, 96
        %v5893 = vpop.permute.xlu0 %5892
        %5894 = vrot.lane.b32.xlu0 %v5365, 96
        %v5895 = vpop.permute.xlu0 %5894
        %5896 = vrot.lane.b32.xlu0 %v5366, 96
        %v5897 = vpop.permute.xlu0 %5896
        %5898 = vrot.lane.b32.xlu0 %v5367, 96
        %v5899 = vpop.permute.xlu0 %5898
        %5900 = vrot.lane.b32.xlu0 %v5368, 96
        %v5901 = vpop.permute.xlu0 %5900
        %5902 = vrot.lane.b32.xlu0 %v5369, 96
        %v5903 = vpop.permute.xlu0 %5902
        %5904 = vrot.lane.b32.xlu0 %v5370, 96
        %v5905 = vpop.permute.xlu0 %5904
        %5906 = vrot.lane.b32.xlu0 %v5371, 96
        %v5907 = vpop.permute.xlu0 %5906
        %5908 = vrot.lane.b32.xlu0 %v5372, 96
        %v5909 = vpop.permute.xlu0 %5908
        %5910 = vrot.lane.b32.xlu0 %v5373, 96
        %v5911 = vpop.permute.xlu0 %5910
        %5912 = vrot.lane.b32.xlu0 %v5374, 96
        %v5913 = vpop.permute.xlu0 %5912
        %5914 = vrot.lane.b32.xlu0 %v5375, 96
        %v5915 = vpop.permute.xlu0 %5914
        %5916 = vrot.lane.b32.xlu0 %v5376, 96
        %v5917 = vpop.permute.xlu0 %5916
        %5918 = vrot.lane.b32.xlu0 %v5377, 96
        %v5919 = vpop.permute.xlu0 %5918
        %5920 = vrot.lane.b32.xlu0 %v5378, 96
        %v5921 = vpop.permute.xlu0 %5920
        %5922 = vrot.lane.b32.xlu0 %v5379, 96
        %v5923 = vpop.permute.xlu0 %5922
        %5924 = vrot.lane.b32.xlu0 %v5380, 96
        %v5925 = vpop.permute.xlu0 %5924
        %5926 = vrot.lane.b32.xlu0 %v5381, 96
        %v5927 = vpop.permute.xlu0 %5926
        %5928 = vrot.lane.b32.xlu0 %v5382, 96
        %v5929 = vpop.permute.xlu0 %5928
        %vm5962 = vcmask 1048320
        %5963 = vst.msk [vmem:[#allocation2] sm:$0xff] %vm5962, %v5867
        %5964 = vst.msk [vmem:[#allocation2 + $0x10] sm:$0xff] %vm5962, %v5869
        %5965 = vst.msk [vmem:[#allocation2 + $0x20] sm:$0xff] %vm5962, %v5871
        %5966 = vst.msk [vmem:[#allocation2 + $0x30] sm:$0xff] %vm5962, %v5873
        %5967 = vst.msk [vmem:[#allocation2 + $0x40] sm:$0xff] %vm5962, %v5875
        %5968 = vst.msk [vmem:[#allocation2 + $0x50] sm:$0xff] %vm5962, %v5877
        %5969 = vst.msk [vmem:[#allocation2 + $0x60] sm:$0xff] %vm5962, %v5879
        %5970 = vst.msk [vmem:[#allocation2 + $0x70] sm:$0xff] %vm5962, %v5881
        %5971 = vst.msk [vmem:[#allocation2 + $0x80] sm:$0xff] %vm5962, %v5883
        %5972 = vst.msk [vmem:[#allocation2 + $0x90] sm:$0xff] %vm5962, %v5885
        %5973 = vst.msk [vmem:[#allocation2 + $0xa0] sm:$0xff] %vm5962, %v5887
        %5974 = vst.msk [vmem:[#allocation2 + $0xb0] sm:$0xff] %vm5962, %v5889
        %5975 = vst.msk [vmem:[#allocation2 + $0xc0] sm:$0xff] %vm5962, %v5891
        %5976 = vst.msk [vmem:[#allocation2 + $0xd0] sm:$0xff] %vm5962, %v5893
        %5977 = vst.msk [vmem:[#allocation2 + $0xe0] sm:$0xff] %vm5962, %v5895
        %5978 = vst.msk [vmem:[#allocation2 + $0xf0] sm:$0xff] %vm5962, %v5897
        %5979 = vst.msk [vmem:[#allocation2 + $0x100] sm:$0xff] %vm5962, %v5899
        %5980 = vst.msk [vmem:[#allocation2 + $0x110] sm:$0xff] %vm5962, %v5901
        %5981 = vst.msk [vmem:[#allocation2 + $0x120] sm:$0xff] %vm5962, %v5903
        %5982 = vst.msk [vmem:[#allocation2 + $0x130] sm:$0xff] %vm5962, %v5905
        %5983 = vst.msk [vmem:[#allocation2 + $0x140] sm:$0xff] %vm5962, %v5907
        %5984 = vst.msk [vmem:[#allocation2 + $0x150] sm:$0xff] %vm5962, %v5909
        %5985 = vst.msk [vmem:[#allocation2 + $0x160] sm:$0xff] %vm5962, %v5911
        %5986 = vst.msk [vmem:[#allocation2 + $0x170] sm:$0xff] %vm5962, %v5913
        %5987 = vst.msk [vmem:[#allocation2 + $0x180] sm:$0xff] %vm5962, %v5915
        %5988 = vst.msk [vmem:[#allocation2 + $0x190] sm:$0xff] %vm5962, %v5917
        %5989 = vst.msk [vmem:[#allocation2 + $0x1a0] sm:$0xff] %vm5962, %v5919
        %5990 = vst.msk [vmem:[#allocation2 + $0x1b0] sm:$0xff] %vm5962, %v5921
        %5991 = vst.msk [vmem:[#allocation2 + $0x1c0] sm:$0xff] %vm5962, %v5923
        %5992 = vst.msk [vmem:[#allocation2 + $0x1d0] sm:$0xff] %vm5962, %v5925
        %5993 = vst.msk [vmem:[#allocation2 + $0x1e0] sm:$0xff] %vm5962, %v5927
        %5994 = vst.msk [vmem:[#allocation2 + $0x1f0] sm:$0xff] %vm5962, %v5929
        %5995 = vst.msk [vmem:[#allocation2 + $0x8] sm:$0xff] %vm5511, %v5416
        %5996 = vst.msk [vmem:[#allocation2 + $0x18] sm:$0xff] %vm5511, %v5419
        %5997 = vst.msk [vmem:[#allocation2 + $0x28] sm:$0xff] %vm5511, %v5422
        %5998 = vst.msk [vmem:[#allocation2 + $0x38] sm:$0xff] %vm5511, %v5425
        %5999 = vst.msk [vmem:[#allocation2 + $0x48] sm:$0xff] %vm5511, %v5428
        %6000 = vst.msk [vmem:[#allocation2 + $0x58] sm:$0xff] %vm5511, %v5431
        %6001 = vst.msk [vmem:[#allocation2 + $0x68] sm:$0xff] %vm5511, %v5434
        %6002 = vst.msk [vmem:[#allocation2 + $0x78] sm:$0xff] %vm5511, %v5437
        %6003 = vst.msk [vmem:[#allocation2 + $0x88] sm:$0xff] %vm5511, %v5440
        %6004 = vst.msk [vmem:[#allocation2 + $0x98] sm:$0xff] %vm5511, %v5443
        %6005 = vst.msk [vmem:[#allocation2 + $0xa8] sm:$0xff] %vm5511, %v5446
        %6006 = vst.msk [vmem:[#allocation2 + $0xb8] sm:$0xff] %vm5511, %v5449
        %6007 = vst.msk [vmem:[#allocation2 + $0xc8] sm:$0xff] %vm5511, %v5452
        %6008 = vst.msk [vmem:[#allocation2 + $0xd8] sm:$0xff] %vm5511, %v5455
        %6009 = vst.msk [vmem:[#allocation2 + $0xe8] sm:$0xff] %vm5511, %v5458
        %6010 = vst.msk [vmem:[#allocation2 + $0xf8] sm:$0xff] %vm5511, %v5461
        %6011 = vst.msk [vmem:[#allocation2 + $0x108] sm:$0xff] %vm5511, %v5464
        %6012 = vst.msk [vmem:[#allocation2 + $0x118] sm:$0xff] %vm5511, %v5467
        %6013 = vst.msk [vmem:[#allocation2 + $0x128] sm:$0xff] %vm5511, %v5470
        %6014 = vst.msk [vmem:[#allocation2 + $0x138] sm:$0xff] %vm5511, %v5473
        %6015 = vst.msk [vmem:[#allocation2 + $0x148] sm:$0xff] %vm5511, %v5476
        %6016 = vst.msk [vmem:[#allocation2 + $0x158] sm:$0xff] %vm5511, %v5479
        %6017 = vst.msk [vmem:[#allocation2 + $0x168] sm:$0xff] %vm5511, %v5482
        %6018 = vst.msk [vmem:[#allocation2 + $0x178] sm:$0xff] %vm5511, %v5485
        %6019 = vst.msk [vmem:[#allocation2 + $0x188] sm:$0xff] %vm5511, %v5488
        %6020 = vst.msk [vmem:[#allocation2 + $0x198] sm:$0xff] %vm5511, %v5491
        %6021 = vst.msk [vmem:[#allocation2 + $0x1a8] sm:$0xff] %vm5511, %v5494
        %6022 = vst.msk [vmem:[#allocation2 + $0x1b8] sm:$0xff] %vm5511, %v5497
        %6023 = vst.msk [vmem:[#allocation2 + $0x1c8] sm:$0xff] %vm5511, %v5500
        %6024 = vst.msk [vmem:[#allocation2 + $0x1d8] sm:$0xff] %vm5511, %v5503
        %6025 = vst.msk [vmem:[#allocation2 + $0x1e8] sm:$0xff] %vm5511, %v5506
        %6026 = vst.msk [vmem:[#allocation2 + $0x1f8] sm:$0xff] %vm5511, %v5509
        %v6027 = vld [vmem:[#allocation2] sm:$0xff]
        %v6028 = vld [vmem:[#allocation2 + $0x8] sm:$0xff]
        %v6029 = vld [vmem:[#allocation2 + $0x10] sm:$0xff]
        %v6030 = vld [vmem:[#allocation2 + $0x18] sm:$0xff]
        %v6031 = vld [vmem:[#allocation2 + $0x20] sm:$0xff]
        %v6032 = vld [vmem:[#allocation2 + $0x28] sm:$0xff]
        %v6033 = vld [vmem:[#allocation2 + $0x30] sm:$0xff]
        %v6034 = vld [vmem:[#allocation2 + $0x38] sm:$0xff]
        %v6035 = vld [vmem:[#allocation2 + $0x40] sm:$0xff]
        %v6036 = vld [vmem:[#allocation2 + $0x48] sm:$0xff]
        %v6037 = vld [vmem:[#allocation2 + $0x50] sm:$0xff]
        %v6038 = vld [vmem:[#allocation2 + $0x58] sm:$0xff]
        %v6039 = vld [vmem:[#allocation2 + $0x60] sm:$0xff]
        %v6040 = vld [vmem:[#allocation2 + $0x68] sm:$0xff]
        %v6041 = vld [vmem:[#allocation2 + $0x70] sm:$0xff]
        %v6042 = vld [vmem:[#allocation2 + $0x78] sm:$0xff]
        %v6043 = vld [vmem:[#allocation2 + $0x80] sm:$0xff]
        %v6044 = vld [vmem:[#allocation2 + $0x88] sm:$0xff]
        %v6045 = vld [vmem:[#allocation2 + $0x90] sm:$0xff]
        %v6046 = vld [vmem:[#allocation2 + $0x98] sm:$0xff]
        %v6047 = vld [vmem:[#allocation2 + $0xa0] sm:$0xff]
        %v6048 = vld [vmem:[#allocation2 + $0xa8] sm:$0xff]
        %v6049 = vld [vmem:[#allocation2 + $0xb0] sm:$0xff]
        %v6050 = vld [vmem:[#allocation2 + $0xb8] sm:$0xff]
        %v6051 = vld [vmem:[#allocation2 + $0xc0] sm:$0xff]
        %v6052 = vld [vmem:[#allocation2 + $0xc8] sm:$0xff]
        %v6053 = vld [vmem:[#allocation2 + $0xd0] sm:$0xff]
        %v6054 = vld [vmem:[#allocation2 + $0xd8] sm:$0xff]
        %v6055 = vld [vmem:[#allocation2 + $0xe0] sm:$0xff]
        %v6056 = vld [vmem:[#allocation2 + $0xe8] sm:$0xff]
        %v6057 = vld [vmem:[#allocation2 + $0xf0] sm:$0xff]
        %v6058 = vld [vmem:[#allocation2 + $0xf8] sm:$0xff]
        %v6059 = vld [vmem:[#allocation2 + $0x100] sm:$0xff]
        %v6060 = vld [vmem:[#allocation2 + $0x108] sm:$0xff]
        %v6061 = vld [vmem:[#allocation2 + $0x110] sm:$0xff]
        %v6062 = vld [vmem:[#allocation2 + $0x118] sm:$0xff]
        %v6063 = vld [vmem:[#allocation2 + $0x120] sm:$0xff]
        %v6064 = vld [vmem:[#allocation2 + $0x128] sm:$0xff]
        %v6065 = vld [vmem:[#allocation2 + $0x130] sm:$0xff]
        %v6066 = vld [vmem:[#allocation2 + $0x138] sm:$0xff]
        %v6067 = vld [vmem:[#allocation2 + $0x140] sm:$0xff]
        %v6068 = vld [vmem:[#allocation2 + $0x148] sm:$0xff]
        %v6069 = vld [vmem:[#allocation2 + $0x150] sm:$0xff]
        %v6070 = vld [vmem:[#allocation2 + $0x158] sm:$0xff]
        %v6071 = vld [vmem:[#allocation2 + $0x160] sm:$0xff]
        %v6072 = vld [vmem:[#allocation2 + $0x168] sm:$0xff]
        %v6073 = vld [vmem:[#allocation2 + $0x170] sm:$0xff]
        %v6074 = vld [vmem:[#allocation2 + $0x178] sm:$0xff]
        %v6075 = vld [vmem:[#allocation2 + $0x180] sm:$0xff]
        %v6076 = vld [vmem:[#allocation2 + $0x188] sm:$0xff]
        %v6077 = vld [vmem:[#allocation2 + $0x190] sm:$0xff]
        %v6078 = vld [vmem:[#allocation2 + $0x198] sm:$0xff]
        %v6079 = vld [vmem:[#allocation2 + $0x1a0] sm:$0xff]
        %v6080 = vld [vmem:[#allocation2 + $0x1a8] sm:$0xff]
        %v6081 = vld [vmem:[#allocation2 + $0x1b0] sm:$0xff]
        %v6082 = vld [vmem:[#allocation2 + $0x1b8] sm:$0xff]
        %v6083 = vld [vmem:[#allocation2 + $0x1c0] sm:$0xff]
        %v6084 = vld [vmem:[#allocation2 + $0x1c8] sm:$0xff]
        %v6085 = vld [vmem:[#allocation2 + $0x1d0] sm:$0xff]
        %v6086 = vld [vmem:[#allocation2 + $0x1d8] sm:$0xff]
        %v6087 = vld [vmem:[#allocation2 + $0x1e0] sm:$0xff]
        %v6088 = vld [vmem:[#allocation2 + $0x1e8] sm:$0xff]
        %v6089 = vld [vmem:[#allocation2 + $0x1f0] sm:$0xff]
        %v6090 = vld [vmem:[#allocation2 + $0x1f8] sm:$0xff]
        %v6091 = vld [vmem:[%s3] sm:$0xf]
        %v6092 = vld [vmem:[%s3 + $0x4] sm:$0xf]
        %v6093 = vld [vmem:[%s3 + $0x8] sm:$0xf]
        %v6094 = vld [vmem:[%s3 + $0xc] sm:$0xf]
        %v6095 = vld [vmem:[%s3 + $0x10] sm:$0xf]
        %v6096 = vld [vmem:[%s3 + $0x14] sm:$0xf]
        %v6097 = vld [vmem:[%s3 + $0x18] sm:$0xf]
        %v6098 = vld [vmem:[%s3 + $0x1c] sm:$0xf]
        %v6099 = vld [vmem:[%s3 + $0x20] sm:$0xf]
        %v6100 = vld [vmem:[%s3 + $0x24] sm:$0xf]
        %v6101 = vld [vmem:[%s3 + $0x28] sm:$0xf]
        %v6102 = vld [vmem:[%s3 + $0x2c] sm:$0xf]
        %v6103 = vld [vmem:[%s3 + $0x30] sm:$0xf]
        %v6104 = vld [vmem:[%s3 + $0x34] sm:$0xf]
        %v6105 = vld [vmem:[%s3 + $0x38] sm:$0xf]
        %v6106 = vld [vmem:[%s3 + $0x3c] sm:$0xf]
        %v6107 = vld [vmem:[%s3 + $0x40] sm:$0xf]
        %v6108 = vld [vmem:[%s3 + $0x44] sm:$0xf]
        %v6109 = vld [vmem:[%s3 + $0x48] sm:$0xf]
        %v6110 = vld [vmem:[%s3 + $0x4c] sm:$0xf]
        %v6111 = vld [vmem:[%s4] sm:$0x1]
        %v6113 = vlaneseq
        %v6114 = vshrl.u32 %v6113, 7
        %v6115 = vsub.s32 0, %v6114
        %v6116 = vrot.slane %v6111, %v6115
        %v6138 = vunpack.c.l.b16 %v6091
        %v6139 = vunpack.c.l.b16 %v6092
        %v6140 = vunpack.c.l.b16 %v6093
        %v6141 = vunpack.c.l.b16 %v6094
        %v6142 = vunpack.c.l.b16 %v6095
        %v6143 = vunpack.c.l.b16 %v6096
        %v6144 = vunpack.c.l.b16 %v6097
        %v6145 = vunpack.c.l.b16 %v6098
        %v6146 = vunpack.c.l.b16 %v6099
        %v6147 = vunpack.c.l.b16 %v6100
        %v6148 = vunpack.c.l.b16 %v6101
        %v6149 = vunpack.c.l.b16 %v6102
        %v6150 = vunpack.c.l.b16 %v6103
        %v6151 = vunpack.c.l.b16 %v6104
        %v6152 = vunpack.c.l.b16 %v6105
        %v6153 = vunpack.c.l.b16 %v6106
        %v6154 = vunpack.c.l.b16 %v6107
        %v6155 = vunpack.c.l.b16 %v6108
        %v6156 = vunpack.c.l.b16 %v6109
        %v6157 = vunpack.c.l.b16 %v6110
        %v6158 = vpack.c.b16 %v6139, %v6138
        %v6159 = vpack.c.b16 %v6141, %v6140
        %v6160 = vpack.c.b16 %v6143, %v6142
        %v6161 = vpack.c.b16 %v6145, %v6144
        %v6162 = vpack.c.b16 %v6147, %v6146
        %v6163 = vpack.c.b16 %v6149, %v6148
        %v6164 = vpack.c.b16 %v6151, %v6150
        %v6165 = vpack.c.b16 %v6153, %v6152
        %v6166 = vpack.c.b16 %v6155, %v6154
        %v6167 = vpack.c.b16 %v6157, %v6156
        %v6179 = vsel %vm5511, %v6028, 0
        %v6182 = vsel %vm5511, %v6030, 0
        %v6185 = vsel %vm5511, %v6032, 0
        %v6188 = vsel %vm5511, %v6034, 0
        %v6191 = vsel %vm5511, %v6036, 0
        %v6194 = vsel %vm5511, %v6038, 0
        %v6197 = vsel %vm5511, %v6040, 0
        %v6200 = vsel %vm5511, %v6042, 0
        %v6203 = vsel %vm5511, %v6044, 0
        %v6206 = vsel %vm5511, %v6046, 0
        %v6209 = vsel %vm5511, %v6048, 0
        %v6212 = vsel %vm5511, %v6050, 0
        %v6215 = vsel %vm5511, %v6052, 0
        %v6218 = vsel %vm5511, %v6054, 0
        %v6221 = vsel %vm5511, %v6056, 0
        %v6224 = vsel %vm5511, %v6058, 0
        %v6227 = vsel %vm5511, %v6060, 0
        %v6230 = vsel %vm5511, %v6062, 0
        %v6233 = vsel %vm5511, %v6064, 0
        %v6236 = vsel %vm5511, %v6066, 0
        %v6239 = vsel %vm5511, %v6068, 0
        %v6242 = vsel %vm5511, %v6070, 0
        %v6245 = vsel %vm5511, %v6072, 0
        %v6248 = vsel %vm5511, %v6074, 0
        %v6251 = vsel %vm5511, %v6076, 0
        %v6254 = vsel %vm5511, %v6078, 0
        %v6257 = vsel %vm5511, %v6080, 0
        %v6260 = vsel %vm5511, %v6082, 0
        %v6263 = vsel %vm5511, %v6084, 0
        %v6266 = vsel %vm5511, %v6086, 0
        %v6269 = vsel %vm5511, %v6088, 0
        %v6272 = vsel %vm5511, %v6090, 0
        %6274 = vmatprep.subr.bf16.mxu0 0
        %6275 = vmatpush1.bf16.msra.mxu0 %v6158
        %6276 = vmatprep.subr.bf16.mxu0 0
        %6277 = vmatpush1.bf16.msra.mxu0 %v6159
        %6278 = vmatprep.subr.bf16.mxu0 0
        %6279 = vmatpush1.bf16.msra.mxu0 %v6160
        %6280 = vmatprep.subr.bf16.mxu0 0
        %6281 = vmatpush1.bf16.msra.mxu0 %v6161
        %6282 = vmatprep.subr.bf16.mxu0 0
        %6283 = vmatpush1.bf16.msra.mxu0 %v6162
        %6284 = vmatprep.subr.bf16.mxu0 0
        %6285 = vmatpush1.bf16.msra.mxu0 %v6163
        %6286 = vmatprep.subr.bf16.mxu0 0
        %6287 = vmatpush1.bf16.msra.mxu0 %v6164
        %6288 = vmatprep.subr.bf16.mxu0 0
        %6289 = vmatpush1.bf16.msra.mxu0 %v6165
        %6290 = vmatprep.subr.bf16.mxu0 0
        %6291 = vmatpush1.bf16.msra.mxu0 %v6166
        %6292 = vmatprep.subr.bf16.mxu0 0
        %6293 = vmatpush1.bf16.msra.mxu0 %v6167
        %6294 = vmatprep.subr.bf16.mxu0 0
        %6295 = vmatpush1.bf16.msra.mxu0 0
        %6296 = vmatprep.subr.bf16.mxu0 0
        %6297 = vmatpush1.bf16.msra.mxu0 0
        %6298 = vmatprep.subr.bf16.mxu0 0
        %6299 = vmatpush1.bf16.msra.mxu0 0
        %6300 = vmatprep.subr.bf16.mxu0 0
        %6301 = vmatpush1.bf16.msra.mxu0 0
        %6302 = vmatprep.subr.bf16.mxu0 0
        %6303 = vmatpush1.bf16.msra.mxu0 0
        %6304 = vmatprep.subr.bf16.mxu0 0
        %6305 = vmatpush1.bf16.msra.mxu0 0
        %6306 = vmatprep.mubr.bf16.mxu0 %v6179
        %6307 = vmatmul.mubr.bf16.gmra.mrb[0].mxu0 %v6027
        %v6308 = vpop.f32.mrb[0].mxu0
        %v6309 = vadd.f32 %v6116, %v6308
        %v6310 = vpop.f32.mrb[0].mxu0
        %v6311 = vpop.f32.mrb[0].mxu0
        %v6312 = vadd.f32 %v6116, %v6311
        %v6313 = vpop.f32.mrb[0].mxu0
        %6314 = vmatprep.mubr.bf16.mxu0 %v6182
        %6315 = vmatmul.mubr.bf16.gmra.mrb[0].mxu0 %v6029
        %v6316 = vpop.f32.mrb[0].mxu0
        %v6317 = vadd.f32 %v6116, %v6316
        %v6318 = vpop.f32.mrb[0].mxu0
        %v6319 = vpop.f32.mrb[0].mxu0
        %v6320 = vadd.f32 %v6116, %v6319
        %v6321 = vpop.f32.mrb[0].mxu0
        %6322 = vmatprep.mubr.bf16.mxu0 %v6185
        %6323 = vmatmul.mubr.bf16.gmra.mrb[0].mxu0 %v6031
        %v6324 = vpop.f32.mrb[0].mxu0
        %v6325 = vadd.f32 %v6116, %v6324
        %v6326 = vpop.f32.mrb[0].mxu0
        %v6327 = vpop.f32.mrb[0].mxu0
        %v6328 = vadd.f32 %v6116, %v6327
        %v6329 = vpop.f32.mrb[0].mxu0
        %6330 = vmatprep.mubr.bf16.mxu0 %v6188
        %6331 = vmatmul.mubr.bf16.gmra.mrb[0].mxu0 %v6033
        %v6332 = vpop.f32.mrb[0].mxu0
        %v6333 = vadd.f32 %v6116, %v6332
        %v6334 = vpop.f32.mrb[0].mxu0
        %v6335 = vpop.f32.mrb[0].mxu0
        %v6336 = vadd.f32 %v6116, %v6335
        %v6337 = vpop.f32.mrb[0].mxu0
        %6338 = vmatprep.mubr.bf16.mxu0 %v6191
        %6339 = vmatmul.mubr.bf16.gmra.mrb[0].mxu0 %v6035
        %v6340 = vpop.f32.mrb[0].mxu0
        %v6341 = vadd.f32 %v6116, %v6340
        %v6342 = vpop.f32.mrb[0].mxu0
        %v6343 = vpop.f32.mrb[0].mxu0
        %v6344 = vadd.f32 %v6116, %v6343
        %v6345 = vpop.f32.mrb[0].mxu0
        %6346 = vmatprep.mubr.bf16.mxu0 %v6194
        %6347 = vmatmul.mubr.bf16.gmra.mrb[0].mxu0 %v6037
        %v6348 = vpop.f32.mrb[0].mxu0
        %v6349 = vadd.f32 %v6116, %v6348
        %v6350 = vpop.f32.mrb[0].mxu0
        %v6351 = vpop.f32.mrb[0].mxu0
        %v6352 = vadd.f32 %v6116, %v6351
        %v6353 = vpop.f32.mrb[0].mxu0
        %6354 = vmatprep.mubr.bf16.mxu0 %v6197
        %6355 = vmatmul.mubr.bf16.gmra.mrb[0].mxu0 %v6039
        %v6356 = vpop.f32.mrb[0].mxu0
        %v6357 = vadd.f32 %v6116, %v6356
        %v6358 = vpop.f32.mrb[0].mxu0
        %v6359 = vpop.f32.mrb[0].mxu0
        %v6360 = vadd.f32 %v6116, %v6359
        %v6361 = vpop.f32.mrb[0].mxu0
        %6362 = vmatprep.mubr.bf16.mxu0 %v6200
        %6363 = vmatmul.mubr.bf16.gmra.mrb[0].mxu0 %v6041
        %v6364 = vpop.f32.mrb[0].mxu0
        %v6365 = vadd.f32 %v6116, %v6364
        %v6366 = vpop.f32.mrb[0].mxu0
        %v6367 = vpop.f32.mrb[0].mxu0
        %v6368 = vadd.f32 %v6116, %v6367
        %v6369 = vpop.f32.mrb[0].mxu0
        %6370 = vmatprep.mubr.bf16.mxu0 %v6203
        %6371 = vmatmul.mubr.bf16.gmra.mrb[0].mxu0 %v6043
        %v6372 = vpop.f32.mrb[0].mxu0
        %v6373 = vadd.f32 %v6116, %v6372
        %v6374 = vpop.f32.mrb[0].mxu0
        %v6375 = vpop.f32.mrb[0].mxu0
        %v6376 = vadd.f32 %v6116, %v6375
        %v6377 = vpop.f32.mrb[0].mxu0
        %6378 = vmatprep.mubr.bf16.mxu0 %v6206
        %6379 = vmatmul.mubr.bf16.gmra.mrb[0].mxu0 %v6045
        %v6380 = vpop.f32.mrb[0].mxu0
        %v6381 = vadd.f32 %v6116, %v6380
        %v6382 = vpop.f32.mrb[0].mxu0
        %v6383 = vpop.f32.mrb[0].mxu0
        %v6384 = vadd.f32 %v6116, %v6383
        %v6385 = vpop.f32.mrb[0].mxu0
        %6386 = vmatprep.mubr.bf16.mxu0 %v6209
        %6387 = vmatmul.mubr.bf16.gmra.mrb[0].mxu0 %v6047
        %v6388 = vpop.f32.mrb[0].mxu0
        %v6389 = vadd.f32 %v6116, %v6388
        %v6390 = vpop.f32.mrb[0].mxu0
        %v6391 = vpop.f32.mrb[0].mxu0
        %v6392 = vadd.f32 %v6116, %v6391
        %v6393 = vpop.f32.mrb[0].mxu0
        %6394 = vmatprep.mubr.bf16.mxu0 %v6212
        %6395 = vmatmul.mubr.bf16.gmra.mrb[0].mxu0 %v6049
        %v6396 = vpop.f32.mrb[0].mxu0
        %v6397 = vadd.f32 %v6116, %v6396
        %v6398 = vpop.f32.mrb[0].mxu0
        %v6399 = vpop.f32.mrb[0].mxu0
        %v6400 = vadd.f32 %v6116, %v6399
        %v6401 = vpop.f32.mrb[0].mxu0
        %6402 = vmatprep.mubr.bf16.mxu0 %v6215
        %6403 = vmatmul.mubr.bf16.gmra.mrb[0].mxu0 %v6051
        %v6404 = vpop.f32.mrb[0].mxu0
        %v6405 = vadd.f32 %v6116, %v6404
        %v6406 = vpop.f32.mrb[0].mxu0
        %v6407 = vpop.f32.mrb[0].mxu0
        %v6408 = vadd.f32 %v6116, %v6407
        %v6409 = vpop.f32.mrb[0].mxu0
        %6410 = vmatprep.mubr.bf16.mxu0 %v6218
        %6411 = vmatmul.mubr.bf16.gmra.mrb[0].mxu0 %v6053
        %v6412 = vpop.f32.mrb[0].mxu0
        %v6413 = vadd.f32 %v6116, %v6412
        %v6414 = vpop.f32.mrb[0].mxu0
        %v6415 = vpop.f32.mrb[0].mxu0
        %v6416 = vadd.f32 %v6116, %v6415
        %v6417 = vpop.f32.mrb[0].mxu0
        %6418 = vmatprep.mubr.bf16.mxu0 %v6221
        %6419 = vmatmul.mubr.bf16.gmra.mrb[0].mxu0 %v6055
        %v6420 = vpop.f32.mrb[0].mxu0
        %v6421 = vadd.f32 %v6116, %v6420
        %v6422 = vpop.f32.mrb[0].mxu0
        %v6423 = vpop.f32.mrb[0].mxu0
        %v6424 = vadd.f32 %v6116, %v6423
        %v6425 = vpop.f32.mrb[0].mxu0
        %6426 = vmatprep.mubr.bf16.mxu0 %v6224
        %6427 = vmatmul.mubr.bf16.gmra.mrb[0].mxu0 %v6057
        %v6428 = vpop.f32.mrb[0].mxu0
        %v6429 = vadd.f32 %v6116, %v6428
        %v6430 = vpop.f32.mrb[0].mxu0
        %v6431 = vpop.f32.mrb[0].mxu0
        %v6432 = vadd.f32 %v6116, %v6431
        %v6433 = vpop.f32.mrb[0].mxu0
        %6434 = vmatprep.mubr.bf16.mxu0 %v6227
        %6435 = vmatmul.mubr.bf16.gmra.mrb[0].mxu0 %v6059
        %v6436 = vpop.f32.mrb[0].mxu0
        %v6437 = vadd.f32 %v6116, %v6436
        %v6438 = vpop.f32.mrb[0].mxu0
        %v6439 = vpop.f32.mrb[0].mxu0
        %v6440 = vadd.f32 %v6116, %v6439
        %v6441 = vpop.f32.mrb[0].mxu0
        %6442 = vmatprep.mubr.bf16.mxu0 %v6230
        %6443 = vmatmul.mubr.bf16.gmra.mrb[0].mxu0 %v6061
        %v6444 = vpop.f32.mrb[0].mxu0
        %v6445 = vadd.f32 %v6116, %v6444
        %v6446 = vpop.f32.mrb[0].mxu0
        %v6447 = vpop.f32.mrb[0].mxu0
        %v6448 = vadd.f32 %v6116, %v6447
        %v6449 = vpop.f32.mrb[0].mxu0
        %6450 = vmatprep.mubr.bf16.mxu0 %v6233
        %6451 = vmatmul.mubr.bf16.gmra.mrb[0].mxu0 %v6063
        %v6452 = vpop.f32.mrb[0].mxu0
        %v6453 = vadd.f32 %v6116, %v6452
        %v6454 = vpop.f32.mrb[0].mxu0
        %v6455 = vpop.f32.mrb[0].mxu0
        %v6456 = vadd.f32 %v6116, %v6455
        %v6457 = vpop.f32.mrb[0].mxu0
        %6458 = vmatprep.mubr.bf16.mxu0 %v6236
        %6459 = vmatmul.mubr.bf16.gmra.mrb[0].mxu0 %v6065
        %v6460 = vpop.f32.mrb[0].mxu0
        %v6461 = vadd.f32 %v6116, %v6460
        %v6462 = vpop.f32.mrb[0].mxu0
        %v6463 = vpop.f32.mrb[0].mxu0
        %v6464 = vadd.f32 %v6116, %v6463
        %v6465 = vpop.f32.mrb[0].mxu0
        %6466 = vmatprep.mubr.bf16.mxu0 %v6239
        %6467 = vmatmul.mubr.bf16.gmra.mrb[0].mxu0 %v6067
        %v6468 = vpop.f32.mrb[0].mxu0
        %v6469 = vadd.f32 %v6116, %v6468
        %v6470 = vpop.f32.mrb[0].mxu0
        %v6471 = vpop.f32.mrb[0].mxu0
        %v6472 = vadd.f32 %v6116, %v6471
        %v6473 = vpop.f32.mrb[0].mxu0
        %6474 = vmatprep.mubr.bf16.mxu0 %v6242
        %6475 = vmatmul.mubr.bf16.gmra.mrb[0].mxu0 %v6069
        %v6476 = vpop.f32.mrb[0].mxu0
        %v6477 = vadd.f32 %v6116, %v6476
        %v6478 = vpop.f32.mrb[0].mxu0
        %v6479 = vpop.f32.mrb[0].mxu0
        %v6480 = vadd.f32 %v6116, %v6479
        %v6481 = vpop.f32.mrb[0].mxu0
        %6482 = vmatprep.mubr.bf16.mxu0 %v6245
        %6483 = vmatmul.mubr.bf16.gmra.mrb[0].mxu0 %v6071
        %v6484 = vpop.f32.mrb[0].mxu0
        %v6485 = vadd.f32 %v6116, %v6484
        %v6486 = vpop.f32.mrb[0].mxu0
        %v6487 = vpop.f32.mrb[0].mxu0
        %v6488 = vadd.f32 %v6116, %v6487
        %v6489 = vpop.f32.mrb[0].mxu0
        %6490 = vmatprep.mubr.bf16.mxu0 %v6248
        %6491 = vmatmul.mubr.bf16.gmra.mrb[0].mxu0 %v6073
        %v6492 = vpop.f32.mrb[0].mxu0
        %v6493 = vadd.f32 %v6116, %v6492
        %v6494 = vpop.f32.mrb[0].mxu0
        %v6495 = vpop.f32.mrb[0].mxu0
        %v6496 = vadd.f32 %v6116, %v6495
        %v6497 = vpop.f32.mrb[0].mxu0
        %6498 = vmatprep.mubr.bf16.mxu0 %v6251
        %6499 = vmatmul.mubr.bf16.gmra.mrb[0].mxu0 %v6075
        %v6500 = vpop.f32.mrb[0].mxu0
        %v6501 = vadd.f32 %v6116, %v6500
        %v6502 = vpop.f32.mrb[0].mxu0
        %v6503 = vpop.f32.mrb[0].mxu0
        %v6504 = vadd.f32 %v6116, %v6503
        %v6505 = vpop.f32.mrb[0].mxu0
        %6506 = vmatprep.mubr.bf16.mxu0 %v6254
        %6507 = vmatmul.mubr.bf16.gmra.mrb[0].mxu0 %v6077
        %v6508 = vpop.f32.mrb[0].mxu0
        %v6509 = vadd.f32 %v6116, %v6508
        %v6510 = vpop.f32.mrb[0].mxu0
        %v6511 = vpop.f32.mrb[0].mxu0
        %v6512 = vadd.f32 %v6116, %v6511
        %v6513 = vpop.f32.mrb[0].mxu0
        %6514 = vmatprep.mubr.bf16.mxu0 %v6257
        %6515 = vmatmul.mubr.bf16.gmra.mrb[0].mxu0 %v6079
        %v6516 = vpop.f32.mrb[0].mxu0
        %v6517 = vadd.f32 %v6116, %v6516
        %v6518 = vpop.f32.mrb[0].mxu0
        %v6519 = vpop.f32.mrb[0].mxu0
        %v6520 = vadd.f32 %v6116, %v6519
        %v6521 = vpop.f32.mrb[0].mxu0
        %6522 = vmatprep.mubr.bf16.mxu0 %v6260
        %6523 = vmatmul.mubr.bf16.gmra.mrb[0].mxu0 %v6081
        %v6524 = vpop.f32.mrb[0].mxu0
        %v6525 = vadd.f32 %v6116, %v6524
        %v6526 = vpop.f32.mrb[0].mxu0
        %v6527 = vpop.f32.mrb[0].mxu0
        %v6528 = vadd.f32 %v6116, %v6527
        %v6529 = vpop.f32.mrb[0].mxu0
        %6530 = vmatprep.mubr.bf16.mxu0 %v6263
        %6531 = vmatmul.mubr.bf16.gmra.mrb[0].mxu0 %v6083
        %v6532 = vpop.f32.mrb[0].mxu0
        %v6533 = vadd.f32 %v6116, %v6532
        %v6534 = vpop.f32.mrb[0].mxu0
        %v6535 = vpop.f32.mrb[0].mxu0
        %v6536 = vadd.f32 %v6116, %v6535
        %v6537 = vpop.f32.mrb[0].mxu0
        %6538 = vmatprep.mubr.bf16.mxu0 %v6266
        %6539 = vmatmul.mubr.bf16.gmra.mrb[0].mxu0 %v6085
        %v6540 = vpop.f32.mrb[0].mxu0
        %v6541 = vadd.f32 %v6116, %v6540
        %v6542 = vpop.f32.mrb[0].mxu0
        %v6543 = vpop.f32.mrb[0].mxu0
        %v6544 = vadd.f32 %v6116, %v6543
        %v6545 = vpop.f32.mrb[0].mxu0
        %6546 = vmatprep.mubr.bf16.mxu0 %v6269
        %6547 = vmatmul.mubr.bf16.gmra.mrb[0].mxu0 %v6087
        %v6548 = vpop.f32.mrb[0].mxu0
        %v6549 = vadd.f32 %v6116, %v6548
        %v6550 = vpop.f32.mrb[0].mxu0
        %v6551 = vpop.f32.mrb[0].mxu0
        %v6552 = vadd.f32 %v6116, %v6551
        %v6553 = vpop.f32.mrb[0].mxu0
        %6554 = vmatprep.mubr.bf16.mxu0 %v6272
        %6555 = vmatmul.mubr.bf16.gmra.mrb[0].mxu0 %v6089
        %v6556 = vpop.f32.mrb[0].mxu0
        %v6557 = vadd.f32 %v6116, %v6556
        %v6558 = vpop.f32.mrb[0].mxu0
        %v6559 = vpop.f32.mrb[0].mxu0
        %v6560 = vadd.f32 %v6116, %v6559
        %v6561 = vpop.f32.mrb[0].mxu0
        %6562 = vdwg.mxu0
        %v6563 = vmax.f32 %v6309, 0.0
        %v6564 = vmax.f32 %v6312, 0.0
        %v6565 = vmax.f32 %v6317, 0.0
        %v6566 = vmax.f32 %v6320, 0.0
        %v6567 = vmax.f32 %v6325, 0.0
        %v6568 = vmax.f32 %v6328, 0.0
        %v6569 = vmax.f32 %v6333, 0.0
        %v6570 = vmax.f32 %v6336, 0.0
        %v6571 = vmax.f32 %v6341, 0.0
        %v6572 = vmax.f32 %v6344, 0.0
        %v6573 = vmax.f32 %v6349, 0.0
        %v6574 = vmax.f32 %v6352, 0.0
        %v6575 = vmax.f32 %v6357, 0.0
        %v6576 = vmax.f32 %v6360, 0.0
        %v6577 = vmax.f32 %v6365, 0.0
        %v6578 = vmax.f32 %v6368, 0.0
        %v6579 = vmax.f32 %v6373, 0.0
        %v6580 = vmax.f32 %v6376, 0.0
        %v6581 = vmax.f32 %v6381, 0.0
        %v6582 = vmax.f32 %v6384, 0.0
        %v6583 = vmax.f32 %v6389, 0.0
        %v6584 = vmax.f32 %v6392, 0.0
        %v6585 = vmax.f32 %v6397, 0.0
        %v6586 = vmax.f32 %v6400, 0.0
        %v6587 = vmax.f32 %v6405, 0.0
        %v6588 = vmax.f32 %v6408, 0.0
        %v6589 = vmax.f32 %v6413, 0.0
        %v6590 = vmax.f32 %v6416, 0.0
        %v6591 = vmax.f32 %v6421, 0.0
        %v6592 = vmax.f32 %v6424, 0.0
        %v6593 = vmax.f32 %v6429, 0.0
        %v6594 = vmax.f32 %v6432, 0.0
        %v6595 = vmax.f32 %v6437, 0.0
        %v6596 = vmax.f32 %v6440, 0.0
        %v6597 = vmax.f32 %v6445, 0.0
        %v6598 = vmax.f32 %v6448, 0.0
        %v6599 = vmax.f32 %v6453, 0.0
        %v6600 = vmax.f32 %v6456, 0.0
        %v6601 = vmax.f32 %v6461, 0.0
        %v6602 = vmax.f32 %v6464, 0.0
        %v6603 = vmax.f32 %v6469, 0.0
        %v6604 = vmax.f32 %v6472, 0.0
        %v6605 = vmax.f32 %v6477, 0.0
        %v6606 = vmax.f32 %v6480, 0.0
        %v6607 = vmax.f32 %v6485, 0.0
        %v6608 = vmax.f32 %v6488, 0.0
        %v6609 = vmax.f32 %v6493, 0.0
        %v6610 = vmax.f32 %v6496, 0.0
        %v6611 = vmax.f32 %v6501, 0.0
        %v6612 = vmax.f32 %v6504, 0.0
        %v6613 = vmax.f32 %v6509, 0.0
        %v6614 = vmax.f32 %v6512, 0.0
        %v6615 = vmax.f32 %v6517, 0.0
        %v6616 = vmax.f32 %v6520, 0.0
        %v6617 = vmax.f32 %v6525, 0.0
        %v6618 = vmax.f32 %v6528, 0.0
        %v6619 = vmax.f32 %v6533, 0.0
        %v6620 = vmax.f32 %v6536, 0.0
        %v6621 = vmax.f32 %v6541, 0.0
        %v6622 = vmax.f32 %v6544, 0.0
        %v6623 = vmax.f32 %v6549, 0.0
        %v6624 = vmax.f32 %v6552, 0.0
        %v6625 = vmax.f32 %v6557, 0.0
        %v6626 = vmax.f32 %v6560, 0.0
        %v6691 = vcombine.high %v6563, %v6563
        %v6693 = vunpack.c.l.s4 1983009808
        %v6694 = vunpack.c.0.s8 %v6693
        %v6695 = vlaneseq
        %v6696 = vshrl.u32 %v6695, 7
        %v6697 = vsub.s32 %v6694, %v6696
        %v6698 = vrot.slane %v6563, %v6697
        %v6700 = vunpack.c.l.s4 1983009808
        %v6701 = vunpack.c.0.s8 %v6700
        %v6702 = vlaneseq
        %v6703 = vshrl.u32 %v6702, 7
        %v6704 = vsub.s32 %v6701, %v6703
        %v6705 = vrot.slane %v6691, %v6704
        %v6706 = vcombine.high %v6698, %v6698
        %v6707 = vcombine.high %v6705, %v6705
        %v6708 = vcombine.high %v6564, %v6564
        %v6710 = vunpack.c.l.s4 1983009808
        %v6711 = vunpack.c.0.s8 %v6710
        %v6712 = vlaneseq
        %v6713 = vshrl.u32 %v6712, 7
        %v6714 = vsub.s32 %v6711, %v6713
        %v6715 = vrot.slane %v6564, %v6714
        %v6717 = vunpack.c.l.s4 1983009808
        %v6718 = vunpack.c.0.s8 %v6717
        %v6719 = vlaneseq
        %v6720 = vshrl.u32 %v6719, 7
        %v6721 = vsub.s32 %v6718, %v6720
        %v6722 = vrot.slane %v6708, %v6721
        %v6723 = vcombine.high %v6715, %v6715
        %v6724 = vcombine.high %v6722, %v6722
        %v6725 = vcombine.high %v6565, %v6565
        %v6727 = vunpack.c.l.s4 1983009808
        %v6728 = vunpack.c.0.s8 %v6727
        %v6729 = vlaneseq
        %v6730 = vshrl.u32 %v6729, 7
        %v6731 = vsub.s32 %v6728, %v6730
        %v6732 = vrot.slane %v6565, %v6731
        %v6734 = vunpack.c.l.s4 1983009808
        %v6735 = vunpack.c.0.s8 %v6734
        %v6736 = vlaneseq
        %v6737 = vshrl.u32 %v6736, 7
        %v6738 = vsub.s32 %v6735, %v6737
        %v6739 = vrot.slane %v6725, %v6738
        %v6740 = vcombine.high %v6732, %v6732
        %v6741 = vcombine.high %v6739, %v6739
        %v6742 = vcombine.high %v6566, %v6566
        %v6744 = vunpack.c.l.s4 1983009808
        %v6745 = vunpack.c.0.s8 %v6744
        %v6746 = vlaneseq
        %v6747 = vshrl.u32 %v6746, 7
        %v6748 = vsub.s32 %v6745, %v6747
        %v6749 = vrot.slane %v6566, %v6748
        %v6751 = vunpack.c.l.s4 1983009808
        %v6752 = vunpack.c.0.s8 %v6751
        %v6753 = vlaneseq
        %v6754 = vshrl.u32 %v6753, 7
        %v6755 = vsub.s32 %v6752, %v6754
        %v6756 = vrot.slane %v6742, %v6755
        %v6757 = vcombine.high %v6749, %v6749
        %v6758 = vcombine.high %v6756, %v6756
        %v6759 = vcombine.high %v6567, %v6567
        %v6761 = vunpack.c.l.s4 1983009808
        %v6762 = vunpack.c.0.s8 %v6761
        %v6763 = vlaneseq
        %v6764 = vshrl.u32 %v6763, 7
        %v6765 = vsub.s32 %v6762, %v6764
        %v6766 = vrot.slane %v6567, %v6765
        %v6768 = vunpack.c.l.s4 1983009808
        %v6769 = vunpack.c.0.s8 %v6768
        %v6770 = vlaneseq
        %v6771 = vshrl.u32 %v6770, 7
        %v6772 = vsub.s32 %v6769, %v6771
        %v6773 = vrot.slane %v6759, %v6772
        %v6774 = vcombine.high %v6766, %v6766
        %v6775 = vcombine.high %v6773, %v6773
        %v6776 = vcombine.high %v6568, %v6568
        %v6778 = vunpack.c.l.s4 1983009808
        %v6779 = vunpack.c.0.s8 %v6778
        %v6780 = vlaneseq
        %v6781 = vshrl.u32 %v6780, 7
        %v6782 = vsub.s32 %v6779, %v6781
        %v6783 = vrot.slane %v6568, %v6782
        %v6785 = vunpack.c.l.s4 1983009808
        %v6786 = vunpack.c.0.s8 %v6785
        %v6787 = vlaneseq
        %v6788 = vshrl.u32 %v6787, 7
        %v6789 = vsub.s32 %v6786, %v6788
        %v6790 = vrot.slane %v6776, %v6789
        %v6791 = vcombine.high %v6783, %v6783
        %v6792 = vcombine.high %v6790, %v6790
        %v6793 = vcombine.high %v6569, %v6569
        %v6795 = vunpack.c.l.s4 1983009808
        %v6796 = vunpack.c.0.s8 %v6795
        %v6797 = vlaneseq
        %v6798 = vshrl.u32 %v6797, 7
        %v6799 = vsub.s32 %v6796, %v6798
        %v6800 = vrot.slane %v6569, %v6799
        %v6802 = vunpack.c.l.s4 1983009808
        %v6803 = vunpack.c.0.s8 %v6802
        %v6804 = vlaneseq
        %v6805 = vshrl.u32 %v6804, 7
        %v6806 = vsub.s32 %v6803, %v6805
        %v6807 = vrot.slane %v6793, %v6806
        %v6808 = vcombine.high %v6800, %v6800
        %v6809 = vcombine.high %v6807, %v6807
        %v6810 = vcombine.high %v6570, %v6570
        %v6812 = vunpack.c.l.s4 1983009808
        %v6813 = vunpack.c.0.s8 %v6812
        %v6814 = vlaneseq
        %v6815 = vshrl.u32 %v6814, 7
        %v6816 = vsub.s32 %v6813, %v6815
        %v6817 = vrot.slane %v6570, %v6816
        %v6819 = vunpack.c.l.s4 1983009808
        %v6820 = vunpack.c.0.s8 %v6819
        %v6821 = vlaneseq
        %v6822 = vshrl.u32 %v6821, 7
        %v6823 = vsub.s32 %v6820, %v6822
        %v6824 = vrot.slane %v6810, %v6823
        %v6825 = vcombine.high %v6817, %v6817
        %v6826 = vcombine.high %v6824, %v6824
        %v6827 = vcombine.high %v6571, %v6571
        %v6829 = vunpack.c.l.s4 1983009808
        %v6830 = vunpack.c.0.s8 %v6829
        %v6831 = vlaneseq
        %v6832 = vshrl.u32 %v6831, 7
        %v6833 = vsub.s32 %v6830, %v6832
        %v6834 = vrot.slane %v6571, %v6833
        %v6836 = vunpack.c.l.s4 1983009808
        %v6837 = vunpack.c.0.s8 %v6836
        %v6838 = vlaneseq
        %v6839 = vshrl.u32 %v6838, 7
        %v6840 = vsub.s32 %v6837, %v6839
        %v6841 = vrot.slane %v6827, %v6840
        %v6842 = vcombine.high %v6834, %v6834
        %v6843 = vcombine.high %v6841, %v6841
        %v6844 = vcombine.high %v6572, %v6572
        %v6846 = vunpack.c.l.s4 1983009808
        %v6847 = vunpack.c.0.s8 %v6846
        %v6848 = vlaneseq
        %v6849 = vshrl.u32 %v6848, 7
        %v6850 = vsub.s32 %v6847, %v6849
        %v6851 = vrot.slane %v6572, %v6850
        %v6853 = vunpack.c.l.s4 1983009808
        %v6854 = vunpack.c.0.s8 %v6853
        %v6855 = vlaneseq
        %v6856 = vshrl.u32 %v6855, 7
        %v6857 = vsub.s32 %v6854, %v6856
        %v6858 = vrot.slane %v6844, %v6857
        %v6859 = vcombine.high %v6851, %v6851
        %v6860 = vcombine.high %v6858, %v6858
        %v6861 = vcombine.high %v6573, %v6573
        %v6863 = vunpack.c.l.s4 1983009808
        %v6864 = vunpack.c.0.s8 %v6863
        %v6865 = vlaneseq
        %v6866 = vshrl.u32 %v6865, 7
        %v6867 = vsub.s32 %v6864, %v6866
        %v6868 = vrot.slane %v6573, %v6867
        %v6870 = vunpack.c.l.s4 1983009808
        %v6871 = vunpack.c.0.s8 %v6870
        %v6872 = vlaneseq
        %v6873 = vshrl.u32 %v6872, 7
        %v6874 = vsub.s32 %v6871, %v6873
        %v6875 = vrot.slane %v6861, %v6874
        %v6876 = vcombine.high %v6868, %v6868
        %v6877 = vcombine.high %v6875, %v6875
        %v6878 = vcombine.high %v6574, %v6574
        %v6880 = vunpack.c.l.s4 1983009808
        %v6881 = vunpack.c.0.s8 %v6880
        %v6882 = vlaneseq
        %v6883 = vshrl.u32 %v6882, 7
        %v6884 = vsub.s32 %v6881, %v6883
        %v6885 = vrot.slane %v6574, %v6884
        %v6887 = vunpack.c.l.s4 1983009808
        %v6888 = vunpack.c.0.s8 %v6887
        %v6889 = vlaneseq
        %v6890 = vshrl.u32 %v6889, 7
        %v6891 = vsub.s32 %v6888, %v6890
        %v6892 = vrot.slane %v6878, %v6891
        %v6893 = vcombine.high %v6885, %v6885
        %v6894 = vcombine.high %v6892, %v6892
        %v6895 = vcombine.high %v6575, %v6575
        %v6897 = vunpack.c.l.s4 1983009808
        %v6898 = vunpack.c.0.s8 %v6897
        %v6899 = vlaneseq
        %v6900 = vshrl.u32 %v6899, 7
        %v6901 = vsub.s32 %v6898, %v6900
        %v6902 = vrot.slane %v6575, %v6901
        %v6904 = vunpack.c.l.s4 1983009808
        %v6905 = vunpack.c.0.s8 %v6904
        %v6906 = vlaneseq
        %v6907 = vshrl.u32 %v6906, 7
        %v6908 = vsub.s32 %v6905, %v6907
        %v6909 = vrot.slane %v6895, %v6908
        %v6910 = vcombine.high %v6902, %v6902
        %v6911 = vcombine.high %v6909, %v6909
        %v6912 = vcombine.high %v6576, %v6576
        %v6914 = vunpack.c.l.s4 1983009808
        %v6915 = vunpack.c.0.s8 %v6914
        %v6916 = vlaneseq
        %v6917 = vshrl.u32 %v6916, 7
        %v6918 = vsub.s32 %v6915, %v6917
        %v6919 = vrot.slane %v6576, %v6918
        %v6921 = vunpack.c.l.s4 1983009808
        %v6922 = vunpack.c.0.s8 %v6921
        %v6923 = vlaneseq
        %v6924 = vshrl.u32 %v6923, 7
        %v6925 = vsub.s32 %v6922, %v6924
        %v6926 = vrot.slane %v6912, %v6925
        %v6927 = vcombine.high %v6919, %v6919
        %v6928 = vcombine.high %v6926, %v6926
        %v6929 = vcombine.high %v6577, %v6577
        %v6931 = vunpack.c.l.s4 1983009808
        %v6932 = vunpack.c.0.s8 %v6931
        %v6933 = vlaneseq
        %v6934 = vshrl.u32 %v6933, 7
        %v6935 = vsub.s32 %v6932, %v6934
        %v6936 = vrot.slane %v6577, %v6935
        %v6938 = vunpack.c.l.s4 1983009808
        %v6939 = vunpack.c.0.s8 %v6938
        %v6940 = vlaneseq
        %v6941 = vshrl.u32 %v6940, 7
        %v6942 = vsub.s32 %v6939, %v6941
        %v6943 = vrot.slane %v6929, %v6942
        %v6944 = vcombine.high %v6936, %v6936
        %v6945 = vcombine.high %v6943, %v6943
        %v6946 = vcombine.high %v6578, %v6578
        %v6948 = vunpack.c.l.s4 1983009808
        %v6949 = vunpack.c.0.s8 %v6948
        %v6950 = vlaneseq
        %v6951 = vshrl.u32 %v6950, 7
        %v6952 = vsub.s32 %v6949, %v6951
        %v6953 = vrot.slane %v6578, %v6952
        %v6955 = vunpack.c.l.s4 1983009808
        %v6956 = vunpack.c.0.s8 %v6955
        %v6957 = vlaneseq
        %v6958 = vshrl.u32 %v6957, 7
        %v6959 = vsub.s32 %v6956, %v6958
        %v6960 = vrot.slane %v6946, %v6959
        %v6961 = vcombine.high %v6953, %v6953
        %v6962 = vcombine.high %v6960, %v6960
        %v6963 = vcombine.high %v6579, %v6579
        %v6965 = vunpack.c.l.s4 1983009808
        %v6966 = vunpack.c.0.s8 %v6965
        %v6967 = vlaneseq
        %v6968 = vshrl.u32 %v6967, 7
        %v6969 = vsub.s32 %v6966, %v6968
        %v6970 = vrot.slane %v6579, %v6969
        %v6972 = vunpack.c.l.s4 1983009808
        %v6973 = vunpack.c.0.s8 %v6972
        %v6974 = vlaneseq
        %v6975 = vshrl.u32 %v6974, 7
        %v6976 = vsub.s32 %v6973, %v6975
        %v6977 = vrot.slane %v6963, %v6976
        %v6978 = vcombine.high %v6970, %v6970
        %v6979 = vcombine.high %v6977, %v6977
        %v6980 = vcombine.high %v6580, %v6580
        %v6982 = vunpack.c.l.s4 1983009808
        %v6983 = vunpack.c.0.s8 %v6982
        %v6984 = vlaneseq
        %v6985 = vshrl.u32 %v6984, 7
        %v6986 = vsub.s32 %v6983, %v6985
        %v6987 = vrot.slane %v6580, %v6986
        %v6989 = vunpack.c.l.s4 1983009808
        %v6990 = vunpack.c.0.s8 %v6989
        %v6991 = vlaneseq
        %v6992 = vshrl.u32 %v6991, 7
        %v6993 = vsub.s32 %v6990, %v6992
        %v6994 = vrot.slane %v6980, %v6993
        %v6995 = vcombine.high %v6987, %v6987
        %v6996 = vcombine.high %v6994, %v6994
        %v6997 = vcombine.high %v6581, %v6581
        %v6999 = vunpack.c.l.s4 1983009808
        %v7000 = vunpack.c.0.s8 %v6999
        %v7001 = vlaneseq
        %v7002 = vshrl.u32 %v7001, 7
        %v7003 = vsub.s32 %v7000, %v7002
        %v7004 = vrot.slane %v6581, %v7003
        %v7006 = vunpack.c.l.s4 1983009808
        %v7007 = vunpack.c.0.s8 %v7006
        %v7008 = vlaneseq
        %v7009 = vshrl.u32 %v7008, 7
        %v7010 = vsub.s32 %v7007, %v7009
        %v7011 = vrot.slane %v6997, %v7010
        %v7012 = vcombine.high %v7004, %v7004
        %v7013 = vcombine.high %v7011, %v7011
        %v7014 = vcombine.high %v6582, %v6582
        %v7016 = vunpack.c.l.s4 1983009808
        %v7017 = vunpack.c.0.s8 %v7016
        %v7018 = vlaneseq
        %v7019 = vshrl.u32 %v7018, 7
        %v7020 = vsub.s32 %v7017, %v7019
        %v7021 = vrot.slane %v6582, %v7020
        %v7023 = vunpack.c.l.s4 1983009808
        %v7024 = vunpack.c.0.s8 %v7023
        %v7025 = vlaneseq
        %v7026 = vshrl.u32 %v7025, 7
        %v7027 = vsub.s32 %v7024, %v7026
        %v7028 = vrot.slane %v7014, %v7027
        %v7029 = vcombine.high %v7021, %v7021
        %v7030 = vcombine.high %v7028, %v7028
        %v7031 = vcombine.high %v6583, %v6583
        %v7033 = vunpack.c.l.s4 1983009808
        %v7034 = vunpack.c.0.s8 %v7033
        %v7035 = vlaneseq
        %v7036 = vshrl.u32 %v7035, 7
        %v7037 = vsub.s32 %v7034, %v7036
        %v7038 = vrot.slane %v6583, %v7037
        %v7040 = vunpack.c.l.s4 1983009808
        %v7041 = vunpack.c.0.s8 %v7040
        %v7042 = vlaneseq
        %v7043 = vshrl.u32 %v7042, 7
        %v7044 = vsub.s32 %v7041, %v7043
        %v7045 = vrot.slane %v7031, %v7044
        %v7046 = vcombine.high %v7038, %v7038
        %v7047 = vcombine.high %v7045, %v7045
        %v7048 = vcombine.high %v6584, %v6584
        %v7050 = vunpack.c.l.s4 1983009808
        %v7051 = vunpack.c.0.s8 %v7050
        %v7052 = vlaneseq
        %v7053 = vshrl.u32 %v7052, 7
        %v7054 = vsub.s32 %v7051, %v7053
        %v7055 = vrot.slane %v6584, %v7054
        %v7057 = vunpack.c.l.s4 1983009808
        %v7058 = vunpack.c.0.s8 %v7057
        %v7059 = vlaneseq
        %v7060 = vshrl.u32 %v7059, 7
        %v7061 = vsub.s32 %v7058, %v7060
        %v7062 = vrot.slane %v7048, %v7061
        %v7063 = vcombine.high %v7055, %v7055
        %v7064 = vcombine.high %v7062, %v7062
        %v7065 = vcombine.high %v6585, %v6585
        %v7067 = vunpack.c.l.s4 1983009808
        %v7068 = vunpack.c.0.s8 %v7067
        %v7069 = vlaneseq
        %v7070 = vshrl.u32 %v7069, 7
        %v7071 = vsub.s32 %v7068, %v7070
        %v7072 = vrot.slane %v6585, %v7071
        %v7074 = vunpack.c.l.s4 1983009808
        %v7075 = vunpack.c.0.s8 %v7074
        %v7076 = vlaneseq
        %v7077 = vshrl.u32 %v7076, 7
        %v7078 = vsub.s32 %v7075, %v7077
        %v7079 = vrot.slane %v7065, %v7078
        %v7080 = vcombine.high %v7072, %v7072
        %v7081 = vcombine.high %v7079, %v7079
        %v7082 = vcombine.high %v6586, %v6586
        %v7084 = vunpack.c.l.s4 1983009808
        %v7085 = vunpack.c.0.s8 %v7084
        %v7086 = vlaneseq
        %v7087 = vshrl.u32 %v7086, 7
        %v7088 = vsub.s32 %v7085, %v7087
        %v7089 = vrot.slane %v6586, %v7088
        %v7091 = vunpack.c.l.s4 1983009808
        %v7092 = vunpack.c.0.s8 %v7091
        %v7093 = vlaneseq
        %v7094 = vshrl.u32 %v7093, 7
        %v7095 = vsub.s32 %v7092, %v7094
        %v7096 = vrot.slane %v7082, %v7095
        %v7097 = vcombine.high %v7089, %v7089
        %v7098 = vcombine.high %v7096, %v7096
        %v7099 = vcombine.high %v6587, %v6587
        %v7101 = vunpack.c.l.s4 1983009808
        %v7102 = vunpack.c.0.s8 %v7101
        %v7103 = vlaneseq
        %v7104 = vshrl.u32 %v7103, 7
        %v7105 = vsub.s32 %v7102, %v7104
        %v7106 = vrot.slane %v6587, %v7105
        %v7108 = vunpack.c.l.s4 1983009808
        %v7109 = vunpack.c.0.s8 %v7108
        %v7110 = vlaneseq
        %v7111 = vshrl.u32 %v7110, 7
        %v7112 = vsub.s32 %v7109, %v7111
        %v7113 = vrot.slane %v7099, %v7112
        %v7114 = vcombine.high %v7106, %v7106
        %v7115 = vcombine.high %v7113, %v7113
        %v7116 = vcombine.high %v6588, %v6588
        %v7118 = vunpack.c.l.s4 1983009808
        %v7119 = vunpack.c.0.s8 %v7118
        %v7120 = vlaneseq
        %v7121 = vshrl.u32 %v7120, 7
        %v7122 = vsub.s32 %v7119, %v7121
        %v7123 = vrot.slane %v6588, %v7122
        %v7125 = vunpack.c.l.s4 1983009808
        %v7126 = vunpack.c.0.s8 %v7125
        %v7127 = vlaneseq
        %v7128 = vshrl.u32 %v7127, 7
        %v7129 = vsub.s32 %v7126, %v7128
        %v7130 = vrot.slane %v7116, %v7129
        %v7131 = vcombine.high %v7123, %v7123
        %v7132 = vcombine.high %v7130, %v7130
        %v7133 = vcombine.high %v6589, %v6589
        %v7135 = vunpack.c.l.s4 1983009808
        %v7136 = vunpack.c.0.s8 %v7135
        %v7137 = vlaneseq
        %v7138 = vshrl.u32 %v7137, 7
        %v7139 = vsub.s32 %v7136, %v7138
        %v7140 = vrot.slane %v6589, %v7139
        %v7142 = vunpack.c.l.s4 1983009808
        %v7143 = vunpack.c.0.s8 %v7142
        %v7144 = vlaneseq
        %v7145 = vshrl.u32 %v7144, 7
        %v7146 = vsub.s32 %v7143, %v7145
        %v7147 = vrot.slane %v7133, %v7146
        %v7148 = vcombine.high %v7140, %v7140
        %v7149 = vcombine.high %v7147, %v7147
        %v7150 = vcombine.high %v6590, %v6590
        %v7152 = vunpack.c.l.s4 1983009808
        %v7153 = vunpack.c.0.s8 %v7152
        %v7154 = vlaneseq
        %v7155 = vshrl.u32 %v7154, 7
        %v7156 = vsub.s32 %v7153, %v7155
        %v7157 = vrot.slane %v6590, %v7156
        %v7159 = vunpack.c.l.s4 1983009808
        %v7160 = vunpack.c.0.s8 %v7159
        %v7161 = vlaneseq
        %v7162 = vshrl.u32 %v7161, 7
        %v7163 = vsub.s32 %v7160, %v7162
        %v7164 = vrot.slane %v7150, %v7163
        %v7165 = vcombine.high %v7157, %v7157
        %v7166 = vcombine.high %v7164, %v7164
        %v7167 = vcombine.high %v6591, %v6591
        %v7169 = vunpack.c.l.s4 1983009808
        %v7170 = vunpack.c.0.s8 %v7169
        %v7171 = vlaneseq
        %v7172 = vshrl.u32 %v7171, 7
        %v7173 = vsub.s32 %v7170, %v7172
        %v7174 = vrot.slane %v6591, %v7173
        %v7176 = vunpack.c.l.s4 1983009808
        %v7177 = vunpack.c.0.s8 %v7176
        %v7178 = vlaneseq
        %v7179 = vshrl.u32 %v7178, 7
        %v7180 = vsub.s32 %v7177, %v7179
        %v7181 = vrot.slane %v7167, %v7180
        %v7182 = vcombine.high %v7174, %v7174
        %v7183 = vcombine.high %v7181, %v7181
        %v7184 = vcombine.high %v6592, %v6592
        %v7186 = vunpack.c.l.s4 1983009808
        %v7187 = vunpack.c.0.s8 %v7186
        %v7188 = vlaneseq
        %v7189 = vshrl.u32 %v7188, 7
        %v7190 = vsub.s32 %v7187, %v7189
        %v7191 = vrot.slane %v6592, %v7190
        %v7193 = vunpack.c.l.s4 1983009808
        %v7194 = vunpack.c.0.s8 %v7193
        %v7195 = vlaneseq
        %v7196 = vshrl.u32 %v7195, 7
        %v7197 = vsub.s32 %v7194, %v7196
        %v7198 = vrot.slane %v7184, %v7197
        %v7199 = vcombine.high %v7191, %v7191
        %v7200 = vcombine.high %v7198, %v7198
        %v7201 = vcombine.high %v6593, %v6593
        %v7203 = vunpack.c.l.s4 1983009808
        %v7204 = vunpack.c.0.s8 %v7203
        %v7205 = vlaneseq
        %v7206 = vshrl.u32 %v7205, 7
        %v7207 = vsub.s32 %v7204, %v7206
        %v7208 = vrot.slane %v6593, %v7207
        %v7210 = vunpack.c.l.s4 1983009808
        %v7211 = vunpack.c.0.s8 %v7210
        %v7212 = vlaneseq
        %v7213 = vshrl.u32 %v7212, 7
        %v7214 = vsub.s32 %v7211, %v7213
        %v7215 = vrot.slane %v7201, %v7214
        %v7216 = vcombine.high %v7208, %v7208
        %v7217 = vcombine.high %v7215, %v7215
        %v7218 = vcombine.high %v6594, %v6594
        %v7220 = vunpack.c.l.s4 1983009808
        %v7221 = vunpack.c.0.s8 %v7220
        %v7222 = vlaneseq
        %v7223 = vshrl.u32 %v7222, 7
        %v7224 = vsub.s32 %v7221, %v7223
        %v7225 = vrot.slane %v6594, %v7224
        %v7227 = vunpack.c.l.s4 1983009808
        %v7228 = vunpack.c.0.s8 %v7227
        %v7229 = vlaneseq
        %v7230 = vshrl.u32 %v7229, 7
        %v7231 = vsub.s32 %v7228, %v7230
        %v7232 = vrot.slane %v7218, %v7231
        %v7233 = vcombine.high %v7225, %v7225
        %v7234 = vcombine.high %v7232, %v7232
        %v7235 = vcombine.high %v6595, %v6595
        %v7237 = vunpack.c.l.s4 1983009808
        %v7238 = vunpack.c.0.s8 %v7237
        %v7239 = vlaneseq
        %v7240 = vshrl.u32 %v7239, 7
        %v7241 = vsub.s32 %v7238, %v7240
        %v7242 = vrot.slane %v6595, %v7241
        %v7244 = vunpack.c.l.s4 1983009808
        %v7245 = vunpack.c.0.s8 %v7244
        %v7246 = vlaneseq
        %v7247 = vshrl.u32 %v7246, 7
        %v7248 = vsub.s32 %v7245, %v7247
        %v7249 = vrot.slane %v7235, %v7248
        %v7250 = vcombine.high %v7242, %v7242
        %v7251 = vcombine.high %v7249, %v7249
        %v7252 = vcombine.high %v6596, %v6596
        %v7254 = vunpack.c.l.s4 1983009808
        %v7255 = vunpack.c.0.s8 %v7254
        %v7256 = vlaneseq
        %v7257 = vshrl.u32 %v7256, 7
        %v7258 = vsub.s32 %v7255, %v7257
        %v7259 = vrot.slane %v6596, %v7258
        %v7261 = vunpack.c.l.s4 1983009808
        %v7262 = vunpack.c.0.s8 %v7261
        %v7263 = vlaneseq
        %v7264 = vshrl.u32 %v7263, 7
        %v7265 = vsub.s32 %v7262, %v7264
        %v7266 = vrot.slane %v7252, %v7265
        %v7267 = vcombine.high %v7259, %v7259
        %v7268 = vcombine.high %v7266, %v7266
        %v7269 = vcombine.high %v6597, %v6597
        %v7271 = vunpack.c.l.s4 1983009808
        %v7272 = vunpack.c.0.s8 %v7271
        %v7273 = vlaneseq
        %v7274 = vshrl.u32 %v7273, 7
        %v7275 = vsub.s32 %v7272, %v7274
        %v7276 = vrot.slane %v6597, %v7275
        %v7278 = vunpack.c.l.s4 1983009808
        %v7279 = vunpack.c.0.s8 %v7278
        %v7280 = vlaneseq
        %v7281 = vshrl.u32 %v7280, 7
        %v7282 = vsub.s32 %v7279, %v7281
        %v7283 = vrot.slane %v7269, %v7282
        %v7284 = vcombine.high %v7276, %v7276
        %v7285 = vcombine.high %v7283, %v7283
        %v7286 = vcombine.high %v6598, %v6598
        %v7288 = vunpack.c.l.s4 1983009808
        %v7289 = vunpack.c.0.s8 %v7288
        %v7290 = vlaneseq
        %v7291 = vshrl.u32 %v7290, 7
        %v7292 = vsub.s32 %v7289, %v7291
        %v7293 = vrot.slane %v6598, %v7292
        %v7295 = vunpack.c.l.s4 1983009808
        %v7296 = vunpack.c.0.s8 %v7295
        %v7297 = vlaneseq
        %v7298 = vshrl.u32 %v7297, 7
        %v7299 = vsub.s32 %v7296, %v7298
        %v7300 = vrot.slane %v7286, %v7299
        %v7301 = vcombine.high %v7293, %v7293
        %v7302 = vcombine.high %v7300, %v7300
        %v7303 = vcombine.high %v6599, %v6599
        %v7305 = vunpack.c.l.s4 1983009808
        %v7306 = vunpack.c.0.s8 %v7305
        %v7307 = vlaneseq
        %v7308 = vshrl.u32 %v7307, 7
        %v7309 = vsub.s32 %v7306, %v7308
        %v7310 = vrot.slane %v6599, %v7309
        %v7312 = vunpack.c.l.s4 1983009808
        %v7313 = vunpack.c.0.s8 %v7312
        %v7314 = vlaneseq
        %v7315 = vshrl.u32 %v7314, 7
        %v7316 = vsub.s32 %v7313, %v7315
        %v7317 = vrot.slane %v7303, %v7316
        %v7318 = vcombine.high %v7310, %v7310
        %v7319 = vcombine.high %v7317, %v7317
        %v7320 = vcombine.high %v6600, %v6600
        %v7322 = vunpack.c.l.s4 1983009808
        %v7323 = vunpack.c.0.s8 %v7322
        %v7324 = vlaneseq
        %v7325 = vshrl.u32 %v7324, 7
        %v7326 = vsub.s32 %v7323, %v7325
        %v7327 = vrot.slane %v6600, %v7326
        %v7329 = vunpack.c.l.s4 1983009808
        %v7330 = vunpack.c.0.s8 %v7329
        %v7331 = vlaneseq
        %v7332 = vshrl.u32 %v7331, 7
        %v7333 = vsub.s32 %v7330, %v7332
        %v7334 = vrot.slane %v7320, %v7333
        %v7335 = vcombine.high %v7327, %v7327
        %v7336 = vcombine.high %v7334, %v7334
        %v7337 = vcombine.high %v6601, %v6601
        %v7339 = vunpack.c.l.s4 1983009808
        %v7340 = vunpack.c.0.s8 %v7339
        %v7341 = vlaneseq
        %v7342 = vshrl.u32 %v7341, 7
        %v7343 = vsub.s32 %v7340, %v7342
        %v7344 = vrot.slane %v6601, %v7343
        %v7346 = vunpack.c.l.s4 1983009808
        %v7347 = vunpack.c.0.s8 %v7346
        %v7348 = vlaneseq
        %v7349 = vshrl.u32 %v7348, 7
        %v7350 = vsub.s32 %v7347, %v7349
        %v7351 = vrot.slane %v7337, %v7350
        %v7352 = vcombine.high %v7344, %v7344
        %v7353 = vcombine.high %v7351, %v7351
        %v7354 = vcombine.high %v6602, %v6602
        %v7356 = vunpack.c.l.s4 1983009808
        %v7357 = vunpack.c.0.s8 %v7356
        %v7358 = vlaneseq
        %v7359 = vshrl.u32 %v7358, 7
        %v7360 = vsub.s32 %v7357, %v7359
        %v7361 = vrot.slane %v6602, %v7360
        %v7363 = vunpack.c.l.s4 1983009808
        %v7364 = vunpack.c.0.s8 %v7363
        %v7365 = vlaneseq
        %v7366 = vshrl.u32 %v7365, 7
        %v7367 = vsub.s32 %v7364, %v7366
        %v7368 = vrot.slane %v7354, %v7367
        %v7369 = vcombine.high %v7361, %v7361
        %v7370 = vcombine.high %v7368, %v7368
        %v7371 = vcombine.high %v6603, %v6603
        %v7373 = vunpack.c.l.s4 1983009808
        %v7374 = vunpack.c.0.s8 %v7373
        %v7375 = vlaneseq
        %v7376 = vshrl.u32 %v7375, 7
        %v7377 = vsub.s32 %v7374, %v7376
        %v7378 = vrot.slane %v6603, %v7377
        %v7380 = vunpack.c.l.s4 1983009808
        %v7381 = vunpack.c.0.s8 %v7380
        %v7382 = vlaneseq
        %v7383 = vshrl.u32 %v7382, 7
        %v7384 = vsub.s32 %v7381, %v7383
        %v7385 = vrot.slane %v7371, %v7384
        %v7386 = vcombine.high %v7378, %v7378
        %v7387 = vcombine.high %v7385, %v7385
        %v7388 = vcombine.high %v6604, %v6604
        %v7390 = vunpack.c.l.s4 1983009808
        %v7391 = vunpack.c.0.s8 %v7390
        %v7392 = vlaneseq
        %v7393 = vshrl.u32 %v7392, 7
        %v7394 = vsub.s32 %v7391, %v7393
        %v7395 = vrot.slane %v6604, %v7394
        %v7397 = vunpack.c.l.s4 1983009808
        %v7398 = vunpack.c.0.s8 %v7397
        %v7399 = vlaneseq
        %v7400 = vshrl.u32 %v7399, 7
        %v7401 = vsub.s32 %v7398, %v7400
        %v7402 = vrot.slane %v7388, %v7401
        %v7403 = vcombine.high %v7395, %v7395
        %v7404 = vcombine.high %v7402, %v7402
        %v7405 = vcombine.high %v6605, %v6605
        %v7407 = vunpack.c.l.s4 1983009808
        %v7408 = vunpack.c.0.s8 %v7407
        %v7409 = vlaneseq
        %v7410 = vshrl.u32 %v7409, 7
        %v7411 = vsub.s32 %v7408, %v7410
        %v7412 = vrot.slane %v6605, %v7411
        %v7414 = vunpack.c.l.s4 1983009808
        %v7415 = vunpack.c.0.s8 %v7414
        %v7416 = vlaneseq
        %v7417 = vshrl.u32 %v7416, 7
        %v7418 = vsub.s32 %v7415, %v7417
        %v7419 = vrot.slane %v7405, %v7418
        %v7420 = vcombine.high %v7412, %v7412
        %v7421 = vcombine.high %v7419, %v7419
        %v7422 = vcombine.high %v6606, %v6606
        %v7424 = vunpack.c.l.s4 1983009808
        %v7425 = vunpack.c.0.s8 %v7424
        %v7426 = vlaneseq
        %v7427 = vshrl.u32 %v7426, 7
        %v7428 = vsub.s32 %v7425, %v7427
        %v7429 = vrot.slane %v6606, %v7428
        %v7431 = vunpack.c.l.s4 1983009808
        %v7432 = vunpack.c.0.s8 %v7431
        %v7433 = vlaneseq
        %v7434 = vshrl.u32 %v7433, 7
        %v7435 = vsub.s32 %v7432, %v7434
        %v7436 = vrot.slane %v7422, %v7435
        %v7437 = vcombine.high %v7429, %v7429
        %v7438 = vcombine.high %v7436, %v7436
        %v7439 = vcombine.high %v6607, %v6607
        %v7441 = vunpack.c.l.s4 1983009808
        %v7442 = vunpack.c.0.s8 %v7441
        %v7443 = vlaneseq
        %v7444 = vshrl.u32 %v7443, 7
        %v7445 = vsub.s32 %v7442, %v7444
        %v7446 = vrot.slane %v6607, %v7445
        %v7448 = vunpack.c.l.s4 1983009808
        %v7449 = vunpack.c.0.s8 %v7448
        %v7450 = vlaneseq
        %v7451 = vshrl.u32 %v7450, 7
        %v7452 = vsub.s32 %v7449, %v7451
        %v7453 = vrot.slane %v7439, %v7452
        %v7454 = vcombine.high %v7446, %v7446
        %v7455 = vcombine.high %v7453, %v7453
        %v7456 = vcombine.high %v6608, %v6608
        %v7458 = vunpack.c.l.s4 1983009808
        %v7459 = vunpack.c.0.s8 %v7458
        %v7460 = vlaneseq
        %v7461 = vshrl.u32 %v7460, 7
        %v7462 = vsub.s32 %v7459, %v7461
        %v7463 = vrot.slane %v6608, %v7462
        %v7465 = vunpack.c.l.s4 1983009808
        %v7466 = vunpack.c.0.s8 %v7465
        %v7467 = vlaneseq
        %v7468 = vshrl.u32 %v7467, 7
        %v7469 = vsub.s32 %v7466, %v7468
        %v7470 = vrot.slane %v7456, %v7469
        %v7471 = vcombine.high %v7463, %v7463
        %v7472 = vcombine.high %v7470, %v7470
        %v7473 = vcombine.high %v6609, %v6609
        %v7475 = vunpack.c.l.s4 1983009808
        %v7476 = vunpack.c.0.s8 %v7475
        %v7477 = vlaneseq
        %v7478 = vshrl.u32 %v7477, 7
        %v7479 = vsub.s32 %v7476, %v7478
        %v7480 = vrot.slane %v6609, %v7479
        %v7482 = vunpack.c.l.s4 1983009808
        %v7483 = vunpack.c.0.s8 %v7482
        %v7484 = vlaneseq
        %v7485 = vshrl.u32 %v7484, 7
        %v7486 = vsub.s32 %v7483, %v7485
        %v7487 = vrot.slane %v7473, %v7486
        %v7488 = vcombine.high %v7480, %v7480
        %v7489 = vcombine.high %v7487, %v7487
        %v7490 = vcombine.high %v6610, %v6610
        %v7492 = vunpack.c.l.s4 1983009808
        %v7493 = vunpack.c.0.s8 %v7492
        %v7494 = vlaneseq
        %v7495 = vshrl.u32 %v7494, 7
        %v7496 = vsub.s32 %v7493, %v7495
        %v7497 = vrot.slane %v6610, %v7496
        %v7499 = vunpack.c.l.s4 1983009808
        %v7500 = vunpack.c.0.s8 %v7499
        %v7501 = vlaneseq
        %v7502 = vshrl.u32 %v7501, 7
        %v7503 = vsub.s32 %v7500, %v7502
        %v7504 = vrot.slane %v7490, %v7503
        %v7505 = vcombine.high %v7497, %v7497
        %v7506 = vcombine.high %v7504, %v7504
        %v7507 = vcombine.high %v6611, %v6611
        %v7509 = vunpack.c.l.s4 1983009808
        %v7510 = vunpack.c.0.s8 %v7509
        %v7511 = vlaneseq
        %v7512 = vshrl.u32 %v7511, 7
        %v7513 = vsub.s32 %v7510, %v7512
        %v7514 = vrot.slane %v6611, %v7513
        %v7516 = vunpack.c.l.s4 1983009808
        %v7517 = vunpack.c.0.s8 %v7516
        %v7518 = vlaneseq
        %v7519 = vshrl.u32 %v7518, 7
        %v7520 = vsub.s32 %v7517, %v7519
        %v7521 = vrot.slane %v7507, %v7520
        %v7522 = vcombine.high %v7514, %v7514
        %v7523 = vcombine.high %v7521, %v7521
        %v7524 = vcombine.high %v6612, %v6612
        %v7526 = vunpack.c.l.s4 1983009808
        %v7527 = vunpack.c.0.s8 %v7526
        %v7528 = vlaneseq
        %v7529 = vshrl.u32 %v7528, 7
        %v7530 = vsub.s32 %v7527, %v7529
        %v7531 = vrot.slane %v6612, %v7530
        %v7533 = vunpack.c.l.s4 1983009808
        %v7534 = vunpack.c.0.s8 %v7533
        %v7535 = vlaneseq
        %v7536 = vshrl.u32 %v7535, 7
        %v7537 = vsub.s32 %v7534, %v7536
        %v7538 = vrot.slane %v7524, %v7537
        %v7539 = vcombine.high %v7531, %v7531
        %v7540 = vcombine.high %v7538, %v7538
        %v7541 = vcombine.high %v6613, %v6613
        %v7543 = vunpack.c.l.s4 1983009808
        %v7544 = vunpack.c.0.s8 %v7543
        %v7545 = vlaneseq
        %v7546 = vshrl.u32 %v7545, 7
        %v7547 = vsub.s32 %v7544, %v7546
        %v7548 = vrot.slane %v6613, %v7547
        %v7550 = vunpack.c.l.s4 1983009808
        %v7551 = vunpack.c.0.s8 %v7550
        %v7552 = vlaneseq
        %v7553 = vshrl.u32 %v7552, 7
        %v7554 = vsub.s32 %v7551, %v7553
        %v7555 = vrot.slane %v7541, %v7554
        %v7556 = vcombine.high %v7548, %v7548
        %v7557 = vcombine.high %v7555, %v7555
        %v7558 = vcombine.high %v6614, %v6614
        %v7560 = vunpack.c.l.s4 1983009808
        %v7561 = vunpack.c.0.s8 %v7560
        %v7562 = vlaneseq
        %v7563 = vshrl.u32 %v7562, 7
        %v7564 = vsub.s32 %v7561, %v7563
        %v7565 = vrot.slane %v6614, %v7564
        %v7567 = vunpack.c.l.s4 1983009808
        %v7568 = vunpack.c.0.s8 %v7567
        %v7569 = vlaneseq
        %v7570 = vshrl.u32 %v7569, 7
        %v7571 = vsub.s32 %v7568, %v7570
        %v7572 = vrot.slane %v7558, %v7571
        %v7573 = vcombine.high %v7565, %v7565
        %v7574 = vcombine.high %v7572, %v7572
        %v7575 = vcombine.high %v6615, %v6615
        %v7577 = vunpack.c.l.s4 1983009808
        %v7578 = vunpack.c.0.s8 %v7577
        %v7579 = vlaneseq
        %v7580 = vshrl.u32 %v7579, 7
        %v7581 = vsub.s32 %v7578, %v7580
        %v7582 = vrot.slane %v6615, %v7581
        %v7584 = vunpack.c.l.s4 1983009808
        %v7585 = vunpack.c.0.s8 %v7584
        %v7586 = vlaneseq
        %v7587 = vshrl.u32 %v7586, 7
        %v7588 = vsub.s32 %v7585, %v7587
        %v7589 = vrot.slane %v7575, %v7588
        %v7590 = vcombine.high %v7582, %v7582
        %v7591 = vcombine.high %v7589, %v7589
        %v7592 = vcombine.high %v6616, %v6616
        %v7594 = vunpack.c.l.s4 1983009808
        %v7595 = vunpack.c.0.s8 %v7594
        %v7596 = vlaneseq
        %v7597 = vshrl.u32 %v7596, 7
        %v7598 = vsub.s32 %v7595, %v7597
        %v7599 = vrot.slane %v6616, %v7598
        %v7601 = vunpack.c.l.s4 1983009808
        %v7602 = vunpack.c.0.s8 %v7601
        %v7603 = vlaneseq
        %v7604 = vshrl.u32 %v7603, 7
        %v7605 = vsub.s32 %v7602, %v7604
        %v7606 = vrot.slane %v7592, %v7605
        %v7607 = vcombine.high %v7599, %v7599
        %v7608 = vcombine.high %v7606, %v7606
        %v7609 = vcombine.high %v6617, %v6617
        %v7611 = vunpack.c.l.s4 1983009808
        %v7612 = vunpack.c.0.s8 %v7611
        %v7613 = vlaneseq
        %v7614 = vshrl.u32 %v7613, 7
        %v7615 = vsub.s32 %v7612, %v7614
        %v7616 = vrot.slane %v6617, %v7615
        %v7618 = vunpack.c.l.s4 1983009808
        %v7619 = vunpack.c.0.s8 %v7618
        %v7620 = vlaneseq
        %v7621 = vshrl.u32 %v7620, 7
        %v7622 = vsub.s32 %v7619, %v7621
        %v7623 = vrot.slane %v7609, %v7622
        %v7624 = vcombine.high %v7616, %v7616
        %v7625 = vcombine.high %v7623, %v7623
        %v7626 = vcombine.high %v6618, %v6618
        %v7628 = vunpack.c.l.s4 1983009808
        %v7629 = vunpack.c.0.s8 %v7628
        %v7630 = vlaneseq
        %v7631 = vshrl.u32 %v7630, 7
        %v7632 = vsub.s32 %v7629, %v7631
        %v7633 = vrot.slane %v6618, %v7632
        %v7635 = vunpack.c.l.s4 1983009808
        %v7636 = vunpack.c.0.s8 %v7635
        %v7637 = vlaneseq
        %v7638 = vshrl.u32 %v7637, 7
        %v7639 = vsub.s32 %v7636, %v7638
        %v7640 = vrot.slane %v7626, %v7639
        %v7641 = vcombine.high %v7633, %v7633
        %v7642 = vcombine.high %v7640, %v7640
        %v7643 = vcombine.high %v6619, %v6619
        %v7645 = vunpack.c.l.s4 1983009808
        %v7646 = vunpack.c.0.s8 %v7645
        %v7647 = vlaneseq
        %v7648 = vshrl.u32 %v7647, 7
        %v7649 = vsub.s32 %v7646, %v7648
        %v7650 = vrot.slane %v6619, %v7649
        %v7652 = vunpack.c.l.s4 1983009808
        %v7653 = vunpack.c.0.s8 %v7652
        %v7654 = vlaneseq
        %v7655 = vshrl.u32 %v7654, 7
        %v7656 = vsub.s32 %v7653, %v7655
        %v7657 = vrot.slane %v7643, %v7656
        %v7658 = vcombine.high %v7650, %v7650
        %v7659 = vcombine.high %v7657, %v7657
        %v7660 = vcombine.high %v6620, %v6620
        %v7662 = vunpack.c.l.s4 1983009808
        %v7663 = vunpack.c.0.s8 %v7662
        %v7664 = vlaneseq
        %v7665 = vshrl.u32 %v7664, 7
        %v7666 = vsub.s32 %v7663, %v7665
        %v7667 = vrot.slane %v6620, %v7666
        %v7669 = vunpack.c.l.s4 1983009808
        %v7670 = vunpack.c.0.s8 %v7669
        %v7671 = vlaneseq
        %v7672 = vshrl.u32 %v7671, 7
        %v7673 = vsub.s32 %v7670, %v7672
        %v7674 = vrot.slane %v7660, %v7673
        %v7675 = vcombine.high %v7667, %v7667
        %v7676 = vcombine.high %v7674, %v7674
        %v7677 = vcombine.high %v6621, %v6621
        %v7679 = vunpack.c.l.s4 1983009808
        %v7680 = vunpack.c.0.s8 %v7679
        %v7681 = vlaneseq
        %v7682 = vshrl.u32 %v7681, 7
        %v7683 = vsub.s32 %v7680, %v7682
        %v7684 = vrot.slane %v6621, %v7683
        %v7686 = vunpack.c.l.s4 1983009808
        %v7687 = vunpack.c.0.s8 %v7686
        %v7688 = vlaneseq
        %v7689 = vshrl.u32 %v7688, 7
        %v7690 = vsub.s32 %v7687, %v7689
        %v7691 = vrot.slane %v7677, %v7690
        %v7692 = vcombine.high %v7684, %v7684
        %v7693 = vcombine.high %v7691, %v7691
        %v7694 = vcombine.high %v6622, %v6622
        %v7696 = vunpack.c.l.s4 1983009808
        %v7697 = vunpack.c.0.s8 %v7696
        %v7698 = vlaneseq
        %v7699 = vshrl.u32 %v7698, 7
        %v7700 = vsub.s32 %v7697, %v7699
        %v7701 = vrot.slane %v6622, %v7700
        %v7703 = vunpack.c.l.s4 1983009808
        %v7704 = vunpack.c.0.s8 %v7703
        %v7705 = vlaneseq
        %v7706 = vshrl.u32 %v7705, 7
        %v7707 = vsub.s32 %v7704, %v7706
        %v7708 = vrot.slane %v7694, %v7707
        %v7709 = vcombine.high %v7701, %v7701
        %v7710 = vcombine.high %v7708, %v7708
        %v7711 = vcombine.high %v6623, %v6623
        %v7713 = vunpack.c.l.s4 1983009808
        %v7714 = vunpack.c.0.s8 %v7713
        %v7715 = vlaneseq
        %v7716 = vshrl.u32 %v7715, 7
        %v7717 = vsub.s32 %v7714, %v7716
        %v7718 = vrot.slane %v6623, %v7717
        %v7720 = vunpack.c.l.s4 1983009808
        %v7721 = vunpack.c.0.s8 %v7720
        %v7722 = vlaneseq
        %v7723 = vshrl.u32 %v7722, 7
        %v7724 = vsub.s32 %v7721, %v7723
        %v7725 = vrot.slane %v7711, %v7724
        %v7726 = vcombine.high %v7718, %v7718
        %v7727 = vcombine.high %v7725, %v7725
        %v7728 = vcombine.high %v6624, %v6624
        %v7730 = vunpack.c.l.s4 1983009808
        %v7731 = vunpack.c.0.s8 %v7730
        %v7732 = vlaneseq
        %v7733 = vshrl.u32 %v7732, 7
        %v7734 = vsub.s32 %v7731, %v7733
        %v7735 = vrot.slane %v6624, %v7734
        %v7737 = vunpack.c.l.s4 1983009808
        %v7738 = vunpack.c.0.s8 %v7737
        %v7739 = vlaneseq
        %v7740 = vshrl.u32 %v7739, 7
        %v7741 = vsub.s32 %v7738, %v7740
        %v7742 = vrot.slane %v7728, %v7741
        %v7743 = vcombine.high %v7735, %v7735
        %v7744 = vcombine.high %v7742, %v7742
        %v7745 = vcombine.high %v6625, %v6625
        %v7747 = vunpack.c.l.s4 1983009808
        %v7748 = vunpack.c.0.s8 %v7747
        %v7749 = vlaneseq
        %v7750 = vshrl.u32 %v7749, 7
        %v7751 = vsub.s32 %v7748, %v7750
        %v7752 = vrot.slane %v6625, %v7751
        %v7754 = vunpack.c.l.s4 1983009808
        %v7755 = vunpack.c.0.s8 %v7754
        %v7756 = vlaneseq
        %v7757 = vshrl.u32 %v7756, 7
        %v7758 = vsub.s32 %v7755, %v7757
        %v7759 = vrot.slane %v7745, %v7758
        %v7760 = vcombine.high %v7752, %v7752
        %v7761 = vcombine.high %v7759, %v7759
        %v7762 = vcombine.high %v6626, %v6626
        %v7764 = vunpack.c.l.s4 1983009808
        %v7765 = vunpack.c.0.s8 %v7764
        %v7766 = vlaneseq
        %v7767 = vshrl.u32 %v7766, 7
        %v7768 = vsub.s32 %v7765, %v7767
        %v7769 = vrot.slane %v6626, %v7768
        %v7771 = vunpack.c.l.s4 1983009808
        %v7772 = vunpack.c.0.s8 %v7771
        %v7773 = vlaneseq
        %v7774 = vshrl.u32 %v7773, 7
        %v7775 = vsub.s32 %v7772, %v7774
        %v7776 = vrot.slane %v7762, %v7775
        %v7777 = vcombine.high %v7769, %v7769
        %v7778 = vcombine.high %v7776, %v7776
        %v8035 = vrot.slane %v6698, 7
        %v8036 = vrot.slane %v8035, 2
        %v8037 = vrot.slane %v6706, 7
        %v8038 = vrot.slane %v8037, 2
        %v8039 = vrot.slane %v6705, 7
        %v8040 = vrot.slane %v8039, 2
        %v8041 = vrot.slane %v6707, 7
        %v8042 = vrot.slane %v8041, 2
        %v8043 = vrot.slane %v6715, 7
        %v8044 = vrot.slane %v8043, 2
        %v8045 = vrot.slane %v6723, 7
        %v8046 = vrot.slane %v8045, 2
        %v8047 = vrot.slane %v6722, 7
        %v8048 = vrot.slane %v8047, 2
        %v8049 = vrot.slane %v6724, 7
        %v8050 = vrot.slane %v8049, 2
        %v8051 = vrot.slane %v6732, 7
        %v8052 = vrot.slane %v8051, 2
        %v8053 = vrot.slane %v6740, 7
        %v8054 = vrot.slane %v8053, 2
        %v8055 = vrot.slane %v6739, 7
        %v8056 = vrot.slane %v8055, 2
        %v8057 = vrot.slane %v6741, 7
        %v8058 = vrot.slane %v8057, 2
        %v8059 = vrot.slane %v6749, 7
        %v8060 = vrot.slane %v8059, 2
        %v8061 = vrot.slane %v6757, 7
        %v8062 = vrot.slane %v8061, 2
        %v8063 = vrot.slane %v6756, 7
        %v8064 = vrot.slane %v8063, 2
        %v8065 = vrot.slane %v6758, 7
        %v8066 = vrot.slane %v8065, 2
        %v8067 = vrot.slane %v6766, 7
        %v8068 = vrot.slane %v8067, 2
        %v8069 = vrot.slane %v6774, 7
        %v8070 = vrot.slane %v8069, 2
        %v8071 = vrot.slane %v6773, 7
        %v8072 = vrot.slane %v8071, 2
        %v8073 = vrot.slane %v6775, 7
        %v8074 = vrot.slane %v8073, 2
        %v8075 = vrot.slane %v6783, 7
        %v8076 = vrot.slane %v8075, 2
        %v8077 = vrot.slane %v6791, 7
        %v8078 = vrot.slane %v8077, 2
        %v8079 = vrot.slane %v6790, 7
        %v8080 = vrot.slane %v8079, 2
        %v8081 = vrot.slane %v6792, 7
        %v8082 = vrot.slane %v8081, 2
        %v8083 = vrot.slane %v6800, 7
        %v8084 = vrot.slane %v8083, 2
        %v8085 = vrot.slane %v6808, 7
        %v8086 = vrot.slane %v8085, 2
        %v8087 = vrot.slane %v6807, 7
        %v8088 = vrot.slane %v8087, 2
        %v8089 = vrot.slane %v6809, 7
        %v8090 = vrot.slane %v8089, 2
        %v8091 = vrot.slane %v6817, 7
        %v8092 = vrot.slane %v8091, 2
        %v8093 = vrot.slane %v6825, 7
        %v8094 = vrot.slane %v8093, 2
        %v8095 = vrot.slane %v6824, 7
        %v8096 = vrot.slane %v8095, 2
        %v8097 = vrot.slane %v6826, 7
        %v8098 = vrot.slane %v8097, 2
        %v8099 = vrot.slane %v6834, 7
        %v8100 = vrot.slane %v8099, 2
        %v8101 = vrot.slane %v6842, 7
        %v8102 = vrot.slane %v8101, 2
        %v8103 = vrot.slane %v6841, 7
        %v8104 = vrot.slane %v8103, 2
        %v8105 = vrot.slane %v6843, 7
        %v8106 = vrot.slane %v8105, 2
        %v8107 = vrot.slane %v6851, 7
        %v8108 = vrot.slane %v8107, 2
        %v8109 = vrot.slane %v6859, 7
        %v8110 = vrot.slane %v8109, 2
        %v8111 = vrot.slane %v6858, 7
        %v8112 = vrot.slane %v8111, 2
        %v8113 = vrot.slane %v6860, 7
        %v8114 = vrot.slane %v8113, 2
        %v8115 = vrot.slane %v6868, 7
        %v8116 = vrot.slane %v8115, 2
        %v8117 = vrot.slane %v6876, 7
        %v8118 = vrot.slane %v8117, 2
        %v8119 = vrot.slane %v6875, 7
        %v8120 = vrot.slane %v8119, 2
        %v8121 = vrot.slane %v6877, 7
        %v8122 = vrot.slane %v8121, 2
        %v8123 = vrot.slane %v6885, 7
        %v8124 = vrot.slane %v8123, 2
        %v8125 = vrot.slane %v6893, 7
        %v8126 = vrot.slane %v8125, 2
        %v8127 = vrot.slane %v6892, 7
        %v8128 = vrot.slane %v8127, 2
        %v8129 = vrot.slane %v6894, 7
        %v8130 = vrot.slane %v8129, 2
        %v8131 = vrot.slane %v6902, 7
        %v8132 = vrot.slane %v8131, 2
        %v8133 = vrot.slane %v6910, 7
        %v8134 = vrot.slane %v8133, 2
        %v8135 = vrot.slane %v6909, 7
        %v8136 = vrot.slane %v8135, 2
        %v8137 = vrot.slane %v6911, 7
        %v8138 = vrot.slane %v8137, 2
        %v8139 = vrot.slane %v6919, 7
        %v8140 = vrot.slane %v8139, 2
        %v8141 = vrot.slane %v6927, 7
        %v8142 = vrot.slane %v8141, 2
        %v8143 = vrot.slane %v6926, 7
        %v8144 = vrot.slane %v8143, 2
        %v8145 = vrot.slane %v6928, 7
        %v8146 = vrot.slane %v8145, 2
        %v8147 = vrot.slane %v6936, 7
        %v8148 = vrot.slane %v8147, 2
        %v8149 = vrot.slane %v6944, 7
        %v8150 = vrot.slane %v8149, 2
        %v8151 = vrot.slane %v6943, 7
        %v8152 = vrot.slane %v8151, 2
        %v8153 = vrot.slane %v6945, 7
        %v8154 = vrot.slane %v8153, 2
        %v8155 = vrot.slane %v6953, 7
        %v8156 = vrot.slane %v8155, 2
        %v8157 = vrot.slane %v6961, 7
        %v8158 = vrot.slane %v8157, 2
        %v8159 = vrot.slane %v6960, 7
        %v8160 = vrot.slane %v8159, 2
        %v8161 = vrot.slane %v6962, 7
        %v8162 = vrot.slane %v8161, 2
        %v8163 = vrot.slane %v6970, 7
        %v8164 = vrot.slane %v8163, 2
        %v8165 = vrot.slane %v6978, 7
        %v8166 = vrot.slane %v8165, 2
        %v8167 = vrot.slane %v6977, 7
        %v8168 = vrot.slane %v8167, 2
        %v8169 = vrot.slane %v6979, 7
        %v8170 = vrot.slane %v8169, 2
        %v8171 = vrot.slane %v6987, 7
        %v8172 = vrot.slane %v8171, 2
        %v8173 = vrot.slane %v6995, 7
        %v8174 = vrot.slane %v8173, 2
        %v8175 = vrot.slane %v6994, 7
        %v8176 = vrot.slane %v8175, 2
        %v8177 = vrot.slane %v6996, 7
        %v8178 = vrot.slane %v8177, 2
        %v8179 = vrot.slane %v7004, 7
        %v8180 = vrot.slane %v8179, 2
        %v8181 = vrot.slane %v7012, 7
        %v8182 = vrot.slane %v8181, 2
        %v8183 = vrot.slane %v7011, 7
        %v8184 = vrot.slane %v8183, 2
        %v8185 = vrot.slane %v7013, 7
        %v8186 = vrot.slane %v8185, 2
        %v8187 = vrot.slane %v7021, 7
        %v8188 = vrot.slane %v8187, 2
        %v8189 = vrot.slane %v7029, 7
        %v8190 = vrot.slane %v8189, 2
        %v8191 = vrot.slane %v7028, 7
        %v8192 = vrot.slane %v8191, 2
        %v8193 = vrot.slane %v7030, 7
        %v8194 = vrot.slane %v8193, 2
        %v8195 = vrot.slane %v7038, 7
        %v8196 = vrot.slane %v8195, 2
        %v8197 = vrot.slane %v7046, 7
        %v8198 = vrot.slane %v8197, 2
        %v8199 = vrot.slane %v7045, 7
        %v8200 = vrot.slane %v8199, 2
        %v8201 = vrot.slane %v7047, 7
        %v8202 = vrot.slane %v8201, 2
        %v8203 = vrot.slane %v7055, 7
        %v8204 = vrot.slane %v8203, 2
        %v8205 = vrot.slane %v7063, 7
        %v8206 = vrot.slane %v8205, 2
        %v8207 = vrot.slane %v7062, 7
        %v8208 = vrot.slane %v8207, 2
        %v8209 = vrot.slane %v7064, 7
        %v8210 = vrot.slane %v8209, 2
        %v8211 = vrot.slane %v7072, 7
        %v8212 = vrot.slane %v8211, 2
        %v8213 = vrot.slane %v7080, 7
        %v8214 = vrot.slane %v8213, 2
        %v8215 = vrot.slane %v7079, 7
        %v8216 = vrot.slane %v8215, 2
        %v8217 = vrot.slane %v7081, 7
        %v8218 = vrot.slane %v8217, 2
        %v8219 = vrot.slane %v7089, 7
        %v8220 = vrot.slane %v8219, 2
        %v8221 = vrot.slane %v7097, 7
        %v8222 = vrot.slane %v8221, 2
        %v8223 = vrot.slane %v7096, 7
        %v8224 = vrot.slane %v8223, 2
        %v8225 = vrot.slane %v7098, 7
        %v8226 = vrot.slane %v8225, 2
        %v8227 = vrot.slane %v7106, 7
        %v8228 = vrot.slane %v8227, 2
        %v8229 = vrot.slane %v7114, 7
        %v8230 = vrot.slane %v8229, 2
        %v8231 = vrot.slane %v7113, 7
        %v8232 = vrot.slane %v8231, 2
        %v8233 = vrot.slane %v7115, 7
        %v8234 = vrot.slane %v8233, 2
        %v8235 = vrot.slane %v7123, 7
        %v8236 = vrot.slane %v8235, 2
        %v8237 = vrot.slane %v7131, 7
        %v8238 = vrot.slane %v8237, 2
        %v8239 = vrot.slane %v7130, 7
        %v8240 = vrot.slane %v8239, 2
        %v8241 = vrot.slane %v7132, 7
        %v8242 = vrot.slane %v8241, 2
        %v8243 = vrot.slane %v7140, 7
        %v8244 = vrot.slane %v8243, 2
        %v8245 = vrot.slane %v7148, 7
        %v8246 = vrot.slane %v8245, 2
        %v8247 = vrot.slane %v7147, 7
        %v8248 = vrot.slane %v8247, 2
        %v8249 = vrot.slane %v7149, 7
        %v8250 = vrot.slane %v8249, 2
        %v8251 = vrot.slane %v7157, 7
        %v8252 = vrot.slane %v8251, 2
        %v8253 = vrot.slane %v7165, 7
        %v8254 = vrot.slane %v8253, 2
        %v8255 = vrot.slane %v7164, 7
        %v8256 = vrot.slane %v8255, 2
        %v8257 = vrot.slane %v7166, 7
        %v8258 = vrot.slane %v8257, 2
        %v8259 = vrot.slane %v7174, 7
        %v8260 = vrot.slane %v8259, 2
        %v8261 = vrot.slane %v7182, 7
        %v8262 = vrot.slane %v8261, 2
        %v8263 = vrot.slane %v7181, 7
        %v8264 = vrot.slane %v8263, 2
        %v8265 = vrot.slane %v7183, 7
        %v8266 = vrot.slane %v8265, 2
        %v8267 = vrot.slane %v7191, 7
        %v8268 = vrot.slane %v8267, 2
        %v8269 = vrot.slane %v7199, 7
        %v8270 = vrot.slane %v8269, 2
        %v8271 = vrot.slane %v7198, 7
        %v8272 = vrot.slane %v8271, 2
        %v8273 = vrot.slane %v7200, 7
        %v8274 = vrot.slane %v8273, 2
        %v8275 = vrot.slane %v7208, 7
        %v8276 = vrot.slane %v8275, 2
        %v8277 = vrot.slane %v7216, 7
        %v8278 = vrot.slane %v8277, 2
        %v8279 = vrot.slane %v7215, 7
        %v8280 = vrot.slane %v8279, 2
        %v8281 = vrot.slane %v7217, 7
        %v8282 = vrot.slane %v8281, 2
        %v8283 = vrot.slane %v7225, 7
        %v8284 = vrot.slane %v8283, 2
        %v8285 = vrot.slane %v7233, 7
        %v8286 = vrot.slane %v8285, 2
        %v8287 = vrot.slane %v7232, 7
        %v8288 = vrot.slane %v8287, 2
        %v8289 = vrot.slane %v7234, 7
        %v8290 = vrot.slane %v8289, 2
        %v8291 = vrot.slane %v7242, 7
        %v8292 = vrot.slane %v8291, 2
        %v8293 = vrot.slane %v7250, 7
        %v8294 = vrot.slane %v8293, 2
        %v8295 = vrot.slane %v7249, 7
        %v8296 = vrot.slane %v8295, 2
        %v8297 = vrot.slane %v7251, 7
        %v8298 = vrot.slane %v8297, 2
        %v8299 = vrot.slane %v7259, 7
        %v8300 = vrot.slane %v8299, 2
        %v8301 = vrot.slane %v7267, 7
        %v8302 = vrot.slane %v8301, 2
        %v8303 = vrot.slane %v7266, 7
        %v8304 = vrot.slane %v8303, 2
        %v8305 = vrot.slane %v7268, 7
        %v8306 = vrot.slane %v8305, 2
        %v8307 = vrot.slane %v7276, 7
        %v8308 = vrot.slane %v8307, 2
        %v8309 = vrot.slane %v7284, 7
        %v8310 = vrot.slane %v8309, 2
        %v8311 = vrot.slane %v7283, 7
        %v8312 = vrot.slane %v8311, 2
        %v8313 = vrot.slane %v7285, 7
        %v8314 = vrot.slane %v8313, 2
        %v8315 = vrot.slane %v7293, 7
        %v8316 = vrot.slane %v8315, 2
        %v8317 = vrot.slane %v7301, 7
        %v8318 = vrot.slane %v8317, 2
        %v8319 = vrot.slane %v7300, 7
        %v8320 = vrot.slane %v8319, 2
        %v8321 = vrot.slane %v7302, 7
        %v8322 = vrot.slane %v8321, 2
        %v8323 = vrot.slane %v7310, 7
        %v8324 = vrot.slane %v8323, 2
        %v8325 = vrot.slane %v7318, 7
        %v8326 = vrot.slane %v8325, 2
        %v8327 = vrot.slane %v7317, 7
        %v8328 = vrot.slane %v8327, 2
        %v8329 = vrot.slane %v7319, 7
        %v8330 = vrot.slane %v8329, 2
        %v8331 = vrot.slane %v7327, 7
        %v8332 = vrot.slane %v8331, 2
        %v8333 = vrot.slane %v7335, 7
        %v8334 = vrot.slane %v8333, 2
        %v8335 = vrot.slane %v7334, 7
        %v8336 = vrot.slane %v8335, 2
        %v8337 = vrot.slane %v7336, 7
        %v8338 = vrot.slane %v8337, 2
        %v8339 = vrot.slane %v7344, 7
        %v8340 = vrot.slane %v8339, 2
        %v8341 = vrot.slane %v7352, 7
        %v8342 = vrot.slane %v8341, 2
        %v8343 = vrot.slane %v7351, 7
        %v8344 = vrot.slane %v8343, 2
        %v8345 = vrot.slane %v7353, 7
        %v8346 = vrot.slane %v8345, 2
        %v8347 = vrot.slane %v7361, 7
        %v8348 = vrot.slane %v8347, 2
        %v8349 = vrot.slane %v7369, 7
        %v8350 = vrot.slane %v8349, 2
        %v8351 = vrot.slane %v7368, 7
        %v8352 = vrot.slane %v8351, 2
        %v8353 = vrot.slane %v7370, 7
        %v8354 = vrot.slane %v8353, 2
        %v8355 = vrot.slane %v7378, 7
        %v8356 = vrot.slane %v8355, 2
        %v8357 = vrot.slane %v7386, 7
        %v8358 = vrot.slane %v8357, 2
        %v8359 = vrot.slane %v7385, 7
        %v8360 = vrot.slane %v8359, 2
        %v8361 = vrot.slane %v7387, 7
        %v8362 = vrot.slane %v8361, 2
        %v8363 = vrot.slane %v7395, 7
        %v8364 = vrot.slane %v8363, 2
        %v8365 = vrot.slane %v7403, 7
        %v8366 = vrot.slane %v8365, 2
        %v8367 = vrot.slane %v7402, 7
        %v8368 = vrot.slane %v8367, 2
        %v8369 = vrot.slane %v7404, 7
        %v8370 = vrot.slane %v8369, 2
        %v8371 = vrot.slane %v7412, 7
        %v8372 = vrot.slane %v8371, 2
        %v8373 = vrot.slane %v7420, 7
        %v8374 = vrot.slane %v8373, 2
        %v8375 = vrot.slane %v7419, 7
        %v8376 = vrot.slane %v8375, 2
        %v8377 = vrot.slane %v7421, 7
        %v8378 = vrot.slane %v8377, 2
        %v8379 = vrot.slane %v7429, 7
        %v8380 = vrot.slane %v8379, 2
        %v8381 = vrot.slane %v7437, 7
        %v8382 = vrot.slane %v8381, 2
        %v8383 = vrot.slane %v7436, 7
        %v8384 = vrot.slane %v8383, 2
        %v8385 = vrot.slane %v7438, 7
        %v8386 = vrot.slane %v8385, 2
        %v8387 = vrot.slane %v7446, 7
        %v8388 = vrot.slane %v8387, 2
        %v8389 = vrot.slane %v7454, 7
        %v8390 = vrot.slane %v8389, 2
        %v8391 = vrot.slane %v7453, 7
        %v8392 = vrot.slane %v8391, 2
        %v8393 = vrot.slane %v7455, 7
        %v8394 = vrot.slane %v8393, 2
        %v8395 = vrot.slane %v7463, 7
        %v8396 = vrot.slane %v8395, 2
        %v8397 = vrot.slane %v7471, 7
        %v8398 = vrot.slane %v8397, 2
        %v8399 = vrot.slane %v7470, 7
        %v8400 = vrot.slane %v8399, 2
        %v8401 = vrot.slane %v7472, 7
        %v8402 = vrot.slane %v8401, 2
        %v8403 = vrot.slane %v7480, 7
        %v8404 = vrot.slane %v8403, 2
        %v8405 = vrot.slane %v7488, 7
        %v8406 = vrot.slane %v8405, 2
        %v8407 = vrot.slane %v7487, 7
        %v8408 = vrot.slane %v8407, 2
        %v8409 = vrot.slane %v7489, 7
        %v8410 = vrot.slane %v8409, 2
        %v8411 = vrot.slane %v7497, 7
        %v8412 = vrot.slane %v8411, 2
        %v8413 = vrot.slane %v7505, 7
        %v8414 = vrot.slane %v8413, 2
        %v8415 = vrot.slane %v7504, 7
        %v8416 = vrot.slane %v8415, 2
        %v8417 = vrot.slane %v7506, 7
        %v8418 = vrot.slane %v8417, 2
        %v8419 = vrot.slane %v7514, 7
        %v8420 = vrot.slane %v8419, 2
        %v8421 = vrot.slane %v7522, 7
        %v8422 = vrot.slane %v8421, 2
        %v8423 = vrot.slane %v7521, 7
        %v8424 = vrot.slane %v8423, 2
        %v8425 = vrot.slane %v7523, 7
        %v8426 = vrot.slane %v8425, 2
        %v8427 = vrot.slane %v7531, 7
        %v8428 = vrot.slane %v8427, 2
        %v8429 = vrot.slane %v7539, 7
        %v8430 = vrot.slane %v8429, 2
        %v8431 = vrot.slane %v7538, 7
        %v8432 = vrot.slane %v8431, 2
        %v8433 = vrot.slane %v7540, 7
        %v8434 = vrot.slane %v8433, 2
        %v8435 = vrot.slane %v7548, 7
        %v8436 = vrot.slane %v8435, 2
        %v8437 = vrot.slane %v7556, 7
        %v8438 = vrot.slane %v8437, 2
        %v8439 = vrot.slane %v7555, 7
        %v8440 = vrot.slane %v8439, 2
        %v8441 = vrot.slane %v7557, 7
        %v8442 = vrot.slane %v8441, 2
        %v8443 = vrot.slane %v7565, 7
        %v8444 = vrot.slane %v8443, 2
        %v8445 = vrot.slane %v7573, 7
        %v8446 = vrot.slane %v8445, 2
        %v8447 = vrot.slane %v7572, 7
        %v8448 = vrot.slane %v8447, 2
        %v8449 = vrot.slane %v7574, 7
        %v8450 = vrot.slane %v8449, 2
        %v8451 = vrot.slane %v7582, 7
        %v8452 = vrot.slane %v8451, 2
        %v8453 = vrot.slane %v7590, 7
        %v8454 = vrot.slane %v8453, 2
        %v8455 = vrot.slane %v7589, 7
        %v8456 = vrot.slane %v8455, 2
        %v8457 = vrot.slane %v7591, 7
        %v8458 = vrot.slane %v8457, 2
        %v8459 = vrot.slane %v7599, 7
        %v8460 = vrot.slane %v8459, 2
        %v8461 = vrot.slane %v7607, 7
        %v8462 = vrot.slane %v8461, 2
        %v8463 = vrot.slane %v7606, 7
        %v8464 = vrot.slane %v8463, 2
        %v8465 = vrot.slane %v7608, 7
        %v8466 = vrot.slane %v8465, 2
        %v8467 = vrot.slane %v7616, 7
        %v8468 = vrot.slane %v8467, 2
        %v8469 = vrot.slane %v7624, 7
        %v8470 = vrot.slane %v8469, 2
        %v8471 = vrot.slane %v7623, 7
        %v8472 = vrot.slane %v8471, 2
        %v8473 = vrot.slane %v7625, 7
        %v8474 = vrot.slane %v8473, 2
        %v8475 = vrot.slane %v7633, 7
        %v8476 = vrot.slane %v8475, 2
        %v8477 = vrot.slane %v7641, 7
        %v8478 = vrot.slane %v8477, 2
        %v8479 = vrot.slane %v7640, 7
        %v8480 = vrot.slane %v8479, 2
        %v8481 = vrot.slane %v7642, 7
        %v8482 = vrot.slane %v8481, 2
        %v8483 = vrot.slane %v7650, 7
        %v8484 = vrot.slane %v8483, 2
        %v8485 = vrot.slane %v7658, 7
        %v8486 = vrot.slane %v8485, 2
        %v8487 = vrot.slane %v7657, 7
        %v8488 = vrot.slane %v8487, 2
        %v8489 = vrot.slane %v7659, 7
        %v8490 = vrot.slane %v8489, 2
        %v8491 = vrot.slane %v7667, 7
        %v8492 = vrot.slane %v8491, 2
        %v8493 = vrot.slane %v7675, 7
        %v8494 = vrot.slane %v8493, 2
        %v8495 = vrot.slane %v7674, 7
        %v8496 = vrot.slane %v8495, 2
        %v8497 = vrot.slane %v7676, 7
        %v8498 = vrot.slane %v8497, 2
        %v8499 = vrot.slane %v7684, 7
        %v8500 = vrot.slane %v8499, 2
        %v8501 = vrot.slane %v7692, 7
        %v8502 = vrot.slane %v8501, 2
        %v8503 = vrot.slane %v7691, 7
        %v8504 = vrot.slane %v8503, 2
        %v8505 = vrot.slane %v7693, 7
        %v8506 = vrot.slane %v8505, 2
        %v8507 = vrot.slane %v7701, 7
        %v8508 = vrot.slane %v8507, 2
        %v8509 = vrot.slane %v7709, 7
        %v8510 = vrot.slane %v8509, 2
        %v8511 = vrot.slane %v7708, 7
        %v8512 = vrot.slane %v8511, 2
        %v8513 = vrot.slane %v7710, 7
        %v8514 = vrot.slane %v8513, 2
        %v8515 = vrot.slane %v7718, 7
        %v8516 = vrot.slane %v8515, 2
        %v8517 = vrot.slane %v7726, 7
        %v8518 = vrot.slane %v8517, 2
        %v8519 = vrot.slane %v7725, 7
        %v8520 = vrot.slane %v8519, 2
        %v8521 = vrot.slane %v7727, 7
        %v8522 = vrot.slane %v8521, 2
        %v8523 = vrot.slane %v7735, 7
        %v8524 = vrot.slane %v8523, 2
        %v8525 = vrot.slane %v7743, 7
        %v8526 = vrot.slane %v8525, 2
        %v8527 = vrot.slane %v7742, 7
        %v8528 = vrot.slane %v8527, 2
        %v8529 = vrot.slane %v7744, 7
        %v8530 = vrot.slane %v8529, 2
        %v8531 = vrot.slane %v7752, 7
        %v8532 = vrot.slane %v8531, 2
        %v8533 = vrot.slane %v7760, 7
        %v8534 = vrot.slane %v8533, 2
        %v8535 = vrot.slane %v7759, 7
        %v8536 = vrot.slane %v8535, 2
        %v8537 = vrot.slane %v7761, 7
        %v8538 = vrot.slane %v8537, 2
        %v8539 = vrot.slane %v7769, 7
        %v8540 = vrot.slane %v8539, 2
        %v8541 = vrot.slane %v7777, 7
        %v8542 = vrot.slane %v8541, 2
        %v8543 = vrot.slane %v7776, 7
        %v8544 = vrot.slane %v8543, 2
        %v8545 = vrot.slane %v7778, 7
        %v8546 = vrot.slane %v8545, 2
        %v8803 = vmax.f32 %v6698, %v8036
        %v8804 = vmax.f32 %v6706, %v8038
        %v8805 = vmax.f32 %v6705, %v8040
        %v8806 = vmax.f32 %v6707, %v8042
        %v8807 = vmax.f32 %v6715, %v8044
        %v8808 = vmax.f32 %v6723, %v8046
        %v8809 = vmax.f32 %v6722, %v8048
        %v8810 = vmax.f32 %v6724, %v8050
        %v8811 = vmax.f32 %v6732, %v8052
        %v8812 = vmax.f32 %v6740, %v8054
        %v8813 = vmax.f32 %v6739, %v8056
        %v8814 = vmax.f32 %v6741, %v8058
        %v8815 = vmax.f32 %v6749, %v8060
        %v8816 = vmax.f32 %v6757, %v8062
        %v8817 = vmax.f32 %v6756, %v8064
        %v8818 = vmax.f32 %v6758, %v8066
        %v8819 = vmax.f32 %v6766, %v8068
        %v8820 = vmax.f32 %v6774, %v8070
        %v8821 = vmax.f32 %v6773, %v8072
        %v8822 = vmax.f32 %v6775, %v8074
        %v8823 = vmax.f32 %v6783, %v8076
        %v8824 = vmax.f32 %v6791, %v8078
        %v8825 = vmax.f32 %v6790, %v8080
        %v8826 = vmax.f32 %v6792, %v8082
        %v8827 = vmax.f32 %v6800, %v8084
        %v8828 = vmax.f32 %v6808, %v8086
        %v8829 = vmax.f32 %v6807, %v8088
        %v8830 = vmax.f32 %v6809, %v8090
        %v8831 = vmax.f32 %v6817, %v8092
        %v8832 = vmax.f32 %v6825, %v8094
        %v8833 = vmax.f32 %v6824, %v8096
        %v8834 = vmax.f32 %v6826, %v8098
        %v8835 = vmax.f32 %v6834, %v8100
        %v8836 = vmax.f32 %v6842, %v8102
        %v8837 = vmax.f32 %v6841, %v8104
        %v8838 = vmax.f32 %v6843, %v8106
        %v8839 = vmax.f32 %v6851, %v8108
        %v8840 = vmax.f32 %v6859, %v8110
        %v8841 = vmax.f32 %v6858, %v8112
        %v8842 = vmax.f32 %v6860, %v8114
        %v8843 = vmax.f32 %v6868, %v8116
        %v8844 = vmax.f32 %v6876, %v8118
        %v8845 = vmax.f32 %v6875, %v8120
        %v8846 = vmax.f32 %v6877, %v8122
        %v8847 = vmax.f32 %v6885, %v8124
        %v8848 = vmax.f32 %v6893, %v8126
        %v8849 = vmax.f32 %v6892, %v8128
        %v8850 = vmax.f32 %v6894, %v8130
        %v8851 = vmax.f32 %v6902, %v8132
        %v8852 = vmax.f32 %v6910, %v8134
        %v8853 = vmax.f32 %v6909, %v8136
        %v8854 = vmax.f32 %v6911, %v8138
        %v8855 = vmax.f32 %v6919, %v8140
        %v8856 = vmax.f32 %v6927, %v8142
        %v8857 = vmax.f32 %v6926, %v8144
        %v8858 = vmax.f32 %v6928, %v8146
        %v8859 = vmax.f32 %v6936, %v8148
        %v8860 = vmax.f32 %v6944, %v8150
        %v8861 = vmax.f32 %v6943, %v8152
        %v8862 = vmax.f32 %v6945, %v8154
        %v8863 = vmax.f32 %v6953, %v8156
        %v8864 = vmax.f32 %v6961, %v8158
        %v8865 = vmax.f32 %v6960, %v8160
        %v8866 = vmax.f32 %v6962, %v8162
        %v8867 = vmax.f32 %v6970, %v8164
        %v8868 = vmax.f32 %v6978, %v8166
        %v8869 = vmax.f32 %v6977, %v8168
        %v8870 = vmax.f32 %v6979, %v8170
        %v8871 = vmax.f32 %v6987, %v8172
        %v8872 = vmax.f32 %v6995, %v8174
        %v8873 = vmax.f32 %v6994, %v8176
        %v8874 = vmax.f32 %v6996, %v8178
        %v8875 = vmax.f32 %v7004, %v8180
        %v8876 = vmax.f32 %v7012, %v8182
        %v8877 = vmax.f32 %v7011, %v8184
        %v8878 = vmax.f32 %v7013, %v8186
        %v8879 = vmax.f32 %v7021, %v8188
        %v8880 = vmax.f32 %v7029, %v8190
        %v8881 = vmax.f32 %v7028, %v8192
        %v8882 = vmax.f32 %v7030, %v8194
        %v8883 = vmax.f32 %v7038, %v8196
        %v8884 = vmax.f32 %v7046, %v8198
        %v8885 = vmax.f32 %v7045, %v8200
        %v8886 = vmax.f32 %v7047, %v8202
        %v8887 = vmax.f32 %v7055, %v8204
        %v8888 = vmax.f32 %v7063, %v8206
        %v8889 = vmax.f32 %v7062, %v8208
        %v8890 = vmax.f32 %v7064, %v8210
        %v8891 = vmax.f32 %v7072, %v8212
        %v8892 = vmax.f32 %v7080, %v8214
        %v8893 = vmax.f32 %v7079, %v8216
        %v8894 = vmax.f32 %v7081, %v8218
        %v8895 = vmax.f32 %v7089, %v8220
        %v8896 = vmax.f32 %v7097, %v8222
        %v8897 = vmax.f32 %v7096, %v8224
        %v8898 = vmax.f32 %v7098, %v8226
        %v8899 = vmax.f32 %v7106, %v8228
        %v8900 = vmax.f32 %v7114, %v8230
        %v8901 = vmax.f32 %v7113, %v8232
        %v8902 = vmax.f32 %v7115, %v8234
        %v8903 = vmax.f32 %v7123, %v8236
        %v8904 = vmax.f32 %v7131, %v8238
        %v8905 = vmax.f32 %v7130, %v8240
        %v8906 = vmax.f32 %v7132, %v8242
        %v8907 = vmax.f32 %v7140, %v8244
        %v8908 = vmax.f32 %v7148, %v8246
        %v8909 = vmax.f32 %v7147, %v8248
        %v8910 = vmax.f32 %v7149, %v8250
        %v8911 = vmax.f32 %v7157, %v8252
        %v8912 = vmax.f32 %v7165, %v8254
        %v8913 = vmax.f32 %v7164, %v8256
        %v8914 = vmax.f32 %v7166, %v8258
        %v8915 = vmax.f32 %v7174, %v8260
        %v8916 = vmax.f32 %v7182, %v8262
        %v8917 = vmax.f32 %v7181, %v8264
        %v8918 = vmax.f32 %v7183, %v8266
        %v8919 = vmax.f32 %v7191, %v8268
        %v8920 = vmax.f32 %v7199, %v8270
        %v8921 = vmax.f32 %v7198, %v8272
        %v8922 = vmax.f32 %v7200, %v8274
        %v8923 = vmax.f32 %v7208, %v8276
        %v8924 = vmax.f32 %v7216, %v8278
        %v8925 = vmax.f32 %v7215, %v8280
        %v8926 = vmax.f32 %v7217, %v8282
        %v8927 = vmax.f32 %v7225, %v8284
        %v8928 = vmax.f32 %v7233, %v8286
        %v8929 = vmax.f32 %v7232, %v8288
        %v8930 = vmax.f32 %v7234, %v8290
        %v8931 = vmax.f32 %v7242, %v8292
        %v8932 = vmax.f32 %v7250, %v8294
        %v8933 = vmax.f32 %v7249, %v8296
        %v8934 = vmax.f32 %v7251, %v8298
        %v8935 = vmax.f32 %v7259, %v8300
        %v8936 = vmax.f32 %v7267, %v8302
        %v8937 = vmax.f32 %v7266, %v8304
        %v8938 = vmax.f32 %v7268, %v8306
        %v8939 = vmax.f32 %v7276, %v8308
        %v8940 = vmax.f32 %v7284, %v8310
        %v8941 = vmax.f32 %v7283, %v8312
        %v8942 = vmax.f32 %v7285, %v8314
        %v8943 = vmax.f32 %v7293, %v8316
        %v8944 = vmax.f32 %v7301, %v8318
        %v8945 = vmax.f32 %v7300, %v8320
        %v8946 = vmax.f32 %v7302, %v8322
        %v8947 = vmax.f32 %v7310, %v8324
        %v8948 = vmax.f32 %v7318, %v8326
        %v8949 = vmax.f32 %v7317, %v8328
        %v8950 = vmax.f32 %v7319, %v8330
        %v8951 = vmax.f32 %v7327, %v8332
        %v8952 = vmax.f32 %v7335, %v8334
        %v8953 = vmax.f32 %v7334, %v8336
        %v8954 = vmax.f32 %v7336, %v8338
        %v8955 = vmax.f32 %v7344, %v8340
        %v8956 = vmax.f32 %v7352, %v8342
        %v8957 = vmax.f32 %v7351, %v8344
        %v8958 = vmax.f32 %v7353, %v8346
        %v8959 = vmax.f32 %v7361, %v8348
        %v8960 = vmax.f32 %v7369, %v8350
        %v8961 = vmax.f32 %v7368, %v8352
        %v8962 = vmax.f32 %v7370, %v8354
        %v8963 = vmax.f32 %v7378, %v8356
        %v8964 = vmax.f32 %v7386, %v8358
        %v8965 = vmax.f32 %v7385, %v8360
        %v8966 = vmax.f32 %v7387, %v8362
        %v8967 = vmax.f32 %v7395, %v8364
        %v8968 = vmax.f32 %v7403, %v8366
        %v8969 = vmax.f32 %v7402, %v8368
        %v8970 = vmax.f32 %v7404, %v8370
        %v8971 = vmax.f32 %v7412, %v8372
        %v8972 = vmax.f32 %v7420, %v8374
        %v8973 = vmax.f32 %v7419, %v8376
        %v8974 = vmax.f32 %v7421, %v8378
        %v8975 = vmax.f32 %v7429, %v8380
        %v8976 = vmax.f32 %v7437, %v8382
        %v8977 = vmax.f32 %v7436, %v8384
        %v8978 = vmax.f32 %v7438, %v8386
        %v8979 = vmax.f32 %v7446, %v8388
        %v8980 = vmax.f32 %v7454, %v8390
        %v8981 = vmax.f32 %v7453, %v8392
        %v8982 = vmax.f32 %v7455, %v8394
        %v8983 = vmax.f32 %v7463, %v8396
        %v8984 = vmax.f32 %v7471, %v8398
        %v8985 = vmax.f32 %v7470, %v8400
        %v8986 = vmax.f32 %v7472, %v8402
        %v8987 = vmax.f32 %v7480, %v8404
        %v8988 = vmax.f32 %v7488, %v8406
        %v8989 = vmax.f32 %v7487, %v8408
        %v8990 = vmax.f32 %v7489, %v8410
        %v8991 = vmax.f32 %v7497, %v8412
        %v8992 = vmax.f32 %v7505, %v8414
        %v8993 = vmax.f32 %v7504, %v8416
        %v8994 = vmax.f32 %v7506, %v8418
        %v8995 = vmax.f32 %v7514, %v8420
        %v8996 = vmax.f32 %v7522, %v8422
        %v8997 = vmax.f32 %v7521, %v8424
        %v8998 = vmax.f32 %v7523, %v8426
        %v8999 = vmax.f32 %v7531, %v8428
        %v9000 = vmax.f32 %v7539, %v8430
        %v9001 = vmax.f32 %v7538, %v8432
        %v9002 = vmax.f32 %v7540, %v8434
        %v9003 = vmax.f32 %v7548, %v8436
        %v9004 = vmax.f32 %v7556, %v8438
        %v9005 = vmax.f32 %v7555, %v8440
        %v9006 = vmax.f32 %v7557, %v8442
        %v9007 = vmax.f32 %v7565, %v8444
        %v9008 = vmax.f32 %v7573, %v8446
        %v9009 = vmax.f32 %v7572, %v8448
        %v9010 = vmax.f32 %v7574, %v8450
        %v9011 = vmax.f32 %v7582, %v8452
        %v9012 = vmax.f32 %v7590, %v8454
        %v9013 = vmax.f32 %v7589, %v8456
        %v9014 = vmax.f32 %v7591, %v8458
        %v9015 = vmax.f32 %v7599, %v8460
        %v9016 = vmax.f32 %v7607, %v8462
        %v9017 = vmax.f32 %v7606, %v8464
        %v9018 = vmax.f32 %v7608, %v8466
        %v9019 = vmax.f32 %v7616, %v8468
        %v9020 = vmax.f32 %v7624, %v8470
        %v9021 = vmax.f32 %v7623, %v8472
        %v9022 = vmax.f32 %v7625, %v8474
        %v9023 = vmax.f32 %v7633, %v8476
        %v9024 = vmax.f32 %v7641, %v8478
        %v9025 = vmax.f32 %v7640, %v8480
        %v9026 = vmax.f32 %v7642, %v8482
        %v9027 = vmax.f32 %v7650, %v8484
        %v9028 = vmax.f32 %v7658, %v8486
        %v9029 = vmax.f32 %v7657, %v8488
        %v9030 = vmax.f32 %v7659, %v8490
        %v9031 = vmax.f32 %v7667, %v8492
        %v9032 = vmax.f32 %v7675, %v8494
        %v9033 = vmax.f32 %v7674, %v8496
        %v9034 = vmax.f32 %v7676, %v8498
        %v9035 = vmax.f32 %v7684, %v8500
        %v9036 = vmax.f32 %v7692, %v8502
        %v9037 = vmax.f32 %v7691, %v8504
        %v9038 = vmax.f32 %v7693, %v8506
        %v9039 = vmax.f32 %v7701, %v8508
        %v9040 = vmax.f32 %v7709, %v8510
        %v9041 = vmax.f32 %v7708, %v8512
        %v9042 = vmax.f32 %v7710, %v8514
        %v9043 = vmax.f32 %v7718, %v8516
        %v9044 = vmax.f32 %v7726, %v8518
        %v9045 = vmax.f32 %v7725, %v8520
        %v9046 = vmax.f32 %v7727, %v8522
        %v9047 = vmax.f32 %v7735, %v8524
        %v9048 = vmax.f32 %v7743, %v8526
        %v9049 = vmax.f32 %v7742, %v8528
        %v9050 = vmax.f32 %v7744, %v8530
        %v9051 = vmax.f32 %v7752, %v8532
        %v9052 = vmax.f32 %v7760, %v8534
        %v9053 = vmax.f32 %v7759, %v8536
        %v9054 = vmax.f32 %v7761, %v8538
        %v9055 = vmax.f32 %v7769, %v8540
        %v9056 = vmax.f32 %v7777, %v8542
        %v9057 = vmax.f32 %v7776, %v8544
        %v9058 = vmax.f32 %v7778, %v8546
        %vm9315 = vcmask 1044484
        %v9316 = vsel %vm9315, %v8803, %v8803
        %vm9317 = vcmask 1046534
        %v9318 = vsel %vm9317, %v8803, %v9316
        %v9319 = vrot.slane %v8804, 7
        %vm9320 = vcmask 1041409
        %v9321 = vsel %vm9320, %v9319, %v9318
        %vm9322 = vcmask 1043459
        %v9323 = vsel %vm9322, %v9319, %v9321
        %vm9324 = vcmask 1045509
        %v9325 = vsel %vm9324, %v9319, %v9323
        %vm9326 = vcmask 1047559
        %v9327 = vsel %vm9326, %v9319, %v9325
        %v9328 = vsel %vm9315, %v8805, %v8805
        %v9329 = vsel %vm9317, %v8805, %v9328
        %v9330 = vrot.slane %v8806, 7
        %v9331 = vsel %vm9320, %v9330, %v9329
        %v9332 = vsel %vm9322, %v9330, %v9331
        %v9333 = vsel %vm9324, %v9330, %v9332
        %v9334 = vsel %vm9326, %v9330, %v9333
        %v9335 = vsel %vm9315, %v8807, %v8807
        %v9336 = vsel %vm9317, %v8807, %v9335
        %v9337 = vrot.slane %v8808, 7
        %v9338 = vsel %vm9320, %v9337, %v9336
        %v9339 = vsel %vm9322, %v9337, %v9338
        %v9340 = vsel %vm9324, %v9337, %v9339
        %v9341 = vsel %vm9326, %v9337, %v9340
        %v9342 = vsel %vm9315, %v8809, %v8809
        %v9343 = vsel %vm9317, %v8809, %v9342
        %v9344 = vrot.slane %v8810, 7
        %v9345 = vsel %vm9320, %v9344, %v9343
        %v9346 = vsel %vm9322, %v9344, %v9345
        %v9347 = vsel %vm9324, %v9344, %v9346
        %v9348 = vsel %vm9326, %v9344, %v9347
        %v9349 = vsel %vm9315, %v8811, %v8811
        %v9350 = vsel %vm9317, %v8811, %v9349
        %v9351 = vrot.slane %v8812, 7
        %v9352 = vsel %vm9320, %v9351, %v9350
        %v9353 = vsel %vm9322, %v9351, %v9352
        %v9354 = vsel %vm9324, %v9351, %v9353
        %v9355 = vsel %vm9326, %v9351, %v9354
        %v9356 = vsel %vm9315, %v8813, %v8813
        %v9357 = vsel %vm9317, %v8813, %v9356
        %v9358 = vrot.slane %v8814, 7
        %v9359 = vsel %vm9320, %v9358, %v9357
        %v9360 = vsel %vm9322, %v9358, %v9359
        %v9361 = vsel %vm9324, %v9358, %v9360
        %v9362 = vsel %vm9326, %v9358, %v9361
        %v9363 = vsel %vm9315, %v8815, %v8815
        %v9364 = vsel %vm9317, %v8815, %v9363
        %v9365 = vrot.slane %v8816, 7
        %v9366 = vsel %vm9320, %v9365, %v9364
        %v9367 = vsel %vm9322, %v9365, %v9366
        %v9368 = vsel %vm9324, %v9365, %v9367
        %v9369 = vsel %vm9326, %v9365, %v9368
        %v9370 = vsel %vm9315, %v8817, %v8817
        %v9371 = vsel %vm9317, %v8817, %v9370
        %v9372 = vrot.slane %v8818, 7
        %v9373 = vsel %vm9320, %v9372, %v9371
        %v9374 = vsel %vm9322, %v9372, %v9373
        %v9375 = vsel %vm9324, %v9372, %v9374
        %v9376 = vsel %vm9326, %v9372, %v9375
        %v9377 = vsel %vm9315, %v8819, %v8819
        %v9378 = vsel %vm9317, %v8819, %v9377
        %v9379 = vrot.slane %v8820, 7
        %v9380 = vsel %vm9320, %v9379, %v9378
        %v9381 = vsel %vm9322, %v9379, %v9380
        %v9382 = vsel %vm9324, %v9379, %v9381
        %v9383 = vsel %vm9326, %v9379, %v9382
        %v9384 = vsel %vm9315, %v8821, %v8821
        %v9385 = vsel %vm9317, %v8821, %v9384
        %v9386 = vrot.slane %v8822, 7
        %v9387 = vsel %vm9320, %v9386, %v9385
        %v9388 = vsel %vm9322, %v9386, %v9387
        %v9389 = vsel %vm9324, %v9386, %v9388
        %v9390 = vsel %vm9326, %v9386, %v9389
        %v9391 = vsel %vm9315, %v8823, %v8823
        %v9392 = vsel %vm9317, %v8823, %v9391
        %v9393 = vrot.slane %v8824, 7
        %v9394 = vsel %vm9320, %v9393, %v9392
        %v9395 = vsel %vm9322, %v9393, %v9394
        %v9396 = vsel %vm9324, %v9393, %v9395
        %v9397 = vsel %vm9326, %v9393, %v9396
        %v9398 = vsel %vm9315, %v8825, %v8825
        %v9399 = vsel %vm9317, %v8825, %v9398
        %v9400 = vrot.slane %v8826, 7
        %v9401 = vsel %vm9320, %v9400, %v9399
        %v9402 = vsel %vm9322, %v9400, %v9401
        %v9403 = vsel %vm9324, %v9400, %v9402
        %v9404 = vsel %vm9326, %v9400, %v9403
        %v9405 = vsel %vm9315, %v8827, %v8827
        %v9406 = vsel %vm9317, %v8827, %v9405
        %v9407 = vrot.slane %v8828, 7
        %v9408 = vsel %vm9320, %v9407, %v9406
        %v9409 = vsel %vm9322, %v9407, %v9408
        %v9410 = vsel %vm9324, %v9407, %v9409
        %v9411 = vsel %vm9326, %v9407, %v9410
        %v9412 = vsel %vm9315, %v8829, %v8829
        %v9413 = vsel %vm9317, %v8829, %v9412
        %v9414 = vrot.slane %v8830, 7
        %v9415 = vsel %vm9320, %v9414, %v9413
        %v9416 = vsel %vm9322, %v9414, %v9415
        %v9417 = vsel %vm9324, %v9414, %v9416
        %v9418 = vsel %vm9326, %v9414, %v9417
        %v9419 = vsel %vm9315, %v8831, %v8831
        %v9420 = vsel %vm9317, %v8831, %v9419
        %v9421 = vrot.slane %v8832, 7
        %v9422 = vsel %vm9320, %v9421, %v9420
        %v9423 = vsel %vm9322, %v9421, %v9422
        %v9424 = vsel %vm9324, %v9421, %v9423
        %v9425 = vsel %vm9326, %v9421, %v9424
        %v9426 = vsel %vm9315, %v8833, %v8833
        %v9427 = vsel %vm9317, %v8833, %v9426
        %v9428 = vrot.slane %v8834, 7
        %v9429 = vsel %vm9320, %v9428, %v9427
        %v9430 = vsel %vm9322, %v9428, %v9429
        %v9431 = vsel %vm9324, %v9428, %v9430
        %v9432 = vsel %vm9326, %v9428, %v9431
        %v9433 = vsel %vm9315, %v8835, %v8835
        %v9434 = vsel %vm9317, %v8835, %v9433
        %v9435 = vrot.slane %v8836, 7
        %v9436 = vsel %vm9320, %v9435, %v9434
        %v9437 = vsel %vm9322, %v9435, %v9436
        %v9438 = vsel %vm9324, %v9435, %v9437
        %v9439 = vsel %vm9326, %v9435, %v9438
        %v9440 = vsel %vm9315, %v8837, %v8837
        %v9441 = vsel %vm9317, %v8837, %v9440
        %v9442 = vrot.slane %v8838, 7
        %v9443 = vsel %vm9320, %v9442, %v9441
        %v9444 = vsel %vm9322, %v9442, %v9443
        %v9445 = vsel %vm9324, %v9442, %v9444
        %v9446 = vsel %vm9326, %v9442, %v9445
        %v9447 = vsel %vm9315, %v8839, %v8839
        %v9448 = vsel %vm9317, %v8839, %v9447
        %v9449 = vrot.slane %v8840, 7
        %v9450 = vsel %vm9320, %v9449, %v9448
        %v9451 = vsel %vm9322, %v9449, %v9450
        %v9452 = vsel %vm9324, %v9449, %v9451
        %v9453 = vsel %vm9326, %v9449, %v9452
        %v9454 = vsel %vm9315, %v8841, %v8841
        %v9455 = vsel %vm9317, %v8841, %v9454
        %v9456 = vrot.slane %v8842, 7
        %v9457 = vsel %vm9320, %v9456, %v9455
        %v9458 = vsel %vm9322, %v9456, %v9457
        %v9459 = vsel %vm9324, %v9456, %v9458
        %v9460 = vsel %vm9326, %v9456, %v9459
        %v9461 = vsel %vm9315, %v8843, %v8843
        %v9462 = vsel %vm9317, %v8843, %v9461
        %v9463 = vrot.slane %v8844, 7
        %v9464 = vsel %vm9320, %v9463, %v9462
        %v9465 = vsel %vm9322, %v9463, %v9464
        %v9466 = vsel %vm9324, %v9463, %v9465
        %v9467 = vsel %vm9326, %v9463, %v9466
        %v9468 = vsel %vm9315, %v8845, %v8845
        %v9469 = vsel %vm9317, %v8845, %v9468
        %v9470 = vrot.slane %v8846, 7
        %v9471 = vsel %vm9320, %v9470, %v9469
        %v9472 = vsel %vm9322, %v9470, %v9471
        %v9473 = vsel %vm9324, %v9470, %v9472
        %v9474 = vsel %vm9326, %v9470, %v9473
        %v9475 = vsel %vm9315, %v8847, %v8847
        %v9476 = vsel %vm9317, %v8847, %v9475
        %v9477 = vrot.slane %v8848, 7
        %v9478 = vsel %vm9320, %v9477, %v9476
        %v9479 = vsel %vm9322, %v9477, %v9478
        %v9480 = vsel %vm9324, %v9477, %v9479
        %v9481 = vsel %vm9326, %v9477, %v9480
        %v9482 = vsel %vm9315, %v8849, %v8849
        %v9483 = vsel %vm9317, %v8849, %v9482
        %v9484 = vrot.slane %v8850, 7
        %v9485 = vsel %vm9320, %v9484, %v9483
        %v9486 = vsel %vm9322, %v9484, %v9485
        %v9487 = vsel %vm9324, %v9484, %v9486
        %v9488 = vsel %vm9326, %v9484, %v9487
        %v9489 = vsel %vm9315, %v8851, %v8851
        %v9490 = vsel %vm9317, %v8851, %v9489
        %v9491 = vrot.slane %v8852, 7
        %v9492 = vsel %vm9320, %v9491, %v9490
        %v9493 = vsel %vm9322, %v9491, %v9492
        %v9494 = vsel %vm9324, %v9491, %v9493
        %v9495 = vsel %vm9326, %v9491, %v9494
        %v9496 = vsel %vm9315, %v8853, %v8853
        %v9497 = vsel %vm9317, %v8853, %v9496
        %v9498 = vrot.slane %v8854, 7
        %v9499 = vsel %vm9320, %v9498, %v9497
        %v9500 = vsel %vm9322, %v9498, %v9499
        %v9501 = vsel %vm9324, %v9498, %v9500
        %v9502 = vsel %vm9326, %v9498, %v9501
        %v9503 = vsel %vm9315, %v8855, %v8855
        %v9504 = vsel %vm9317, %v8855, %v9503
        %v9505 = vrot.slane %v8856, 7
        %v9506 = vsel %vm9320, %v9505, %v9504
        %v9507 = vsel %vm9322, %v9505, %v9506
        %v9508 = vsel %vm9324, %v9505, %v9507
        %v9509 = vsel %vm9326, %v9505, %v9508
        %v9510 = vsel %vm9315, %v8857, %v8857
        %v9511 = vsel %vm9317, %v8857, %v9510
        %v9512 = vrot.slane %v8858, 7
        %v9513 = vsel %vm9320, %v9512, %v9511
        %v9514 = vsel %vm9322, %v9512, %v9513
        %v9515 = vsel %vm9324, %v9512, %v9514
        %v9516 = vsel %vm9326, %v9512, %v9515
        %v9517 = vsel %vm9315, %v8859, %v8859
        %v9518 = vsel %vm9317, %v8859, %v9517
        %v9519 = vrot.slane %v8860, 7
        %v9520 = vsel %vm9320, %v9519, %v9518
        %v9521 = vsel %vm9322, %v9519, %v9520
        %v9522 = vsel %vm9324, %v9519, %v9521
        %v9523 = vsel %vm9326, %v9519, %v9522
        %v9524 = vsel %vm9315, %v8861, %v8861
        %v9525 = vsel %vm9317, %v8861, %v9524
        %v9526 = vrot.slane %v8862, 7
        %v9527 = vsel %vm9320, %v9526, %v9525
        %v9528 = vsel %vm9322, %v9526, %v9527
        %v9529 = vsel %vm9324, %v9526, %v9528
        %v9530 = vsel %vm9326, %v9526, %v9529
        %v9531 = vsel %vm9315, %v8863, %v8863
        %v9532 = vsel %vm9317, %v8863, %v9531
        %v9533 = vrot.slane %v8864, 7
        %v9534 = vsel %vm9320, %v9533, %v9532
        %v9535 = vsel %vm9322, %v9533, %v9534
        %v9536 = vsel %vm9324, %v9533, %v9535
        %v9537 = vsel %vm9326, %v9533, %v9536
        %v9538 = vsel %vm9315, %v8865, %v8865
        %v9539 = vsel %vm9317, %v8865, %v9538
        %v9540 = vrot.slane %v8866, 7
        %v9541 = vsel %vm9320, %v9540, %v9539
        %v9542 = vsel %vm9322, %v9540, %v9541
        %v9543 = vsel %vm9324, %v9540, %v9542
        %v9544 = vsel %vm9326, %v9540, %v9543
        %v9545 = vsel %vm9315, %v8867, %v8867
        %v9546 = vsel %vm9317, %v8867, %v9545
        %v9547 = vrot.slane %v8868, 7
        %v9548 = vsel %vm9320, %v9547, %v9546
        %v9549 = vsel %vm9322, %v9547, %v9548
        %v9550 = vsel %vm9324, %v9547, %v9549
        %v9551 = vsel %vm9326, %v9547, %v9550
        %v9552 = vsel %vm9315, %v8869, %v8869
        %v9553 = vsel %vm9317, %v8869, %v9552
        %v9554 = vrot.slane %v8870, 7
        %v9555 = vsel %vm9320, %v9554, %v9553
        %v9556 = vsel %vm9322, %v9554, %v9555
        %v9557 = vsel %vm9324, %v9554, %v9556
        %v9558 = vsel %vm9326, %v9554, %v9557
        %v9559 = vsel %vm9315, %v8871, %v8871
        %v9560 = vsel %vm9317, %v8871, %v9559
        %v9561 = vrot.slane %v8872, 7
        %v9562 = vsel %vm9320, %v9561, %v9560
        %v9563 = vsel %vm9322, %v9561, %v9562
        %v9564 = vsel %vm9324, %v9561, %v9563
        %v9565 = vsel %vm9326, %v9561, %v9564
        %v9566 = vsel %vm9315, %v8873, %v8873
        %v9567 = vsel %vm9317, %v8873, %v9566
        %v9568 = vrot.slane %v8874, 7
        %v9569 = vsel %vm9320, %v9568, %v9567
        %v9570 = vsel %vm9322, %v9568, %v9569
        %v9571 = vsel %vm9324, %v9568, %v9570
        %v9572 = vsel %vm9326, %v9568, %v9571
        %v9573 = vsel %vm9315, %v8875, %v8875
        %v9574 = vsel %vm9317, %v8875, %v9573
        %v9575 = vrot.slane %v8876, 7
        %v9576 = vsel %vm9320, %v9575, %v9574
        %v9577 = vsel %vm9322, %v9575, %v9576
        %v9578 = vsel %vm9324, %v9575, %v9577
        %v9579 = vsel %vm9326, %v9575, %v9578
        %v9580 = vsel %vm9315, %v8877, %v8877
        %v9581 = vsel %vm9317, %v8877, %v9580
        %v9582 = vrot.slane %v8878, 7
        %v9583 = vsel %vm9320, %v9582, %v9581
        %v9584 = vsel %vm9322, %v9582, %v9583
        %v9585 = vsel %vm9324, %v9582, %v9584
        %v9586 = vsel %vm9326, %v9582, %v9585
        %v9587 = vsel %vm9315, %v8879, %v8879
        %v9588 = vsel %vm9317, %v8879, %v9587
        %v9589 = vrot.slane %v8880, 7
        %v9590 = vsel %vm9320, %v9589, %v9588
        %v9591 = vsel %vm9322, %v9589, %v9590
        %v9592 = vsel %vm9324, %v9589, %v9591
        %v9593 = vsel %vm9326, %v9589, %v9592
        %v9594 = vsel %vm9315, %v8881, %v8881
        %v9595 = vsel %vm9317, %v8881, %v9594
        %v9596 = vrot.slane %v8882, 7
        %v9597 = vsel %vm9320, %v9596, %v9595
        %v9598 = vsel %vm9322, %v9596, %v9597
        %v9599 = vsel %vm9324, %v9596, %v9598
        %v9600 = vsel %vm9326, %v9596, %v9599
        %v9601 = vsel %vm9315, %v8883, %v8883
        %v9602 = vsel %vm9317, %v8883, %v9601
        %v9603 = vrot.slane %v8884, 7
        %v9604 = vsel %vm9320, %v9603, %v9602
        %v9605 = vsel %vm9322, %v9603, %v9604
        %v9606 = vsel %vm9324, %v9603, %v9605
        %v9607 = vsel %vm9326, %v9603, %v9606
        %v9608 = vsel %vm9315, %v8885, %v8885
        %v9609 = vsel %vm9317, %v8885, %v9608
        %v9610 = vrot.slane %v8886, 7
        %v9611 = vsel %vm9320, %v9610, %v9609
        %v9612 = vsel %vm9322, %v9610, %v9611
        %v9613 = vsel %vm9324, %v9610, %v9612
        %v9614 = vsel %vm9326, %v9610, %v9613
        %v9615 = vsel %vm9315, %v8887, %v8887
        %v9616 = vsel %vm9317, %v8887, %v9615
        %v9617 = vrot.slane %v8888, 7
        %v9618 = vsel %vm9320, %v9617, %v9616
        %v9619 = vsel %vm9322, %v9617, %v9618
        %v9620 = vsel %vm9324, %v9617, %v9619
        %v9621 = vsel %vm9326, %v9617, %v9620
        %v9622 = vsel %vm9315, %v8889, %v8889
        %v9623 = vsel %vm9317, %v8889, %v9622
        %v9624 = vrot.slane %v8890, 7
        %v9625 = vsel %vm9320, %v9624, %v9623
        %v9626 = vsel %vm9322, %v9624, %v9625
        %v9627 = vsel %vm9324, %v9624, %v9626
        %v9628 = vsel %vm9326, %v9624, %v9627
        %v9629 = vsel %vm9315, %v8891, %v8891
        %v9630 = vsel %vm9317, %v8891, %v9629
        %v9631 = vrot.slane %v8892, 7
        %v9632 = vsel %vm9320, %v9631, %v9630
        %v9633 = vsel %vm9322, %v9631, %v9632
        %v9634 = vsel %vm9324, %v9631, %v9633
        %v9635 = vsel %vm9326, %v9631, %v9634
        %v9636 = vsel %vm9315, %v8893, %v8893
        %v9637 = vsel %vm9317, %v8893, %v9636
        %v9638 = vrot.slane %v8894, 7
        %v9639 = vsel %vm9320, %v9638, %v9637
        %v9640 = vsel %vm9322, %v9638, %v9639
        %v9641 = vsel %vm9324, %v9638, %v9640
        %v9642 = vsel %vm9326, %v9638, %v9641
        %v9643 = vsel %vm9315, %v8895, %v8895
        %v9644 = vsel %vm9317, %v8895, %v9643
        %v9645 = vrot.slane %v8896, 7
        %v9646 = vsel %vm9320, %v9645, %v9644
        %v9647 = vsel %vm9322, %v9645, %v9646
        %v9648 = vsel %vm9324, %v9645, %v9647
        %v9649 = vsel %vm9326, %v9645, %v9648
        %v9650 = vsel %vm9315, %v8897, %v8897
        %v9651 = vsel %vm9317, %v8897, %v9650
        %v9652 = vrot.slane %v8898, 7
        %v9653 = vsel %vm9320, %v9652, %v9651
        %v9654 = vsel %vm9322, %v9652, %v9653
        %v9655 = vsel %vm9324, %v9652, %v9654
        %v9656 = vsel %vm9326, %v9652, %v9655
        %v9657 = vsel %vm9315, %v8899, %v8899
        %v9658 = vsel %vm9317, %v8899, %v9657
        %v9659 = vrot.slane %v8900, 7
        %v9660 = vsel %vm9320, %v9659, %v9658
        %v9661 = vsel %vm9322, %v9659, %v9660
        %v9662 = vsel %vm9324, %v9659, %v9661
        %v9663 = vsel %vm9326, %v9659, %v9662
        %v9664 = vsel %vm9315, %v8901, %v8901
        %v9665 = vsel %vm9317, %v8901, %v9664
        %v9666 = vrot.slane %v8902, 7
        %v9667 = vsel %vm9320, %v9666, %v9665
        %v9668 = vsel %vm9322, %v9666, %v9667
        %v9669 = vsel %vm9324, %v9666, %v9668
        %v9670 = vsel %vm9326, %v9666, %v9669
        %v9671 = vsel %vm9315, %v8903, %v8903
        %v9672 = vsel %vm9317, %v8903, %v9671
        %v9673 = vrot.slane %v8904, 7
        %v9674 = vsel %vm9320, %v9673, %v9672
        %v9675 = vsel %vm9322, %v9673, %v9674
        %v9676 = vsel %vm9324, %v9673, %v9675
        %v9677 = vsel %vm9326, %v9673, %v9676
        %v9678 = vsel %vm9315, %v8905, %v8905
        %v9679 = vsel %vm9317, %v8905, %v9678
        %v9680 = vrot.slane %v8906, 7
        %v9681 = vsel %vm9320, %v9680, %v9679
        %v9682 = vsel %vm9322, %v9680, %v9681
        %v9683 = vsel %vm9324, %v9680, %v9682
        %v9684 = vsel %vm9326, %v9680, %v9683
        %v9685 = vsel %vm9315, %v8907, %v8907
        %v9686 = vsel %vm9317, %v8907, %v9685
        %v9687 = vrot.slane %v8908, 7
        %v9688 = vsel %vm9320, %v9687, %v9686
        %v9689 = vsel %vm9322, %v9687, %v9688
        %v9690 = vsel %vm9324, %v9687, %v9689
        %v9691 = vsel %vm9326, %v9687, %v9690
        %v9692 = vsel %vm9315, %v8909, %v8909
        %v9693 = vsel %vm9317, %v8909, %v9692
        %v9694 = vrot.slane %v8910, 7
        %v9695 = vsel %vm9320, %v9694, %v9693
        %v9696 = vsel %vm9322, %v9694, %v9695
        %v9697 = vsel %vm9324, %v9694, %v9696
        %v9698 = vsel %vm9326, %v9694, %v9697
        %v9699 = vsel %vm9315, %v8911, %v8911
        %v9700 = vsel %vm9317, %v8911, %v9699
        %v9701 = vrot.slane %v8912, 7
        %v9702 = vsel %vm9320, %v9701, %v9700
        %v9703 = vsel %vm9322, %v9701, %v9702
        %v9704 = vsel %vm9324, %v9701, %v9703
        %v9705 = vsel %vm9326, %v9701, %v9704
        %v9706 = vsel %vm9315, %v8913, %v8913
        %v9707 = vsel %vm9317, %v8913, %v9706
        %v9708 = vrot.slane %v8914, 7
        %v9709 = vsel %vm9320, %v9708, %v9707
        %v9710 = vsel %vm9322, %v9708, %v9709
        %v9711 = vsel %vm9324, %v9708, %v9710
        %v9712 = vsel %vm9326, %v9708, %v9711
        %v9713 = vsel %vm9315, %v8915, %v8915
        %v9714 = vsel %vm9317, %v8915, %v9713
        %v9715 = vrot.slane %v8916, 7
        %v9716 = vsel %vm9320, %v9715, %v9714
        %v9717 = vsel %vm9322, %v9715, %v9716
        %v9718 = vsel %vm9324, %v9715, %v9717
        %v9719 = vsel %vm9326, %v9715, %v9718
        %v9720 = vsel %vm9315, %v8917, %v8917
        %v9721 = vsel %vm9317, %v8917, %v9720
        %v9722 = vrot.slane %v8918, 7
        %v9723 = vsel %vm9320, %v9722, %v9721
        %v9724 = vsel %vm9322, %v9722, %v9723
        %v9725 = vsel %vm9324, %v9722, %v9724
        %v9726 = vsel %vm9326, %v9722, %v9725
        %v9727 = vsel %vm9315, %v8919, %v8919
        %v9728 = vsel %vm9317, %v8919, %v9727
        %v9729 = vrot.slane %v8920, 7
        %v9730 = vsel %vm9320, %v9729, %v9728
        %v9731 = vsel %vm9322, %v9729, %v9730
        %v9732 = vsel %vm9324, %v9729, %v9731
        %v9733 = vsel %vm9326, %v9729, %v9732
        %v9734 = vsel %vm9315, %v8921, %v8921
        %v9735 = vsel %vm9317, %v8921, %v9734
        %v9736 = vrot.slane %v8922, 7
        %v9737 = vsel %vm9320, %v9736, %v9735
        %v9738 = vsel %vm9322, %v9736, %v9737
        %v9739 = vsel %vm9324, %v9736, %v9738
        %v9740 = vsel %vm9326, %v9736, %v9739
        %v9741 = vsel %vm9315, %v8923, %v8923
        %v9742 = vsel %vm9317, %v8923, %v9741
        %v9743 = vrot.slane %v8924, 7
        %v9744 = vsel %vm9320, %v9743, %v9742
        %v9745 = vsel %vm9322, %v9743, %v9744
        %v9746 = vsel %vm9324, %v9743, %v9745
        %v9747 = vsel %vm9326, %v9743, %v9746
        %v9748 = vsel %vm9315, %v8925, %v8925
        %v9749 = vsel %vm9317, %v8925, %v9748
        %v9750 = vrot.slane %v8926, 7
        %v9751 = vsel %vm9320, %v9750, %v9749
        %v9752 = vsel %vm9322, %v9750, %v9751
        %v9753 = vsel %vm9324, %v9750, %v9752
        %v9754 = vsel %vm9326, %v9750, %v9753
        %v9755 = vsel %vm9315, %v8927, %v8927
        %v9756 = vsel %vm9317, %v8927, %v9755
        %v9757 = vrot.slane %v8928, 7
        %v9758 = vsel %vm9320, %v9757, %v9756
        %v9759 = vsel %vm9322, %v9757, %v9758
        %v9760 = vsel %vm9324, %v9757, %v9759
        %v9761 = vsel %vm9326, %v9757, %v9760
        %v9762 = vsel %vm9315, %v8929, %v8929
        %v9763 = vsel %vm9317, %v8929, %v9762
        %v9764 = vrot.slane %v8930, 7
        %v9765 = vsel %vm9320, %v9764, %v9763
        %v9766 = vsel %vm9322, %v9764, %v9765
        %v9767 = vsel %vm9324, %v9764, %v9766
        %v9768 = vsel %vm9326, %v9764, %v9767
        %v9769 = vsel %vm9315, %v8931, %v8931
        %v9770 = vsel %vm9317, %v8931, %v9769
        %v9771 = vrot.slane %v8932, 7
        %v9772 = vsel %vm9320, %v9771, %v9770
        %v9773 = vsel %vm9322, %v9771, %v9772
        %v9774 = vsel %vm9324, %v9771, %v9773
        %v9775 = vsel %vm9326, %v9771, %v9774
        %v9776 = vsel %vm9315, %v8933, %v8933
        %v9777 = vsel %vm9317, %v8933, %v9776
        %v9778 = vrot.slane %v8934, 7
        %v9779 = vsel %vm9320, %v9778, %v9777
        %v9780 = vsel %vm9322, %v9778, %v9779
        %v9781 = vsel %vm9324, %v9778, %v9780
        %v9782 = vsel %vm9326, %v9778, %v9781
        %v9783 = vsel %vm9315, %v8935, %v8935
        %v9784 = vsel %vm9317, %v8935, %v9783
        %v9785 = vrot.slane %v8936, 7
        %v9786 = vsel %vm9320, %v9785, %v9784
        %v9787 = vsel %vm9322, %v9785, %v9786
        %v9788 = vsel %vm9324, %v9785, %v9787
        %v9789 = vsel %vm9326, %v9785, %v9788
        %v9790 = vsel %vm9315, %v8937, %v8937
        %v9791 = vsel %vm9317, %v8937, %v9790
        %v9792 = vrot.slane %v8938, 7
        %v9793 = vsel %vm9320, %v9792, %v9791
        %v9794 = vsel %vm9322, %v9792, %v9793
        %v9795 = vsel %vm9324, %v9792, %v9794
        %v9796 = vsel %vm9326, %v9792, %v9795
        %v9797 = vsel %vm9315, %v8939, %v8939
        %v9798 = vsel %vm9317, %v8939, %v9797
        %v9799 = vrot.slane %v8940, 7
        %v9800 = vsel %vm9320, %v9799, %v9798
        %v9801 = vsel %vm9322, %v9799, %v9800
        %v9802 = vsel %vm9324, %v9799, %v9801
        %v9803 = vsel %vm9326, %v9799, %v9802
        %v9804 = vsel %vm9315, %v8941, %v8941
        %v9805 = vsel %vm9317, %v8941, %v9804
        %v9806 = vrot.slane %v8942, 7
        %v9807 = vsel %vm9320, %v9806, %v9805
        %v9808 = vsel %vm9322, %v9806, %v9807
        %v9809 = vsel %vm9324, %v9806, %v9808
        %v9810 = vsel %vm9326, %v9806, %v9809
        %v9811 = vsel %vm9315, %v8943, %v8943
        %v9812 = vsel %vm9317, %v8943, %v9811
        %v9813 = vrot.slane %v8944, 7
        %v9814 = vsel %vm9320, %v9813, %v9812
        %v9815 = vsel %vm9322, %v9813, %v9814
        %v9816 = vsel %vm9324, %v9813, %v9815
        %v9817 = vsel %vm9326, %v9813, %v9816
        %v9818 = vsel %vm9315, %v8945, %v8945
        %v9819 = vsel %vm9317, %v8945, %v9818
        %v9820 = vrot.slane %v8946, 7
        %v9821 = vsel %vm9320, %v9820, %v9819
        %v9822 = vsel %vm9322, %v9820, %v9821
        %v9823 = vsel %vm9324, %v9820, %v9822
        %v9824 = vsel %vm9326, %v9820, %v9823
        %v9825 = vsel %vm9315, %v8947, %v8947
        %v9826 = vsel %vm9317, %v8947, %v9825
        %v9827 = vrot.slane %v8948, 7
        %v9828 = vsel %vm9320, %v9827, %v9826
        %v9829 = vsel %vm9322, %v9827, %v9828
        %v9830 = vsel %vm9324, %v9827, %v9829
        %v9831 = vsel %vm9326, %v9827, %v9830
        %v9832 = vsel %vm9315, %v8949, %v8949
        %v9833 = vsel %vm9317, %v8949, %v9832
        %v9834 = vrot.slane %v8950, 7
        %v9835 = vsel %vm9320, %v9834, %v9833
        %v9836 = vsel %vm9322, %v9834, %v9835
        %v9837 = vsel %vm9324, %v9834, %v9836
        %v9838 = vsel %vm9326, %v9834, %v9837
        %v9839 = vsel %vm9315, %v8951, %v8951
        %v9840 = vsel %vm9317, %v8951, %v9839
        %v9841 = vrot.slane %v8952, 7
        %v9842 = vsel %vm9320, %v9841, %v9840
        %v9843 = vsel %vm9322, %v9841, %v9842
        %v9844 = vsel %vm9324, %v9841, %v9843
        %v9845 = vsel %vm9326, %v9841, %v9844
        %v9846 = vsel %vm9315, %v8953, %v8953
        %v9847 = vsel %vm9317, %v8953, %v9846
        %v9848 = vrot.slane %v8954, 7
        %v9849 = vsel %vm9320, %v9848, %v9847
        %v9850 = vsel %vm9322, %v9848, %v9849
        %v9851 = vsel %vm9324, %v9848, %v9850
        %v9852 = vsel %vm9326, %v9848, %v9851
        %v9853 = vsel %vm9315, %v8955, %v8955
        %v9854 = vsel %vm9317, %v8955, %v9853
        %v9855 = vrot.slane %v8956, 7
        %v9856 = vsel %vm9320, %v9855, %v9854
        %v9857 = vsel %vm9322, %v9855, %v9856
        %v9858 = vsel %vm9324, %v9855, %v9857
        %v9859 = vsel %vm9326, %v9855, %v9858
        %v9860 = vsel %vm9315, %v8957, %v8957
        %v9861 = vsel %vm9317, %v8957, %v9860
        %v9862 = vrot.slane %v8958, 7
        %v9863 = vsel %vm9320, %v9862, %v9861
        %v9864 = vsel %vm9322, %v9862, %v9863
        %v9865 = vsel %vm9324, %v9862, %v9864
        %v9866 = vsel %vm9326, %v9862, %v9865
        %v9867 = vsel %vm9315, %v8959, %v8959
        %v9868 = vsel %vm9317, %v8959, %v9867
        %v9869 = vrot.slane %v8960, 7
        %v9870 = vsel %vm9320, %v9869, %v9868
        %v9871 = vsel %vm9322, %v9869, %v9870
        %v9872 = vsel %vm9324, %v9869, %v9871
        %v9873 = vsel %vm9326, %v9869, %v9872
        %v9874 = vsel %vm9315, %v8961, %v8961
        %v9875 = vsel %vm9317, %v8961, %v9874
        %v9876 = vrot.slane %v8962, 7
        %v9877 = vsel %vm9320, %v9876, %v9875
        %v9878 = vsel %vm9322, %v9876, %v9877
        %v9879 = vsel %vm9324, %v9876, %v9878
        %v9880 = vsel %vm9326, %v9876, %v9879
        %v9881 = vsel %vm9315, %v8963, %v8963
        %v9882 = vsel %vm9317, %v8963, %v9881
        %v9883 = vrot.slane %v8964, 7
        %v9884 = vsel %vm9320, %v9883, %v9882
        %v9885 = vsel %vm9322, %v9883, %v9884
        %v9886 = vsel %vm9324, %v9883, %v9885
        %v9887 = vsel %vm9326, %v9883, %v9886
        %v9888 = vsel %vm9315, %v8965, %v8965
        %v9889 = vsel %vm9317, %v8965, %v9888
        %v9890 = vrot.slane %v8966, 7
        %v9891 = vsel %vm9320, %v9890, %v9889
        %v9892 = vsel %vm9322, %v9890, %v9891
        %v9893 = vsel %vm9324, %v9890, %v9892
        %v9894 = vsel %vm9326, %v9890, %v9893
        %v9895 = vsel %vm9315, %v8967, %v8967
        %v9896 = vsel %vm9317, %v8967, %v9895
        %v9897 = vrot.slane %v8968, 7
        %v9898 = vsel %vm9320, %v9897, %v9896
        %v9899 = vsel %vm9322, %v9897, %v9898
        %v9900 = vsel %vm9324, %v9897, %v9899
        %v9901 = vsel %vm9326, %v9897, %v9900
        %v9902 = vsel %vm9315, %v8969, %v8969
        %v9903 = vsel %vm9317, %v8969, %v9902
        %v9904 = vrot.slane %v8970, 7
        %v9905 = vsel %vm9320, %v9904, %v9903
        %v9906 = vsel %vm9322, %v9904, %v9905
        %v9907 = vsel %vm9324, %v9904, %v9906
        %v9908 = vsel %vm9326, %v9904, %v9907
        %v9909 = vsel %vm9315, %v8971, %v8971
        %v9910 = vsel %vm9317, %v8971, %v9909
        %v9911 = vrot.slane %v8972, 7
        %v9912 = vsel %vm9320, %v9911, %v9910
        %v9913 = vsel %vm9322, %v9911, %v9912
        %v9914 = vsel %vm9324, %v9911, %v9913
        %v9915 = vsel %vm9326, %v9911, %v9914
        %v9916 = vsel %vm9315, %v8973, %v8973
        %v9917 = vsel %vm9317, %v8973, %v9916
        %v9918 = vrot.slane %v8974, 7
        %v9919 = vsel %vm9320, %v9918, %v9917
        %v9920 = vsel %vm9322, %v9918, %v9919
        %v9921 = vsel %vm9324, %v9918, %v9920
        %v9922 = vsel %vm9326, %v9918, %v9921
        %v9923 = vsel %vm9315, %v8975, %v8975
        %v9924 = vsel %vm9317, %v8975, %v9923
        %v9925 = vrot.slane %v8976, 7
        %v9926 = vsel %vm9320, %v9925, %v9924
        %v9927 = vsel %vm9322, %v9925, %v9926
        %v9928 = vsel %vm9324, %v9925, %v9927
        %v9929 = vsel %vm9326, %v9925, %v9928
        %v9930 = vsel %vm9315, %v8977, %v8977
        %v9931 = vsel %vm9317, %v8977, %v9930
        %v9932 = vrot.slane %v8978, 7
        %v9933 = vsel %vm9320, %v9932, %v9931
        %v9934 = vsel %vm9322, %v9932, %v9933
        %v9935 = vsel %vm9324, %v9932, %v9934
        %v9936 = vsel %vm9326, %v9932, %v9935
        %v9937 = vsel %vm9315, %v8979, %v8979
        %v9938 = vsel %vm9317, %v8979, %v9937
        %v9939 = vrot.slane %v8980, 7
        %v9940 = vsel %vm9320, %v9939, %v9938
        %v9941 = vsel %vm9322, %v9939, %v9940
        %v9942 = vsel %vm9324, %v9939, %v9941
        %v9943 = vsel %vm9326, %v9939, %v9942
        %v9944 = vsel %vm9315, %v8981, %v8981
        %v9945 = vsel %vm9317, %v8981, %v9944
        %v9946 = vrot.slane %v8982, 7
        %v9947 = vsel %vm9320, %v9946, %v9945
        %v9948 = vsel %vm9322, %v9946, %v9947
        %v9949 = vsel %vm9324, %v9946, %v9948
        %v9950 = vsel %vm9326, %v9946, %v9949
        %v9951 = vsel %vm9315, %v8983, %v8983
        %v9952 = vsel %vm9317, %v8983, %v9951
        %v9953 = vrot.slane %v8984, 7
        %v9954 = vsel %vm9320, %v9953, %v9952
        %v9955 = vsel %vm9322, %v9953, %v9954
        %v9956 = vsel %vm9324, %v9953, %v9955
        %v9957 = vsel %vm9326, %v9953, %v9956
        %v9958 = vsel %vm9315, %v8985, %v8985
        %v9959 = vsel %vm9317, %v8985, %v9958
        %v9960 = vrot.slane %v8986, 7
        %v9961 = vsel %vm9320, %v9960, %v9959
        %v9962 = vsel %vm9322, %v9960, %v9961
        %v9963 = vsel %vm9324, %v9960, %v9962
        %v9964 = vsel %vm9326, %v9960, %v9963
        %v9965 = vsel %vm9315, %v8987, %v8987
        %v9966 = vsel %vm9317, %v8987, %v9965
        %v9967 = vrot.slane %v8988, 7
        %v9968 = vsel %vm9320, %v9967, %v9966
        %v9969 = vsel %vm9322, %v9967, %v9968
        %v9970 = vsel %vm9324, %v9967, %v9969
        %v9971 = vsel %vm9326, %v9967, %v9970
        %v9972 = vsel %vm9315, %v8989, %v8989
        %v9973 = vsel %vm9317, %v8989, %v9972
        %v9974 = vrot.slane %v8990, 7
        %v9975 = vsel %vm9320, %v9974, %v9973
        %v9976 = vsel %vm9322, %v9974, %v9975
        %v9977 = vsel %vm9324, %v9974, %v9976
        %v9978 = vsel %vm9326, %v9974, %v9977
        %v9979 = vsel %vm9315, %v8991, %v8991
        %v9980 = vsel %vm9317, %v8991, %v9979
        %v9981 = vrot.slane %v8992, 7
        %v9982 = vsel %vm9320, %v9981, %v9980
        %v9983 = vsel %vm9322, %v9981, %v9982
        %v9984 = vsel %vm9324, %v9981, %v9983
        %v9985 = vsel %vm9326, %v9981, %v9984
        %v9986 = vsel %vm9315, %v8993, %v8993
        %v9987 = vsel %vm9317, %v8993, %v9986
        %v9988 = vrot.slane %v8994, 7
        %v9989 = vsel %vm9320, %v9988, %v9987
        %v9990 = vsel %vm9322, %v9988, %v9989
        %v9991 = vsel %vm9324, %v9988, %v9990
        %v9992 = vsel %vm9326, %v9988, %v9991
        %v9993 = vsel %vm9315, %v8995, %v8995
        %v9994 = vsel %vm9317, %v8995, %v9993
        %v9995 = vrot.slane %v8996, 7
        %v9996 = vsel %vm9320, %v9995, %v9994
        %v9997 = vsel %vm9322, %v9995, %v9996
        %v9998 = vsel %vm9324, %v9995, %v9997
        %v9999 = vsel %vm9326, %v9995, %v9998
        %v10000 = vsel %vm9315, %v8997, %v8997
        %v10001 = vsel %vm9317, %v8997, %v10000
        %v10002 = vrot.slane %v8998, 7
        %v10003 = vsel %vm9320, %v10002, %v10001
        %v10004 = vsel %vm9322, %v10002, %v10003
        %v10005 = vsel %vm9324, %v10002, %v10004
        %v10006 = vsel %vm9326, %v10002, %v10005
        %v10007 = vsel %vm9315, %v8999, %v8999
        %v10008 = vsel %vm9317, %v8999, %v10007
        %v10009 = vrot.slane %v9000, 7
        %v10010 = vsel %vm9320, %v10009, %v10008
        %v10011 = vsel %vm9322, %v10009, %v10010
        %v10012 = vsel %vm9324, %v10009, %v10011
        %v10013 = vsel %vm9326, %v10009, %v10012
        %v10014 = vsel %vm9315, %v9001, %v9001
        %v10015 = vsel %vm9317, %v9001, %v10014
        %v10016 = vrot.slane %v9002, 7
        %v10017 = vsel %vm9320, %v10016, %v10015
        %v10018 = vsel %vm9322, %v10016, %v10017
        %v10019 = vsel %vm9324, %v10016, %v10018
        %v10020 = vsel %vm9326, %v10016, %v10019
        %v10021 = vsel %vm9315, %v9003, %v9003
        %v10022 = vsel %vm9317, %v9003, %v10021
        %v10023 = vrot.slane %v9004, 7
        %v10024 = vsel %vm9320, %v10023, %v10022
        %v10025 = vsel %vm9322, %v10023, %v10024
        %v10026 = vsel %vm9324, %v10023, %v10025
        %v10027 = vsel %vm9326, %v10023, %v10026
        %v10028 = vsel %vm9315, %v9005, %v9005
        %v10029 = vsel %vm9317, %v9005, %v10028
        %v10030 = vrot.slane %v9006, 7
        %v10031 = vsel %vm9320, %v10030, %v10029
        %v10032 = vsel %vm9322, %v10030, %v10031
        %v10033 = vsel %vm9324, %v10030, %v10032
        %v10034 = vsel %vm9326, %v10030, %v10033
        %v10035 = vsel %vm9315, %v9007, %v9007
        %v10036 = vsel %vm9317, %v9007, %v10035
        %v10037 = vrot.slane %v9008, 7
        %v10038 = vsel %vm9320, %v10037, %v10036
        %v10039 = vsel %vm9322, %v10037, %v10038
        %v10040 = vsel %vm9324, %v10037, %v10039
        %v10041 = vsel %vm9326, %v10037, %v10040
        %v10042 = vsel %vm9315, %v9009, %v9009
        %v10043 = vsel %vm9317, %v9009, %v10042
        %v10044 = vrot.slane %v9010, 7
        %v10045 = vsel %vm9320, %v10044, %v10043
        %v10046 = vsel %vm9322, %v10044, %v10045
        %v10047 = vsel %vm9324, %v10044, %v10046
        %v10048 = vsel %vm9326, %v10044, %v10047
        %v10049 = vsel %vm9315, %v9011, %v9011
        %v10050 = vsel %vm9317, %v9011, %v10049
        %v10051 = vrot.slane %v9012, 7
        %v10052 = vsel %vm9320, %v10051, %v10050
        %v10053 = vsel %vm9322, %v10051, %v10052
        %v10054 = vsel %vm9324, %v10051, %v10053
        %v10055 = vsel %vm9326, %v10051, %v10054
        %v10056 = vsel %vm9315, %v9013, %v9013
        %v10057 = vsel %vm9317, %v9013, %v10056
        %v10058 = vrot.slane %v9014, 7
        %v10059 = vsel %vm9320, %v10058, %v10057
        %v10060 = vsel %vm9322, %v10058, %v10059
        %v10061 = vsel %vm9324, %v10058, %v10060
        %v10062 = vsel %vm9326, %v10058, %v10061
        %v10063 = vsel %vm9315, %v9015, %v9015
        %v10064 = vsel %vm9317, %v9015, %v10063
        %v10065 = vrot.slane %v9016, 7
        %v10066 = vsel %vm9320, %v10065, %v10064
        %v10067 = vsel %vm9322, %v10065, %v10066
        %v10068 = vsel %vm9324, %v10065, %v10067
        %v10069 = vsel %vm9326, %v10065, %v10068
        %v10070 = vsel %vm9315, %v9017, %v9017
        %v10071 = vsel %vm9317, %v9017, %v10070
        %v10072 = vrot.slane %v9018, 7
        %v10073 = vsel %vm9320, %v10072, %v10071
        %v10074 = vsel %vm9322, %v10072, %v10073
        %v10075 = vsel %vm9324, %v10072, %v10074
        %v10076 = vsel %vm9326, %v10072, %v10075
        %v10077 = vsel %vm9315, %v9019, %v9019
        %v10078 = vsel %vm9317, %v9019, %v10077
        %v10079 = vrot.slane %v9020, 7
        %v10080 = vsel %vm9320, %v10079, %v10078
        %v10081 = vsel %vm9322, %v10079, %v10080
        %v10082 = vsel %vm9324, %v10079, %v10081
        %v10083 = vsel %vm9326, %v10079, %v10082
        %v10084 = vsel %vm9315, %v9021, %v9021
        %v10085 = vsel %vm9317, %v9021, %v10084
        %v10086 = vrot.slane %v9022, 7
        %v10087 = vsel %vm9320, %v10086, %v10085
        %v10088 = vsel %vm9322, %v10086, %v10087
        %v10089 = vsel %vm9324, %v10086, %v10088
        %v10090 = vsel %vm9326, %v10086, %v10089
        %v10091 = vsel %vm9315, %v9023, %v9023
        %v10092 = vsel %vm9317, %v9023, %v10091
        %v10093 = vrot.slane %v9024, 7
        %v10094 = vsel %vm9320, %v10093, %v10092
        %v10095 = vsel %vm9322, %v10093, %v10094
        %v10096 = vsel %vm9324, %v10093, %v10095
        %v10097 = vsel %vm9326, %v10093, %v10096
        %v10098 = vsel %vm9315, %v9025, %v9025
        %v10099 = vsel %vm9317, %v9025, %v10098
        %v10100 = vrot.slane %v9026, 7
        %v10101 = vsel %vm9320, %v10100, %v10099
        %v10102 = vsel %vm9322, %v10100, %v10101
        %v10103 = vsel %vm9324, %v10100, %v10102
        %v10104 = vsel %vm9326, %v10100, %v10103
        %v10105 = vsel %vm9315, %v9027, %v9027
        %v10106 = vsel %vm9317, %v9027, %v10105
        %v10107 = vrot.slane %v9028, 7
        %v10108 = vsel %vm9320, %v10107, %v10106
        %v10109 = vsel %vm9322, %v10107, %v10108
        %v10110 = vsel %vm9324, %v10107, %v10109
        %v10111 = vsel %vm9326, %v10107, %v10110
        %v10112 = vsel %vm9315, %v9029, %v9029
        %v10113 = vsel %vm9317, %v9029, %v10112
        %v10114 = vrot.slane %v9030, 7
        %v10115 = vsel %vm9320, %v10114, %v10113
        %v10116 = vsel %vm9322, %v10114, %v10115
        %v10117 = vsel %vm9324, %v10114, %v10116
        %v10118 = vsel %vm9326, %v10114, %v10117
        %v10119 = vsel %vm9315, %v9031, %v9031
        %v10120 = vsel %vm9317, %v9031, %v10119
        %v10121 = vrot.slane %v9032, 7
        %v10122 = vsel %vm9320, %v10121, %v10120
        %v10123 = vsel %vm9322, %v10121, %v10122
        %v10124 = vsel %vm9324, %v10121, %v10123
        %v10125 = vsel %vm9326, %v10121, %v10124
        %v10126 = vsel %vm9315, %v9033, %v9033
        %v10127 = vsel %vm9317, %v9033, %v10126
        %v10128 = vrot.slane %v9034, 7
        %v10129 = vsel %vm9320, %v10128, %v10127
        %v10130 = vsel %vm9322, %v10128, %v10129
        %v10131 = vsel %vm9324, %v10128, %v10130
        %v10132 = vsel %vm9326, %v10128, %v10131
        %v10133 = vsel %vm9315, %v9035, %v9035
        %v10134 = vsel %vm9317, %v9035, %v10133
        %v10135 = vrot.slane %v9036, 7
        %v10136 = vsel %vm9320, %v10135, %v10134
        %v10137 = vsel %vm9322, %v10135, %v10136
        %v10138 = vsel %vm9324, %v10135, %v10137
        %v10139 = vsel %vm9326, %v10135, %v10138
        %v10140 = vsel %vm9315, %v9037, %v9037
        %v10141 = vsel %vm9317, %v9037, %v10140
        %v10142 = vrot.slane %v9038, 7
        %v10143 = vsel %vm9320, %v10142, %v10141
        %v10144 = vsel %vm9322, %v10142, %v10143
        %v10145 = vsel %vm9324, %v10142, %v10144
        %v10146 = vsel %vm9326, %v10142, %v10145
        %v10147 = vsel %vm9315, %v9039, %v9039
        %v10148 = vsel %vm9317, %v9039, %v10147
        %v10149 = vrot.slane %v9040, 7
        %v10150 = vsel %vm9320, %v10149, %v10148
        %v10151 = vsel %vm9322, %v10149, %v10150
        %v10152 = vsel %vm9324, %v10149, %v10151
        %v10153 = vsel %vm9326, %v10149, %v10152
        %v10154 = vsel %vm9315, %v9041, %v9041
        %v10155 = vsel %vm9317, %v9041, %v10154
        %v10156 = vrot.slane %v9042, 7
        %v10157 = vsel %vm9320, %v10156, %v10155
        %v10158 = vsel %vm9322, %v10156, %v10157
        %v10159 = vsel %vm9324, %v10156, %v10158
        %v10160 = vsel %vm9326, %v10156, %v10159
        %v10161 = vsel %vm9315, %v9043, %v9043
        %v10162 = vsel %vm9317, %v9043, %v10161
        %v10163 = vrot.slane %v9044, 7
        %v10164 = vsel %vm9320, %v10163, %v10162
        %v10165 = vsel %vm9322, %v10163, %v10164
        %v10166 = vsel %vm9324, %v10163, %v10165
        %v10167 = vsel %vm9326, %v10163, %v10166
        %v10168 = vsel %vm9315, %v9045, %v9045
        %v10169 = vsel %vm9317, %v9045, %v10168
        %v10170 = vrot.slane %v9046, 7
        %v10171 = vsel %vm9320, %v10170, %v10169
        %v10172 = vsel %vm9322, %v10170, %v10171
        %v10173 = vsel %vm9324, %v10170, %v10172
        %v10174 = vsel %vm9326, %v10170, %v10173
        %v10175 = vsel %vm9315, %v9047, %v9047
        %v10176 = vsel %vm9317, %v9047, %v10175
        %v10177 = vrot.slane %v9048, 7
        %v10178 = vsel %vm9320, %v10177, %v10176
        %v10179 = vsel %vm9322, %v10177, %v10178
        %v10180 = vsel %vm9324, %v10177, %v10179
        %v10181 = vsel %vm9326, %v10177, %v10180
        %v10182 = vsel %vm9315, %v9049, %v9049
        %v10183 = vsel %vm9317, %v9049, %v10182
        %v10184 = vrot.slane %v9050, 7
        %v10185 = vsel %vm9320, %v10184, %v10183
        %v10186 = vsel %vm9322, %v10184, %v10185
        %v10187 = vsel %vm9324, %v10184, %v10186
        %v10188 = vsel %vm9326, %v10184, %v10187
        %v10189 = vsel %vm9315, %v9051, %v9051
        %v10190 = vsel %vm9317, %v9051, %v10189
        %v10191 = vrot.slane %v9052, 7
        %v10192 = vsel %vm9320, %v10191, %v10190
        %v10193 = vsel %vm9322, %v10191, %v10192
        %v10194 = vsel %vm9324, %v10191, %v10193
        %v10195 = vsel %vm9326, %v10191, %v10194
        %v10196 = vsel %vm9315, %v9053, %v9053
        %v10197 = vsel %vm9317, %v9053, %v10196
        %v10198 = vrot.slane %v9054, 7
        %v10199 = vsel %vm9320, %v10198, %v10197
        %v10200 = vsel %vm9322, %v10198, %v10199
        %v10201 = vsel %vm9324, %v10198, %v10200
        %v10202 = vsel %vm9326, %v10198, %v10201
        %v10203 = vsel %vm9315, %v9055, %v9055
        %v10204 = vsel %vm9317, %v9055, %v10203
        %v10205 = vrot.slane %v9056, 7
        %v10206 = vsel %vm9320, %v10205, %v10204
        %v10207 = vsel %vm9322, %v10205, %v10206
        %v10208 = vsel %vm9324, %v10205, %v10207
        %v10209 = vsel %vm9326, %v10205, %v10208
        %v10210 = vsel %vm9315, %v9057, %v9057
        %v10211 = vsel %vm9317, %v9057, %v10210
        %v10212 = vrot.slane %v9058, 7
        %v10213 = vsel %vm9320, %v10212, %v10211
        %v10214 = vsel %vm9322, %v10212, %v10213
        %v10215 = vsel %vm9324, %v10212, %v10214
        %v10216 = vsel %vm9326, %v10212, %v10215
        %v10345 = vcombine.low %v9327, %v9355
        %v10347 = vunpack.c.l.s4 1934713408
        %v10348 = vunpack.c.0.s8 %v10347
        %v10349 = vlaneseq
        %v10350 = vshrl.u32 %v10349, 7
        %v10351 = vsub.s32 %v10348, %v10350
        %v10352 = vrot.slane %v10345, %v10351
        %v10353 = vcombine.high %v10352, 0.0
        %v10354 = vcombine.low %v9383, %v9411
        %v10356 = vunpack.c.l.s4 1934713408
        %v10357 = vunpack.c.0.s8 %v10356
        %v10358 = vlaneseq
        %v10359 = vshrl.u32 %v10358, 7
        %v10360 = vsub.s32 %v10357, %v10359
        %v10361 = vrot.slane %v10354, %v10360
        %v10362 = vcombine.high %v10361, 0.0
        %v10363 = vcombine.low %v9439, %v9467
        %v10365 = vunpack.c.l.s4 1934713408
        %v10366 = vunpack.c.0.s8 %v10365
        %v10367 = vlaneseq
        %v10368 = vshrl.u32 %v10367, 7
        %v10369 = vsub.s32 %v10366, %v10368
        %v10370 = vrot.slane %v10363, %v10369
        %v10371 = vcombine.high %v10370, 0.0
        %v10372 = vcombine.low %v9495, %v9523
        %v10374 = vunpack.c.l.s4 1934713408
        %v10375 = vunpack.c.0.s8 %v10374
        %v10376 = vlaneseq
        %v10377 = vshrl.u32 %v10376, 7
        %v10378 = vsub.s32 %v10375, %v10377
        %v10379 = vrot.slane %v10372, %v10378
        %v10380 = vcombine.high %v10379, 0.0
        %v10381 = vcombine.low %v9551, %v9579
        %v10383 = vunpack.c.l.s4 1934713408
        %v10384 = vunpack.c.0.s8 %v10383
        %v10385 = vlaneseq
        %v10386 = vshrl.u32 %v10385, 7
        %v10387 = vsub.s32 %v10384, %v10386
        %v10388 = vrot.slane %v10381, %v10387
        %v10389 = vcombine.high %v10388, 0.0
        %v10390 = vcombine.low %v9607, %v9635
        %v10392 = vunpack.c.l.s4 1934713408
        %v10393 = vunpack.c.0.s8 %v10392
        %v10394 = vlaneseq
        %v10395 = vshrl.u32 %v10394, 7
        %v10396 = vsub.s32 %v10393, %v10395
        %v10397 = vrot.slane %v10390, %v10396
        %v10398 = vcombine.high %v10397, 0.0
        %v10399 = vcombine.low %v9663, %v9691
        %v10401 = vunpack.c.l.s4 1934713408
        %v10402 = vunpack.c.0.s8 %v10401
        %v10403 = vlaneseq
        %v10404 = vshrl.u32 %v10403, 7
        %v10405 = vsub.s32 %v10402, %v10404
        %v10406 = vrot.slane %v10399, %v10405
        %v10407 = vcombine.high %v10406, 0.0
        %v10408 = vcombine.low %v9719, %v9747
        %v10410 = vunpack.c.l.s4 1934713408
        %v10411 = vunpack.c.0.s8 %v10410
        %v10412 = vlaneseq
        %v10413 = vshrl.u32 %v10412, 7
        %v10414 = vsub.s32 %v10411, %v10413
        %v10415 = vrot.slane %v10408, %v10414
        %v10416 = vcombine.high %v10415, 0.0
        %v10417 = vcombine.low %v9775, %v9803
        %v10419 = vunpack.c.l.s4 1934713408
        %v10420 = vunpack.c.0.s8 %v10419
        %v10421 = vlaneseq
        %v10422 = vshrl.u32 %v10421, 7
        %v10423 = vsub.s32 %v10420, %v10422
        %v10424 = vrot.slane %v10417, %v10423
        %v10425 = vcombine.high %v10424, 0.0
        %v10426 = vcombine.low %v9831, %v9859
        %v10428 = vunpack.c.l.s4 1934713408
        %v10429 = vunpack.c.0.s8 %v10428
        %v10430 = vlaneseq
        %v10431 = vshrl.u32 %v10430, 7
        %v10432 = vsub.s32 %v10429, %v10431
        %v10433 = vrot.slane %v10426, %v10432
        %v10434 = vcombine.high %v10433, 0.0
        %v10435 = vcombine.low %v9887, %v9915
        %v10437 = vunpack.c.l.s4 1934713408
        %v10438 = vunpack.c.0.s8 %v10437
        %v10439 = vlaneseq
        %v10440 = vshrl.u32 %v10439, 7
        %v10441 = vsub.s32 %v10438, %v10440
        %v10442 = vrot.slane %v10435, %v10441
        %v10443 = vcombine.high %v10442, 0.0
        %v10444 = vcombine.low %v9943, %v9971
        %v10446 = vunpack.c.l.s4 1934713408
        %v10447 = vunpack.c.0.s8 %v10446
        %v10448 = vlaneseq
        %v10449 = vshrl.u32 %v10448, 7
        %v10450 = vsub.s32 %v10447, %v10449
        %v10451 = vrot.slane %v10444, %v10450
        %v10452 = vcombine.high %v10451, 0.0
        %v10453 = vcombine.low %v9999, %v10027
        %v10455 = vunpack.c.l.s4 1934713408
        %v10456 = vunpack.c.0.s8 %v10455
        %v10457 = vlaneseq
        %v10458 = vshrl.u32 %v10457, 7
        %v10459 = vsub.s32 %v10456, %v10458
        %v10460 = vrot.slane %v10453, %v10459
        %v10461 = vcombine.high %v10460, 0.0
        %v10462 = vcombine.low %v10055, %v10083
        %v10464 = vunpack.c.l.s4 1934713408
        %v10465 = vunpack.c.0.s8 %v10464
        %v10466 = vlaneseq
        %v10467 = vshrl.u32 %v10466, 7
        %v10468 = vsub.s32 %v10465, %v10467
        %v10469 = vrot.slane %v10462, %v10468
        %v10470 = vcombine.high %v10469, 0.0
        %v10471 = vcombine.low %v10111, %v10139
        %v10473 = vunpack.c.l.s4 1934713408
        %v10474 = vunpack.c.0.s8 %v10473
        %v10475 = vlaneseq
        %v10476 = vshrl.u32 %v10475, 7
        %v10477 = vsub.s32 %v10474, %v10476
        %v10478 = vrot.slane %v10471, %v10477
        %v10479 = vcombine.high %v10478, 0.0
        %v10480 = vcombine.low %v10167, %v10195
        %v10482 = vunpack.c.l.s4 1934713408
        %v10483 = vunpack.c.0.s8 %v10482
        %v10484 = vlaneseq
        %v10485 = vshrl.u32 %v10484, 7
        %v10486 = vsub.s32 %v10483, %v10485
        %v10487 = vrot.slane %v10480, %v10486
        %v10488 = vcombine.high %v10487, 0.0
        %v10489 = vcombine.low %v9334, %v9362
        %v10491 = vunpack.c.l.s4 1934713408
        %v10492 = vunpack.c.0.s8 %v10491
        %v10493 = vlaneseq
        %v10494 = vshrl.u32 %v10493, 7
        %v10495 = vsub.s32 %v10492, %v10494
        %v10496 = vrot.slane %v10489, %v10495
        %v10497 = vcombine.high %v10496, 0.0
        %v10498 = vcombine.low %v9390, %v9418
        %v10500 = vunpack.c.l.s4 1934713408
        %v10501 = vunpack.c.0.s8 %v10500
        %v10502 = vlaneseq
        %v10503 = vshrl.u32 %v10502, 7
        %v10504 = vsub.s32 %v10501, %v10503
        %v10505 = vrot.slane %v10498, %v10504
        %v10506 = vcombine.high %v10505, 0.0
        %v10507 = vcombine.low %v9446, %v9474
        %v10509 = vunpack.c.l.s4 1934713408
        %v10510 = vunpack.c.0.s8 %v10509
        %v10511 = vlaneseq
        %v10512 = vshrl.u32 %v10511, 7
        %v10513 = vsub.s32 %v10510, %v10512
        %v10514 = vrot.slane %v10507, %v10513
        %v10515 = vcombine.high %v10514, 0.0
        %v10516 = vcombine.low %v9502, %v9530
        %v10518 = vunpack.c.l.s4 1934713408
        %v10519 = vunpack.c.0.s8 %v10518
        %v10520 = vlaneseq
        %v10521 = vshrl.u32 %v10520, 7
        %v10522 = vsub.s32 %v10519, %v10521
        %v10523 = vrot.slane %v10516, %v10522
        %v10524 = vcombine.high %v10523, 0.0
        %v10525 = vcombine.low %v9558, %v9586
        %v10527 = vunpack.c.l.s4 1934713408
        %v10528 = vunpack.c.0.s8 %v10527
        %v10529 = vlaneseq
        %v10530 = vshrl.u32 %v10529, 7
        %v10531 = vsub.s32 %v10528, %v10530
        %v10532 = vrot.slane %v10525, %v10531
        %v10533 = vcombine.high %v10532, 0.0
        %v10534 = vcombine.low %v9614, %v9642
        %v10536 = vunpack.c.l.s4 1934713408
        %v10537 = vunpack.c.0.s8 %v10536
        %v10538 = vlaneseq
        %v10539 = vshrl.u32 %v10538, 7
        %v10540 = vsub.s32 %v10537, %v10539
        %v10541 = vrot.slane %v10534, %v10540
        %v10542 = vcombine.high %v10541, 0.0
        %v10543 = vcombine.low %v9670, %v9698
        %v10545 = vunpack.c.l.s4 1934713408
        %v10546 = vunpack.c.0.s8 %v10545
        %v10547 = vlaneseq
        %v10548 = vshrl.u32 %v10547, 7
        %v10549 = vsub.s32 %v10546, %v10548
        %v10550 = vrot.slane %v10543, %v10549
        %v10551 = vcombine.high %v10550, 0.0
        %v10552 = vcombine.low %v9726, %v9754
        %v10554 = vunpack.c.l.s4 1934713408
        %v10555 = vunpack.c.0.s8 %v10554
        %v10556 = vlaneseq
        %v10557 = vshrl.u32 %v10556, 7
        %v10558 = vsub.s32 %v10555, %v10557
        %v10559 = vrot.slane %v10552, %v10558
        %v10560 = vcombine.high %v10559, 0.0
        %v10561 = vcombine.low %v9782, %v9810
        %v10563 = vunpack.c.l.s4 1934713408
        %v10564 = vunpack.c.0.s8 %v10563
        %v10565 = vlaneseq
        %v10566 = vshrl.u32 %v10565, 7
        %v10567 = vsub.s32 %v10564, %v10566
        %v10568 = vrot.slane %v10561, %v10567
        %v10569 = vcombine.high %v10568, 0.0
        %v10570 = vcombine.low %v9838, %v9866
        %v10572 = vunpack.c.l.s4 1934713408
        %v10573 = vunpack.c.0.s8 %v10572
        %v10574 = vlaneseq
        %v10575 = vshrl.u32 %v10574, 7
        %v10576 = vsub.s32 %v10573, %v10575
        %v10577 = vrot.slane %v10570, %v10576
        %v10578 = vcombine.high %v10577, 0.0
        %v10579 = vcombine.low %v9894, %v9922
        %v10581 = vunpack.c.l.s4 1934713408
        %v10582 = vunpack.c.0.s8 %v10581
        %v10583 = vlaneseq
        %v10584 = vshrl.u32 %v10583, 7
        %v10585 = vsub.s32 %v10582, %v10584
        %v10586 = vrot.slane %v10579, %v10585
        %v10587 = vcombine.high %v10586, 0.0
        %v10588 = vcombine.low %v9950, %v9978
        %v10590 = vunpack.c.l.s4 1934713408
        %v10591 = vunpack.c.0.s8 %v10590
        %v10592 = vlaneseq
        %v10593 = vshrl.u32 %v10592, 7
        %v10594 = vsub.s32 %v10591, %v10593
        %v10595 = vrot.slane %v10588, %v10594
        %v10596 = vcombine.high %v10595, 0.0
        %v10597 = vcombine.low %v10006, %v10034
        %v10599 = vunpack.c.l.s4 1934713408
        %v10600 = vunpack.c.0.s8 %v10599
        %v10601 = vlaneseq
        %v10602 = vshrl.u32 %v10601, 7
        %v10603 = vsub.s32 %v10600, %v10602
        %v10604 = vrot.slane %v10597, %v10603
        %v10605 = vcombine.high %v10604, 0.0
        %v10606 = vcombine.low %v10062, %v10090
        %v10608 = vunpack.c.l.s4 1934713408
        %v10609 = vunpack.c.0.s8 %v10608
        %v10610 = vlaneseq
        %v10611 = vshrl.u32 %v10610, 7
        %v10612 = vsub.s32 %v10609, %v10611
        %v10613 = vrot.slane %v10606, %v10612
        %v10614 = vcombine.high %v10613, 0.0
        %v10615 = vcombine.low %v10118, %v10146
        %v10617 = vunpack.c.l.s4 1934713408
        %v10618 = vunpack.c.0.s8 %v10617
        %v10619 = vlaneseq
        %v10620 = vshrl.u32 %v10619, 7
        %v10621 = vsub.s32 %v10618, %v10620
        %v10622 = vrot.slane %v10615, %v10621
        %v10623 = vcombine.high %v10622, 0.0
        %v10624 = vcombine.low %v10174, %v10202
        %v10626 = vunpack.c.l.s4 1934713408
        %v10627 = vunpack.c.0.s8 %v10626
        %v10628 = vlaneseq
        %v10629 = vshrl.u32 %v10628, 7
        %v10630 = vsub.s32 %v10627, %v10629
        %v10631 = vrot.slane %v10624, %v10630
        %v10632 = vcombine.high %v10631, 0.0
        %v10633 = vcombine.low %v9341, %v9369
        %v10635 = vunpack.c.l.s4 1934713408
        %v10636 = vunpack.c.0.s8 %v10635
        %v10637 = vlaneseq
        %v10638 = vshrl.u32 %v10637, 7
        %v10639 = vsub.s32 %v10636, %v10638
        %v10640 = vrot.slane %v10633, %v10639
        %v10641 = vcombine.high %v10640, 0.0
        %v10642 = vcombine.low %v9397, %v9425
        %v10644 = vunpack.c.l.s4 1934713408
        %v10645 = vunpack.c.0.s8 %v10644
        %v10646 = vlaneseq
        %v10647 = vshrl.u32 %v10646, 7
        %v10648 = vsub.s32 %v10645, %v10647
        %v10649 = vrot.slane %v10642, %v10648
        %v10650 = vcombine.high %v10649, 0.0
        %v10651 = vcombine.low %v9453, %v9481
        %v10653 = vunpack.c.l.s4 1934713408
        %v10654 = vunpack.c.0.s8 %v10653
        %v10655 = vlaneseq
        %v10656 = vshrl.u32 %v10655, 7
        %v10657 = vsub.s32 %v10654, %v10656
        %v10658 = vrot.slane %v10651, %v10657
        %v10659 = vcombine.high %v10658, 0.0
        %v10660 = vcombine.low %v9509, %v9537
        %v10662 = vunpack.c.l.s4 1934713408
        %v10663 = vunpack.c.0.s8 %v10662
        %v10664 = vlaneseq
        %v10665 = vshrl.u32 %v10664, 7
        %v10666 = vsub.s32 %v10663, %v10665
        %v10667 = vrot.slane %v10660, %v10666
        %v10668 = vcombine.high %v10667, 0.0
        %v10669 = vcombine.low %v9565, %v9593
        %v10671 = vunpack.c.l.s4 1934713408
        %v10672 = vunpack.c.0.s8 %v10671
        %v10673 = vlaneseq
        %v10674 = vshrl.u32 %v10673, 7
        %v10675 = vsub.s32 %v10672, %v10674
        %v10676 = vrot.slane %v10669, %v10675
        %v10677 = vcombine.high %v10676, 0.0
        %v10678 = vcombine.low %v9621, %v9649
        %v10680 = vunpack.c.l.s4 1934713408
        %v10681 = vunpack.c.0.s8 %v10680
        %v10682 = vlaneseq
        %v10683 = vshrl.u32 %v10682, 7
        %v10684 = vsub.s32 %v10681, %v10683
        %v10685 = vrot.slane %v10678, %v10684
        %v10686 = vcombine.high %v10685, 0.0
        %v10687 = vcombine.low %v9677, %v9705
        %v10689 = vunpack.c.l.s4 1934713408
        %v10690 = vunpack.c.0.s8 %v10689
        %v10691 = vlaneseq
        %v10692 = vshrl.u32 %v10691, 7
        %v10693 = vsub.s32 %v10690, %v10692
        %v10694 = vrot.slane %v10687, %v10693
        %v10695 = vcombine.high %v10694, 0.0
        %v10696 = vcombine.low %v9733, %v9761
        %v10698 = vunpack.c.l.s4 1934713408
        %v10699 = vunpack.c.0.s8 %v10698
        %v10700 = vlaneseq
        %v10701 = vshrl.u32 %v10700, 7
        %v10702 = vsub.s32 %v10699, %v10701
        %v10703 = vrot.slane %v10696, %v10702
        %v10704 = vcombine.high %v10703, 0.0
        %v10705 = vcombine.low %v9789, %v9817
        %v10707 = vunpack.c.l.s4 1934713408
        %v10708 = vunpack.c.0.s8 %v10707
        %v10709 = vlaneseq
        %v10710 = vshrl.u32 %v10709, 7
        %v10711 = vsub.s32 %v10708, %v10710
        %v10712 = vrot.slane %v10705, %v10711
        %v10713 = vcombine.high %v10712, 0.0
        %v10714 = vcombine.low %v9845, %v9873
        %v10716 = vunpack.c.l.s4 1934713408
        %v10717 = vunpack.c.0.s8 %v10716
        %v10718 = vlaneseq
        %v10719 = vshrl.u32 %v10718, 7
        %v10720 = vsub.s32 %v10717, %v10719
        %v10721 = vrot.slane %v10714, %v10720
        %v10722 = vcombine.high %v10721, 0.0
        %v10723 = vcombine.low %v9901, %v9929
        %v10725 = vunpack.c.l.s4 1934713408
        %v10726 = vunpack.c.0.s8 %v10725
        %v10727 = vlaneseq
        %v10728 = vshrl.u32 %v10727, 7
        %v10729 = vsub.s32 %v10726, %v10728
        %v10730 = vrot.slane %v10723, %v10729
        %v10731 = vcombine.high %v10730, 0.0
        %v10732 = vcombine.low %v9957, %v9985
        %v10734 = vunpack.c.l.s4 1934713408
        %v10735 = vunpack.c.0.s8 %v10734
        %v10736 = vlaneseq
        %v10737 = vshrl.u32 %v10736, 7
        %v10738 = vsub.s32 %v10735, %v10737
        %v10739 = vrot.slane %v10732, %v10738
        %v10740 = vcombine.high %v10739, 0.0
        %v10741 = vcombine.low %v10013, %v10041
        %v10743 = vunpack.c.l.s4 1934713408
        %v10744 = vunpack.c.0.s8 %v10743
        %v10745 = vlaneseq
        %v10746 = vshrl.u32 %v10745, 7
        %v10747 = vsub.s32 %v10744, %v10746
        %v10748 = vrot.slane %v10741, %v10747
        %v10749 = vcombine.high %v10748, 0.0
        %v10750 = vcombine.low %v10069, %v10097
        %v10752 = vunpack.c.l.s4 1934713408
        %v10753 = vunpack.c.0.s8 %v10752
        %v10754 = vlaneseq
        %v10755 = vshrl.u32 %v10754, 7
        %v10756 = vsub.s32 %v10753, %v10755
        %v10757 = vrot.slane %v10750, %v10756
        %v10758 = vcombine.high %v10757, 0.0
        %v10759 = vcombine.low %v10125, %v10153
        %v10761 = vunpack.c.l.s4 1934713408
        %v10762 = vunpack.c.0.s8 %v10761
        %v10763 = vlaneseq
        %v10764 = vshrl.u32 %v10763, 7
        %v10765 = vsub.s32 %v10762, %v10764
        %v10766 = vrot.slane %v10759, %v10765
        %v10767 = vcombine.high %v10766, 0.0
        %v10768 = vcombine.low %v10181, %v10209
        %v10770 = vunpack.c.l.s4 1934713408
        %v10771 = vunpack.c.0.s8 %v10770
        %v10772 = vlaneseq
        %v10773 = vshrl.u32 %v10772, 7
        %v10774 = vsub.s32 %v10771, %v10773
        %v10775 = vrot.slane %v10768, %v10774
        %v10776 = vcombine.high %v10775, 0.0
        %v10777 = vcombine.low %v9348, %v9376
        %v10779 = vunpack.c.l.s4 1934713408
        %v10780 = vunpack.c.0.s8 %v10779
        %v10781 = vlaneseq
        %v10782 = vshrl.u32 %v10781, 7
        %v10783 = vsub.s32 %v10780, %v10782
        %v10784 = vrot.slane %v10777, %v10783
        %v10785 = vcombine.high %v10784, 0.0
        %v10786 = vcombine.low %v9404, %v9432
        %v10788 = vunpack.c.l.s4 1934713408
        %v10789 = vunpack.c.0.s8 %v10788
        %v10790 = vlaneseq
        %v10791 = vshrl.u32 %v10790, 7
        %v10792 = vsub.s32 %v10789, %v10791
        %v10793 = vrot.slane %v10786, %v10792
        %v10794 = vcombine.high %v10793, 0.0
        %v10795 = vcombine.low %v9460, %v9488
        %v10797 = vunpack.c.l.s4 1934713408
        %v10798 = vunpack.c.0.s8 %v10797
        %v10799 = vlaneseq
        %v10800 = vshrl.u32 %v10799, 7
        %v10801 = vsub.s32 %v10798, %v10800
        %v10802 = vrot.slane %v10795, %v10801
        %v10803 = vcombine.high %v10802, 0.0
        %v10804 = vcombine.low %v9516, %v9544
        %v10806 = vunpack.c.l.s4 1934713408
        %v10807 = vunpack.c.0.s8 %v10806
        %v10808 = vlaneseq
        %v10809 = vshrl.u32 %v10808, 7
        %v10810 = vsub.s32 %v10807, %v10809
        %v10811 = vrot.slane %v10804, %v10810
        %v10812 = vcombine.high %v10811, 0.0
        %v10813 = vcombine.low %v9572, %v9600
        %v10815 = vunpack.c.l.s4 1934713408
        %v10816 = vunpack.c.0.s8 %v10815
        %v10817 = vlaneseq
        %v10818 = vshrl.u32 %v10817, 7
        %v10819 = vsub.s32 %v10816, %v10818
        %v10820 = vrot.slane %v10813, %v10819
        %v10821 = vcombine.high %v10820, 0.0
        %v10822 = vcombine.low %v9628, %v9656
        %v10824 = vunpack.c.l.s4 1934713408
        %v10825 = vunpack.c.0.s8 %v10824
        %v10826 = vlaneseq
        %v10827 = vshrl.u32 %v10826, 7
        %v10828 = vsub.s32 %v10825, %v10827
        %v10829 = vrot.slane %v10822, %v10828
        %v10830 = vcombine.high %v10829, 0.0
        %v10831 = vcombine.low %v9684, %v9712
        %v10833 = vunpack.c.l.s4 1934713408
        %v10834 = vunpack.c.0.s8 %v10833
        %v10835 = vlaneseq
        %v10836 = vshrl.u32 %v10835, 7
        %v10837 = vsub.s32 %v10834, %v10836
        %v10838 = vrot.slane %v10831, %v10837
        %v10839 = vcombine.high %v10838, 0.0
        %v10840 = vcombine.low %v9740, %v9768
        %v10842 = vunpack.c.l.s4 1934713408
        %v10843 = vunpack.c.0.s8 %v10842
        %v10844 = vlaneseq
        %v10845 = vshrl.u32 %v10844, 7
        %v10846 = vsub.s32 %v10843, %v10845
        %v10847 = vrot.slane %v10840, %v10846
        %v10848 = vcombine.high %v10847, 0.0
        %v10849 = vcombine.low %v9796, %v9824
        %v10851 = vunpack.c.l.s4 1934713408
        %v10852 = vunpack.c.0.s8 %v10851
        %v10853 = vlaneseq
        %v10854 = vshrl.u32 %v10853, 7
        %v10855 = vsub.s32 %v10852, %v10854
        %v10856 = vrot.slane %v10849, %v10855
        %v10857 = vcombine.high %v10856, 0.0
        %v10858 = vcombine.low %v9852, %v9880
        %v10860 = vunpack.c.l.s4 1934713408
        %v10861 = vunpack.c.0.s8 %v10860
        %v10862 = vlaneseq
        %v10863 = vshrl.u32 %v10862, 7
        %v10864 = vsub.s32 %v10861, %v10863
        %v10865 = vrot.slane %v10858, %v10864
        %v10866 = vcombine.high %v10865, 0.0
        %v10867 = vcombine.low %v9908, %v9936
        %v10869 = vunpack.c.l.s4 1934713408
        %v10870 = vunpack.c.0.s8 %v10869
        %v10871 = vlaneseq
        %v10872 = vshrl.u32 %v10871, 7
        %v10873 = vsub.s32 %v10870, %v10872
        %v10874 = vrot.slane %v10867, %v10873
        %v10875 = vcombine.high %v10874, 0.0
        %v10876 = vcombine.low %v9964, %v9992
        %v10878 = vunpack.c.l.s4 1934713408
        %v10879 = vunpack.c.0.s8 %v10878
        %v10880 = vlaneseq
        %v10881 = vshrl.u32 %v10880, 7
        %v10882 = vsub.s32 %v10879, %v10881
        %v10883 = vrot.slane %v10876, %v10882
        %v10884 = vcombine.high %v10883, 0.0
        %v10885 = vcombine.low %v10020, %v10048
        %v10887 = vunpack.c.l.s4 1934713408
        %v10888 = vunpack.c.0.s8 %v10887
        %v10889 = vlaneseq
        %v10890 = vshrl.u32 %v10889, 7
        %v10891 = vsub.s32 %v10888, %v10890
        %v10892 = vrot.slane %v10885, %v10891
        %v10893 = vcombine.high %v10892, 0.0
        %v10894 = vcombine.low %v10076, %v10104
        %v10896 = vunpack.c.l.s4 1934713408
        %v10897 = vunpack.c.0.s8 %v10896
        %v10898 = vlaneseq
        %v10899 = vshrl.u32 %v10898, 7
        %v10900 = vsub.s32 %v10897, %v10899
        %v10901 = vrot.slane %v10894, %v10900
        %v10902 = vcombine.high %v10901, 0.0
        %v10903 = vcombine.low %v10132, %v10160
        %v10905 = vunpack.c.l.s4 1934713408
        %v10906 = vunpack.c.0.s8 %v10905
        %v10907 = vlaneseq
        %v10908 = vshrl.u32 %v10907, 7
        %v10909 = vsub.s32 %v10906, %v10908
        %v10910 = vrot.slane %v10903, %v10909
        %v10911 = vcombine.high %v10910, 0.0
        %v10912 = vcombine.low %v10188, %v10216
        %v10914 = vunpack.c.l.s4 1934713408
        %v10915 = vunpack.c.0.s8 %v10914
        %v10916 = vlaneseq
        %v10917 = vshrl.u32 %v10916, 7
        %v10918 = vsub.s32 %v10915, %v10917
        %v10919 = vrot.slane %v10912, %v10918
        %v10920 = vcombine.high %v10919, 0.0
        %v10937 = vcombine.low %v10352, %v10361
        %v10938 = vcombine.low %v10370, %v10379
        %v10940 = vunpack.c.l.s4 1983009808
        %v10941 = vunpack.c.0.s8 %v10940
        %v10942 = vlaneseq
        %v10943 = vshrl.u32 %v10942, 7
        %v10944 = vsub.s32 %v10941, %v10943
        %v10945 = vrot.slane %v10937, %v10944
        %v10947 = vunpack.c.l.s4 1983009808
        %v10948 = vunpack.c.0.s8 %v10947
        %v10949 = vlaneseq
        %v10950 = vshrl.u32 %v10949, 7
        %v10951 = vsub.s32 %v10948, %v10950
        %v10952 = vrot.slane %v10938, %v10951
        %v10953 = vcombine.low %v10945, %v10952
        %v10954 = vcombine.low %v10388, %v10397
        %v10955 = vcombine.low %v10406, %v10415
        %v10957 = vunpack.c.l.s4 1983009808
        %v10958 = vunpack.c.0.s8 %v10957
        %v10959 = vlaneseq
        %v10960 = vshrl.u32 %v10959, 7
        %v10961 = vsub.s32 %v10958, %v10960
        %v10962 = vrot.slane %v10954, %v10961
        %v10964 = vunpack.c.l.s4 1983009808
        %v10965 = vunpack.c.0.s8 %v10964
        %v10966 = vlaneseq
        %v10967 = vshrl.u32 %v10966, 7
        %v10968 = vsub.s32 %v10965, %v10967
        %v10969 = vrot.slane %v10955, %v10968
        %v10970 = vcombine.low %v10962, %v10969
        %v10971 = vcombine.low %v10424, %v10433
        %v10972 = vcombine.low %v10442, %v10451
        %v10974 = vunpack.c.l.s4 1983009808
        %v10975 = vunpack.c.0.s8 %v10974
        %v10976 = vlaneseq
        %v10977 = vshrl.u32 %v10976, 7
        %v10978 = vsub.s32 %v10975, %v10977
        %v10979 = vrot.slane %v10971, %v10978
        %v10981 = vunpack.c.l.s4 1983009808
        %v10982 = vunpack.c.0.s8 %v10981
        %v10983 = vlaneseq
        %v10984 = vshrl.u32 %v10983, 7
        %v10985 = vsub.s32 %v10982, %v10984
        %v10986 = vrot.slane %v10972, %v10985
        %v10987 = vcombine.low %v10979, %v10986
        %v10988 = vcombine.low %v10460, %v10469
        %v10989 = vcombine.low %v10478, %v10487
        %v10991 = vunpack.c.l.s4 1983009808
        %v10992 = vunpack.c.0.s8 %v10991
        %v10993 = vlaneseq
        %v10994 = vshrl.u32 %v10993, 7
        %v10995 = vsub.s32 %v10992, %v10994
        %v10996 = vrot.slane %v10988, %v10995
        %v10998 = vunpack.c.l.s4 1983009808
        %v10999 = vunpack.c.0.s8 %v10998
        %v11000 = vlaneseq
        %v11001 = vshrl.u32 %v11000, 7
        %v11002 = vsub.s32 %v10999, %v11001
        %v11003 = vrot.slane %v10989, %v11002
        %v11004 = vcombine.low %v10996, %v11003
        %v11025 = vcombine.low %v10353, %v10362
        %v11026 = vcombine.low %v10371, %v10380
        %v11028 = vunpack.c.l.s4 1983009808
        %v11029 = vunpack.c.0.s8 %v11028
        %v11030 = vlaneseq
        %v11031 = vshrl.u32 %v11030, 7
        %v11032 = vsub.s32 %v11029, %v11031
        %v11033 = vrot.slane %v11025, %v11032
        %v11035 = vunpack.c.l.s4 1983009808
        %v11036 = vunpack.c.0.s8 %v11035
        %v11037 = vlaneseq
        %v11038 = vshrl.u32 %v11037, 7
        %v11039 = vsub.s32 %v11036, %v11038
        %v11040 = vrot.slane %v11026, %v11039
        %v11041 = vcombine.low %v11033, %v11040
        %v11042 = vcombine.low %v10389, %v10398
        %v11043 = vcombine.low %v10407, %v10416
        %v11045 = vunpack.c.l.s4 1983009808
        %v11046 = vunpack.c.0.s8 %v11045
        %v11047 = vlaneseq
        %v11048 = vshrl.u32 %v11047, 7
        %v11049 = vsub.s32 %v11046, %v11048
        %v11050 = vrot.slane %v11042, %v11049
        %v11052 = vunpack.c.l.s4 1983009808
        %v11053 = vunpack.c.0.s8 %v11052
        %v11054 = vlaneseq
        %v11055 = vshrl.u32 %v11054, 7
        %v11056 = vsub.s32 %v11053, %v11055
        %v11057 = vrot.slane %v11043, %v11056
        %v11058 = vcombine.low %v11050, %v11057
        %v11059 = vcombine.low %v10425, %v10434
        %v11060 = vcombine.low %v10443, %v10452
        %v11062 = vunpack.c.l.s4 1983009808
        %v11063 = vunpack.c.0.s8 %v11062
        %v11064 = vlaneseq
        %v11065 = vshrl.u32 %v11064, 7
        %v11066 = vsub.s32 %v11063, %v11065
        %v11067 = vrot.slane %v11059, %v11066
        %v11069 = vunpack.c.l.s4 1983009808
        %v11070 = vunpack.c.0.s8 %v11069
        %v11071 = vlaneseq
        %v11072 = vshrl.u32 %v11071, 7
        %v11073 = vsub.s32 %v11070, %v11072
        %v11074 = vrot.slane %v11060, %v11073
        %v11075 = vcombine.low %v11067, %v11074
        %v11076 = vcombine.low %v10461, %v10470
        %v11077 = vcombine.low %v10479, %v10488
        %v11079 = vunpack.c.l.s4 1983009808
        %v11080 = vunpack.c.0.s8 %v11079
        %v11081 = vlaneseq
        %v11082 = vshrl.u32 %v11081, 7
        %v11083 = vsub.s32 %v11080, %v11082
        %v11084 = vrot.slane %v11076, %v11083
        %v11086 = vunpack.c.l.s4 1983009808
        %v11087 = vunpack.c.0.s8 %v11086
        %v11088 = vlaneseq
        %v11089 = vshrl.u32 %v11088, 7
        %v11090 = vsub.s32 %v11087, %v11089
        %v11091 = vrot.slane %v11077, %v11090
        %v11092 = vcombine.low %v11084, %v11091
        %11093 = vrot.lane.b32.xlu0 %v11041, 64
        %v11094 = vpop.permute.xlu0 %11093
        %11095 = vrot.lane.b32.xlu0 %v11058, 64
        %v11096 = vpop.permute.xlu0 %11095
        %11097 = vrot.lane.b32.xlu0 %v11075, 64
        %v11098 = vpop.permute.xlu0 %11097
        %11099 = vrot.lane.b32.xlu0 %v11092, 64
        %v11100 = vpop.permute.xlu0 %11099
        %v11121 = vcombine.low %v10496, %v10505
        %v11122 = vcombine.low %v10514, %v10523
        %v11124 = vunpack.c.l.s4 1983009808
        %v11125 = vunpack.c.0.s8 %v11124
        %v11126 = vlaneseq
        %v11127 = vshrl.u32 %v11126, 7
        %v11128 = vsub.s32 %v11125, %v11127
        %v11129 = vrot.slane %v11121, %v11128
        %v11131 = vunpack.c.l.s4 1983009808
        %v11132 = vunpack.c.0.s8 %v11131
        %v11133 = vlaneseq
        %v11134 = vshrl.u32 %v11133, 7
        %v11135 = vsub.s32 %v11132, %v11134
        %v11136 = vrot.slane %v11122, %v11135
        %v11137 = vcombine.low %v11129, %v11136
        %v11138 = vcombine.low %v10532, %v10541
        %v11139 = vcombine.low %v10550, %v10559
        %v11141 = vunpack.c.l.s4 1983009808
        %v11142 = vunpack.c.0.s8 %v11141
        %v11143 = vlaneseq
        %v11144 = vshrl.u32 %v11143, 7
        %v11145 = vsub.s32 %v11142, %v11144
        %v11146 = vrot.slane %v11138, %v11145
        %v11148 = vunpack.c.l.s4 1983009808
        %v11149 = vunpack.c.0.s8 %v11148
        %v11150 = vlaneseq
        %v11151 = vshrl.u32 %v11150, 7
        %v11152 = vsub.s32 %v11149, %v11151
        %v11153 = vrot.slane %v11139, %v11152
        %v11154 = vcombine.low %v11146, %v11153
        %v11155 = vcombine.low %v10568, %v10577
        %v11156 = vcombine.low %v10586, %v10595
        %v11158 = vunpack.c.l.s4 1983009808
        %v11159 = vunpack.c.0.s8 %v11158
        %v11160 = vlaneseq
        %v11161 = vshrl.u32 %v11160, 7
        %v11162 = vsub.s32 %v11159, %v11161
        %v11163 = vrot.slane %v11155, %v11162
        %v11165 = vunpack.c.l.s4 1983009808
        %v11166 = vunpack.c.0.s8 %v11165
        %v11167 = vlaneseq
        %v11168 = vshrl.u32 %v11167, 7
        %v11169 = vsub.s32 %v11166, %v11168
        %v11170 = vrot.slane %v11156, %v11169
        %v11171 = vcombine.low %v11163, %v11170
        %v11172 = vcombine.low %v10604, %v10613
        %v11173 = vcombine.low %v10622, %v10631
        %v11175 = vunpack.c.l.s4 1983009808
        %v11176 = vunpack.c.0.s8 %v11175
        %v11177 = vlaneseq
        %v11178 = vshrl.u32 %v11177, 7
        %v11179 = vsub.s32 %v11176, %v11178
        %v11180 = vrot.slane %v11172, %v11179
        %v11182 = vunpack.c.l.s4 1983009808
        %v11183 = vunpack.c.0.s8 %v11182
        %v11184 = vlaneseq
        %v11185 = vshrl.u32 %v11184, 7
        %v11186 = vsub.s32 %v11183, %v11185
        %v11187 = vrot.slane %v11173, %v11186
        %v11188 = vcombine.low %v11180, %v11187
        %v11209 = vcombine.low %v10497, %v10506
        %v11210 = vcombine.low %v10515, %v10524
        %v11212 = vunpack.c.l.s4 1983009808
        %v11213 = vunpack.c.0.s8 %v11212
        %v11214 = vlaneseq
        %v11215 = vshrl.u32 %v11214, 7
        %v11216 = vsub.s32 %v11213, %v11215
        %v11217 = vrot.slane %v11209, %v11216
        %v11219 = vunpack.c.l.s4 1983009808
        %v11220 = vunpack.c.0.s8 %v11219
        %v11221 = vlaneseq
        %v11222 = vshrl.u32 %v11221, 7
        %v11223 = vsub.s32 %v11220, %v11222
        %v11224 = vrot.slane %v11210, %v11223
        %v11225 = vcombine.low %v11217, %v11224
        %v11226 = vcombine.low %v10533, %v10542
        %v11227 = vcombine.low %v10551, %v10560
        %v11229 = vunpack.c.l.s4 1983009808
        %v11230 = vunpack.c.0.s8 %v11229
        %v11231 = vlaneseq
        %v11232 = vshrl.u32 %v11231, 7
        %v11233 = vsub.s32 %v11230, %v11232
        %v11234 = vrot.slane %v11226, %v11233
        %v11236 = vunpack.c.l.s4 1983009808
        %v11237 = vunpack.c.0.s8 %v11236
        %v11238 = vlaneseq
        %v11239 = vshrl.u32 %v11238, 7
        %v11240 = vsub.s32 %v11237, %v11239
        %v11241 = vrot.slane %v11227, %v11240
        %v11242 = vcombine.low %v11234, %v11241
        %v11243 = vcombine.low %v10569, %v10578
        %v11244 = vcombine.low %v10587, %v10596
        %v11246 = vunpack.c.l.s4 1983009808
        %v11247 = vunpack.c.0.s8 %v11246
        %v11248 = vlaneseq
        %v11249 = vshrl.u32 %v11248, 7
        %v11250 = vsub.s32 %v11247, %v11249
        %v11251 = vrot.slane %v11243, %v11250
        %v11253 = vunpack.c.l.s4 1983009808
        %v11254 = vunpack.c.0.s8 %v11253
        %v11255 = vlaneseq
        %v11256 = vshrl.u32 %v11255, 7
        %v11257 = vsub.s32 %v11254, %v11256
        %v11258 = vrot.slane %v11244, %v11257
        %v11259 = vcombine.low %v11251, %v11258
        %v11260 = vcombine.low %v10605, %v10614
        %v11261 = vcombine.low %v10623, %v10632
        %v11263 = vunpack.c.l.s4 1983009808
        %v11264 = vunpack.c.0.s8 %v11263
        %v11265 = vlaneseq
        %v11266 = vshrl.u32 %v11265, 7
        %v11267 = vsub.s32 %v11264, %v11266
        %v11268 = vrot.slane %v11260, %v11267
        %v11270 = vunpack.c.l.s4 1983009808
        %v11271 = vunpack.c.0.s8 %v11270
        %v11272 = vlaneseq
        %v11273 = vshrl.u32 %v11272, 7
        %v11274 = vsub.s32 %v11271, %v11273
        %v11275 = vrot.slane %v11261, %v11274
        %v11276 = vcombine.low %v11268, %v11275
        %11277 = vrot.lane.b32.xlu0 %v11225, 64
        %v11278 = vpop.permute.xlu0 %11277
        %11279 = vrot.lane.b32.xlu0 %v11242, 64
        %v11280 = vpop.permute.xlu0 %11279
        %11281 = vrot.lane.b32.xlu0 %v11259, 64
        %v11282 = vpop.permute.xlu0 %11281
        %11283 = vrot.lane.b32.xlu0 %v11276, 64
        %v11284 = vpop.permute.xlu0 %11283
        %v11305 = vcombine.low %v10640, %v10649
        %v11306 = vcombine.low %v10658, %v10667
        %v11308 = vunpack.c.l.s4 1983009808
        %v11309 = vunpack.c.0.s8 %v11308
        %v11310 = vlaneseq
        %v11311 = vshrl.u32 %v11310, 7
        %v11312 = vsub.s32 %v11309, %v11311
        %v11313 = vrot.slane %v11305, %v11312
        %v11315 = vunpack.c.l.s4 1983009808
        %v11316 = vunpack.c.0.s8 %v11315
        %v11317 = vlaneseq
        %v11318 = vshrl.u32 %v11317, 7
        %v11319 = vsub.s32 %v11316, %v11318
        %v11320 = vrot.slane %v11306, %v11319
        %v11321 = vcombine.low %v11313, %v11320
        %v11322 = vcombine.low %v10676, %v10685
        %v11323 = vcombine.low %v10694, %v10703
        %v11325 = vunpack.c.l.s4 1983009808
        %v11326 = vunpack.c.0.s8 %v11325
        %v11327 = vlaneseq
        %v11328 = vshrl.u32 %v11327, 7
        %v11329 = vsub.s32 %v11326, %v11328
        %v11330 = vrot.slane %v11322, %v11329
        %v11332 = vunpack.c.l.s4 1983009808
        %v11333 = vunpack.c.0.s8 %v11332
        %v11334 = vlaneseq
        %v11335 = vshrl.u32 %v11334, 7
        %v11336 = vsub.s32 %v11333, %v11335
        %v11337 = vrot.slane %v11323, %v11336
        %v11338 = vcombine.low %v11330, %v11337
        %v11339 = vcombine.low %v10712, %v10721
        %v11340 = vcombine.low %v10730, %v10739
        %v11342 = vunpack.c.l.s4 1983009808
        %v11343 = vunpack.c.0.s8 %v11342
        %v11344 = vlaneseq
        %v11345 = vshrl.u32 %v11344, 7
        %v11346 = vsub.s32 %v11343, %v11345
        %v11347 = vrot.slane %v11339, %v11346
        %v11349 = vunpack.c.l.s4 1983009808
        %v11350 = vunpack.c.0.s8 %v11349
        %v11351 = vlaneseq
        %v11352 = vshrl.u32 %v11351, 7
        %v11353 = vsub.s32 %v11350, %v11352
        %v11354 = vrot.slane %v11340, %v11353
        %v11355 = vcombine.low %v11347, %v11354
        %v11356 = vcombine.low %v10748, %v10757
        %v11357 = vcombine.low %v10766, %v10775
        %v11359 = vunpack.c.l.s4 1983009808
        %v11360 = vunpack.c.0.s8 %v11359
        %v11361 = vlaneseq
        %v11362 = vshrl.u32 %v11361, 7
        %v11363 = vsub.s32 %v11360, %v11362
        %v11364 = vrot.slane %v11356, %v11363
        %v11366 = vunpack.c.l.s4 1983009808
        %v11367 = vunpack.c.0.s8 %v11366
        %v11368 = vlaneseq
        %v11369 = vshrl.u32 %v11368, 7
        %v11370 = vsub.s32 %v11367, %v11369
        %v11371 = vrot.slane %v11357, %v11370
        %v11372 = vcombine.low %v11364, %v11371
        %v11393 = vcombine.low %v10641, %v10650
        %v11394 = vcombine.low %v10659, %v10668
        %v11396 = vunpack.c.l.s4 1983009808
        %v11397 = vunpack.c.0.s8 %v11396
        %v11398 = vlaneseq
        %v11399 = vshrl.u32 %v11398, 7
        %v11400 = vsub.s32 %v11397, %v11399
        %v11401 = vrot.slane %v11393, %v11400
        %v11403 = vunpack.c.l.s4 1983009808
        %v11404 = vunpack.c.0.s8 %v11403
        %v11405 = vlaneseq
        %v11406 = vshrl.u32 %v11405, 7
        %v11407 = vsub.s32 %v11404, %v11406
        %v11408 = vrot.slane %v11394, %v11407
        %v11409 = vcombine.low %v11401, %v11408
        %v11410 = vcombine.low %v10677, %v10686
        %v11411 = vcombine.low %v10695, %v10704
        %v11413 = vunpack.c.l.s4 1983009808
        %v11414 = vunpack.c.0.s8 %v11413
        %v11415 = vlaneseq
        %v11416 = vshrl.u32 %v11415, 7
        %v11417 = vsub.s32 %v11414, %v11416
        %v11418 = vrot.slane %v11410, %v11417
        %v11420 = vunpack.c.l.s4 1983009808
        %v11421 = vunpack.c.0.s8 %v11420
        %v11422 = vlaneseq
        %v11423 = vshrl.u32 %v11422, 7
        %v11424 = vsub.s32 %v11421, %v11423
        %v11425 = vrot.slane %v11411, %v11424
        %v11426 = vcombine.low %v11418, %v11425
        %v11427 = vcombine.low %v10713, %v10722
        %v11428 = vcombine.low %v10731, %v10740
        %v11430 = vunpack.c.l.s4 1983009808
        %v11431 = vunpack.c.0.s8 %v11430
        %v11432 = vlaneseq
        %v11433 = vshrl.u32 %v11432, 7
        %v11434 = vsub.s32 %v11431, %v11433
        %v11435 = vrot.slane %v11427, %v11434
        %v11437 = vunpack.c.l.s4 1983009808
        %v11438 = vunpack.c.0.s8 %v11437
        %v11439 = vlaneseq
        %v11440 = vshrl.u32 %v11439, 7
        %v11441 = vsub.s32 %v11438, %v11440
        %v11442 = vrot.slane %v11428, %v11441
        %v11443 = vcombine.low %v11435, %v11442
        %v11444 = vcombine.low %v10749, %v10758
        %v11445 = vcombine.low %v10767, %v10776
        %v11447 = vunpack.c.l.s4 1983009808
        %v11448 = vunpack.c.0.s8 %v11447
        %v11449 = vlaneseq
        %v11450 = vshrl.u32 %v11449, 7
        %v11451 = vsub.s32 %v11448, %v11450
        %v11452 = vrot.slane %v11444, %v11451
        %v11454 = vunpack.c.l.s4 1983009808
        %v11455 = vunpack.c.0.s8 %v11454
        %v11456 = vlaneseq
        %v11457 = vshrl.u32 %v11456, 7
        %v11458 = vsub.s32 %v11455, %v11457
        %v11459 = vrot.slane %v11445, %v11458
        %v11460 = vcombine.low %v11452, %v11459
        %11461 = vrot.lane.b32.xlu0 %v11409, 64
        %v11462 = vpop.permute.xlu0 %11461
        %11463 = vrot.lane.b32.xlu0 %v11426, 64
        %v11464 = vpop.permute.xlu0 %11463
        %11465 = vrot.lane.b32.xlu0 %v11443, 64
        %v11466 = vpop.permute.xlu0 %11465
        %11467 = vrot.lane.b32.xlu0 %v11460, 64
        %v11468 = vpop.permute.xlu0 %11467
        %v11489 = vcombine.low %v10784, %v10793
        %v11490 = vcombine.low %v10802, %v10811
        %v11492 = vunpack.c.l.s4 1983009808
        %v11493 = vunpack.c.0.s8 %v11492
        %v11494 = vlaneseq
        %v11495 = vshrl.u32 %v11494, 7
        %v11496 = vsub.s32 %v11493, %v11495
        %v11497 = vrot.slane %v11489, %v11496
        %v11499 = vunpack.c.l.s4 1983009808
        %v11500 = vunpack.c.0.s8 %v11499
        %v11501 = vlaneseq
        %v11502 = vshrl.u32 %v11501, 7
        %v11503 = vsub.s32 %v11500, %v11502
        %v11504 = vrot.slane %v11490, %v11503
        %v11505 = vcombine.low %v11497, %v11504
        %v11506 = vcombine.low %v10820, %v10829
        %v11507 = vcombine.low %v10838, %v10847
        %v11509 = vunpack.c.l.s4 1983009808
        %v11510 = vunpack.c.0.s8 %v11509
        %v11511 = vlaneseq
        %v11512 = vshrl.u32 %v11511, 7
        %v11513 = vsub.s32 %v11510, %v11512
        %v11514 = vrot.slane %v11506, %v11513
        %v11516 = vunpack.c.l.s4 1983009808
        %v11517 = vunpack.c.0.s8 %v11516
        %v11518 = vlaneseq
        %v11519 = vshrl.u32 %v11518, 7
        %v11520 = vsub.s32 %v11517, %v11519
        %v11521 = vrot.slane %v11507, %v11520
        %v11522 = vcombine.low %v11514, %v11521
        %v11523 = vcombine.low %v10856, %v10865
        %v11524 = vcombine.low %v10874, %v10883
        %v11526 = vunpack.c.l.s4 1983009808
        %v11527 = vunpack.c.0.s8 %v11526
        %v11528 = vlaneseq
        %v11529 = vshrl.u32 %v11528, 7
        %v11530 = vsub.s32 %v11527, %v11529
        %v11531 = vrot.slane %v11523, %v11530
        %v11533 = vunpack.c.l.s4 1983009808
        %v11534 = vunpack.c.0.s8 %v11533
        %v11535 = vlaneseq
        %v11536 = vshrl.u32 %v11535, 7
        %v11537 = vsub.s32 %v11534, %v11536
        %v11538 = vrot.slane %v11524, %v11537
        %v11539 = vcombine.low %v11531, %v11538
        %v11540 = vcombine.low %v10892, %v10901
        %v11541 = vcombine.low %v10910, %v10919
        %v11543 = vunpack.c.l.s4 1983009808
        %v11544 = vunpack.c.0.s8 %v11543
        %v11545 = vlaneseq
        %v11546 = vshrl.u32 %v11545, 7
        %v11547 = vsub.s32 %v11544, %v11546
        %v11548 = vrot.slane %v11540, %v11547
        %v11550 = vunpack.c.l.s4 1983009808
        %v11551 = vunpack.c.0.s8 %v11550
        %v11552 = vlaneseq
        %v11553 = vshrl.u32 %v11552, 7
        %v11554 = vsub.s32 %v11551, %v11553
        %v11555 = vrot.slane %v11541, %v11554
        %v11556 = vcombine.low %v11548, %v11555
        %v11577 = vcombine.low %v10785, %v10794
        %v11578 = vcombine.low %v10803, %v10812
        %v11580 = vunpack.c.l.s4 1983009808
        %v11581 = vunpack.c.0.s8 %v11580
        %v11582 = vlaneseq
        %v11583 = vshrl.u32 %v11582, 7
        %v11584 = vsub.s32 %v11581, %v11583
        %v11585 = vrot.slane %v11577, %v11584
        %v11587 = vunpack.c.l.s4 1983009808
        %v11588 = vunpack.c.0.s8 %v11587
        %v11589 = vlaneseq
        %v11590 = vshrl.u32 %v11589, 7
        %v11591 = vsub.s32 %v11588, %v11590
        %v11592 = vrot.slane %v11578, %v11591
        %v11593 = vcombine.low %v11585, %v11592
        %v11594 = vcombine.low %v10821, %v10830
        %v11595 = vcombine.low %v10839, %v10848
        %v11597 = vunpack.c.l.s4 1983009808
        %v11598 = vunpack.c.0.s8 %v11597
        %v11599 = vlaneseq
        %v11600 = vshrl.u32 %v11599, 7
        %v11601 = vsub.s32 %v11598, %v11600
        %v11602 = vrot.slane %v11594, %v11601
        %v11604 = vunpack.c.l.s4 1983009808
        %v11605 = vunpack.c.0.s8 %v11604
        %v11606 = vlaneseq
        %v11607 = vshrl.u32 %v11606, 7
        %v11608 = vsub.s32 %v11605, %v11607
        %v11609 = vrot.slane %v11595, %v11608
        %v11610 = vcombine.low %v11602, %v11609
        %v11611 = vcombine.low %v10857, %v10866
        %v11612 = vcombine.low %v10875, %v10884
        %v11614 = vunpack.c.l.s4 1983009808
        %v11615 = vunpack.c.0.s8 %v11614
        %v11616 = vlaneseq
        %v11617 = vshrl.u32 %v11616, 7
        %v11618 = vsub.s32 %v11615, %v11617
        %v11619 = vrot.slane %v11611, %v11618
        %v11621 = vunpack.c.l.s4 1983009808
        %v11622 = vunpack.c.0.s8 %v11621
        %v11623 = vlaneseq
        %v11624 = vshrl.u32 %v11623, 7
        %v11625 = vsub.s32 %v11622, %v11624
        %v11626 = vrot.slane %v11612, %v11625
        %v11627 = vcombine.low %v11619, %v11626
        %v11628 = vcombine.low %v10893, %v10902
        %v11629 = vcombine.low %v10911, %v10920
        %v11631 = vunpack.c.l.s4 1983009808
        %v11632 = vunpack.c.0.s8 %v11631
        %v11633 = vlaneseq
        %v11634 = vshrl.u32 %v11633, 7
        %v11635 = vsub.s32 %v11632, %v11634
        %v11636 = vrot.slane %v11628, %v11635
        %v11638 = vunpack.c.l.s4 1983009808
        %v11639 = vunpack.c.0.s8 %v11638
        %v11640 = vlaneseq
        %v11641 = vshrl.u32 %v11640, 7
        %v11642 = vsub.s32 %v11639, %v11641
        %v11643 = vrot.slane %v11629, %v11642
        %v11644 = vcombine.low %v11636, %v11643
        %11645 = vrot.lane.b32.xlu0 %v11593, 64
        %v11646 = vpop.permute.xlu0 %11645
        %11647 = vrot.lane.b32.xlu0 %v11610, 64
        %v11648 = vpop.permute.xlu0 %11647
        %11649 = vrot.lane.b32.xlu0 %v11627, 64
        %v11650 = vpop.permute.xlu0 %11649
        %11651 = vrot.lane.b32.xlu0 %v11644, 64
        %v11652 = vpop.permute.xlu0 %11651
        %vm11657 = vcmask 523264
        %v11658 = vsel %vm11657, %v10953, %v11094
        %v11659 = vsel %vm11657, %v10970, %v11096
        %v11660 = vsel %vm11657, %v10987, %v11098
        %v11661 = vsel %vm11657, %v11004, %v11100
        %v11662 = vsel %vm11657, %v11137, %v11278
        %v11663 = vsel %vm11657, %v11154, %v11280
        %v11664 = vsel %vm11657, %v11171, %v11282
        %v11665 = vsel %vm11657, %v11188, %v11284
        %v11666 = vsel %vm11657, %v11321, %v11462
        %v11667 = vsel %vm11657, %v11338, %v11464
        %v11668 = vsel %vm11657, %v11355, %v11466
        %v11669 = vsel %vm11657, %v11372, %v11468
        %v11670 = vsel %vm11657, %v11505, %v11646
        %v11671 = vsel %vm11657, %v11522, %v11648
        %v11672 = vsel %vm11657, %v11539, %v11650
        %v11673 = vsel %vm11657, %v11556, %v11652
        %v11674 = vpack.c.bf16 %v11659, %v11658
        %v11675 = vpack.c.bf16 %v11663, %v11662
        %v11676 = vpack.c.bf16 %v11667, %v11666
        %v11677 = vpack.c.bf16 %v11671, %v11670
        %v11678 = vpack.c.bf16 %v11661, %v11660
        %v11679 = vpack.c.bf16 %v11665, %v11664
        %v11680 = vpack.c.bf16 %v11669, %v11668
        %v11681 = vpack.c.bf16 %v11673, %v11672
        %v11682 = vld [vmem:[%s5] sm:$0xf]
        %v11683 = vld [vmem:[%s5 + $0x4] sm:$0xf]
        %v11684 = vld [vmem:[%s5 + $0x8] sm:$0xf]
        %v11685 = vld [vmem:[%s5 + $0xc] sm:$0xf]
        %v11686 = vld [vmem:[%s5 + $0x10] sm:$0xf]
        %v11687 = vld [vmem:[%s5 + $0x14] sm:$0xf]
        %v11688 = vld [vmem:[%s5 + $0x18] sm:$0xf]
        %v11689 = vld [vmem:[%s5 + $0x1c] sm:$0xf]
        %v11690 = vld [vmem:[%s5 + $0x20] sm:$0xf]
        %v11691 = vld [vmem:[%s5 + $0x24] sm:$0xf]
        %v11692 = vld [vmem:[%s5 + $0x28] sm:$0xf]
        %v11693 = vld [vmem:[%s5 + $0x2c] sm:$0xf]
        %v11694 = vld [vmem:[%s5 + $0x30] sm:$0xf]
        %v11695 = vld [vmem:[%s5 + $0x34] sm:$0xf]
        %v11696 = vld [vmem:[%s5 + $0x38] sm:$0xf]
        %v11697 = vld [vmem:[%s5 + $0x3c] sm:$0xf]
        %v11698 = vld [vmem:[%s5 + $0x40] sm:$0xf]
        %v11699 = vld [vmem:[%s5 + $0x44] sm:$0xf]
        %v11700 = vld [vmem:[%s5 + $0x48] sm:$0xf]
        %v11701 = vld [vmem:[%s5 + $0x4c] sm:$0xf]
        %v11702 = vld [vmem:[%s5 + $0x50] sm:$0xf]
        %v11703 = vld [vmem:[%s5 + $0x54] sm:$0xf]
        %v11704 = vld [vmem:[%s5 + $0x58] sm:$0xf]
        %v11705 = vld [vmem:[%s5 + $0x5c] sm:$0xf]
        %v11706 = vld [vmem:[%s5 + $0x60] sm:$0xf]
        %v11707 = vld [vmem:[%s5 + $0x64] sm:$0xf]
        %v11708 = vld [vmem:[%s5 + $0x68] sm:$0xf]
        %v11709 = vld [vmem:[%s5 + $0x6c] sm:$0xf]
        %v11710 = vld [vmem:[%s5 + $0x70] sm:$0xf]
        %v11711 = vld [vmem:[%s5 + $0x74] sm:$0xf]
        %v11712 = vld [vmem:[%s5 + $0x78] sm:$0xf]
        %v11713 = vld [vmem:[%s5 + $0x7c] sm:$0xf]
        %v11714 = vld [vmem:[%s5 + $0x80] sm:$0xf]
        %v11715 = vld [vmem:[%s5 + $0x84] sm:$0xf]
        %v11716 = vld [vmem:[%s5 + $0x88] sm:$0xf]
        %v11717 = vld [vmem:[%s5 + $0x8c] sm:$0xf]
        %v11718 = vld [vmem:[%s5 + $0x90] sm:$0xf]
        %v11719 = vld [vmem:[%s5 + $0x94] sm:$0xf]
        %v11720 = vld [vmem:[%s5 + $0x98] sm:$0xf]
        %v11721 = vld [vmem:[%s5 + $0x9c] sm:$0xf]
        %v11722 = vld [vmem:[%s5 + $0xa0] sm:$0xf]
        %v11723 = vld [vmem:[%s5 + $0xa4] sm:$0xf]
        %v11724 = vld [vmem:[%s5 + $0xa8] sm:$0xf]
        %v11725 = vld [vmem:[%s5 + $0xac] sm:$0xf]
        %v11726 = vld [vmem:[%s5 + $0xb0] sm:$0xf]
        %v11727 = vld [vmem:[%s5 + $0xb4] sm:$0xf]
        %v11728 = vld [vmem:[%s5 + $0xb8] sm:$0xf]
        %v11729 = vld [vmem:[%s5 + $0xbc] sm:$0xf]
        %v11730 = vld [vmem:[%s5 + $0xc0] sm:$0xf]
        %v11731 = vld [vmem:[%s5 + $0xc4] sm:$0xf]
        %v11732 = vld [vmem:[%s5 + $0xc8] sm:$0xf]
        %v11733 = vld [vmem:[%s5 + $0xcc] sm:$0xf]
        %v11734 = vld [vmem:[%s5 + $0xd0] sm:$0xf]
        %v11735 = vld [vmem:[%s5 + $0xd4] sm:$0xf]
        %v11736 = vld [vmem:[%s5 + $0xd8] sm:$0xf]
        %v11737 = vld [vmem:[%s5 + $0xdc] sm:$0xf]
        %v11738 = vld [vmem:[%s5 + $0xe0] sm:$0xf]
        %v11739 = vld [vmem:[%s5 + $0xe4] sm:$0xf]
        %v11740 = vld [vmem:[%s5 + $0xe8] sm:$0xf]
        %v11741 = vld [vmem:[%s5 + $0xec] sm:$0xf]
        %v11742 = vld [vmem:[%s5 + $0xf0] sm:$0xf]
        %v11743 = vld [vmem:[%s5 + $0xf4] sm:$0xf]
        %v11744 = vld [vmem:[%s5 + $0xf8] sm:$0xf]
        %v11745 = vld [vmem:[%s5 + $0xfc] sm:$0xf]
        %v11746 = vld [vmem:[%s6] sm:$0x1]
        %v11748 = vlaneseq
        %v11749 = vshrl.u32 %v11748, 7
        %v11750 = vsub.s32 0, %v11749
        %v11751 = vrot.slane %v11746, %v11750
        %v11817 = vunpack.c.l.b16 %v11682
        %v11818 = vunpack.c.l.b16 %v11683
        %v11819 = vunpack.c.l.b16 %v11684
        %v11820 = vunpack.c.l.b16 %v11685
        %v11821 = vunpack.c.l.b16 %v11686
        %v11822 = vunpack.c.l.b16 %v11687
        %v11823 = vunpack.c.l.b16 %v11688
        %v11824 = vunpack.c.l.b16 %v11689
        %v11825 = vunpack.c.l.b16 %v11690
        %v11826 = vunpack.c.l.b16 %v11691
        %v11827 = vunpack.c.l.b16 %v11692
        %v11828 = vunpack.c.l.b16 %v11693
        %v11829 = vunpack.c.l.b16 %v11694
        %v11830 = vunpack.c.l.b16 %v11695
        %v11831 = vunpack.c.l.b16 %v11696
        %v11832 = vunpack.c.l.b16 %v11697
        %v11833 = vunpack.c.l.b16 %v11698
        %v11834 = vunpack.c.l.b16 %v11699
        %v11835 = vunpack.c.l.b16 %v11700
        %v11836 = vunpack.c.l.b16 %v11701
        %v11837 = vunpack.c.l.b16 %v11702
        %v11838 = vunpack.c.l.b16 %v11703
        %v11839 = vunpack.c.l.b16 %v11704
        %v11840 = vunpack.c.l.b16 %v11705
        %v11841 = vunpack.c.l.b16 %v11706
        %v11842 = vunpack.c.l.b16 %v11707
        %v11843 = vunpack.c.l.b16 %v11708
        %v11844 = vunpack.c.l.b16 %v11709
        %v11845 = vunpack.c.l.b16 %v11710
        %v11846 = vunpack.c.l.b16 %v11711
        %v11847 = vunpack.c.l.b16 %v11712
        %v11848 = vunpack.c.l.b16 %v11713
        %v11849 = vunpack.c.l.b16 %v11714
        %v11850 = vunpack.c.l.b16 %v11715
        %v11851 = vunpack.c.l.b16 %v11716
        %v11852 = vunpack.c.l.b16 %v11717
        %v11853 = vunpack.c.l.b16 %v11718
        %v11854 = vunpack.c.l.b16 %v11719
        %v11855 = vunpack.c.l.b16 %v11720
        %v11856 = vunpack.c.l.b16 %v11721
        %v11857 = vunpack.c.l.b16 %v11722
        %v11858 = vunpack.c.l.b16 %v11723
        %v11859 = vunpack.c.l.b16 %v11724
        %v11860 = vunpack.c.l.b16 %v11725
        %v11861 = vunpack.c.l.b16 %v11726
        %v11862 = vunpack.c.l.b16 %v11727
        %v11863 = vunpack.c.l.b16 %v11728
        %v11864 = vunpack.c.l.b16 %v11729
        %v11865 = vunpack.c.l.b16 %v11730
        %v11866 = vunpack.c.l.b16 %v11731
        %v11867 = vunpack.c.l.b16 %v11732
        %v11868 = vunpack.c.l.b16 %v11733
        %v11869 = vunpack.c.l.b16 %v11734
        %v11870 = vunpack.c.l.b16 %v11735
        %v11871 = vunpack.c.l.b16 %v11736
        %v11872 = vunpack.c.l.b16 %v11737
        %v11873 = vunpack.c.l.b16 %v11738
        %v11874 = vunpack.c.l.b16 %v11739
        %v11875 = vunpack.c.l.b16 %v11740
        %v11876 = vunpack.c.l.b16 %v11741
        %v11877 = vunpack.c.l.b16 %v11742
        %v11878 = vunpack.c.l.b16 %v11743
        %v11879 = vunpack.c.l.b16 %v11744
        %v11880 = vunpack.c.l.b16 %v11745
        %v11881 = vpack.c.b16 %v11818, %v11817
        %v11882 = vpack.c.b16 %v11820, %v11819
        %v11883 = vpack.c.b16 %v11822, %v11821
        %v11884 = vpack.c.b16 %v11824, %v11823
        %v11885 = vpack.c.b16 %v11826, %v11825
        %v11886 = vpack.c.b16 %v11828, %v11827
        %v11887 = vpack.c.b16 %v11830, %v11829
        %v11888 = vpack.c.b16 %v11832, %v11831
        %v11889 = vpack.c.b16 %v11834, %v11833
        %v11890 = vpack.c.b16 %v11836, %v11835
        %v11891 = vpack.c.b16 %v11838, %v11837
        %v11892 = vpack.c.b16 %v11840, %v11839
        %v11893 = vpack.c.b16 %v11842, %v11841
        %v11894 = vpack.c.b16 %v11844, %v11843
        %v11895 = vpack.c.b16 %v11846, %v11845
        %v11896 = vpack.c.b16 %v11848, %v11847
        %v11897 = vpack.c.b16 %v11850, %v11849
        %v11898 = vpack.c.b16 %v11852, %v11851
        %v11899 = vpack.c.b16 %v11854, %v11853
        %v11900 = vpack.c.b16 %v11856, %v11855
        %v11901 = vpack.c.b16 %v11858, %v11857
        %v11902 = vpack.c.b16 %v11860, %v11859
        %v11903 = vpack.c.b16 %v11862, %v11861
        %v11904 = vpack.c.b16 %v11864, %v11863
        %v11905 = vpack.c.b16 %v11866, %v11865
        %v11906 = vpack.c.b16 %v11868, %v11867
        %v11907 = vpack.c.b16 %v11870, %v11869
        %v11908 = vpack.c.b16 %v11872, %v11871
        %v11909 = vpack.c.b16 %v11874, %v11873
        %v11910 = vpack.c.b16 %v11876, %v11875
        %v11911 = vpack.c.b16 %v11878, %v11877
        %v11912 = vpack.c.b16 %v11880, %v11879
        %11945 = vmatprep.subr.bf16.mxu0 0
        %11946 = vmatpush1.bf16.msra.mxu0 %v11881
        %11947 = vmatprep.subr.bf16.mxu0 0
        %11948 = vmatpush1.bf16.msra.mxu0 %v11882
        %11949 = vmatprep.subr.bf16.mxu0 0
        %11950 = vmatpush1.bf16.msra.mxu0 %v11883
        %11951 = vmatprep.subr.bf16.mxu0 0
        %11952 = vmatpush1.bf16.msra.mxu0 %v11884
        %11953 = vmatprep.subr.bf16.mxu0 0
        %11954 = vmatpush1.bf16.msra.mxu0 %v11885
        %11955 = vmatprep.subr.bf16.mxu0 0
        %11956 = vmatpush1.bf16.msra.mxu0 %v11886
        %11957 = vmatprep.subr.bf16.mxu0 0
        %11958 = vmatpush1.bf16.msra.mxu0 %v11887
        %11959 = vmatprep.subr.bf16.mxu0 0
        %11960 = vmatpush1.bf16.msra.mxu0 %v11888
        %11961 = vmatprep.subr.bf16.mxu0 0
        %11962 = vmatpush1.bf16.msra.mxu0 %v11889
        %11963 = vmatprep.subr.bf16.mxu0 0
        %11964 = vmatpush1.bf16.msra.mxu0 %v11890
        %11965 = vmatprep.subr.bf16.mxu0 0
        %11966 = vmatpush1.bf16.msra.mxu0 %v11891
        %11967 = vmatprep.subr.bf16.mxu0 0
        %11968 = vmatpush1.bf16.msra.mxu0 %v11892
        %11969 = vmatprep.subr.bf16.mxu0 0
        %11970 = vmatpush1.bf16.msra.mxu0 %v11893
        %11971 = vmatprep.subr.bf16.mxu0 0
        %11972 = vmatpush1.bf16.msra.mxu0 %v11894
        %11973 = vmatprep.subr.bf16.mxu0 0
        %11974 = vmatpush1.bf16.msra.mxu0 %v11895
        %11975 = vmatprep.subr.bf16.mxu0 0
        %11976 = vmatpush1.bf16.msra.mxu0 %v11896
        %11977 = vmatprep.mubr.bf16.mxu0 %v11675
        %11978 = vmatmul.mubr.bf16.gmra.mrb[0].mxu0 %v11674
        %v11979 = vpop.f32.mrb[0].mxu0
        %v11980 = vadd.f32 %v11751, %v11979
        %v11981 = vpop.f32.mrb[0].mxu0
        %v11982 = vpop.f32.mrb[0].mxu0
        %v11983 = vadd.f32 %v11751, %v11982
        %v11984 = vpop.f32.mrb[0].mxu0
        %11985 = vmatprep.mubr.bf16.mxu0 %v11679
        %11986 = vmatmul.mubr.bf16.gmra.mrb[0].mxu0 %v11678
        %v11987 = vpop.f32.mrb[0].mxu0
        %v11988 = vadd.f32 %v11751, %v11987
        %v11989 = vpop.f32.mrb[0].mxu0
        %v11990 = vpop.f32.mrb[0].mxu0
        %v11991 = vadd.f32 %v11751, %v11990
        %v11992 = vpop.f32.mrb[0].mxu0
        %11993 = vdwg.mxu0
        %11994 = vmatprep.subr.bf16.mxu0 0
        %11995 = vmatpush1.bf16.msra.mxu0 %v11897
        %11996 = vmatprep.subr.bf16.mxu0 0
        %11997 = vmatpush1.bf16.msra.mxu0 %v11898
        %11998 = vmatprep.subr.bf16.mxu0 0
        %11999 = vmatpush1.bf16.msra.mxu0 %v11899
        %12000 = vmatprep.subr.bf16.mxu0 0
        %12001 = vmatpush1.bf16.msra.mxu0 %v11900
        %12002 = vmatprep.subr.bf16.mxu0 0
        %12003 = vmatpush1.bf16.msra.mxu0 %v11901
        %12004 = vmatprep.subr.bf16.mxu0 0
        %12005 = vmatpush1.bf16.msra.mxu0 %v11902
        %12006 = vmatprep.subr.bf16.mxu0 0
        %12007 = vmatpush1.bf16.msra.mxu0 %v11903
        %12008 = vmatprep.subr.bf16.mxu0 0
        %12009 = vmatpush1.bf16.msra.mxu0 %v11904
        %12010 = vmatprep.subr.bf16.mxu0 0
        %12011 = vmatpush1.bf16.msra.mxu0 %v11905
        %12012 = vmatprep.subr.bf16.mxu0 0
        %12013 = vmatpush1.bf16.msra.mxu0 %v11906
        %12014 = vmatprep.subr.bf16.mxu0 0
        %12015 = vmatpush1.bf16.msra.mxu0 %v11907
        %12016 = vmatprep.subr.bf16.mxu0 0
        %12017 = vmatpush1.bf16.msra.mxu0 %v11908
        %12018 = vmatprep.subr.bf16.mxu0 0
        %12019 = vmatpush1.bf16.msra.mxu0 %v11909
        %12020 = vmatprep.subr.bf16.mxu0 0
        %12021 = vmatpush1.bf16.msra.mxu0 %v11910
        %12022 = vmatprep.subr.bf16.mxu0 0
        %12023 = vmatpush1.bf16.msra.mxu0 %v11911
        %12024 = vmatprep.subr.bf16.mxu0 0
        %12025 = vmatpush1.bf16.msra.mxu0 %v11912
        %12026 = vmatprep.mubr.bf16.mxu0 %v11677
        %12027 = vmatmul.mubr.bf16.gmra.mrb[0].mxu0 %v11676
        %v12028 = vpop.f32.mrb[0].mxu0
        %v12029 = vadd.f32 %v11980, %v12028
        %v12030 = vpop.f32.mrb[0].mxu0
        %v12031 = vpop.f32.mrb[0].mxu0
        %v12032 = vadd.f32 %v11983, %v12031
        %v12033 = vpop.f32.mrb[0].mxu0
        %12034 = vmatprep.mubr.bf16.mxu0 %v11681
        %12035 = vmatmul.mubr.bf16.gmra.mrb[0].mxu0 %v11680
        %v12036 = vpop.f32.mrb[0].mxu0
        %v12037 = vadd.f32 %v11988, %v12036
        %v12038 = vpop.f32.mrb[0].mxu0
        %v12039 = vpop.f32.mrb[0].mxu0
        %v12040 = vadd.f32 %v11991, %v12039
        %v12041 = vpop.f32.mrb[0].mxu0
        %12042 = vdwg.mxu0
        %v12043 = vmax.f32 %v12029, 0.0
        %v12044 = vmax.f32 %v12032, 0.0
        %v12045 = vmax.f32 %v12037, 0.0
        %v12046 = vmax.f32 %v12040, 0.0
        %v12047 = vpack.c.bf16 %v12044, %v12043
        %v12048 = vpack.c.bf16 %v12046, %v12045
        %v12049 = vld [vmem:[%s7] sm:$0xf]
        %v12050 = vld [vmem:[%s7 + $0x4] sm:$0xf]
        %v12051 = vld [vmem:[%s7 + $0x8] sm:$0xf]
        %v12052 = vld [vmem:[%s7 + $0xc] sm:$0xf]
        %v12053 = vld [vmem:[%s8] sm:$0x1]
        %v12055 = vlaneseq
        %v12056 = vshrl.u32 %v12055, 7
        %v12057 = vsub.s32 0, %v12056
        %v12058 = vrot.slane %v12053, %v12057
        %v12064 = vunpack.c.l.b16 %v12049
        %v12065 = vunpack.c.l.b16 %v12050
        %v12066 = vunpack.c.l.b16 %v12051
        %v12067 = vunpack.c.l.b16 %v12052
        %v12068 = vpack.c.b16 %v12065, %v12064
        %v12069 = vpack.c.b16 %v12067, %v12066
        %v12073 = vsel %vm5511, %v12047, 0
        %v12076 = vsel %vm5511, %v12048, 0
        %12078 = vmatprep.subr.bf16.mxu0 0
        %12079 = vmatpush1.bf16.msra.mxu0 %v12068
        %12080 = vmatprep.subr.bf16.mxu0 0
        %12081 = vmatpush1.bf16.msra.mxu0 %v12069
        %12082 = vmatprep.subr.bf16.mxu0 0
        %12083 = vmatpush1.bf16.msra.mxu0 0
        %12084 = vmatprep.subr.bf16.mxu0 0
        %12085 = vmatpush1.bf16.msra.mxu0 0
        %12086 = vmatprep.subr.bf16.mxu0 0
        %12087 = vmatpush1.bf16.msra.mxu0 0
        %12088 = vmatprep.subr.bf16.mxu0 0
        %12089 = vmatpush1.bf16.msra.mxu0 0
        %12090 = vmatprep.subr.bf16.mxu0 0
        %12091 = vmatpush1.bf16.msra.mxu0 0
        %12092 = vmatprep.subr.bf16.mxu0 0
        %12093 = vmatpush1.bf16.msra.mxu0 0
        %12094 = vmatprep.subr.bf16.mxu0 0
        %12095 = vmatpush1.bf16.msra.mxu0 0
        %12096 = vmatprep.subr.bf16.mxu0 0
        %12097 = vmatpush1.bf16.msra.mxu0 0
        %12098 = vmatprep.subr.bf16.mxu0 0
        %12099 = vmatpush1.bf16.msra.mxu0 0
        %12100 = vmatprep.subr.bf16.mxu0 0
        %12101 = vmatpush1.bf16.msra.mxu0 0
        %12102 = vmatprep.subr.bf16.mxu0 0
        %12103 = vmatpush1.bf16.msra.mxu0 0
        %12104 = vmatprep.subr.bf16.mxu0 0
        %12105 = vmatpush1.bf16.msra.mxu0 0
        %12106 = vmatprep.subr.bf16.mxu0 0
        %12107 = vmatpush1.bf16.msra.mxu0 0
        %12108 = vmatprep.subr.bf16.mxu0 0
        %12109 = vmatpush1.bf16.msra.mxu0 0
        %12110 = vmatprep.mubr.bf16.mxu0 0
        %12111 = vmatmul.mubr.bf16.gmra.mrb[0].mxu0 %v12073
        %v12112 = vpop.f32.mrb[0].mxu0
        %v12113 = vadd.f32 %v12058, %v12112
        %v12114 = vpop.f32.mrb[0].mxu0
        %v12115 = vpop.f32.mrb[0].mxu0
        %v12116 = vadd.f32 %v12058, %v12115
        %v12117 = vpop.f32.mrb[0].mxu0
        %12118 = vmatprep.mubr.bf16.mxu0 0
        %12119 = vmatmul.mubr.bf16.gmra.mrb[0].mxu0 %v12076
        %v12120 = vpop.f32.mrb[0].mxu0
        %v12121 = vadd.f32 %v12058, %v12120
        %v12122 = vpop.f32.mrb[0].mxu0
        %v12123 = vpop.f32.mrb[0].mxu0
        %v12124 = vadd.f32 %v12058, %v12123
        %v12125 = vpop.f32.mrb[0].mxu0
        %12126 = vdwg.mxu0
        %vm12127 = vcmask 64512
        %12128 = vst.msk [vmem:[%s428] sm:$0xff] %vm12127, %v12113
        %12129 = vst.msk [vmem:[%s428 + $0x8] sm:$0xff] %vm12127, %v12116
        %12130 = vst.msk [vmem:[%s428 + $0x10] sm:$0xff] %vm12127, %v12121
        %12131 = vst.msk [vmem:[%s428 + $0x18] sm:$0xff] %vm12127, %v12124
        %s12132 = smul.u32 4, %s20
        %p12133 = scmp.lt.s32.totalorder %s12132, 7
        %s12134 = scalar_select %p12133, %s12132, 7
        %s12135 = smul.addr %s12134, 8
        %s12136 = scalar_lea.vmem %s9, %s12135
        // Predicated region
        $region95: #{tpu_custom_call.1} parent=89 // pred_check
          %p12137 = pneg %p232
        $region96: #{tpu_custom_call.1} parent=89 // pred_check_branch
          %12139 = sbr.rel (%p12137) target = $region98
        $region97: #{tpu_custom_call.1} parent=89 // pred_region
          %s12140 = smul.u32 4, %s20
        $region98: #{tpu_custom_call.1} parent=89 // pred_fallthru
          _
      $region90: #{tpu_custom_call.1} parent=5 // pred_fallthru
        _
      %p12141 = scmp.le.s32.totalorder 2, %s15
      // Predicated region
      $region99: #{tpu_custom_call.1} parent=5 // pred_check
        %p12142 = pneg %p12141
      $region100: #{tpu_custom_call.1} parent=5 // pred_check_branch
        %12144 = sbr.rel (%p12142) target = $region102
      $region101: #{tpu_custom_call.1} parent=5 // pred_region
        %s12145 = ssub.s32 %s15, 2
        // Predicated region
        $region103: #{tpu_custom_call.1} parent=101 // pred_check
          %p12146 = pneg %p238
        $region104: #{tpu_custom_call.1} parent=101 // pred_check_branch
          %12148 = sbr.rel (%p12146) target = $region106
        $region105: #{tpu_custom_call.1} parent=101 // pred_region
          %s12149 = smul.u32 4, %s21
          %p12150 = scmp.lt.s32.totalorder %s12149, 7
          %s12151 = scalar_select %p12150, %s12149, 7
          %s12152 = smul.addr %s12151, 8
          %s12153 = scalar_lea.vmem %s9, %s12152
        $region106: #{tpu_custom_call.1} parent=101 // pred_fallthru
          _
      $region102: #{tpu_custom_call.1} parent=5 // pred_fallthru
        _
    $region6: #{tpu_custom_call.1} parent=1 // loop_footer
      %s19 = sadd.s32 1, %s15
    $region7: #{tpu_custom_call.1} parent=1 // loop_footer_branch
      %14 = sbr.rel target = $region3
    $region8: #{tpu_custom_call.1} parent=1 // loop_exit
      _

</llo_original>
